<compile_context>
chip_gen: v7x
topology: tpu7x:2x2x1
jax: 0.10.0
libtpu: 0.0.40
codegen_flags: <defaults>
</compile_context>

<pallas_src>
import functools

import jax
import jax.numpy as jnp
from jax.experimental import pallas as pl
from jax.experimental.pallas import tpu as pltpu


def _round_up(n, m):
    return ((n + m - 1) // m) * m


def _unet_block_kernel(xp_ref, w1_ref, b1_ref, w2_ref, b2_ref, o_ref,
                       pat1_ref, pat2_ref, mid_ref,
                       *, H, W, K, C1, C2):
    """Fused conv+ReLU -> conv+ReLU for one batch element.

    xp_ref  : (1, Cp_in, H+2p, W+2p) zero-padded input (channels padded to 8x) (VMEM)
    w1_ref  : (C1, K*K*Cp_in)        conv1 im2col weight matrix                (VMEM)
    b1_ref  : (C1, 1)                conv1 bias                                (VMEM)
    w2_ref  : (C2, K*K*Cp1)          conv2 im2col weight matrix                (VMEM)
    b2_ref  : (C2, 1)                conv2 bias                                (VMEM)
    o_ref   : (1, C2, H*W)           output, lane-dense last dim               (VMEM)
    pat1_ref: (K*K*Cp_in, H*W)       conv1 im2col patch matrix        (VMEM scratch)
    pat2_ref: (K*K*Cp1,  H*W)        conv2 im2col patch matrix        (VMEM scratch)
    mid_ref : (Cp1, H+2p, W+2p) f32  conv1 activation with zero halo  (VMEM scratch)
    """
    p = K // 2
    HW = H * W
    Cp_in = xp_ref.shape[1]
    Cp1 = mid_ref.shape[0]

    # ---------- conv1: im2col (8-aligned blocks) + ONE MXU matmul ----------
    for t in range(K * K):                                    # unrolled tap loop
        kh, kw = divmod(t, K)
        patch = xp_ref[0, :, kh:kh + H, kw:kw + W]            # (Cp_in, H, W)
        pat1_ref[t * Cp_in:(t + 1) * Cp_in, :] = patch.reshape(Cp_in, HW)
    acc1 = jnp.dot(w1_ref[...], pat1_ref[...],
                   preferred_element_type=jnp.float32)        # (C1, HW)
    acc1 = jnp.maximum(acc1 + b1_ref[...], 0.0)               # bias + ReLU

    # Stage the activation for conv2 with a zero halo (interior written once).
    mid_ref[...] = jnp.zeros_like(mid_ref)
    mid_ref[0:C1, p:p + H, p:p + W] = acc1.reshape(C1, H, W)

    # ---------- conv2: im2col + ONE MXU matmul ----------
    for t in range(K * K):
        kh, kw = divmod(t, K)
        patch = mid_ref[:, kh:kh + H, kw:kw + W]              # (Cp1, H, W)
        pat2_ref[t * Cp1:(t + 1) * Cp1, :] = patch.reshape(Cp1, HW)
    acc2 = jnp.dot(w2_ref[...], pat2_ref[...],
                   preferred_element_type=jnp.float32)        # (C2, HW)
    acc2 = jnp.maximum(acc2 + b2_ref[...], 0.0)

    # single lane-dense store of the block output
    o_ref[...] = acc2.reshape(1, C2, HW).astype(o_ref.dtype)


def unet_conv_block(x_nchw, params):
    """Forward pass equivalent to UNetConvBlock.forward. x_nchw: (B, Cin, H, W)."""
    (w1, b1), (w2, b2) = params                  # PyTorch layouts: OIHW / (Cout,)
    B, Cin, H, W = x_nchw.shape
    C1, _, K, _ = w1.shape
    C2 = w2.shape[0]
    p = K // 2
    Hp, Wp = H + 2 * p, W + 2 * p
    HW = H * W
    Cp_in = _round_up(Cin, 8)                    # pad channels -> 8-aligned sublanes
    Cp1 = _round_up(C1, 8)

    # spatial 'same' padding (matches PyTorch padding=K//2) + channel zero-pad
    xp = jnp.pad(x_nchw, ((0, 0), (0, Cp_in - Cin), (p, p), (p, p)))

    # im2col weight matrices; contraction index = (kh*K + kw)*Cp + ci
    w1_m = jnp.zeros((C1, K, K, Cp_in), w1.dtype)
    w1_m = w1_m.at[:, :, :, :Cin].set(jnp.transpose(w1, (0, 2, 3, 1)))
    w1_m = w1_m.reshape(C1, K * K * Cp_in)
    w2_m = jnp.zeros((C2, K, K, Cp1), w2.dtype)
    w2_m = w2_m.at[:, :, :, :C1].set(jnp.transpose(w2, (0, 2, 3, 1)))
    w2_m = w2_m.reshape(C2, K * K * Cp1)
    b1_c = b1.reshape(C1, 1).astype(jnp.float32)
    b2_c = b2.reshape(C2, 1).astype(jnp.float32)

    kernel = functools.partial(_unet_block_kernel, H=H, W=W, K=K, C1=C1, C2=C2)

    out_flat = pl.pallas_call(
        kernel,
        out_shape=jax.ShapeDtypeStruct((B, C2, HW), x_nchw.dtype),
        grid_spec=pltpu.PrefetchScalarGridSpec(
            num_scalar_prefetch=0,
            grid=(B,),
            in_specs=[
                pl.BlockSpec((1, Cp_in, Hp, Wp), lambda b: (b, 0, 0, 0)),
                pl.BlockSpec((C1, K * K * Cp_in), lambda b: (0, 0)),
                pl.BlockSpec((C1, 1), lambda b: (0, 0)),
                pl.BlockSpec((C2, K * K * Cp1), lambda b: (0, 0)),
                pl.BlockSpec((C2, 1), lambda b: (0, 0)),
            ],
            out_specs=pl.BlockSpec((1, C2, HW), lambda b: (b, 0, 0)),
            scratch_shapes=[
                pltpu.VMEM((K * K * Cp_in, HW), x_nchw.dtype),   # conv1 patches
                pltpu.VMEM((K * K * Cp1, HW), jnp.float32),      # conv2 patches
                pltpu.VMEM((Cp1, Hp, Wp), jnp.float32),          # conv1 activation
            ],
        ),
        compiler_params=pltpu.CompilerParams(
            dimension_semantics=("parallel",),        # batch across TCs (v7x megacore)
            vmem_limit_bytes=64 * 1024 * 1024,        # headroom above scoped defaults
        ),
    )(xp, w1_m, b1_c, w2_m, b2_c)

    # free row-major split of the lane-dense last dim
    return out_flat.reshape(B, C2, H, W)


def init_conv_params(key, in_size, out_size, kernel_size):
    """Deterministic init mirroring nn.Conv2d default (uniform +-1/sqrt(fan_in))."""
    kw_key, kb_key = jax.random.split(key)
    fan_in = in_size * kernel_size * kernel_size
    bound = float(1.0 / (fan_in ** 0.5))
    # PyTorch OIHW layout
    w = jax.random.uniform(kw_key, (out_size, in_size, kernel_size, kernel_size),
                           jnp.float32, -bound, bound)
    b = jax.random.uniform(kb_key, (out_size,), jnp.float32, -bound, bound)
    return w, b


def _reference(x_nchw, params):
    """Pure-JAX reference (lax.conv) for correctness checking."""
    (w1, b1), (w2, b2) = params
    dn = ('NCHW', 'OIHW', 'NCHW')
    h = jax.lax.conv_general_dilated(x_nchw, w1, (1, 1), 'SAME',
                                     dimension_numbers=dn)
    h = jnp.maximum(h + b1.reshape(1, -1, 1, 1), 0.0)
    y = jax.lax.conv_general_dilated(h, w2, (1, 1), 'SAME',
                                     dimension_numbers=dn)
    y = jnp.maximum(y + b2.reshape(1, -1, 1, 1), 0.0)
    return y


if __name__ == "__main__":
    B, Cin, Cout, H, W, K = 2, 4, 8, 16, 16, 3

    key = jax.random.PRNGKey(0)
    kx, k1, k2 = jax.random.split(key, 3)

    x = jax.random.normal(kx, (B, Cin, H, W), jnp.float32)
    params = (init_conv_params(k1, Cin, Cout, K),
              init_conv_params(k2, Cout, Cout, K))

    out = unet_conv_block(x, params)
    out = jax.block_until_ready(out)

    ref = jax.block_until_ready(_reference(x, params))
    assert out.shape == (B, Cout, H, W)
    assert jnp.allclose(out, ref, atol=1e-4, rtol=1e-4)

    print("KERNEL_OK")
</pallas_src>

<mosaic_0001>
module attributes {stable_mosaic.version = 11 : i64} {
  func.func @_unet_block_kernel(%arg0: i32, %arg1: memref<1x8x18x18xf32, #tpu.memory_space<vmem>>, %arg2: memref<8x72xf32, #tpu.memory_space<vmem>>, %arg3: memref<8x1xf32, #tpu.memory_space<vmem>>, %arg4: memref<8x72xf32, #tpu.memory_space<vmem>>, %arg5: memref<8x1xf32, #tpu.memory_space<vmem>>, %arg6: memref<1x8x256xf32, #tpu.memory_space<vmem>>, %arg7: memref<72x256xf32, #tpu.memory_space<vmem>>, %arg8: memref<72x256xf32, #tpu.memory_space<vmem>>, %arg9: memref<8x18x18xf32, #tpu.memory_space<vmem>>) attributes {dimension_semantics = [#tpu.dimension_semantics<parallel>], iteration_bounds = array<i64: 2>, scalar_prefetch = 0 : i64, scratch_operands = 3 : i64, tpu.core_type = #tpu.core_type<tc>, window_params = [{transform_indices = @transform_0, window_bounds = array<i64: 1, 8, 18, 18>}, {pipeline_mode = #tpu.pipeline_mode<synchronous>, transform_indices = @transform_1, window_bounds = array<i64: 8, 72>}, {pipeline_mode = #tpu.pipeline_mode<synchronous>, transform_indices = @transform_2, window_bounds = array<i64: 8, 1>}, {pipeline_mode = #tpu.pipeline_mode<synchronous>, transform_indices = @transform_3, window_bounds = array<i64: 8, 72>}, {pipeline_mode = #tpu.pipeline_mode<synchronous>, transform_indices = @transform_4, window_bounds = array<i64: 8, 1>}, {transform_indices = @transform_5, window_bounds = array<i64: 1, 8, 256>}]} {
    %c0 = arith.constant 0 : index
    %c0_0 = arith.constant 0 : index
    %c0_1 = arith.constant 0 : index
    %c0_2 = arith.constant 0 : index
    %0 = vector.load %arg1[%c0, %c0_0, %c0_1, %c0_2] : memref<1x8x18x18xf32, #tpu.memory_space<vmem>>, vector<1x8x16x16xf32>
    %1 = vector.shape_cast %0 : vector<1x8x16x16xf32> to vector<8x16x16xf32>
    %2 = vector.shape_cast %1 : vector<8x16x16xf32> to vector<8x256xf32>
    %c0_3 = arith.constant 0 : index
    %c0_4 = arith.constant 0 : index
    %3 = vector.load %arg7[%c0_3, %c0_4] : memref<72x256xf32, #tpu.memory_space<vmem>>, vector<8x256xf32>
    tpu.vector_store %arg7[%c0_3, %c0_4], %2 {strides = array<i32>} : memref<72x256xf32, #tpu.memory_space<vmem>>, vector<8x256xf32>,
    %c0_5 = arith.constant 0 : index
    %c0_6 = arith.constant 0 : index
    %c0_7 = arith.constant 0 : index
    %c1 = arith.constant 1 : index
    %4 = vector.load %arg1[%c0_5, %c0_6, %c0_7, %c1] : memref<1x8x18x18xf32, #tpu.memory_space<vmem>>, vector<1x8x16x16xf32>
    %5 = vector.shape_cast %4 : vector<1x8x16x16xf32> to vector<8x16x16xf32>
    %6 = vector.shape_cast %5 : vector<8x16x16xf32> to vector<8x256xf32>
    %c8 = arith.constant 8 : index
    %c0_8 = arith.constant 0 : index
    %7 = vector.load %arg7[%c8, %c0_8] : memref<72x256xf32, #tpu.memory_space<vmem>>, vector<8x256xf32>
    tpu.vector_store %arg7[%c8, %c0_8], %6 {strides = array<i32>} : memref<72x256xf32, #tpu.memory_space<vmem>>, vector<8x256xf32>,
    %c0_9 = arith.constant 0 : index
    %c0_10 = arith.constant 0 : index
    %c0_11 = arith.constant 0 : index
    %c2 = arith.constant 2 : index
    %8 = vector.load %arg1[%c0_9, %c0_10, %c0_11, %c2] : memref<1x8x18x18xf32, #tpu.memory_space<vmem>>, vector<1x8x16x16xf32>
    %9 = vector.shape_cast %8 : vector<1x8x16x16xf32> to vector<8x16x16xf32>
    %10 = vector.shape_cast %9 : vector<8x16x16xf32> to vector<8x256xf32>
    %c16 = arith.constant 16 : index
    %c0_12 = arith.constant 0 : index
    %11 = vector.load %arg7[%c16, %c0_12] : memref<72x256xf32, #tpu.memory_space<vmem>>, vector<8x256xf32>
    tpu.vector_store %arg7[%c16, %c0_12], %10 {strides = array<i32>} : memref<72x256xf32, #tpu.memory_space<vmem>>, vector<8x256xf32>,
    %c0_13 = arith.constant 0 : index
    %c0_14 = arith.constant 0 : index
    %c1_15 = arith.constant 1 : index
    %c0_16 = arith.constant 0 : index
    %12 = vector.load %arg1[%c0_13, %c0_14, %c1_15, %c0_16] : memref<1x8x18x18xf32, #tpu.memory_space<vmem>>, vector<1x8x16x16xf32>
    %13 = vector.shape_cast %12 : vector<1x8x16x16xf32> to vector<8x16x16xf32>
    %14 = vector.shape_cast %13 : vector<8x16x16xf32> to vector<8x256xf32>
    %c24 = arith.constant 24 : index
    %c0_17 = arith.constant 0 : index
    %15 = vector.load %arg7[%c24, %c0_17] : memref<72x256xf32, #tpu.memory_space<vmem>>, vector<8x256xf32>
    tpu.vector_store %arg7[%c24, %c0_17], %14 {strides = array<i32>} : memref<72x256xf32, #tpu.memory_space<vmem>>, vector<8x256xf32>,
    %c0_18 = arith.constant 0 : index
    %c0_19 = arith.constant 0 : index
    %c1_20 = arith.constant 1 : index
    %c1_21 = arith.constant 1 : index
    %16 = vector.load %arg1[%c0_18, %c0_19, %c1_20, %c1_21] : memref<1x8x18x18xf32, #tpu.memory_space<vmem>>, vector<1x8x16x16xf32>
    %17 = vector.shape_cast %16 : vector<1x8x16x16xf32> to vector<8x16x16xf32>
    %18 = vector.shape_cast %17 : vector<8x16x16xf32> to vector<8x256xf32>
    %c32 = arith.constant 32 : index
    %c0_22 = arith.constant 0 : index
    %19 = vector.load %arg7[%c32, %c0_22] : memref<72x256xf32, #tpu.memory_space<vmem>>, vector<8x256xf32>
    tpu.vector_store %arg7[%c32, %c0_22], %18 {strides = array<i32>} : memref<72x256xf32, #tpu.memory_space<vmem>>, vector<8x256xf32>,
    %c0_23 = arith.constant 0 : index
    %c0_24 = arith.constant 0 : index
    %c1_25 = arith.constant 1 : index
    %c2_26 = arith.constant 2 : index
    %20 = vector.load %arg1[%c0_23, %c0_24, %c1_25, %c2_26] : memref<1x8x18x18xf32, #tpu.memory_space<vmem>>, vector<1x8x16x16xf32>
    %21 = vector.shape_cast %20 : vector<1x8x16x16xf32> to vector<8x16x16xf32>
    %22 = vector.shape_cast %21 : vector<8x16x16xf32> to vector<8x256xf32>
    %c40 = arith.constant 40 : index
    %c0_27 = arith.constant 0 : index
    %23 = vector.load %arg7[%c40, %c0_27] : memref<72x256xf32, #tpu.memory_space<vmem>>, vector<8x256xf32>
    tpu.vector_store %arg7[%c40, %c0_27], %22 {strides = array<i32>} : memref<72x256xf32, #tpu.memory_space<vmem>>, vector<8x256xf32>,
    %c0_28 = arith.constant 0 : index
    %c0_29 = arith.constant 0 : index
    %c2_30 = arith.constant 2 : index
    %c0_31 = arith.constant 0 : index
    %24 = vector.load %arg1[%c0_28, %c0_29, %c2_30, %c0_31] : memref<1x8x18x18xf32, #tpu.memory_space<vmem>>, vector<1x8x16x16xf32>
    %25 = vector.shape_cast %24 : vector<1x8x16x16xf32> to vector<8x16x16xf32>
    %26 = vector.shape_cast %25 : vector<8x16x16xf32> to vector<8x256xf32>
    %c48 = arith.constant 48 : index
    %c0_32 = arith.constant 0 : index
    %27 = vector.load %arg7[%c48, %c0_32] : memref<72x256xf32, #tpu.memory_space<vmem>>, vector<8x256xf32>
    tpu.vector_store %arg7[%c48, %c0_32], %26 {strides = array<i32>} : memref<72x256xf32, #tpu.memory_space<vmem>>, vector<8x256xf32>,
    %c0_33 = arith.constant 0 : index
    %c0_34 = arith.constant 0 : index
    %c2_35 = arith.constant 2 : index
    %c1_36 = arith.constant 1 : index
    %28 = vector.load %arg1[%c0_33, %c0_34, %c2_35, %c1_36] : memref<1x8x18x18xf32, #tpu.memory_space<vmem>>, vector<1x8x16x16xf32>
    %29 = vector.shape_cast %28 : vector<1x8x16x16xf32> to vector<8x16x16xf32>
    %30 = vector.shape_cast %29 : vector<8x16x16xf32> to vector<8x256xf32>
    %c56 = arith.constant 56 : index
    %c0_37 = arith.constant 0 : index
    %31 = vector.load %arg7[%c56, %c0_37] : memref<72x256xf32, #tpu.memory_space<vmem>>, vector<8x256xf32>
    tpu.vector_store %arg7[%c56, %c0_37], %30 {strides = array<i32>} : memref<72x256xf32, #tpu.memory_space<vmem>>, vector<8x256xf32>,
    %c0_38 = arith.constant 0 : index
    %c0_39 = arith.constant 0 : index
    %c2_40 = arith.constant 2 : index
    %c2_41 = arith.constant 2 : index
    %32 = vector.load %arg1[%c0_38, %c0_39, %c2_40, %c2_41] : memref<1x8x18x18xf32, #tpu.memory_space<vmem>>, vector<1x8x16x16xf32>
    %33 = vector.shape_cast %32 : vector<1x8x16x16xf32> to vector<8x16x16xf32>
    %34 = vector.shape_cast %33 : vector<8x16x16xf32> to vector<8x256xf32>
    %c64 = arith.constant 64 : index
    %c0_42 = arith.constant 0 : index
    %35 = vector.load %arg7[%c64, %c0_42] : memref<72x256xf32, #tpu.memory_space<vmem>>, vector<8x256xf32>
    tpu.vector_store %arg7[%c64, %c0_42], %34 {strides = array<i32>} : memref<72x256xf32, #tpu.memory_space<vmem>>, vector<8x256xf32>,
    %c0_43 = arith.constant 0 : index
    %c0_44 = arith.constant 0 : index
    %36 = vector.load %arg2[%c0_43, %c0_44] : memref<8x72xf32, #tpu.memory_space<vmem>>, vector<8x72xf32>
    %c0_45 = arith.constant 0 : index
    %c0_46 = arith.constant 0 : index
    %37 = vector.load %arg7[%c0_45, %c0_46] : memref<72x256xf32, #tpu.memory_space<vmem>>, vector<72x256xf32>
    %cst = arith.constant dense<0.000000e+00> : vector<8x256xf32>
    %38 = tpu.matmul %36, %37, %cst {dimension_numbers = #tpu.dot_dimension_numbers<[1], [0], [0], [1], [0, 0, 1, 1], [], []>} : vector<8x72xf32>, vector<72x256xf32>, vector<8x256xf32> -> vector<8x256xf32>
    %c0_47 = arith.constant 0 : index
    %c0_48 = arith.constant 0 : index
    %39 = vector.load %arg3[%c0_47, %c0_48] : memref<8x1xf32, #tpu.memory_space<vmem>>, vector<8x1xf32>
    %40 = vector.broadcast %39 : vector<8x1xf32> to vector<8x256xf32>
    %41 = arith.addf %38, %40 : vector<8x256xf32>
    %cst_49 = arith.constant 0.000000e+00 : f32
    %42 = vector.broadcast %cst_49 : f32 to vector<8x256xf32>
    %43 = arith.maximumf %41, %42 : vector<8x256xf32>
    %cst_50 = arith.constant 0.000000e+00 : f32
    %44 = vector.broadcast %cst_50 : f32 to vector<8x18x18xf32>
    %c0_51 = arith.constant 0 : index
    %c0_52 = arith.constant 0 : index
    %c0_53 = arith.constant 0 : index
    %45 = vector.load %arg9[%c0_51, %c0_52, %c0_53] : memref<8x18x18xf32, #tpu.memory_space<vmem>>, vector<8x18x18xf32>
    tpu.vector_store %arg9[%c0_51, %c0_52, %c0_53], %44 {strides = array<i32>} : memref<8x18x18xf32, #tpu.memory_space<vmem>>, vector<8x18x18xf32>,
    %46 = vector.shape_cast %43 : vector<8x256xf32> to vector<8x16x16xf32>
    %c0_54 = arith.constant 0 : index
    %c1_55 = arith.constant 1 : index
    %c1_56 = arith.constant 1 : index
    %47 = vector.load %arg9[%c0_54, %c1_55, %c1_56] : memref<8x18x18xf32, #tpu.memory_space<vmem>>, vector<8x16x16xf32>
    tpu.vector_store %arg9[%c0_54, %c1_55, %c1_56], %46 {strides = array<i32>} : memref<8x18x18xf32, #tpu.memory_space<vmem>>, vector<8x16x16xf32>,
    %c0_57 = arith.constant 0 : index
    %c0_58 = arith.constant 0 : index
    %c0_59 = arith.constant 0 : index
    %48 = vector.load %arg9[%c0_57, %c0_58, %c0_59] : memref<8x18x18xf32, #tpu.memory_space<vmem>>, vector<8x16x16xf32>
    %49 = vector.shape_cast %48 : vector<8x16x16xf32> to vector<8x256xf32>
    %c0_60 = arith.constant 0 : index
    %c0_61 = arith.constant 0 : index
    %50 = vector.load %arg8[%c0_60, %c0_61] : memref<72x256xf32, #tpu.memory_space<vmem>>, vector<8x256xf32>
    tpu.vector_store %arg8[%c0_60, %c0_61], %49 {strides = array<i32>} : memref<72x256xf32, #tpu.memory_space<vmem>>, vector<8x256xf32>,
    %c0_62 = arith.constant 0 : index
    %c0_63 = arith.constant 0 : index
    %c1_64 = arith.constant 1 : index
    %51 = vector.load %arg9[%c0_62, %c0_63, %c1_64] : memref<8x18x18xf32, #tpu.memory_space<vmem>>, vector<8x16x16xf32>
    %52 = vector.shape_cast %51 : vector<8x16x16xf32> to vector<8x256xf32>
    %c8_65 = arith.constant 8 : index
    %c0_66 = arith.constant 0 : index
    %53 = vector.load %arg8[%c8_65, %c0_66] : memref<72x256xf32, #tpu.memory_space<vmem>>, vector<8x256xf32>
    tpu.vector_store %arg8[%c8_65, %c0_66], %52 {strides = array<i32>} : memref<72x256xf32, #tpu.memory_space<vmem>>, vector<8x256xf32>,
    %c0_67 = arith.constant 0 : index
    %c0_68 = arith.constant 0 : index
    %c2_69 = arith.constant 2 : index
    %54 = vector.load %arg9[%c0_67, %c0_68, %c2_69] : memref<8x18x18xf32, #tpu.memory_space<vmem>>, vector<8x16x16xf32>
    %55 = vector.shape_cast %54 : vector<8x16x16xf32> to vector<8x256xf32>
    %c16_70 = arith.constant 16 : index
    %c0_71 = arith.constant 0 : index
    %56 = vector.load %arg8[%c16_70, %c0_71] : memref<72x256xf32, #tpu.memory_space<vmem>>, vector<8x256xf32>
    tpu.vector_store %arg8[%c16_70, %c0_71], %55 {strides = array<i32>} : memref<72x256xf32, #tpu.memory_space<vmem>>, vector<8x256xf32>,
    %c0_72 = arith.constant 0 : index
    %c1_73 = arith.constant 1 : index
    %c0_74 = arith.constant 0 : index
    %57 = vector.load %arg9[%c0_72, %c1_73, %c0_74] : memref<8x18x18xf32, #tpu.memory_space<vmem>>, vector<8x16x16xf32>
    %58 = vector.shape_cast %57 : vector<8x16x16xf32> to vector<8x256xf32>
    %c24_75 = arith.constant 24 : index
    %c0_76 = arith.constant 0 : index
    %59 = vector.load %arg8[%c24_75, %c0_76] : memref<72x256xf32, #tpu.memory_space<vmem>>, vector<8x256xf32>
    tpu.vector_store %arg8[%c24_75, %c0_76], %58 {strides = array<i32>} : memref<72x256xf32, #tpu.memory_space<vmem>>, vector<8x256xf32>,
    %c0_77 = arith.constant 0 : index
    %c1_78 = arith.constant 1 : index
    %c1_79 = arith.constant 1 : index
    %60 = vector.load %arg9[%c0_77, %c1_78, %c1_79] : memref<8x18x18xf32, #tpu.memory_space<vmem>>, vector<8x16x16xf32>
    %61 = vector.shape_cast %60 : vector<8x16x16xf32> to vector<8x256xf32>
    %c32_80 = arith.constant 32 : index
    %c0_81 = arith.constant 0 : index
    %62 = vector.load %arg8[%c32_80, %c0_81] : memref<72x256xf32, #tpu.memory_space<vmem>>, vector<8x256xf32>
    tpu.vector_store %arg8[%c32_80, %c0_81], %61 {strides = array<i32>} : memref<72x256xf32, #tpu.memory_space<vmem>>, vector<8x256xf32>,
    %c0_82 = arith.constant 0 : index
    %c1_83 = arith.constant 1 : index
    %c2_84 = arith.constant 2 : index
    %63 = vector.load %arg9[%c0_82, %c1_83, %c2_84] : memref<8x18x18xf32, #tpu.memory_space<vmem>>, vector<8x16x16xf32>
    %64 = vector.shape_cast %63 : vector<8x16x16xf32> to vector<8x256xf32>
    %c40_85 = arith.constant 40 : index
    %c0_86 = arith.constant 0 : index
    %65 = vector.load %arg8[%c40_85, %c0_86] : memref<72x256xf32, #tpu.memory_space<vmem>>, vector<8x256xf32>
    tpu.vector_store %arg8[%c40_85, %c0_86], %64 {strides = array<i32>} : memref<72x256xf32, #tpu.memory_space<vmem>>, vector<8x256xf32>,
    %c0_87 = arith.constant 0 : index
    %c2_88 = arith.constant 2 : index
    %c0_89 = arith.constant 0 : index
    %66 = vector.load %arg9[%c0_87, %c2_88, %c0_89] : memref<8x18x18xf32, #tpu.memory_space<vmem>>, vector<8x16x16xf32>
    %67 = vector.shape_cast %66 : vector<8x16x16xf32> to vector<8x256xf32>
    %c48_90 = arith.constant 48 : index
    %c0_91 = arith.constant 0 : index
    %68 = vector.load %arg8[%c48_90, %c0_91] : memref<72x256xf32, #tpu.memory_space<vmem>>, vector<8x256xf32>
    tpu.vector_store %arg8[%c48_90, %c0_91], %67 {strides = array<i32>} : memref<72x256xf32, #tpu.memory_space<vmem>>, vector<8x256xf32>,
    %c0_92 = arith.constant 0 : index
    %c2_93 = arith.constant 2 : index
    %c1_94 = arith.constant 1 : index
    %69 = vector.load %arg9[%c0_92, %c2_93, %c1_94] : memref<8x18x18xf32, #tpu.memory_space<vmem>>, vector<8x16x16xf32>
    %70 = vector.shape_cast %69 : vector<8x16x16xf32> to vector<8x256xf32>
    %c56_95 = arith.constant 56 : index
    %c0_96 = arith.constant 0 : index
    %71 = vector.load %arg8[%c56_95, %c0_96] : memref<72x256xf32, #tpu.memory_space<vmem>>, vector<8x256xf32>
    tpu.vector_store %arg8[%c56_95, %c0_96], %70 {strides = array<i32>} : memref<72x256xf32, #tpu.memory_space<vmem>>, vector<8x256xf32>,
    %c0_97 = arith.constant 0 : index
    %c2_98 = arith.constant 2 : index
    %c2_99 = arith.constant 2 : index
    %72 = vector.load %arg9[%c0_97, %c2_98, %c2_99] : memref<8x18x18xf32, #tpu.memory_space<vmem>>, vector<8x16x16xf32>
    %73 = vector.shape_cast %72 : vector<8x16x16xf32> to vector<8x256xf32>
    %c64_100 = arith.constant 64 : index
    %c0_101 = arith.constant 0 : index
    %74 = vector.load %arg8[%c64_100, %c0_101] : memref<72x256xf32, #tpu.memory_space<vmem>>, vector<8x256xf32>
    tpu.vector_store %arg8[%c64_100, %c0_101], %73 {strides = array<i32>} : memref<72x256xf32, #tpu.memory_space<vmem>>, vector<8x256xf32>,
    %c0_102 = arith.constant 0 : index
    %c0_103 = arith.constant 0 : index
    %75 = vector.load %arg4[%c0_102, %c0_103] : memref<8x72xf32, #tpu.memory_space<vmem>>, vector<8x72xf32>
    %c0_104 = arith.constant 0 : index
    %c0_105 = arith.constant 0 : index
    %76 = vector.load %arg8[%c0_104, %c0_105] : memref<72x256xf32, #tpu.memory_space<vmem>>, vector<72x256xf32>
    %cst_106 = arith.constant dense<0.000000e+00> : vector<8x256xf32>
    %77 = tpu.matmul %75, %76, %cst_106 {dimension_numbers = #tpu.dot_dimension_numbers<[1], [0], [0], [1], [0, 0, 1, 1], [], []>} : vector<8x72xf32>, vector<72x256xf32>, vector<8x256xf32> -> vector<8x256xf32>
    %c0_107 = arith.constant 0 : index
    %c0_108 = arith.constant 0 : index
    %78 = vector.load %arg5[%c0_107, %c0_108] : memref<8x1xf32, #tpu.memory_space<vmem>>, vector<8x1xf32>
    %79 = vector.broadcast %78 : vector<8x1xf32> to vector<8x256xf32>
    %80 = arith.addf %77, %79 : vector<8x256xf32>
    %cst_109 = arith.constant 0.000000e+00 : f32
    %81 = vector.broadcast %cst_109 : f32 to vector<8x256xf32>
    %82 = arith.maximumf %80, %81 : vector<8x256xf32>
    %83 = vector.shape_cast %82 : vector<8x256xf32> to vector<1x8x256xf32>
    %c0_110 = arith.constant 0 : index
    %c0_111 = arith.constant 0 : index
    %c0_112 = arith.constant 0 : index
    %84 = vector.load %arg6[%c0_110, %c0_111, %c0_112] : memref<1x8x256xf32, #tpu.memory_space<vmem>>, vector<1x8x256xf32>
    tpu.vector_store %arg6[%c0_110, %c0_111, %c0_112], %83 {strides = array<i32>} : memref<1x8x256xf32, #tpu.memory_space<vmem>>, vector<1x8x256xf32>,
    return
  }
  func.func @transform_0(%arg0: i32) -> (i32, i32, i32, i32) {
    %c0_i32 = arith.constant 0 : i32
    %c0_i32_0 = arith.constant 0 : i32
    %c0_i32_1 = arith.constant 0 : i32
    %c0_i32_2 = arith.constant 0 : i32
    return %arg0, %c0_i32, %c0_i32_0, %c0_i32_1 : i32, i32, i32, i32
  }
  func.func @transform_1(%arg0: i32) -> (i32, i32) {
    %c0_i32 = arith.constant 0 : i32
    %c0_i32_0 = arith.constant 0 : i32
    %c0_i32_1 = arith.constant 0 : i32
    return %c0_i32, %c0_i32_0 : i32, i32
  }
  func.func @transform_2(%arg0: i32) -> (i32, i32) {
    %c0_i32 = arith.constant 0 : i32
    %c0_i32_0 = arith.constant 0 : i32
    %c0_i32_1 = arith.constant 0 : i32
    return %c0_i32, %c0_i32_0 : i32, i32
  }
  func.func @transform_3(%arg0: i32) -> (i32, i32) {
    %c0_i32 = arith.constant 0 : i32
    %c0_i32_0 = arith.constant 0 : i32
    %c0_i32_1 = arith.constant 0 : i32
    return %c0_i32, %c0_i32_0 : i32, i32
  }
  func.func @transform_4(%arg0: i32) -> (i32, i32) {
    %c0_i32 = arith.constant 0 : i32
    %c0_i32_0 = arith.constant 0 : i32
    %c0_i32_1 = arith.constant 0 : i32
    return %c0_i32, %c0_i32_0 : i32, i32
  }
  func.func @transform_5(%arg0: i32) -> (i32, i32, i32) {
    %c0_i32 = arith.constant 0 : i32
    %c0_i32_0 = arith.constant 0 : i32
    %c0_i32_1 = arith.constant 0 : i32
    return %arg0, %c0_i32, %c0_i32_0 : i32, i32, i32
  }
}

</mosaic_0001>

<llo_original>
// kernel: tpu_custom_call.1
$region0: #{tpu_custom_call.1}
  #allocation0 [shape = 'u32[]', space=smem, size = 0x4, offset = 0x4, fixed_abs, tag = 'smem constant byte address 0x4 - core index']
  #allocation1 [shape = 'u32[144,128]{1,0:T(1,128)}', space=vmem, size = 0x12000, scoped, tag = 'internal scratch']
  #allocation2 [shape = 'f32[72,256]{1,0:T(8,128)}', space=vmem, size = 0x12000, scoped, tag = 'scratch operand']
  #allocation3 [shape = 'f32[72,256]{1,0:T(8,128)}', space=vmem, size = 0x12000, scoped, tag = 'scratch operand']
  #allocation4 [shape = 'f32[8,18,18]{2,1,0:T(8,128)}', space=vmem, size = 0x18000, scoped, tag = 'scratch operand']
  %s0 = inlined_call_operand.hbm [shape: f32[2,8,18,18], index: 0, kind: input, shape index: {}]
  %s1 = inlined_call_operand.hbm [shape: f32[8,72], index: 1, kind: input, shape index: {}]
  %s2 = inlined_call_operand.hbm [shape: f32[8,1], index: 2, kind: input, shape index: {}]
  %s3 = inlined_call_operand.hbm [shape: f32[8,72], index: 3, kind: input, shape index: {}]
  %s4 = inlined_call_operand.hbm [shape: f32[8,1], index: 4, kind: input, shape index: {}]
  %s5 = inlined_call_operand.hbm [shape: f32[2,8,256], index: 5, kind: output, shape index: {}]
  %s6 = sld [smem:[#allocation0]]
  $region73: #{tpu_custom_call.1} parent=0
    _
  %s8 = ssub.s32 1, %s6
  %s9 = scalar_select 0, %s8, %s6
  $region1: #{tpu_custom_call.1} parent=0
    #allocation5 [shape = 'u8[196608]{0}', space=vmem, size = 0x30000, scoped, tag = 'input window, operand 0']
    #allocation6 [shape = 's32[2]{0}', space=sflag, size = 0x8, scoped, tag = 'scoped memory for tpu_custom_call.1']
    #allocation7 [shape = 's32[2]{0}', space=sflag, size = 0x8, scoped, tag = 'scoped memory for tpu_custom_call.1']
    #allocation8 [shape = 'u8[4096]{0}', space=vmem, size = 0x1000, scoped, tag = 'input window, operand 1, single buffered']
    #allocation9 [shape = 's32[1]{0}', space=sflag, size = 0x4, scoped, tag = 'scoped memory for tpu_custom_call.1']
    #allocation10 [shape = 'u8[4096]{0}', space=vmem, size = 0x1000, scoped, tag = 'input window, operand 2, single buffered']
    #allocation11 [shape = 'u8[4096]{0}', space=vmem, size = 0x1000, scoped, tag = 'input window, operand 3, single buffered']
    #allocation12 [shape = 's32[1]{0}', space=sflag, size = 0x4, scoped, tag = 'scoped memory for tpu_custom_call.1']
    #allocation13 [shape = 'u8[4096]{0}', space=vmem, size = 0x1000, scoped, tag = 'input window, operand 4, single buffered']
    #allocation14 [shape = 'u8[16384]{0}', space=vmem, size = 0x4000, scoped, tag = 'output window, operand 0']
    %10 = vsyncpa [#allocation6], 0
    %s11 = scalar_lea.sflag [#allocation6], 1
    %12 = vsyncpa %s11, 0
    %13 = vsyncpa [#allocation9], 0
    %14 = vsyncpa [#allocation12], 0
    %15 = vsyncpa [#allocation7], 0
    %s16 = scalar_lea.sflag [#allocation7], 1
    %17 = vsyncpa %s16, 0
    loop: start=0, step=1, limit=4
    $region2: #{tpu_custom_call.1} parent=1 // loop_pre_header
      _
    $region3: #{tpu_custom_call.1} parent=1 // loop_header
      %s19 = sphi 0, %s23
      %p20 = scmp.ge.s32.totalorder %s19, 4
      %s29 = sphi 0, %s31
      %s32 = sphi 0, %s29
      %s33 = sphi 0, %s32
      %s49 = sphi 0, %s33
      %s53 = sphi 0, %s53
      %s55 = sphi 0, %s53
      %s56 = sphi 0, %s55
      %s70 = sphi 0, %s56
      %s74 = sphi 0, %s74
      %s76 = sphi 0, %s74
      %s77 = sphi 0, %s76
      %s91 = sphi 0, %s77
      %s95 = sphi 0, %s95
      %s97 = sphi 0, %s95
      %s98 = sphi 0, %s97
      %s112 = sphi 0, %s98
      %s116 = sphi 0, %s116
      %s118 = sphi 0, %s116
      %s119 = sphi 0, %s118
      %s133 = sphi 0, %s119
      %s139 = sphi 0, %s141
      %s142 = sphi 0, %s139
      %s143 = sphi 0, %s142
      %s159 = sphi 0, %s143
    $region4: #{tpu_custom_call.1} parent=1 // loop_header_branch
      %22 = sbr.rel (%p20) target = $region8
    $region5: #{tpu_custom_call.1} parent=1 // loop_body
      %s24 = ssub.s32 %s19, 1
      %s25 = ssub.s32 %s19, 2
      %s26 = sadd.s32 %s19, 1
      %s27 = ssub.s32 %s19, %s26
      %p28 = scmp.eq.s32.totalorder %s27, 0
      %s30 = sadd.s32 %s29, 1
      %s31 = scalar_select %p28, %s29, %s30
      %p34 = pneg %p28
      %p35 = scmp.eq.s32.totalorder %s19, 1
      %p36 = por %p34, %p35
      %p37 = scmp.ne.s32.totalorder %s29, %s32
      %p38 = scmp.eq.s32.totalorder %s19, 0
      %p39 = por %p37, %p38
      %p40 = scmp.ne.s32.totalorder %s29, %s32
      %p41 = scmp.eq.s32.totalorder %s24, 1
      %p42 = por %p40, %p41
      %p43 = scmp.ne.s32.totalorder %s32, %s33
      %p44 = scmp.eq.s32.totalorder %s24, 0
      %p45 = por %p43, %p44
      %p46 = scmp.ne.s32.totalorder %s32, %s33
      %p47 = scmp.eq.s32.totalorder %s25, 1
      %p48 = por %p46, %p47
      %p50 = scmp.ne.s32.totalorder %s33, %s49
      %p51 = scmp.eq.s32.totalorder %s25, 0
      %p52 = por %p50, %p51
      %s54 = sadd.s32 %s53, 1
      %p57 = scmp.eq.s32.totalorder %s19, 1
      %p58 = scmp.ne.s32.totalorder %s53, %s55
      %p59 = scmp.eq.s32.totalorder %s19, 0
      %p60 = por %p58, %p59
      %p61 = scmp.ne.s32.totalorder %s53, %s55
      %p62 = scmp.eq.s32.totalorder %s24, 1
      %p63 = por %p61, %p62
      %p64 = scmp.ne.s32.totalorder %s55, %s56
      %p65 = scmp.eq.s32.totalorder %s24, 0
      %p66 = por %p64, %p65
      %p67 = scmp.ne.s32.totalorder %s55, %s56
      %p68 = scmp.eq.s32.totalorder %s25, 1
      %p69 = por %p67, %p68
      %p71 = scmp.ne.s32.totalorder %s56, %s70
      %p72 = scmp.eq.s32.totalorder %s25, 0
      %p73 = por %p71, %p72
      %s75 = sadd.s32 %s74, 1
      %p78 = scmp.eq.s32.totalorder %s19, 1
      %p79 = scmp.ne.s32.totalorder %s74, %s76
      %p80 = scmp.eq.s32.totalorder %s19, 0
      %p81 = por %p79, %p80
      %p82 = scmp.ne.s32.totalorder %s74, %s76
      %p83 = scmp.eq.s32.totalorder %s24, 1
      %p84 = por %p82, %p83
      %p85 = scmp.ne.s32.totalorder %s76, %s77
      %p86 = scmp.eq.s32.totalorder %s24, 0
      %p87 = por %p85, %p86
      %p88 = scmp.ne.s32.totalorder %s76, %s77
      %p89 = scmp.eq.s32.totalorder %s25, 1
      %p90 = por %p88, %p89
      %p92 = scmp.ne.s32.totalorder %s77, %s91
      %p93 = scmp.eq.s32.totalorder %s25, 0
      %p94 = por %p92, %p93
      %s96 = sadd.s32 %s95, 1
      %p99 = scmp.eq.s32.totalorder %s19, 1
      %p100 = scmp.ne.s32.totalorder %s95, %s97
      %p101 = scmp.eq.s32.totalorder %s19, 0
      %p102 = por %p100, %p101
      %p103 = scmp.ne.s32.totalorder %s95, %s97
      %p104 = scmp.eq.s32.totalorder %s24, 1
      %p105 = por %p103, %p104
      %p106 = scmp.ne.s32.totalorder %s97, %s98
      %p107 = scmp.eq.s32.totalorder %s24, 0
      %p108 = por %p106, %p107
      %p109 = scmp.ne.s32.totalorder %s97, %s98
      %p110 = scmp.eq.s32.totalorder %s25, 1
      %p111 = por %p109, %p110
      %p113 = scmp.ne.s32.totalorder %s98, %s112
      %p114 = scmp.eq.s32.totalorder %s25, 0
      %p115 = por %p113, %p114
      %s117 = sadd.s32 %s116, 1
      %p120 = scmp.eq.s32.totalorder %s19, 1
      %p121 = scmp.ne.s32.totalorder %s116, %s118
      %p122 = scmp.eq.s32.totalorder %s19, 0
      %p123 = por %p121, %p122
      %p124 = scmp.ne.s32.totalorder %s116, %s118
      %p125 = scmp.eq.s32.totalorder %s24, 1
      %p126 = por %p124, %p125
      %p127 = scmp.ne.s32.totalorder %s118, %s119
      %p128 = scmp.eq.s32.totalorder %s24, 0
      %p129 = por %p127, %p128
      %p130 = scmp.ne.s32.totalorder %s118, %s119
      %p131 = scmp.eq.s32.totalorder %s25, 1
      %p132 = por %p130, %p131
      %p134 = scmp.ne.s32.totalorder %s119, %s133
      %p135 = scmp.eq.s32.totalorder %s25, 0
      %p136 = por %p134, %p135
      %s137 = ssub.s32 %s19, %s26
      %p138 = scmp.eq.s32.totalorder %s137, 0
      %s140 = sadd.s32 %s139, 1
      %s141 = scalar_select %p138, %s139, %s140
      %p144 = pneg %p138
      %p145 = scmp.eq.s32.totalorder %s19, 1
      %p146 = por %p144, %p145
      %p147 = scmp.ne.s32.totalorder %s139, %s142
      %p148 = scmp.eq.s32.totalorder %s19, 0
      %p149 = por %p147, %p148
      %p150 = scmp.ne.s32.totalorder %s139, %s142
      %p151 = scmp.eq.s32.totalorder %s24, 1
      %p152 = por %p150, %p151
      %p153 = scmp.ne.s32.totalorder %s142, %s143
      %p154 = scmp.eq.s32.totalorder %s24, 0
      %p155 = por %p153, %p154
      %p156 = scmp.ne.s32.totalorder %s142, %s143
      %p157 = scmp.eq.s32.totalorder %s25, 1
      %p158 = por %p156, %p157
      %p160 = scmp.ne.s32.totalorder %s143, %s159
      %p161 = scmp.eq.s32.totalorder %s25, 0
      %p162 = por %p160, %p161
      %p163 = scmp.le.s32.totalorder 1, %s19
      %p164 = scmp.lt.s32.totalorder %s19, 3
      %p165 = pnand %p163, %p164
      %p166 = pneg %p165
      // Predicated region
      $region9: #{tpu_custom_call.1} parent=5 // pred_check
        _
      $region10: #{tpu_custom_call.1} parent=5 // pred_check_branch
        %168 = sbr.rel (%p165) target = $region12
      $region11: #{tpu_custom_call.1} parent=5 // pred_region
        %s169 = ssub.s32 %s19, 1
        // Predicated region
        $region13: #{tpu_custom_call.1} parent=11 // pred_check
          %p170 = pneg %p66
        $region14: #{tpu_custom_call.1} parent=11 // pred_check_branch
          %172 = sbr.rel (%p170) target = $region16
        $region15: #{tpu_custom_call.1} parent=11 // pred_region
          %s174 = ssub.s32 128, 128
          %175 = vsyncadd [#allocation9], %s174
          %s177 = sshll.u32 [#allocation8], 4
          %s178 = int_to_ptr.vmem [resolvable:$true] %s177
          %180 = dma.hbm_to_vmem [thread:$0]  %s1, 128, %s178, [#allocation9]
        $region16: #{tpu_custom_call.1} parent=11 // pred_fallthru
          _
        // Predicated region
        $region17: #{tpu_custom_call.1} parent=11 // pred_check
          %p181 = pneg %p87
        $region18: #{tpu_custom_call.1} parent=11 // pred_check_branch
          %183 = sbr.rel (%p181) target = $region20
        $region19: #{tpu_custom_call.1} parent=11 // pred_region
          %s185 = ssub.s32 128, 128
          %186 = vsyncadd [#allocation9], %s185
          %s188 = sshll.u32 [#allocation10], 4
          %s189 = int_to_ptr.vmem [resolvable:$true] %s188
          %191 = dma.hbm_to_vmem [thread:$0]  %s2, 128, %s189, [#allocation9]
        $region20: #{tpu_custom_call.1} parent=11 // pred_fallthru
          _
        // Predicated region
        $region21: #{tpu_custom_call.1} parent=11 // pred_check
          %p192 = pneg %p108
        $region22: #{tpu_custom_call.1} parent=11 // pred_check_branch
          %194 = sbr.rel (%p192) target = $region24
        $region23: #{tpu_custom_call.1} parent=11 // pred_region
          %s196 = ssub.s32 128, 128
          %197 = vsyncadd [#allocation12], %s196
          %s199 = sshll.u32 [#allocation11], 4
          %s200 = int_to_ptr.vmem [resolvable:$true] %s199
          %202 = dma.hbm_to_vmem [thread:$0]  %s3, 128, %s200, [#allocation12]
        $region24: #{tpu_custom_call.1} parent=11 // pred_fallthru
          _
        // Predicated region
        $region25: #{tpu_custom_call.1} parent=11 // pred_check
          %p203 = pneg %p129
        $region26: #{tpu_custom_call.1} parent=11 // pred_check_branch
          %205 = sbr.rel (%p203) target = $region28
        $region27: #{tpu_custom_call.1} parent=11 // pred_region
          %s207 = ssub.s32 128, 128
          %208 = vsyncadd [#allocation12], %s207
          %s210 = sshll.u32 [#allocation13], 4
          %s211 = int_to_ptr.vmem [resolvable:$true] %s210
          %213 = dma.hbm_to_vmem [thread:$0]  %s4, 128, %s211, [#allocation12]
        $region28: #{tpu_custom_call.1} parent=11 // pred_fallthru
          _
      $region12: #{tpu_custom_call.1} parent=5 // pred_fallthru
        _
      %p214 = scmp.lt.s32.totalorder %s19, 2
      // Predicated region
      $region29: #{tpu_custom_call.1} parent=5 // pred_check
        %p215 = pneg %p214
      $region30: #{tpu_custom_call.1} parent=5 // pred_check_branch
        %217 = sbr.rel (%p215) target = $region32
      $region31: #{tpu_custom_call.1} parent=5 // pred_region
        // Predicated region
        $region33: #{tpu_custom_call.1} parent=31 // pred_check
          %p218 = pneg %p39
        $region34: #{tpu_custom_call.1} parent=31 // pred_check_branch
          %220 = sbr.rel (%p218) target = $region36
        $region35: #{tpu_custom_call.1} parent=31 // pred_region
          %s221 = sand.u32 %s29, 1
          %s222 = scalar_lea.sflag [#allocation6], %s221
          %s223 = sand.u32 %s29, 1
          %s224 = smul.addr %s223, 192
          %s225 = scalar_lea.vmem [#allocation5], %s224
          %s227 = ssub.s32 3072, 3072
          %228 = vsyncadd %s222, %s227
          %s229 = smul.addr %s19, 24
          %s230 = smul.addr %s229, 128
          %s231 = scalar_lea.hbm %s0, %s230
          %s232 = sshll.u32 %s225, 4
          %s233 = int_to_ptr.vmem [resolvable:$true] %s232
          %238 = dma.hbm_to_vmem [thread:$0]  %s231, 3072, %s233, %s222, 128, 128, 8
        $region36: #{tpu_custom_call.1} parent=31 // pred_fallthru
          _
      $region32: #{tpu_custom_call.1} parent=5 // pred_fallthru
        _
      %p239 = scmp.le.s32.totalorder 1, %s19
      %p240 = scmp.lt.s32.totalorder %s19, 3
      %p241 = pnand %p239, %p240
      %p242 = pneg %p241
      // Predicated region
      $region37: #{tpu_custom_call.1} parent=5 // pred_check
        _
      $region38: #{tpu_custom_call.1} parent=5 // pred_check_branch
        %244 = sbr.rel (%p241) target = $region40
      $region39: #{tpu_custom_call.1} parent=5 // pred_region
        %s245 = ssub.s32 %s19, 1
        %s246 = sand.u32 %s32, 1
        %s247 = scalar_lea.sflag [#allocation6], %s246
        %s248 = sand.u32 %s32, 1
        %s249 = smul.addr %s248, 192
        %s250 = scalar_lea.vmem [#allocation5], %s249
        // Predicated region
        $region41: #{tpu_custom_call.1} parent=39 // pred_check
          %p251 = pneg %p45
        $region42: #{tpu_custom_call.1} parent=39 // pred_check_branch
          %253 = sbr.rel (%p251) target = $region44
        $region43: #{tpu_custom_call.1} parent=39 // pred_region
          %254 = dma.done %s247, 3072
        $region44: #{tpu_custom_call.1} parent=39 // pred_fallthru
          _
        // Predicated region
        $region45: #{tpu_custom_call.1} parent=39 // pred_check
          %p255 = pneg %p66
        $region46: #{tpu_custom_call.1} parent=39 // pred_check_branch
          %257 = sbr.rel (%p255) target = $region48
        $region47: #{tpu_custom_call.1} parent=39 // pred_region
          %258 = dma.done [#allocation9], 128
        $region48: #{tpu_custom_call.1} parent=39 // pred_fallthru
          _
        // Predicated region
        $region49: #{tpu_custom_call.1} parent=39 // pred_check
          %p259 = pneg %p87
        $region50: #{tpu_custom_call.1} parent=39 // pred_check_branch
          %261 = sbr.rel (%p259) target = $region52
        $region51: #{tpu_custom_call.1} parent=39 // pred_region
          %262 = dma.done [#allocation9], 128
        $region52: #{tpu_custom_call.1} parent=39 // pred_fallthru
          _
        // Predicated region
        $region53: #{tpu_custom_call.1} parent=39 // pred_check
          %p263 = pneg %p108
        $region54: #{tpu_custom_call.1} parent=39 // pred_check_branch
          %265 = sbr.rel (%p263) target = $region56
        $region55: #{tpu_custom_call.1} parent=39 // pred_region
          %266 = dma.done [#allocation12], 128
        $region56: #{tpu_custom_call.1} parent=39 // pred_fallthru
          _
        // Predicated region
        $region57: #{tpu_custom_call.1} parent=39 // pred_check
          %p267 = pneg %p129
        $region58: #{tpu_custom_call.1} parent=39 // pred_check_branch
          %269 = sbr.rel (%p267) target = $region60
        $region59: #{tpu_custom_call.1} parent=39 // pred_region
          %270 = dma.done [#allocation12], 128
        $region60: #{tpu_custom_call.1} parent=39 // pred_fallthru
          _
        %s271 = sand.u32 %s32, 1
        %s272 = scalar_lea.sflag [#allocation6], %s271
        %s273 = sand.u32 %s32, 1
        %s274 = smul.addr %s273, 192
        %s275 = scalar_lea.vmem [#allocation5], %s274
        %p276 = pneg %p45
        %p277 = pneg %p42
        %p278 = pneg %p66
        %p279 = pneg %p63
        %p280 = pneg %p87
        %p281 = pneg %p84
        %p282 = pneg %p108
        %p283 = pneg %p105
        %p284 = pneg %p129
        %p285 = pneg %p126
        %p286 = pneg %p155
        %p287 = pneg %p152
        %s288 = sand.u32 %s142, 1
        %s289 = scalar_lea.sflag [#allocation7], %s288
        %s290 = sand.u32 %s142, 1
        %s291 = smul.addr %s290, 16
        %s292 = scalar_lea.vmem [#allocation14], %s291
        %v293 = vld [vmem:[%s250] sm:$0xff]
        %v294 = vld [vmem:[%s250 + $0x8] sm:$0xff]
        %v295 = vld [vmem:[%s250 + $0x18] sm:$0xff]
        %v296 = vld [vmem:[%s250 + $0x20] sm:$0xff]
        %v297 = vld [vmem:[%s250 + $0x30] sm:$0xff]
        %v298 = vld [vmem:[%s250 + $0x38] sm:$0xff]
        %v299 = vld [vmem:[%s250 + $0x48] sm:$0xff]
        %v300 = vld [vmem:[%s250 + $0x50] sm:$0xff]
        %v301 = vld [vmem:[%s250 + $0x60] sm:$0xff]
        %v302 = vld [vmem:[%s250 + $0x68] sm:$0xff]
        %v303 = vld [vmem:[%s250 + $0x78] sm:$0xff]
        %v304 = vld [vmem:[%s250 + $0x80] sm:$0xff]
        %v305 = vld [vmem:[%s250 + $0x90] sm:$0xff]
        %v306 = vld [vmem:[%s250 + $0x98] sm:$0xff]
        %v307 = vld [vmem:[%s250 + $0xa8] sm:$0xff]
        %v308 = vld [vmem:[%s250 + $0xb0] sm:$0xff]
        %v309 = vcombine.low %v293, %v297
        %v310 = vcombine.high %v293, %v297
        %v312 = vunpack.c.l.s4 1983009808
        %v313 = vunpack.c.0.s8 %v312
        %v314 = vlaneseq
        %v315 = vshrl.u32 %v314, 7
        %v316 = vsub.s32 %v313, %v315
        %v317 = vrot.slane %v309, %v316
        %v319 = vunpack.c.l.s4 1983009808
        %v320 = vunpack.c.0.s8 %v319
        %v321 = vlaneseq
        %v322 = vshrl.u32 %v321, 7
        %v323 = vsub.s32 %v320, %v322
        %v324 = vrot.slane %v310, %v323
        %v325 = vcombine.low %v295, %v299
        %v326 = vcombine.high %v295, %v299
        %v328 = vunpack.c.l.s4 1983009808
        %v329 = vunpack.c.0.s8 %v328
        %v330 = vlaneseq
        %v331 = vshrl.u32 %v330, 7
        %v332 = vsub.s32 %v329, %v331
        %v333 = vrot.slane %v325, %v332
        %v335 = vunpack.c.l.s4 1983009808
        %v336 = vunpack.c.0.s8 %v335
        %v337 = vlaneseq
        %v338 = vshrl.u32 %v337, 7
        %v339 = vsub.s32 %v336, %v338
        %v340 = vrot.slane %v326, %v339
        %v341 = vcombine.low %v301, %v305
        %v342 = vcombine.high %v301, %v305
        %v344 = vunpack.c.l.s4 1983009808
        %v345 = vunpack.c.0.s8 %v344
        %v346 = vlaneseq
        %v347 = vshrl.u32 %v346, 7
        %v348 = vsub.s32 %v345, %v347
        %v349 = vrot.slane %v341, %v348
        %v351 = vunpack.c.l.s4 1983009808
        %v352 = vunpack.c.0.s8 %v351
        %v353 = vlaneseq
        %v354 = vshrl.u32 %v353, 7
        %v355 = vsub.s32 %v352, %v354
        %v356 = vrot.slane %v342, %v355
        %v357 = vcombine.low %v303, %v307
        %v358 = vcombine.high %v303, %v307
        %v360 = vunpack.c.l.s4 1983009808
        %v361 = vunpack.c.0.s8 %v360
        %v362 = vlaneseq
        %v363 = vshrl.u32 %v362, 7
        %v364 = vsub.s32 %v361, %v363
        %v365 = vrot.slane %v357, %v364
        %v367 = vunpack.c.l.s4 1983009808
        %v368 = vunpack.c.0.s8 %v367
        %v369 = vlaneseq
        %v370 = vshrl.u32 %v369, 7
        %v371 = vsub.s32 %v368, %v370
        %v372 = vrot.slane %v358, %v371
        %v373 = vcombine.low %v317, %v333
        %v374 = vcombine.high %v317, %v333
        %v376 = vunpack.c.l.s4 1934713408
        %v377 = vunpack.c.0.s8 %v376
        %v378 = vlaneseq
        %v379 = vshrl.u32 %v378, 7
        %v380 = vsub.s32 %v377, %v379
        %v381 = vrot.slane %v373, %v380
        %v383 = vunpack.c.l.s4 1934713408
        %v384 = vunpack.c.0.s8 %v383
        %v385 = vlaneseq
        %v386 = vshrl.u32 %v385, 7
        %v387 = vsub.s32 %v384, %v386
        %v388 = vrot.slane %v374, %v387
        %v389 = vcombine.low %v324, %v340
        %v390 = vcombine.high %v324, %v340
        %v392 = vunpack.c.l.s4 1934713408
        %v393 = vunpack.c.0.s8 %v392
        %v394 = vlaneseq
        %v395 = vshrl.u32 %v394, 7
        %v396 = vsub.s32 %v393, %v395
        %v397 = vrot.slane %v389, %v396
        %v399 = vunpack.c.l.s4 1934713408
        %v400 = vunpack.c.0.s8 %v399
        %v401 = vlaneseq
        %v402 = vshrl.u32 %v401, 7
        %v403 = vsub.s32 %v400, %v402
        %v404 = vrot.slane %v390, %v403
        %v405 = vcombine.low %v349, %v365
        %v406 = vcombine.high %v349, %v365
        %v408 = vunpack.c.l.s4 1934713408
        %v409 = vunpack.c.0.s8 %v408
        %v410 = vlaneseq
        %v411 = vshrl.u32 %v410, 7
        %v412 = vsub.s32 %v409, %v411
        %v413 = vrot.slane %v405, %v412
        %v415 = vunpack.c.l.s4 1934713408
        %v416 = vunpack.c.0.s8 %v415
        %v417 = vlaneseq
        %v418 = vshrl.u32 %v417, 7
        %v419 = vsub.s32 %v416, %v418
        %v420 = vrot.slane %v406, %v419
        %v421 = vcombine.low %v356, %v372
        %v422 = vcombine.high %v356, %v372
        %v424 = vunpack.c.l.s4 1934713408
        %v425 = vunpack.c.0.s8 %v424
        %v426 = vlaneseq
        %v427 = vshrl.u32 %v426, 7
        %v428 = vsub.s32 %v425, %v427
        %v429 = vrot.slane %v421, %v428
        %v431 = vunpack.c.l.s4 1934713408
        %v432 = vunpack.c.0.s8 %v431
        %v433 = vlaneseq
        %v434 = vshrl.u32 %v433, 7
        %v435 = vsub.s32 %v432, %v434
        %v436 = vrot.slane %v422, %v435
        %v437 = vcombine.low %v381, %v413
        %v438 = vcombine.high %v381, %v413
        %v439 = vcombine.low %v388, %v420
        %v440 = vcombine.high %v388, %v420
        %v441 = vcombine.low %v397, %v429
        %v442 = vcombine.high %v397, %v429
        %v443 = vcombine.low %v404, %v436
        %v444 = vcombine.high %v404, %v436
        %v445 = vcombine.low %v294, %v298
        %v446 = vcombine.high %v294, %v298
        %v448 = vunpack.c.l.s4 1983009808
        %v449 = vunpack.c.0.s8 %v448
        %v450 = vlaneseq
        %v451 = vshrl.u32 %v450, 7
        %v452 = vsub.s32 %v449, %v451
        %v453 = vrot.slane %v445, %v452
        %v455 = vunpack.c.l.s4 1983009808
        %v456 = vunpack.c.0.s8 %v455
        %v457 = vlaneseq
        %v458 = vshrl.u32 %v457, 7
        %v459 = vsub.s32 %v456, %v458
        %v460 = vrot.slane %v446, %v459
        %v461 = vcombine.low %v296, %v300
        %v462 = vcombine.high %v296, %v300
        %v464 = vunpack.c.l.s4 1983009808
        %v465 = vunpack.c.0.s8 %v464
        %v466 = vlaneseq
        %v467 = vshrl.u32 %v466, 7
        %v468 = vsub.s32 %v465, %v467
        %v469 = vrot.slane %v461, %v468
        %v471 = vunpack.c.l.s4 1983009808
        %v472 = vunpack.c.0.s8 %v471
        %v473 = vlaneseq
        %v474 = vshrl.u32 %v473, 7
        %v475 = vsub.s32 %v472, %v474
        %v476 = vrot.slane %v462, %v475
        %v477 = vcombine.low %v302, %v306
        %v478 = vcombine.high %v302, %v306
        %v480 = vunpack.c.l.s4 1983009808
        %v481 = vunpack.c.0.s8 %v480
        %v482 = vlaneseq
        %v483 = vshrl.u32 %v482, 7
        %v484 = vsub.s32 %v481, %v483
        %v485 = vrot.slane %v477, %v484
        %v487 = vunpack.c.l.s4 1983009808
        %v488 = vunpack.c.0.s8 %v487
        %v489 = vlaneseq
        %v490 = vshrl.u32 %v489, 7
        %v491 = vsub.s32 %v488, %v490
        %v492 = vrot.slane %v478, %v491
        %v493 = vcombine.low %v304, %v308
        %v494 = vcombine.high %v304, %v308
        %v496 = vunpack.c.l.s4 1983009808
        %v497 = vunpack.c.0.s8 %v496
        %v498 = vlaneseq
        %v499 = vshrl.u32 %v498, 7
        %v500 = vsub.s32 %v497, %v499
        %v501 = vrot.slane %v493, %v500
        %v503 = vunpack.c.l.s4 1983009808
        %v504 = vunpack.c.0.s8 %v503
        %v505 = vlaneseq
        %v506 = vshrl.u32 %v505, 7
        %v507 = vsub.s32 %v504, %v506
        %v508 = vrot.slane %v494, %v507
        %v509 = vcombine.low %v453, %v469
        %v510 = vcombine.high %v453, %v469
        %v512 = vunpack.c.l.s4 1934713408
        %v513 = vunpack.c.0.s8 %v512
        %v514 = vlaneseq
        %v515 = vshrl.u32 %v514, 7
        %v516 = vsub.s32 %v513, %v515
        %v517 = vrot.slane %v509, %v516
        %v519 = vunpack.c.l.s4 1934713408
        %v520 = vunpack.c.0.s8 %v519
        %v521 = vlaneseq
        %v522 = vshrl.u32 %v521, 7
        %v523 = vsub.s32 %v520, %v522
        %v524 = vrot.slane %v510, %v523
        %v525 = vcombine.low %v460, %v476
        %v526 = vcombine.high %v460, %v476
        %v528 = vunpack.c.l.s4 1934713408
        %v529 = vunpack.c.0.s8 %v528
        %v530 = vlaneseq
        %v531 = vshrl.u32 %v530, 7
        %v532 = vsub.s32 %v529, %v531
        %v533 = vrot.slane %v525, %v532
        %v535 = vunpack.c.l.s4 1934713408
        %v536 = vunpack.c.0.s8 %v535
        %v537 = vlaneseq
        %v538 = vshrl.u32 %v537, 7
        %v539 = vsub.s32 %v536, %v538
        %v540 = vrot.slane %v526, %v539
        %v541 = vcombine.low %v485, %v501
        %v542 = vcombine.high %v485, %v501
        %v544 = vunpack.c.l.s4 1934713408
        %v545 = vunpack.c.0.s8 %v544
        %v546 = vlaneseq
        %v547 = vshrl.u32 %v546, 7
        %v548 = vsub.s32 %v545, %v547
        %v549 = vrot.slane %v541, %v548
        %v551 = vunpack.c.l.s4 1934713408
        %v552 = vunpack.c.0.s8 %v551
        %v553 = vlaneseq
        %v554 = vshrl.u32 %v553, 7
        %v555 = vsub.s32 %v552, %v554
        %v556 = vrot.slane %v542, %v555
        %v557 = vcombine.low %v492, %v508
        %v558 = vcombine.high %v492, %v508
        %v560 = vunpack.c.l.s4 1934713408
        %v561 = vunpack.c.0.s8 %v560
        %v562 = vlaneseq
        %v563 = vshrl.u32 %v562, 7
        %v564 = vsub.s32 %v561, %v563
        %v565 = vrot.slane %v557, %v564
        %v567 = vunpack.c.l.s4 1934713408
        %v568 = vunpack.c.0.s8 %v567
        %v569 = vlaneseq
        %v570 = vshrl.u32 %v569, 7
        %v571 = vsub.s32 %v568, %v570
        %v572 = vrot.slane %v558, %v571
        %v573 = vcombine.low %v517, %v549
        %v574 = vcombine.high %v517, %v549
        %v575 = vcombine.low %v524, %v556
        %v576 = vcombine.high %v524, %v556
        %v577 = vcombine.low %v533, %v565
        %v578 = vcombine.high %v533, %v565
        %v579 = vcombine.low %v540, %v572
        %v580 = vcombine.high %v540, %v572
        %582 = vrot.lane.b32.xlu0 %v438, 16
        %v583 = vpop.permute.xlu0 %582
        %586 = vrot.lane.b32.xlu0 %v439, 32
        %v587 = vpop.permute.xlu0 %586
        %590 = vrot.lane.b32.xlu0 %v440, 48
        %v591 = vpop.permute.xlu0 %590
        %594 = vrot.lane.b32.xlu0 %v441, 64
        %v595 = vpop.permute.xlu0 %594
        %598 = vrot.lane.b32.xlu0 %v442, 80
        %v599 = vpop.permute.xlu0 %598
        %602 = vrot.lane.b32.xlu0 %v443, 96
        %v603 = vpop.permute.xlu0 %602
        %606 = vrot.lane.b32.xlu0 %v444, 112
        %v607 = vpop.permute.xlu0 %606
        %610 = vrot.lane.b32.xlu0 %v574, 16
        %v611 = vpop.permute.xlu0 %610
        %614 = vrot.lane.b32.xlu0 %v575, 32
        %v615 = vpop.permute.xlu0 %614
        %618 = vrot.lane.b32.xlu0 %v576, 48
        %v619 = vpop.permute.xlu0 %618
        %622 = vrot.lane.b32.xlu0 %v577, 64
        %v623 = vpop.permute.xlu0 %622
        %626 = vrot.lane.b32.xlu0 %v578, 80
        %v627 = vpop.permute.xlu0 %626
        %630 = vrot.lane.b32.xlu0 %v579, 96
        %v631 = vpop.permute.xlu0 %630
        %634 = vrot.lane.b32.xlu0 %v580, 112
        %v635 = vpop.permute.xlu0 %634
        %vm637 = vcmask 130048
        %v638 = vsel %vm637, %v437, %v583
        %vm639 = vcmask 261120
        %v640 = vsel %vm639, %v638, %v587
        %vm641 = vcmask 392192
        %v642 = vsel %vm641, %v640, %v591
        %vm643 = vcmask 523264
        %v644 = vsel %vm643, %v642, %v595
        %vm645 = vcmask 654336
        %v646 = vsel %vm645, %v644, %v599
        %vm647 = vcmask 785408
        %v648 = vsel %vm647, %v646, %v603
        %vm649 = vcmask 916480
        %v650 = vsel %vm649, %v648, %v607
        %v651 = vsel %vm637, %v573, %v611
        %v652 = vsel %vm639, %v651, %v615
        %v653 = vsel %vm641, %v652, %v619
        %v654 = vsel %vm643, %v653, %v623
        %v655 = vsel %vm645, %v654, %v627
        %v656 = vsel %vm647, %v655, %v631
        %v657 = vsel %vm649, %v656, %v635
        %658 = vst [vmem:[#allocation2] sm:$0xff] %v650
        %659 = vst [vmem:[#allocation2 + $0x8] sm:$0xff] %v657
        %v660 = vld [vmem:[%s250] sm:$0xff]
        %v661 = vld [vmem:[%s250 + $0x8] sm:$0xff]
        %v662 = vld [vmem:[%s250 + $0x18] sm:$0xff]
        %v663 = vld [vmem:[%s250 + $0x20] sm:$0xff]
        %v664 = vld [vmem:[%s250 + $0x30] sm:$0xff]
        %v665 = vld [vmem:[%s250 + $0x38] sm:$0xff]
        %v666 = vld [vmem:[%s250 + $0x48] sm:$0xff]
        %v667 = vld [vmem:[%s250 + $0x50] sm:$0xff]
        %v668 = vld [vmem:[%s250 + $0x60] sm:$0xff]
        %v669 = vld [vmem:[%s250 + $0x68] sm:$0xff]
        %v670 = vld [vmem:[%s250 + $0x78] sm:$0xff]
        %v671 = vld [vmem:[%s250 + $0x80] sm:$0xff]
        %v672 = vld [vmem:[%s250 + $0x90] sm:$0xff]
        %v673 = vld [vmem:[%s250 + $0x98] sm:$0xff]
        %v674 = vld [vmem:[%s250 + $0xa8] sm:$0xff]
        %v675 = vld [vmem:[%s250 + $0xb0] sm:$0xff]
        %692 = vrot.lane.b32.xlu0 %v660, 127
        %v693 = vpop.permute.xlu0 %692
        %694 = vrot.lane.b32.xlu0 %v661, 127
        %v695 = vpop.permute.xlu0 %694
        %696 = vrot.lane.b32.xlu0 %v662, 127
        %v697 = vpop.permute.xlu0 %696
        %698 = vrot.lane.b32.xlu0 %v663, 127
        %v699 = vpop.permute.xlu0 %698
        %700 = vrot.lane.b32.xlu0 %v664, 127
        %v701 = vpop.permute.xlu0 %700
        %702 = vrot.lane.b32.xlu0 %v665, 127
        %v703 = vpop.permute.xlu0 %702
        %704 = vrot.lane.b32.xlu0 %v666, 127
        %v705 = vpop.permute.xlu0 %704
        %706 = vrot.lane.b32.xlu0 %v667, 127
        %v707 = vpop.permute.xlu0 %706
        %708 = vrot.lane.b32.xlu0 %v668, 127
        %v709 = vpop.permute.xlu0 %708
        %710 = vrot.lane.b32.xlu0 %v669, 127
        %v711 = vpop.permute.xlu0 %710
        %712 = vrot.lane.b32.xlu0 %v670, 127
        %v713 = vpop.permute.xlu0 %712
        %714 = vrot.lane.b32.xlu0 %v671, 127
        %v715 = vpop.permute.xlu0 %714
        %716 = vrot.lane.b32.xlu0 %v672, 127
        %v717 = vpop.permute.xlu0 %716
        %718 = vrot.lane.b32.xlu0 %v673, 127
        %v719 = vpop.permute.xlu0 %718
        %720 = vrot.lane.b32.xlu0 %v674, 127
        %v721 = vpop.permute.xlu0 %720
        %722 = vrot.lane.b32.xlu0 %v675, 127
        %v723 = vpop.permute.xlu0 %722
        %v740 = vcombine.low %v693, %v701
        %v741 = vcombine.high %v693, %v701
        %v743 = vunpack.c.l.s4 1983009808
        %v744 = vunpack.c.0.s8 %v743
        %v745 = vlaneseq
        %v746 = vshrl.u32 %v745, 7
        %v747 = vsub.s32 %v744, %v746
        %v748 = vrot.slane %v740, %v747
        %v750 = vunpack.c.l.s4 1983009808
        %v751 = vunpack.c.0.s8 %v750
        %v752 = vlaneseq
        %v753 = vshrl.u32 %v752, 7
        %v754 = vsub.s32 %v751, %v753
        %v755 = vrot.slane %v741, %v754
        %v756 = vcombine.low %v697, %v705
        %v757 = vcombine.high %v697, %v705
        %v759 = vunpack.c.l.s4 1983009808
        %v760 = vunpack.c.0.s8 %v759
        %v761 = vlaneseq
        %v762 = vshrl.u32 %v761, 7
        %v763 = vsub.s32 %v760, %v762
        %v764 = vrot.slane %v756, %v763
        %v766 = vunpack.c.l.s4 1983009808
        %v767 = vunpack.c.0.s8 %v766
        %v768 = vlaneseq
        %v769 = vshrl.u32 %v768, 7
        %v770 = vsub.s32 %v767, %v769
        %v771 = vrot.slane %v757, %v770
        %v772 = vcombine.low %v709, %v717
        %v773 = vcombine.high %v709, %v717
        %v775 = vunpack.c.l.s4 1983009808
        %v776 = vunpack.c.0.s8 %v775
        %v777 = vlaneseq
        %v778 = vshrl.u32 %v777, 7
        %v779 = vsub.s32 %v776, %v778
        %v780 = vrot.slane %v772, %v779
        %v782 = vunpack.c.l.s4 1983009808
        %v783 = vunpack.c.0.s8 %v782
        %v784 = vlaneseq
        %v785 = vshrl.u32 %v784, 7
        %v786 = vsub.s32 %v783, %v785
        %v787 = vrot.slane %v773, %v786
        %v788 = vcombine.low %v713, %v721
        %v789 = vcombine.high %v713, %v721
        %v791 = vunpack.c.l.s4 1983009808
        %v792 = vunpack.c.0.s8 %v791
        %v793 = vlaneseq
        %v794 = vshrl.u32 %v793, 7
        %v795 = vsub.s32 %v792, %v794
        %v796 = vrot.slane %v788, %v795
        %v798 = vunpack.c.l.s4 1983009808
        %v799 = vunpack.c.0.s8 %v798
        %v800 = vlaneseq
        %v801 = vshrl.u32 %v800, 7
        %v802 = vsub.s32 %v799, %v801
        %v803 = vrot.slane %v789, %v802
        %v804 = vcombine.low %v748, %v764
        %v805 = vcombine.high %v748, %v764
        %v807 = vunpack.c.l.s4 1934713408
        %v808 = vunpack.c.0.s8 %v807
        %v809 = vlaneseq
        %v810 = vshrl.u32 %v809, 7
        %v811 = vsub.s32 %v808, %v810
        %v812 = vrot.slane %v804, %v811
        %v814 = vunpack.c.l.s4 1934713408
        %v815 = vunpack.c.0.s8 %v814
        %v816 = vlaneseq
        %v817 = vshrl.u32 %v816, 7
        %v818 = vsub.s32 %v815, %v817
        %v819 = vrot.slane %v805, %v818
        %v820 = vcombine.low %v755, %v771
        %v821 = vcombine.high %v755, %v771
        %v823 = vunpack.c.l.s4 1934713408
        %v824 = vunpack.c.0.s8 %v823
        %v825 = vlaneseq
        %v826 = vshrl.u32 %v825, 7
        %v827 = vsub.s32 %v824, %v826
        %v828 = vrot.slane %v820, %v827
        %v830 = vunpack.c.l.s4 1934713408
        %v831 = vunpack.c.0.s8 %v830
        %v832 = vlaneseq
        %v833 = vshrl.u32 %v832, 7
        %v834 = vsub.s32 %v831, %v833
        %v835 = vrot.slane %v821, %v834
        %v836 = vcombine.low %v780, %v796
        %v837 = vcombine.high %v780, %v796
        %v839 = vunpack.c.l.s4 1934713408
        %v840 = vunpack.c.0.s8 %v839
        %v841 = vlaneseq
        %v842 = vshrl.u32 %v841, 7
        %v843 = vsub.s32 %v840, %v842
        %v844 = vrot.slane %v836, %v843
        %v846 = vunpack.c.l.s4 1934713408
        %v847 = vunpack.c.0.s8 %v846
        %v848 = vlaneseq
        %v849 = vshrl.u32 %v848, 7
        %v850 = vsub.s32 %v847, %v849
        %v851 = vrot.slane %v837, %v850
        %v852 = vcombine.low %v787, %v803
        %v853 = vcombine.high %v787, %v803
        %v855 = vunpack.c.l.s4 1934713408
        %v856 = vunpack.c.0.s8 %v855
        %v857 = vlaneseq
        %v858 = vshrl.u32 %v857, 7
        %v859 = vsub.s32 %v856, %v858
        %v860 = vrot.slane %v852, %v859
        %v862 = vunpack.c.l.s4 1934713408
        %v863 = vunpack.c.0.s8 %v862
        %v864 = vlaneseq
        %v865 = vshrl.u32 %v864, 7
        %v866 = vsub.s32 %v863, %v865
        %v867 = vrot.slane %v853, %v866
        %v868 = vcombine.low %v812, %v844
        %v869 = vcombine.high %v812, %v844
        %v870 = vcombine.low %v819, %v851
        %v871 = vcombine.high %v819, %v851
        %v872 = vcombine.low %v828, %v860
        %v873 = vcombine.high %v828, %v860
        %v874 = vcombine.low %v835, %v867
        %v875 = vcombine.high %v835, %v867
        %v876 = vcombine.low %v695, %v703
        %v877 = vcombine.high %v695, %v703
        %v879 = vunpack.c.l.s4 1983009808
        %v880 = vunpack.c.0.s8 %v879
        %v881 = vlaneseq
        %v882 = vshrl.u32 %v881, 7
        %v883 = vsub.s32 %v880, %v882
        %v884 = vrot.slane %v876, %v883
        %v886 = vunpack.c.l.s4 1983009808
        %v887 = vunpack.c.0.s8 %v886
        %v888 = vlaneseq
        %v889 = vshrl.u32 %v888, 7
        %v890 = vsub.s32 %v887, %v889
        %v891 = vrot.slane %v877, %v890
        %v892 = vcombine.low %v699, %v707
        %v893 = vcombine.high %v699, %v707
        %v895 = vunpack.c.l.s4 1983009808
        %v896 = vunpack.c.0.s8 %v895
        %v897 = vlaneseq
        %v898 = vshrl.u32 %v897, 7
        %v899 = vsub.s32 %v896, %v898
        %v900 = vrot.slane %v892, %v899
        %v902 = vunpack.c.l.s4 1983009808
        %v903 = vunpack.c.0.s8 %v902
        %v904 = vlaneseq
        %v905 = vshrl.u32 %v904, 7
        %v906 = vsub.s32 %v903, %v905
        %v907 = vrot.slane %v893, %v906
        %v908 = vcombine.low %v711, %v719
        %v909 = vcombine.high %v711, %v719
        %v911 = vunpack.c.l.s4 1983009808
        %v912 = vunpack.c.0.s8 %v911
        %v913 = vlaneseq
        %v914 = vshrl.u32 %v913, 7
        %v915 = vsub.s32 %v912, %v914
        %v916 = vrot.slane %v908, %v915
        %v918 = vunpack.c.l.s4 1983009808
        %v919 = vunpack.c.0.s8 %v918
        %v920 = vlaneseq
        %v921 = vshrl.u32 %v920, 7
        %v922 = vsub.s32 %v919, %v921
        %v923 = vrot.slane %v909, %v922
        %v924 = vcombine.low %v715, %v723
        %v925 = vcombine.high %v715, %v723
        %v927 = vunpack.c.l.s4 1983009808
        %v928 = vunpack.c.0.s8 %v927
        %v929 = vlaneseq
        %v930 = vshrl.u32 %v929, 7
        %v931 = vsub.s32 %v928, %v930
        %v932 = vrot.slane %v924, %v931
        %v934 = vunpack.c.l.s4 1983009808
        %v935 = vunpack.c.0.s8 %v934
        %v936 = vlaneseq
        %v937 = vshrl.u32 %v936, 7
        %v938 = vsub.s32 %v935, %v937
        %v939 = vrot.slane %v925, %v938
        %v940 = vcombine.low %v884, %v900
        %v941 = vcombine.high %v884, %v900
        %v943 = vunpack.c.l.s4 1934713408
        %v944 = vunpack.c.0.s8 %v943
        %v945 = vlaneseq
        %v946 = vshrl.u32 %v945, 7
        %v947 = vsub.s32 %v944, %v946
        %v948 = vrot.slane %v940, %v947
        %v950 = vunpack.c.l.s4 1934713408
        %v951 = vunpack.c.0.s8 %v950
        %v952 = vlaneseq
        %v953 = vshrl.u32 %v952, 7
        %v954 = vsub.s32 %v951, %v953
        %v955 = vrot.slane %v941, %v954
        %v956 = vcombine.low %v891, %v907
        %v957 = vcombine.high %v891, %v907
        %v959 = vunpack.c.l.s4 1934713408
        %v960 = vunpack.c.0.s8 %v959
        %v961 = vlaneseq
        %v962 = vshrl.u32 %v961, 7
        %v963 = vsub.s32 %v960, %v962
        %v964 = vrot.slane %v956, %v963
        %v966 = vunpack.c.l.s4 1934713408
        %v967 = vunpack.c.0.s8 %v966
        %v968 = vlaneseq
        %v969 = vshrl.u32 %v968, 7
        %v970 = vsub.s32 %v967, %v969
        %v971 = vrot.slane %v957, %v970
        %v972 = vcombine.low %v916, %v932
        %v973 = vcombine.high %v916, %v932
        %v975 = vunpack.c.l.s4 1934713408
        %v976 = vunpack.c.0.s8 %v975
        %v977 = vlaneseq
        %v978 = vshrl.u32 %v977, 7
        %v979 = vsub.s32 %v976, %v978
        %v980 = vrot.slane %v972, %v979
        %v982 = vunpack.c.l.s4 1934713408
        %v983 = vunpack.c.0.s8 %v982
        %v984 = vlaneseq
        %v985 = vshrl.u32 %v984, 7
        %v986 = vsub.s32 %v983, %v985
        %v987 = vrot.slane %v973, %v986
        %v988 = vcombine.low %v923, %v939
        %v989 = vcombine.high %v923, %v939
        %v991 = vunpack.c.l.s4 1934713408
        %v992 = vunpack.c.0.s8 %v991
        %v993 = vlaneseq
        %v994 = vshrl.u32 %v993, 7
        %v995 = vsub.s32 %v992, %v994
        %v996 = vrot.slane %v988, %v995
        %v998 = vunpack.c.l.s4 1934713408
        %v999 = vunpack.c.0.s8 %v998
        %v1000 = vlaneseq
        %v1001 = vshrl.u32 %v1000, 7
        %v1002 = vsub.s32 %v999, %v1001
        %v1003 = vrot.slane %v989, %v1002
        %v1004 = vcombine.low %v948, %v980
        %v1005 = vcombine.high %v948, %v980
        %v1006 = vcombine.low %v955, %v987
        %v1007 = vcombine.high %v955, %v987
        %v1008 = vcombine.low %v964, %v996
        %v1009 = vcombine.high %v964, %v996
        %v1010 = vcombine.low %v971, %v1003
        %v1011 = vcombine.high %v971, %v1003
        %1013 = vrot.lane.b32.xlu0 %v869, 16
        %v1014 = vpop.permute.xlu0 %1013
        %1017 = vrot.lane.b32.xlu0 %v870, 32
        %v1018 = vpop.permute.xlu0 %1017
        %1021 = vrot.lane.b32.xlu0 %v871, 48
        %v1022 = vpop.permute.xlu0 %1021
        %1025 = vrot.lane.b32.xlu0 %v872, 64
        %v1026 = vpop.permute.xlu0 %1025
        %1029 = vrot.lane.b32.xlu0 %v873, 80
        %v1030 = vpop.permute.xlu0 %1029
        %1033 = vrot.lane.b32.xlu0 %v874, 96
        %v1034 = vpop.permute.xlu0 %1033
        %1037 = vrot.lane.b32.xlu0 %v875, 112
        %v1038 = vpop.permute.xlu0 %1037
        %1041 = vrot.lane.b32.xlu0 %v1005, 16
        %v1042 = vpop.permute.xlu0 %1041
        %1045 = vrot.lane.b32.xlu0 %v1006, 32
        %v1046 = vpop.permute.xlu0 %1045
        %1049 = vrot.lane.b32.xlu0 %v1007, 48
        %v1050 = vpop.permute.xlu0 %1049
        %1053 = vrot.lane.b32.xlu0 %v1008, 64
        %v1054 = vpop.permute.xlu0 %1053
        %1057 = vrot.lane.b32.xlu0 %v1009, 80
        %v1058 = vpop.permute.xlu0 %1057
        %1061 = vrot.lane.b32.xlu0 %v1010, 96
        %v1062 = vpop.permute.xlu0 %1061
        %1065 = vrot.lane.b32.xlu0 %v1011, 112
        %v1066 = vpop.permute.xlu0 %1065
        %v1068 = vsel %vm637, %v868, %v1014
        %v1069 = vsel %vm639, %v1068, %v1018
        %v1070 = vsel %vm641, %v1069, %v1022
        %v1071 = vsel %vm643, %v1070, %v1026
        %v1072 = vsel %vm645, %v1071, %v1030
        %v1073 = vsel %vm647, %v1072, %v1034
        %v1074 = vsel %vm649, %v1073, %v1038
        %v1075 = vsel %vm637, %v1004, %v1042
        %v1076 = vsel %vm639, %v1075, %v1046
        %v1077 = vsel %vm641, %v1076, %v1050
        %v1078 = vsel %vm643, %v1077, %v1054
        %v1079 = vsel %vm645, %v1078, %v1058
        %v1080 = vsel %vm647, %v1079, %v1062
        %v1081 = vsel %vm649, %v1080, %v1066
        %1082 = vst [vmem:[#allocation2 + $0x10] sm:$0xff] %v1074
        %1083 = vst [vmem:[#allocation2 + $0x18] sm:$0xff] %v1081
        %v1084 = vld [vmem:[%s250] sm:$0xff]
        %v1085 = vld [vmem:[%s250 + $0x8] sm:$0xff]
        %v1086 = vld [vmem:[%s250 + $0x18] sm:$0xff]
        %v1087 = vld [vmem:[%s250 + $0x20] sm:$0xff]
        %v1088 = vld [vmem:[%s250 + $0x30] sm:$0xff]
        %v1089 = vld [vmem:[%s250 + $0x38] sm:$0xff]
        %v1090 = vld [vmem:[%s250 + $0x48] sm:$0xff]
        %v1091 = vld [vmem:[%s250 + $0x50] sm:$0xff]
        %v1092 = vld [vmem:[%s250 + $0x60] sm:$0xff]
        %v1093 = vld [vmem:[%s250 + $0x68] sm:$0xff]
        %v1094 = vld [vmem:[%s250 + $0x78] sm:$0xff]
        %v1095 = vld [vmem:[%s250 + $0x80] sm:$0xff]
        %v1096 = vld [vmem:[%s250 + $0x90] sm:$0xff]
        %v1097 = vld [vmem:[%s250 + $0x98] sm:$0xff]
        %v1098 = vld [vmem:[%s250 + $0xa8] sm:$0xff]
        %v1099 = vld [vmem:[%s250 + $0xb0] sm:$0xff]
        %1116 = vrot.lane.b32.xlu0 %v1084, 126
        %v1117 = vpop.permute.xlu0 %1116
        %1118 = vrot.lane.b32.xlu0 %v1085, 126
        %v1119 = vpop.permute.xlu0 %1118
        %1120 = vrot.lane.b32.xlu0 %v1086, 126
        %v1121 = vpop.permute.xlu0 %1120
        %1122 = vrot.lane.b32.xlu0 %v1087, 126
        %v1123 = vpop.permute.xlu0 %1122
        %1124 = vrot.lane.b32.xlu0 %v1088, 126
        %v1125 = vpop.permute.xlu0 %1124
        %1126 = vrot.lane.b32.xlu0 %v1089, 126
        %v1127 = vpop.permute.xlu0 %1126
        %1128 = vrot.lane.b32.xlu0 %v1090, 126
        %v1129 = vpop.permute.xlu0 %1128
        %1130 = vrot.lane.b32.xlu0 %v1091, 126
        %v1131 = vpop.permute.xlu0 %1130
        %1132 = vrot.lane.b32.xlu0 %v1092, 126
        %v1133 = vpop.permute.xlu0 %1132
        %1134 = vrot.lane.b32.xlu0 %v1093, 126
        %v1135 = vpop.permute.xlu0 %1134
        %1136 = vrot.lane.b32.xlu0 %v1094, 126
        %v1137 = vpop.permute.xlu0 %1136
        %1138 = vrot.lane.b32.xlu0 %v1095, 126
        %v1139 = vpop.permute.xlu0 %1138
        %1140 = vrot.lane.b32.xlu0 %v1096, 126
        %v1141 = vpop.permute.xlu0 %1140
        %1142 = vrot.lane.b32.xlu0 %v1097, 126
        %v1143 = vpop.permute.xlu0 %1142
        %1144 = vrot.lane.b32.xlu0 %v1098, 126
        %v1145 = vpop.permute.xlu0 %1144
        %1146 = vrot.lane.b32.xlu0 %v1099, 126
        %v1147 = vpop.permute.xlu0 %1146
        %v1164 = vcombine.low %v1117, %v1125
        %v1165 = vcombine.high %v1117, %v1125
        %v1167 = vunpack.c.l.s4 1983009808
        %v1168 = vunpack.c.0.s8 %v1167
        %v1169 = vlaneseq
        %v1170 = vshrl.u32 %v1169, 7
        %v1171 = vsub.s32 %v1168, %v1170
        %v1172 = vrot.slane %v1164, %v1171
        %v1174 = vunpack.c.l.s4 1983009808
        %v1175 = vunpack.c.0.s8 %v1174
        %v1176 = vlaneseq
        %v1177 = vshrl.u32 %v1176, 7
        %v1178 = vsub.s32 %v1175, %v1177
        %v1179 = vrot.slane %v1165, %v1178
        %v1180 = vcombine.low %v1121, %v1129
        %v1181 = vcombine.high %v1121, %v1129
        %v1183 = vunpack.c.l.s4 1983009808
        %v1184 = vunpack.c.0.s8 %v1183
        %v1185 = vlaneseq
        %v1186 = vshrl.u32 %v1185, 7
        %v1187 = vsub.s32 %v1184, %v1186
        %v1188 = vrot.slane %v1180, %v1187
        %v1190 = vunpack.c.l.s4 1983009808
        %v1191 = vunpack.c.0.s8 %v1190
        %v1192 = vlaneseq
        %v1193 = vshrl.u32 %v1192, 7
        %v1194 = vsub.s32 %v1191, %v1193
        %v1195 = vrot.slane %v1181, %v1194
        %v1196 = vcombine.low %v1133, %v1141
        %v1197 = vcombine.high %v1133, %v1141
        %v1199 = vunpack.c.l.s4 1983009808
        %v1200 = vunpack.c.0.s8 %v1199
        %v1201 = vlaneseq
        %v1202 = vshrl.u32 %v1201, 7
        %v1203 = vsub.s32 %v1200, %v1202
        %v1204 = vrot.slane %v1196, %v1203
        %v1206 = vunpack.c.l.s4 1983009808
        %v1207 = vunpack.c.0.s8 %v1206
        %v1208 = vlaneseq
        %v1209 = vshrl.u32 %v1208, 7
        %v1210 = vsub.s32 %v1207, %v1209
        %v1211 = vrot.slane %v1197, %v1210
        %v1212 = vcombine.low %v1137, %v1145
        %v1213 = vcombine.high %v1137, %v1145
        %v1215 = vunpack.c.l.s4 1983009808
        %v1216 = vunpack.c.0.s8 %v1215
        %v1217 = vlaneseq
        %v1218 = vshrl.u32 %v1217, 7
        %v1219 = vsub.s32 %v1216, %v1218
        %v1220 = vrot.slane %v1212, %v1219
        %v1222 = vunpack.c.l.s4 1983009808
        %v1223 = vunpack.c.0.s8 %v1222
        %v1224 = vlaneseq
        %v1225 = vshrl.u32 %v1224, 7
        %v1226 = vsub.s32 %v1223, %v1225
        %v1227 = vrot.slane %v1213, %v1226
        %v1228 = vcombine.low %v1172, %v1188
        %v1229 = vcombine.high %v1172, %v1188
        %v1231 = vunpack.c.l.s4 1934713408
        %v1232 = vunpack.c.0.s8 %v1231
        %v1233 = vlaneseq
        %v1234 = vshrl.u32 %v1233, 7
        %v1235 = vsub.s32 %v1232, %v1234
        %v1236 = vrot.slane %v1228, %v1235
        %v1238 = vunpack.c.l.s4 1934713408
        %v1239 = vunpack.c.0.s8 %v1238
        %v1240 = vlaneseq
        %v1241 = vshrl.u32 %v1240, 7
        %v1242 = vsub.s32 %v1239, %v1241
        %v1243 = vrot.slane %v1229, %v1242
        %v1244 = vcombine.low %v1179, %v1195
        %v1245 = vcombine.high %v1179, %v1195
        %v1247 = vunpack.c.l.s4 1934713408
        %v1248 = vunpack.c.0.s8 %v1247
        %v1249 = vlaneseq
        %v1250 = vshrl.u32 %v1249, 7
        %v1251 = vsub.s32 %v1248, %v1250
        %v1252 = vrot.slane %v1244, %v1251
        %v1254 = vunpack.c.l.s4 1934713408
        %v1255 = vunpack.c.0.s8 %v1254
        %v1256 = vlaneseq
        %v1257 = vshrl.u32 %v1256, 7
        %v1258 = vsub.s32 %v1255, %v1257
        %v1259 = vrot.slane %v1245, %v1258
        %v1260 = vcombine.low %v1204, %v1220
        %v1261 = vcombine.high %v1204, %v1220
        %v1263 = vunpack.c.l.s4 1934713408
        %v1264 = vunpack.c.0.s8 %v1263
        %v1265 = vlaneseq
        %v1266 = vshrl.u32 %v1265, 7
        %v1267 = vsub.s32 %v1264, %v1266
        %v1268 = vrot.slane %v1260, %v1267
        %v1270 = vunpack.c.l.s4 1934713408
        %v1271 = vunpack.c.0.s8 %v1270
        %v1272 = vlaneseq
        %v1273 = vshrl.u32 %v1272, 7
        %v1274 = vsub.s32 %v1271, %v1273
        %v1275 = vrot.slane %v1261, %v1274
        %v1276 = vcombine.low %v1211, %v1227
        %v1277 = vcombine.high %v1211, %v1227
        %v1279 = vunpack.c.l.s4 1934713408
        %v1280 = vunpack.c.0.s8 %v1279
        %v1281 = vlaneseq
        %v1282 = vshrl.u32 %v1281, 7
        %v1283 = vsub.s32 %v1280, %v1282
        %v1284 = vrot.slane %v1276, %v1283
        %v1286 = vunpack.c.l.s4 1934713408
        %v1287 = vunpack.c.0.s8 %v1286
        %v1288 = vlaneseq
        %v1289 = vshrl.u32 %v1288, 7
        %v1290 = vsub.s32 %v1287, %v1289
        %v1291 = vrot.slane %v1277, %v1290
        %v1292 = vcombine.low %v1236, %v1268
        %v1293 = vcombine.high %v1236, %v1268
        %v1294 = vcombine.low %v1243, %v1275
        %v1295 = vcombine.high %v1243, %v1275
        %v1296 = vcombine.low %v1252, %v1284
        %v1297 = vcombine.high %v1252, %v1284
        %v1298 = vcombine.low %v1259, %v1291
        %v1299 = vcombine.high %v1259, %v1291
        %v1300 = vcombine.low %v1119, %v1127
        %v1301 = vcombine.high %v1119, %v1127
        %v1303 = vunpack.c.l.s4 1983009808
        %v1304 = vunpack.c.0.s8 %v1303
        %v1305 = vlaneseq
        %v1306 = vshrl.u32 %v1305, 7
        %v1307 = vsub.s32 %v1304, %v1306
        %v1308 = vrot.slane %v1300, %v1307
        %v1310 = vunpack.c.l.s4 1983009808
        %v1311 = vunpack.c.0.s8 %v1310
        %v1312 = vlaneseq
        %v1313 = vshrl.u32 %v1312, 7
        %v1314 = vsub.s32 %v1311, %v1313
        %v1315 = vrot.slane %v1301, %v1314
        %v1316 = vcombine.low %v1123, %v1131
        %v1317 = vcombine.high %v1123, %v1131
        %v1319 = vunpack.c.l.s4 1983009808
        %v1320 = vunpack.c.0.s8 %v1319
        %v1321 = vlaneseq
        %v1322 = vshrl.u32 %v1321, 7
        %v1323 = vsub.s32 %v1320, %v1322
        %v1324 = vrot.slane %v1316, %v1323
        %v1326 = vunpack.c.l.s4 1983009808
        %v1327 = vunpack.c.0.s8 %v1326
        %v1328 = vlaneseq
        %v1329 = vshrl.u32 %v1328, 7
        %v1330 = vsub.s32 %v1327, %v1329
        %v1331 = vrot.slane %v1317, %v1330
        %v1332 = vcombine.low %v1135, %v1143
        %v1333 = vcombine.high %v1135, %v1143
        %v1335 = vunpack.c.l.s4 1983009808
        %v1336 = vunpack.c.0.s8 %v1335
        %v1337 = vlaneseq
        %v1338 = vshrl.u32 %v1337, 7
        %v1339 = vsub.s32 %v1336, %v1338
        %v1340 = vrot.slane %v1332, %v1339
        %v1342 = vunpack.c.l.s4 1983009808
        %v1343 = vunpack.c.0.s8 %v1342
        %v1344 = vlaneseq
        %v1345 = vshrl.u32 %v1344, 7
        %v1346 = vsub.s32 %v1343, %v1345
        %v1347 = vrot.slane %v1333, %v1346
        %v1348 = vcombine.low %v1139, %v1147
        %v1349 = vcombine.high %v1139, %v1147
        %v1351 = vunpack.c.l.s4 1983009808
        %v1352 = vunpack.c.0.s8 %v1351
        %v1353 = vlaneseq
        %v1354 = vshrl.u32 %v1353, 7
        %v1355 = vsub.s32 %v1352, %v1354
        %v1356 = vrot.slane %v1348, %v1355
        %v1358 = vunpack.c.l.s4 1983009808
        %v1359 = vunpack.c.0.s8 %v1358
        %v1360 = vlaneseq
        %v1361 = vshrl.u32 %v1360, 7
        %v1362 = vsub.s32 %v1359, %v1361
        %v1363 = vrot.slane %v1349, %v1362
        %v1364 = vcombine.low %v1308, %v1324
        %v1365 = vcombine.high %v1308, %v1324
        %v1367 = vunpack.c.l.s4 1934713408
        %v1368 = vunpack.c.0.s8 %v1367
        %v1369 = vlaneseq
        %v1370 = vshrl.u32 %v1369, 7
        %v1371 = vsub.s32 %v1368, %v1370
        %v1372 = vrot.slane %v1364, %v1371
        %v1374 = vunpack.c.l.s4 1934713408
        %v1375 = vunpack.c.0.s8 %v1374
        %v1376 = vlaneseq
        %v1377 = vshrl.u32 %v1376, 7
        %v1378 = vsub.s32 %v1375, %v1377
        %v1379 = vrot.slane %v1365, %v1378
        %v1380 = vcombine.low %v1315, %v1331
        %v1381 = vcombine.high %v1315, %v1331
        %v1383 = vunpack.c.l.s4 1934713408
        %v1384 = vunpack.c.0.s8 %v1383
        %v1385 = vlaneseq
        %v1386 = vshrl.u32 %v1385, 7
        %v1387 = vsub.s32 %v1384, %v1386
        %v1388 = vrot.slane %v1380, %v1387
        %v1390 = vunpack.c.l.s4 1934713408
        %v1391 = vunpack.c.0.s8 %v1390
        %v1392 = vlaneseq
        %v1393 = vshrl.u32 %v1392, 7
        %v1394 = vsub.s32 %v1391, %v1393
        %v1395 = vrot.slane %v1381, %v1394
        %v1396 = vcombine.low %v1340, %v1356
        %v1397 = vcombine.high %v1340, %v1356
        %v1399 = vunpack.c.l.s4 1934713408
        %v1400 = vunpack.c.0.s8 %v1399
        %v1401 = vlaneseq
        %v1402 = vshrl.u32 %v1401, 7
        %v1403 = vsub.s32 %v1400, %v1402
        %v1404 = vrot.slane %v1396, %v1403
        %v1406 = vunpack.c.l.s4 1934713408
        %v1407 = vunpack.c.0.s8 %v1406
        %v1408 = vlaneseq
        %v1409 = vshrl.u32 %v1408, 7
        %v1410 = vsub.s32 %v1407, %v1409
        %v1411 = vrot.slane %v1397, %v1410
        %v1412 = vcombine.low %v1347, %v1363
        %v1413 = vcombine.high %v1347, %v1363
        %v1415 = vunpack.c.l.s4 1934713408
        %v1416 = vunpack.c.0.s8 %v1415
        %v1417 = vlaneseq
        %v1418 = vshrl.u32 %v1417, 7
        %v1419 = vsub.s32 %v1416, %v1418
        %v1420 = vrot.slane %v1412, %v1419
        %v1422 = vunpack.c.l.s4 1934713408
        %v1423 = vunpack.c.0.s8 %v1422
        %v1424 = vlaneseq
        %v1425 = vshrl.u32 %v1424, 7
        %v1426 = vsub.s32 %v1423, %v1425
        %v1427 = vrot.slane %v1413, %v1426
        %v1428 = vcombine.low %v1372, %v1404
        %v1429 = vcombine.high %v1372, %v1404
        %v1430 = vcombine.low %v1379, %v1411
        %v1431 = vcombine.high %v1379, %v1411
        %v1432 = vcombine.low %v1388, %v1420
        %v1433 = vcombine.high %v1388, %v1420
        %v1434 = vcombine.low %v1395, %v1427
        %v1435 = vcombine.high %v1395, %v1427
        %1437 = vrot.lane.b32.xlu0 %v1293, 16
        %v1438 = vpop.permute.xlu0 %1437
        %1441 = vrot.lane.b32.xlu0 %v1294, 32
        %v1442 = vpop.permute.xlu0 %1441
        %1445 = vrot.lane.b32.xlu0 %v1295, 48
        %v1446 = vpop.permute.xlu0 %1445
        %1449 = vrot.lane.b32.xlu0 %v1296, 64
        %v1450 = vpop.permute.xlu0 %1449
        %1453 = vrot.lane.b32.xlu0 %v1297, 80
        %v1454 = vpop.permute.xlu0 %1453
        %1457 = vrot.lane.b32.xlu0 %v1298, 96
        %v1458 = vpop.permute.xlu0 %1457
        %1461 = vrot.lane.b32.xlu0 %v1299, 112
        %v1462 = vpop.permute.xlu0 %1461
        %1465 = vrot.lane.b32.xlu0 %v1429, 16
        %v1466 = vpop.permute.xlu0 %1465
        %1469 = vrot.lane.b32.xlu0 %v1430, 32
        %v1470 = vpop.permute.xlu0 %1469
        %1473 = vrot.lane.b32.xlu0 %v1431, 48
        %v1474 = vpop.permute.xlu0 %1473
        %1477 = vrot.lane.b32.xlu0 %v1432, 64
        %v1478 = vpop.permute.xlu0 %1477
        %1481 = vrot.lane.b32.xlu0 %v1433, 80
        %v1482 = vpop.permute.xlu0 %1481
        %1485 = vrot.lane.b32.xlu0 %v1434, 96
        %v1486 = vpop.permute.xlu0 %1485
        %1489 = vrot.lane.b32.xlu0 %v1435, 112
        %v1490 = vpop.permute.xlu0 %1489
        %v1492 = vsel %vm637, %v1292, %v1438
        %v1493 = vsel %vm639, %v1492, %v1442
        %v1494 = vsel %vm641, %v1493, %v1446
        %v1495 = vsel %vm643, %v1494, %v1450
        %v1496 = vsel %vm645, %v1495, %v1454
        %v1497 = vsel %vm647, %v1496, %v1458
        %v1498 = vsel %vm649, %v1497, %v1462
        %v1499 = vsel %vm637, %v1428, %v1466
        %v1500 = vsel %vm639, %v1499, %v1470
        %v1501 = vsel %vm641, %v1500, %v1474
        %v1502 = vsel %vm643, %v1501, %v1478
        %v1503 = vsel %vm645, %v1502, %v1482
        %v1504 = vsel %vm647, %v1503, %v1486
        %v1505 = vsel %vm649, %v1504, %v1490
        %1506 = vst [vmem:[#allocation2 + $0x20] sm:$0xff] %v1498
        %1507 = vst [vmem:[#allocation2 + $0x28] sm:$0xff] %v1505
        %v1508 = vld [vmem:[%s250 + $0x1] sm:$0xff]
        %v1509 = vld [vmem:[%s250 + $0x9] sm:$0xff]
        %v1510 = vld [vmem:[%s250 + $0x19] sm:$0xff]
        %v1511 = vld [vmem:[%s250 + $0x21] sm:$0xff]
        %v1512 = vld [vmem:[%s250 + $0x31] sm:$0xff]
        %v1513 = vld [vmem:[%s250 + $0x39] sm:$0xff]
        %v1514 = vld [vmem:[%s250 + $0x49] sm:$0xff]
        %v1515 = vld [vmem:[%s250 + $0x51] sm:$0xff]
        %v1516 = vld [vmem:[%s250 + $0x61] sm:$0xff]
        %v1517 = vld [vmem:[%s250 + $0x69] sm:$0xff]
        %v1518 = vld [vmem:[%s250 + $0x79] sm:$0xff]
        %v1519 = vld [vmem:[%s250 + $0x81] sm:$0xff]
        %v1520 = vld [vmem:[%s250 + $0x91] sm:$0xff]
        %v1521 = vld [vmem:[%s250 + $0x99] sm:$0xff]
        %v1522 = vld [vmem:[%s250 + $0xa9] sm:$0xff]
        %v1523 = vld [vmem:[%s250 + $0xb1] sm:$0xff]
        %v1524 = vcombine.low %v1508, %v1512
        %v1525 = vcombine.high %v1508, %v1512
        %v1527 = vunpack.c.l.s4 1983009808
        %v1528 = vunpack.c.0.s8 %v1527
        %v1529 = vlaneseq
        %v1530 = vshrl.u32 %v1529, 7
        %v1531 = vsub.s32 %v1528, %v1530
        %v1532 = vrot.slane %v1524, %v1531
        %v1534 = vunpack.c.l.s4 1983009808
        %v1535 = vunpack.c.0.s8 %v1534
        %v1536 = vlaneseq
        %v1537 = vshrl.u32 %v1536, 7
        %v1538 = vsub.s32 %v1535, %v1537
        %v1539 = vrot.slane %v1525, %v1538
        %v1540 = vcombine.low %v1510, %v1514
        %v1541 = vcombine.high %v1510, %v1514
        %v1543 = vunpack.c.l.s4 1983009808
        %v1544 = vunpack.c.0.s8 %v1543
        %v1545 = vlaneseq
        %v1546 = vshrl.u32 %v1545, 7
        %v1547 = vsub.s32 %v1544, %v1546
        %v1548 = vrot.slane %v1540, %v1547
        %v1550 = vunpack.c.l.s4 1983009808
        %v1551 = vunpack.c.0.s8 %v1550
        %v1552 = vlaneseq
        %v1553 = vshrl.u32 %v1552, 7
        %v1554 = vsub.s32 %v1551, %v1553
        %v1555 = vrot.slane %v1541, %v1554
        %v1556 = vcombine.low %v1516, %v1520
        %v1557 = vcombine.high %v1516, %v1520
        %v1559 = vunpack.c.l.s4 1983009808
        %v1560 = vunpack.c.0.s8 %v1559
        %v1561 = vlaneseq
        %v1562 = vshrl.u32 %v1561, 7
        %v1563 = vsub.s32 %v1560, %v1562
        %v1564 = vrot.slane %v1556, %v1563
        %v1566 = vunpack.c.l.s4 1983009808
        %v1567 = vunpack.c.0.s8 %v1566
        %v1568 = vlaneseq
        %v1569 = vshrl.u32 %v1568, 7
        %v1570 = vsub.s32 %v1567, %v1569
        %v1571 = vrot.slane %v1557, %v1570
        %v1572 = vcombine.low %v1518, %v1522
        %v1573 = vcombine.high %v1518, %v1522
        %v1575 = vunpack.c.l.s4 1983009808
        %v1576 = vunpack.c.0.s8 %v1575
        %v1577 = vlaneseq
        %v1578 = vshrl.u32 %v1577, 7
        %v1579 = vsub.s32 %v1576, %v1578
        %v1580 = vrot.slane %v1572, %v1579
        %v1582 = vunpack.c.l.s4 1983009808
        %v1583 = vunpack.c.0.s8 %v1582
        %v1584 = vlaneseq
        %v1585 = vshrl.u32 %v1584, 7
        %v1586 = vsub.s32 %v1583, %v1585
        %v1587 = vrot.slane %v1573, %v1586
        %v1588 = vcombine.low %v1532, %v1548
        %v1589 = vcombine.high %v1532, %v1548
        %v1591 = vunpack.c.l.s4 1934713408
        %v1592 = vunpack.c.0.s8 %v1591
        %v1593 = vlaneseq
        %v1594 = vshrl.u32 %v1593, 7
        %v1595 = vsub.s32 %v1592, %v1594
        %v1596 = vrot.slane %v1588, %v1595
        %v1598 = vunpack.c.l.s4 1934713408
        %v1599 = vunpack.c.0.s8 %v1598
        %v1600 = vlaneseq
        %v1601 = vshrl.u32 %v1600, 7
        %v1602 = vsub.s32 %v1599, %v1601
        %v1603 = vrot.slane %v1589, %v1602
        %v1604 = vcombine.low %v1539, %v1555
        %v1605 = vcombine.high %v1539, %v1555
        %v1607 = vunpack.c.l.s4 1934713408
        %v1608 = vunpack.c.0.s8 %v1607
        %v1609 = vlaneseq
        %v1610 = vshrl.u32 %v1609, 7
        %v1611 = vsub.s32 %v1608, %v1610
        %v1612 = vrot.slane %v1604, %v1611
        %v1614 = vunpack.c.l.s4 1934713408
        %v1615 = vunpack.c.0.s8 %v1614
        %v1616 = vlaneseq
        %v1617 = vshrl.u32 %v1616, 7
        %v1618 = vsub.s32 %v1615, %v1617
        %v1619 = vrot.slane %v1605, %v1618
        %v1620 = vcombine.low %v1564, %v1580
        %v1621 = vcombine.high %v1564, %v1580
        %v1623 = vunpack.c.l.s4 1934713408
        %v1624 = vunpack.c.0.s8 %v1623
        %v1625 = vlaneseq
        %v1626 = vshrl.u32 %v1625, 7
        %v1627 = vsub.s32 %v1624, %v1626
        %v1628 = vrot.slane %v1620, %v1627
        %v1630 = vunpack.c.l.s4 1934713408
        %v1631 = vunpack.c.0.s8 %v1630
        %v1632 = vlaneseq
        %v1633 = vshrl.u32 %v1632, 7
        %v1634 = vsub.s32 %v1631, %v1633
        %v1635 = vrot.slane %v1621, %v1634
        %v1636 = vcombine.low %v1571, %v1587
        %v1637 = vcombine.high %v1571, %v1587
        %v1639 = vunpack.c.l.s4 1934713408
        %v1640 = vunpack.c.0.s8 %v1639
        %v1641 = vlaneseq
        %v1642 = vshrl.u32 %v1641, 7
        %v1643 = vsub.s32 %v1640, %v1642
        %v1644 = vrot.slane %v1636, %v1643
        %v1646 = vunpack.c.l.s4 1934713408
        %v1647 = vunpack.c.0.s8 %v1646
        %v1648 = vlaneseq
        %v1649 = vshrl.u32 %v1648, 7
        %v1650 = vsub.s32 %v1647, %v1649
        %v1651 = vrot.slane %v1637, %v1650
        %v1652 = vcombine.low %v1596, %v1628
        %v1653 = vcombine.high %v1596, %v1628
        %v1654 = vcombine.low %v1603, %v1635
        %v1655 = vcombine.high %v1603, %v1635
        %v1656 = vcombine.low %v1612, %v1644
        %v1657 = vcombine.high %v1612, %v1644
        %v1658 = vcombine.low %v1619, %v1651
        %v1659 = vcombine.high %v1619, %v1651
        %v1660 = vcombine.low %v1509, %v1513
        %v1661 = vcombine.high %v1509, %v1513
        %v1663 = vunpack.c.l.s4 1983009808
        %v1664 = vunpack.c.0.s8 %v1663
        %v1665 = vlaneseq
        %v1666 = vshrl.u32 %v1665, 7
        %v1667 = vsub.s32 %v1664, %v1666
        %v1668 = vrot.slane %v1660, %v1667
        %v1670 = vunpack.c.l.s4 1983009808
        %v1671 = vunpack.c.0.s8 %v1670
        %v1672 = vlaneseq
        %v1673 = vshrl.u32 %v1672, 7
        %v1674 = vsub.s32 %v1671, %v1673
        %v1675 = vrot.slane %v1661, %v1674
        %v1676 = vcombine.low %v1511, %v1515
        %v1677 = vcombine.high %v1511, %v1515
        %v1679 = vunpack.c.l.s4 1983009808
        %v1680 = vunpack.c.0.s8 %v1679
        %v1681 = vlaneseq
        %v1682 = vshrl.u32 %v1681, 7
        %v1683 = vsub.s32 %v1680, %v1682
        %v1684 = vrot.slane %v1676, %v1683
        %v1686 = vunpack.c.l.s4 1983009808
        %v1687 = vunpack.c.0.s8 %v1686
        %v1688 = vlaneseq
        %v1689 = vshrl.u32 %v1688, 7
        %v1690 = vsub.s32 %v1687, %v1689
        %v1691 = vrot.slane %v1677, %v1690
        %v1692 = vcombine.low %v1517, %v1521
        %v1693 = vcombine.high %v1517, %v1521
        %v1695 = vunpack.c.l.s4 1983009808
        %v1696 = vunpack.c.0.s8 %v1695
        %v1697 = vlaneseq
        %v1698 = vshrl.u32 %v1697, 7
        %v1699 = vsub.s32 %v1696, %v1698
        %v1700 = vrot.slane %v1692, %v1699
        %v1702 = vunpack.c.l.s4 1983009808
        %v1703 = vunpack.c.0.s8 %v1702
        %v1704 = vlaneseq
        %v1705 = vshrl.u32 %v1704, 7
        %v1706 = vsub.s32 %v1703, %v1705
        %v1707 = vrot.slane %v1693, %v1706
        %v1708 = vcombine.low %v1519, %v1523
        %v1709 = vcombine.high %v1519, %v1523
        %v1711 = vunpack.c.l.s4 1983009808
        %v1712 = vunpack.c.0.s8 %v1711
        %v1713 = vlaneseq
        %v1714 = vshrl.u32 %v1713, 7
        %v1715 = vsub.s32 %v1712, %v1714
        %v1716 = vrot.slane %v1708, %v1715
        %v1718 = vunpack.c.l.s4 1983009808
        %v1719 = vunpack.c.0.s8 %v1718
        %v1720 = vlaneseq
        %v1721 = vshrl.u32 %v1720, 7
        %v1722 = vsub.s32 %v1719, %v1721
        %v1723 = vrot.slane %v1709, %v1722
        %v1724 = vcombine.low %v1668, %v1684
        %v1725 = vcombine.high %v1668, %v1684
        %v1727 = vunpack.c.l.s4 1934713408
        %v1728 = vunpack.c.0.s8 %v1727
        %v1729 = vlaneseq
        %v1730 = vshrl.u32 %v1729, 7
        %v1731 = vsub.s32 %v1728, %v1730
        %v1732 = vrot.slane %v1724, %v1731
        %v1734 = vunpack.c.l.s4 1934713408
        %v1735 = vunpack.c.0.s8 %v1734
        %v1736 = vlaneseq
        %v1737 = vshrl.u32 %v1736, 7
        %v1738 = vsub.s32 %v1735, %v1737
        %v1739 = vrot.slane %v1725, %v1738
        %v1740 = vcombine.low %v1675, %v1691
        %v1741 = vcombine.high %v1675, %v1691
        %v1743 = vunpack.c.l.s4 1934713408
        %v1744 = vunpack.c.0.s8 %v1743
        %v1745 = vlaneseq
        %v1746 = vshrl.u32 %v1745, 7
        %v1747 = vsub.s32 %v1744, %v1746
        %v1748 = vrot.slane %v1740, %v1747
        %v1750 = vunpack.c.l.s4 1934713408
        %v1751 = vunpack.c.0.s8 %v1750
        %v1752 = vlaneseq
        %v1753 = vshrl.u32 %v1752, 7
        %v1754 = vsub.s32 %v1751, %v1753
        %v1755 = vrot.slane %v1741, %v1754
        %v1756 = vcombine.low %v1700, %v1716
        %v1757 = vcombine.high %v1700, %v1716
        %v1759 = vunpack.c.l.s4 1934713408
        %v1760 = vunpack.c.0.s8 %v1759
        %v1761 = vlaneseq
        %v1762 = vshrl.u32 %v1761, 7
        %v1763 = vsub.s32 %v1760, %v1762
        %v1764 = vrot.slane %v1756, %v1763
        %v1766 = vunpack.c.l.s4 1934713408
        %v1767 = vunpack.c.0.s8 %v1766
        %v1768 = vlaneseq
        %v1769 = vshrl.u32 %v1768, 7
        %v1770 = vsub.s32 %v1767, %v1769
        %v1771 = vrot.slane %v1757, %v1770
        %v1772 = vcombine.low %v1707, %v1723
        %v1773 = vcombine.high %v1707, %v1723
        %v1775 = vunpack.c.l.s4 1934713408
        %v1776 = vunpack.c.0.s8 %v1775
        %v1777 = vlaneseq
        %v1778 = vshrl.u32 %v1777, 7
        %v1779 = vsub.s32 %v1776, %v1778
        %v1780 = vrot.slane %v1772, %v1779
        %v1782 = vunpack.c.l.s4 1934713408
        %v1783 = vunpack.c.0.s8 %v1782
        %v1784 = vlaneseq
        %v1785 = vshrl.u32 %v1784, 7
        %v1786 = vsub.s32 %v1783, %v1785
        %v1787 = vrot.slane %v1773, %v1786
        %v1788 = vcombine.low %v1732, %v1764
        %v1789 = vcombine.high %v1732, %v1764
        %v1790 = vcombine.low %v1739, %v1771
        %v1791 = vcombine.high %v1739, %v1771
        %v1792 = vcombine.low %v1748, %v1780
        %v1793 = vcombine.high %v1748, %v1780
        %v1794 = vcombine.low %v1755, %v1787
        %v1795 = vcombine.high %v1755, %v1787
        %1797 = vrot.lane.b32.xlu0 %v1653, 16
        %v1798 = vpop.permute.xlu0 %1797
        %1801 = vrot.lane.b32.xlu0 %v1654, 32
        %v1802 = vpop.permute.xlu0 %1801
        %1805 = vrot.lane.b32.xlu0 %v1655, 48
        %v1806 = vpop.permute.xlu0 %1805
        %1809 = vrot.lane.b32.xlu0 %v1656, 64
        %v1810 = vpop.permute.xlu0 %1809
        %1813 = vrot.lane.b32.xlu0 %v1657, 80
        %v1814 = vpop.permute.xlu0 %1813
        %1817 = vrot.lane.b32.xlu0 %v1658, 96
        %v1818 = vpop.permute.xlu0 %1817
        %1821 = vrot.lane.b32.xlu0 %v1659, 112
        %v1822 = vpop.permute.xlu0 %1821
        %1825 = vrot.lane.b32.xlu0 %v1789, 16
        %v1826 = vpop.permute.xlu0 %1825
        %1829 = vrot.lane.b32.xlu0 %v1790, 32
        %v1830 = vpop.permute.xlu0 %1829
        %1833 = vrot.lane.b32.xlu0 %v1791, 48
        %v1834 = vpop.permute.xlu0 %1833
        %1837 = vrot.lane.b32.xlu0 %v1792, 64
        %v1838 = vpop.permute.xlu0 %1837
        %1841 = vrot.lane.b32.xlu0 %v1793, 80
        %v1842 = vpop.permute.xlu0 %1841
        %1845 = vrot.lane.b32.xlu0 %v1794, 96
        %v1846 = vpop.permute.xlu0 %1845
        %1849 = vrot.lane.b32.xlu0 %v1795, 112
        %v1850 = vpop.permute.xlu0 %1849
        %v1852 = vsel %vm637, %v1652, %v1798
        %v1853 = vsel %vm639, %v1852, %v1802
        %v1854 = vsel %vm641, %v1853, %v1806
        %v1855 = vsel %vm643, %v1854, %v1810
        %v1856 = vsel %vm645, %v1855, %v1814
        %v1857 = vsel %vm647, %v1856, %v1818
        %v1858 = vsel %vm649, %v1857, %v1822
        %v1859 = vsel %vm637, %v1788, %v1826
        %v1860 = vsel %vm639, %v1859, %v1830
        %v1861 = vsel %vm641, %v1860, %v1834
        %v1862 = vsel %vm643, %v1861, %v1838
        %v1863 = vsel %vm645, %v1862, %v1842
        %v1864 = vsel %vm647, %v1863, %v1846
        %v1865 = vsel %vm649, %v1864, %v1850
        %1866 = vst [vmem:[#allocation2 + $0x30] sm:$0xff] %v1858
        %1867 = vst [vmem:[#allocation2 + $0x38] sm:$0xff] %v1865
        %v1868 = vld [vmem:[%s250 + $0x1] sm:$0xff]
        %v1869 = vld [vmem:[%s250 + $0x9] sm:$0xff]
        %v1870 = vld [vmem:[%s250 + $0x19] sm:$0xff]
        %v1871 = vld [vmem:[%s250 + $0x21] sm:$0xff]
        %v1872 = vld [vmem:[%s250 + $0x31] sm:$0xff]
        %v1873 = vld [vmem:[%s250 + $0x39] sm:$0xff]
        %v1874 = vld [vmem:[%s250 + $0x49] sm:$0xff]
        %v1875 = vld [vmem:[%s250 + $0x51] sm:$0xff]
        %v1876 = vld [vmem:[%s250 + $0x61] sm:$0xff]
        %v1877 = vld [vmem:[%s250 + $0x69] sm:$0xff]
        %v1878 = vld [vmem:[%s250 + $0x79] sm:$0xff]
        %v1879 = vld [vmem:[%s250 + $0x81] sm:$0xff]
        %v1880 = vld [vmem:[%s250 + $0x91] sm:$0xff]
        %v1881 = vld [vmem:[%s250 + $0x99] sm:$0xff]
        %v1882 = vld [vmem:[%s250 + $0xa9] sm:$0xff]
        %v1883 = vld [vmem:[%s250 + $0xb1] sm:$0xff]
        %1900 = vrot.lane.b32.xlu0 %v1868, 127
        %v1901 = vpop.permute.xlu0 %1900
        %1902 = vrot.lane.b32.xlu0 %v1869, 127
        %v1903 = vpop.permute.xlu0 %1902
        %1904 = vrot.lane.b32.xlu0 %v1870, 127
        %v1905 = vpop.permute.xlu0 %1904
        %1906 = vrot.lane.b32.xlu0 %v1871, 127
        %v1907 = vpop.permute.xlu0 %1906
        %1908 = vrot.lane.b32.xlu0 %v1872, 127
        %v1909 = vpop.permute.xlu0 %1908
        %1910 = vrot.lane.b32.xlu0 %v1873, 127
        %v1911 = vpop.permute.xlu0 %1910
        %1912 = vrot.lane.b32.xlu0 %v1874, 127
        %v1913 = vpop.permute.xlu0 %1912
        %1914 = vrot.lane.b32.xlu0 %v1875, 127
        %v1915 = vpop.permute.xlu0 %1914
        %1916 = vrot.lane.b32.xlu0 %v1876, 127
        %v1917 = vpop.permute.xlu0 %1916
        %1918 = vrot.lane.b32.xlu0 %v1877, 127
        %v1919 = vpop.permute.xlu0 %1918
        %1920 = vrot.lane.b32.xlu0 %v1878, 127
        %v1921 = vpop.permute.xlu0 %1920
        %1922 = vrot.lane.b32.xlu0 %v1879, 127
        %v1923 = vpop.permute.xlu0 %1922
        %1924 = vrot.lane.b32.xlu0 %v1880, 127
        %v1925 = vpop.permute.xlu0 %1924
        %1926 = vrot.lane.b32.xlu0 %v1881, 127
        %v1927 = vpop.permute.xlu0 %1926
        %1928 = vrot.lane.b32.xlu0 %v1882, 127
        %v1929 = vpop.permute.xlu0 %1928
        %1930 = vrot.lane.b32.xlu0 %v1883, 127
        %v1931 = vpop.permute.xlu0 %1930
        %v1948 = vcombine.low %v1901, %v1909
        %v1949 = vcombine.high %v1901, %v1909
        %v1951 = vunpack.c.l.s4 1983009808
        %v1952 = vunpack.c.0.s8 %v1951
        %v1953 = vlaneseq
        %v1954 = vshrl.u32 %v1953, 7
        %v1955 = vsub.s32 %v1952, %v1954
        %v1956 = vrot.slane %v1948, %v1955
        %v1958 = vunpack.c.l.s4 1983009808
        %v1959 = vunpack.c.0.s8 %v1958
        %v1960 = vlaneseq
        %v1961 = vshrl.u32 %v1960, 7
        %v1962 = vsub.s32 %v1959, %v1961
        %v1963 = vrot.slane %v1949, %v1962
        %v1964 = vcombine.low %v1905, %v1913
        %v1965 = vcombine.high %v1905, %v1913
        %v1967 = vunpack.c.l.s4 1983009808
        %v1968 = vunpack.c.0.s8 %v1967
        %v1969 = vlaneseq
        %v1970 = vshrl.u32 %v1969, 7
        %v1971 = vsub.s32 %v1968, %v1970
        %v1972 = vrot.slane %v1964, %v1971
        %v1974 = vunpack.c.l.s4 1983009808
        %v1975 = vunpack.c.0.s8 %v1974
        %v1976 = vlaneseq
        %v1977 = vshrl.u32 %v1976, 7
        %v1978 = vsub.s32 %v1975, %v1977
        %v1979 = vrot.slane %v1965, %v1978
        %v1980 = vcombine.low %v1917, %v1925
        %v1981 = vcombine.high %v1917, %v1925
        %v1983 = vunpack.c.l.s4 1983009808
        %v1984 = vunpack.c.0.s8 %v1983
        %v1985 = vlaneseq
        %v1986 = vshrl.u32 %v1985, 7
        %v1987 = vsub.s32 %v1984, %v1986
        %v1988 = vrot.slane %v1980, %v1987
        %v1990 = vunpack.c.l.s4 1983009808
        %v1991 = vunpack.c.0.s8 %v1990
        %v1992 = vlaneseq
        %v1993 = vshrl.u32 %v1992, 7
        %v1994 = vsub.s32 %v1991, %v1993
        %v1995 = vrot.slane %v1981, %v1994
        %v1996 = vcombine.low %v1921, %v1929
        %v1997 = vcombine.high %v1921, %v1929
        %v1999 = vunpack.c.l.s4 1983009808
        %v2000 = vunpack.c.0.s8 %v1999
        %v2001 = vlaneseq
        %v2002 = vshrl.u32 %v2001, 7
        %v2003 = vsub.s32 %v2000, %v2002
        %v2004 = vrot.slane %v1996, %v2003
        %v2006 = vunpack.c.l.s4 1983009808
        %v2007 = vunpack.c.0.s8 %v2006
        %v2008 = vlaneseq
        %v2009 = vshrl.u32 %v2008, 7
        %v2010 = vsub.s32 %v2007, %v2009
        %v2011 = vrot.slane %v1997, %v2010
        %v2012 = vcombine.low %v1956, %v1972
        %v2013 = vcombine.high %v1956, %v1972
        %v2015 = vunpack.c.l.s4 1934713408
        %v2016 = vunpack.c.0.s8 %v2015
        %v2017 = vlaneseq
        %v2018 = vshrl.u32 %v2017, 7
        %v2019 = vsub.s32 %v2016, %v2018
        %v2020 = vrot.slane %v2012, %v2019
        %v2022 = vunpack.c.l.s4 1934713408
        %v2023 = vunpack.c.0.s8 %v2022
        %v2024 = vlaneseq
        %v2025 = vshrl.u32 %v2024, 7
        %v2026 = vsub.s32 %v2023, %v2025
        %v2027 = vrot.slane %v2013, %v2026
        %v2028 = vcombine.low %v1963, %v1979
        %v2029 = vcombine.high %v1963, %v1979
        %v2031 = vunpack.c.l.s4 1934713408
        %v2032 = vunpack.c.0.s8 %v2031
        %v2033 = vlaneseq
        %v2034 = vshrl.u32 %v2033, 7
        %v2035 = vsub.s32 %v2032, %v2034
        %v2036 = vrot.slane %v2028, %v2035
        %v2038 = vunpack.c.l.s4 1934713408
        %v2039 = vunpack.c.0.s8 %v2038
        %v2040 = vlaneseq
        %v2041 = vshrl.u32 %v2040, 7
        %v2042 = vsub.s32 %v2039, %v2041
        %v2043 = vrot.slane %v2029, %v2042
        %v2044 = vcombine.low %v1988, %v2004
        %v2045 = vcombine.high %v1988, %v2004
        %v2047 = vunpack.c.l.s4 1934713408
        %v2048 = vunpack.c.0.s8 %v2047
        %v2049 = vlaneseq
        %v2050 = vshrl.u32 %v2049, 7
        %v2051 = vsub.s32 %v2048, %v2050
        %v2052 = vrot.slane %v2044, %v2051
        %v2054 = vunpack.c.l.s4 1934713408
        %v2055 = vunpack.c.0.s8 %v2054
        %v2056 = vlaneseq
        %v2057 = vshrl.u32 %v2056, 7
        %v2058 = vsub.s32 %v2055, %v2057
        %v2059 = vrot.slane %v2045, %v2058
        %v2060 = vcombine.low %v1995, %v2011
        %v2061 = vcombine.high %v1995, %v2011
        %v2063 = vunpack.c.l.s4 1934713408
        %v2064 = vunpack.c.0.s8 %v2063
        %v2065 = vlaneseq
        %v2066 = vshrl.u32 %v2065, 7
        %v2067 = vsub.s32 %v2064, %v2066
        %v2068 = vrot.slane %v2060, %v2067
        %v2070 = vunpack.c.l.s4 1934713408
        %v2071 = vunpack.c.0.s8 %v2070
        %v2072 = vlaneseq
        %v2073 = vshrl.u32 %v2072, 7
        %v2074 = vsub.s32 %v2071, %v2073
        %v2075 = vrot.slane %v2061, %v2074
        %v2076 = vcombine.low %v2020, %v2052
        %v2077 = vcombine.high %v2020, %v2052
        %v2078 = vcombine.low %v2027, %v2059
        %v2079 = vcombine.high %v2027, %v2059
        %v2080 = vcombine.low %v2036, %v2068
        %v2081 = vcombine.high %v2036, %v2068
        %v2082 = vcombine.low %v2043, %v2075
        %v2083 = vcombine.high %v2043, %v2075
        %v2084 = vcombine.low %v1903, %v1911
        %v2085 = vcombine.high %v1903, %v1911
        %v2087 = vunpack.c.l.s4 1983009808
        %v2088 = vunpack.c.0.s8 %v2087
        %v2089 = vlaneseq
        %v2090 = vshrl.u32 %v2089, 7
        %v2091 = vsub.s32 %v2088, %v2090
        %v2092 = vrot.slane %v2084, %v2091
        %v2094 = vunpack.c.l.s4 1983009808
        %v2095 = vunpack.c.0.s8 %v2094
        %v2096 = vlaneseq
        %v2097 = vshrl.u32 %v2096, 7
        %v2098 = vsub.s32 %v2095, %v2097
        %v2099 = vrot.slane %v2085, %v2098
        %v2100 = vcombine.low %v1907, %v1915
        %v2101 = vcombine.high %v1907, %v1915
        %v2103 = vunpack.c.l.s4 1983009808
        %v2104 = vunpack.c.0.s8 %v2103
        %v2105 = vlaneseq
        %v2106 = vshrl.u32 %v2105, 7
        %v2107 = vsub.s32 %v2104, %v2106
        %v2108 = vrot.slane %v2100, %v2107
        %v2110 = vunpack.c.l.s4 1983009808
        %v2111 = vunpack.c.0.s8 %v2110
        %v2112 = vlaneseq
        %v2113 = vshrl.u32 %v2112, 7
        %v2114 = vsub.s32 %v2111, %v2113
        %v2115 = vrot.slane %v2101, %v2114
        %v2116 = vcombine.low %v1919, %v1927
        %v2117 = vcombine.high %v1919, %v1927
        %v2119 = vunpack.c.l.s4 1983009808
        %v2120 = vunpack.c.0.s8 %v2119
        %v2121 = vlaneseq
        %v2122 = vshrl.u32 %v2121, 7
        %v2123 = vsub.s32 %v2120, %v2122
        %v2124 = vrot.slane %v2116, %v2123
        %v2126 = vunpack.c.l.s4 1983009808
        %v2127 = vunpack.c.0.s8 %v2126
        %v2128 = vlaneseq
        %v2129 = vshrl.u32 %v2128, 7
        %v2130 = vsub.s32 %v2127, %v2129
        %v2131 = vrot.slane %v2117, %v2130
        %v2132 = vcombine.low %v1923, %v1931
        %v2133 = vcombine.high %v1923, %v1931
        %v2135 = vunpack.c.l.s4 1983009808
        %v2136 = vunpack.c.0.s8 %v2135
        %v2137 = vlaneseq
        %v2138 = vshrl.u32 %v2137, 7
        %v2139 = vsub.s32 %v2136, %v2138
        %v2140 = vrot.slane %v2132, %v2139
        %v2142 = vunpack.c.l.s4 1983009808
        %v2143 = vunpack.c.0.s8 %v2142
        %v2144 = vlaneseq
        %v2145 = vshrl.u32 %v2144, 7
        %v2146 = vsub.s32 %v2143, %v2145
        %v2147 = vrot.slane %v2133, %v2146
        %v2148 = vcombine.low %v2092, %v2108
        %v2149 = vcombine.high %v2092, %v2108
        %v2151 = vunpack.c.l.s4 1934713408
        %v2152 = vunpack.c.0.s8 %v2151
        %v2153 = vlaneseq
        %v2154 = vshrl.u32 %v2153, 7
        %v2155 = vsub.s32 %v2152, %v2154
        %v2156 = vrot.slane %v2148, %v2155
        %v2158 = vunpack.c.l.s4 1934713408
        %v2159 = vunpack.c.0.s8 %v2158
        %v2160 = vlaneseq
        %v2161 = vshrl.u32 %v2160, 7
        %v2162 = vsub.s32 %v2159, %v2161
        %v2163 = vrot.slane %v2149, %v2162
        %v2164 = vcombine.low %v2099, %v2115
        %v2165 = vcombine.high %v2099, %v2115
        %v2167 = vunpack.c.l.s4 1934713408
        %v2168 = vunpack.c.0.s8 %v2167
        %v2169 = vlaneseq
        %v2170 = vshrl.u32 %v2169, 7
        %v2171 = vsub.s32 %v2168, %v2170
        %v2172 = vrot.slane %v2164, %v2171
        %v2174 = vunpack.c.l.s4 1934713408
        %v2175 = vunpack.c.0.s8 %v2174
        %v2176 = vlaneseq
        %v2177 = vshrl.u32 %v2176, 7
        %v2178 = vsub.s32 %v2175, %v2177
        %v2179 = vrot.slane %v2165, %v2178
        %v2180 = vcombine.low %v2124, %v2140
        %v2181 = vcombine.high %v2124, %v2140
        %v2183 = vunpack.c.l.s4 1934713408
        %v2184 = vunpack.c.0.s8 %v2183
        %v2185 = vlaneseq
        %v2186 = vshrl.u32 %v2185, 7
        %v2187 = vsub.s32 %v2184, %v2186
        %v2188 = vrot.slane %v2180, %v2187
        %v2190 = vunpack.c.l.s4 1934713408
        %v2191 = vunpack.c.0.s8 %v2190
        %v2192 = vlaneseq
        %v2193 = vshrl.u32 %v2192, 7
        %v2194 = vsub.s32 %v2191, %v2193
        %v2195 = vrot.slane %v2181, %v2194
        %v2196 = vcombine.low %v2131, %v2147
        %v2197 = vcombine.high %v2131, %v2147
        %v2199 = vunpack.c.l.s4 1934713408
        %v2200 = vunpack.c.0.s8 %v2199
        %v2201 = vlaneseq
        %v2202 = vshrl.u32 %v2201, 7
        %v2203 = vsub.s32 %v2200, %v2202
        %v2204 = vrot.slane %v2196, %v2203
        %v2206 = vunpack.c.l.s4 1934713408
        %v2207 = vunpack.c.0.s8 %v2206
        %v2208 = vlaneseq
        %v2209 = vshrl.u32 %v2208, 7
        %v2210 = vsub.s32 %v2207, %v2209
        %v2211 = vrot.slane %v2197, %v2210
        %v2212 = vcombine.low %v2156, %v2188
        %v2213 = vcombine.high %v2156, %v2188
        %v2214 = vcombine.low %v2163, %v2195
        %v2215 = vcombine.high %v2163, %v2195
        %v2216 = vcombine.low %v2172, %v2204
        %v2217 = vcombine.high %v2172, %v2204
        %v2218 = vcombine.low %v2179, %v2211
        %v2219 = vcombine.high %v2179, %v2211
        %2221 = vrot.lane.b32.xlu0 %v2077, 16
        %v2222 = vpop.permute.xlu0 %2221
        %2225 = vrot.lane.b32.xlu0 %v2078, 32
        %v2226 = vpop.permute.xlu0 %2225
        %2229 = vrot.lane.b32.xlu0 %v2079, 48
        %v2230 = vpop.permute.xlu0 %2229
        %2233 = vrot.lane.b32.xlu0 %v2080, 64
        %v2234 = vpop.permute.xlu0 %2233
        %2237 = vrot.lane.b32.xlu0 %v2081, 80
        %v2238 = vpop.permute.xlu0 %2237
        %2241 = vrot.lane.b32.xlu0 %v2082, 96
        %v2242 = vpop.permute.xlu0 %2241
        %2245 = vrot.lane.b32.xlu0 %v2083, 112
        %v2246 = vpop.permute.xlu0 %2245
        %2249 = vrot.lane.b32.xlu0 %v2213, 16
        %v2250 = vpop.permute.xlu0 %2249
        %2253 = vrot.lane.b32.xlu0 %v2214, 32
        %v2254 = vpop.permute.xlu0 %2253
        %2257 = vrot.lane.b32.xlu0 %v2215, 48
        %v2258 = vpop.permute.xlu0 %2257
        %2261 = vrot.lane.b32.xlu0 %v2216, 64
        %v2262 = vpop.permute.xlu0 %2261
        %2265 = vrot.lane.b32.xlu0 %v2217, 80
        %v2266 = vpop.permute.xlu0 %2265
        %2269 = vrot.lane.b32.xlu0 %v2218, 96
        %v2270 = vpop.permute.xlu0 %2269
        %2273 = vrot.lane.b32.xlu0 %v2219, 112
        %v2274 = vpop.permute.xlu0 %2273
        %v2276 = vsel %vm637, %v2076, %v2222
        %v2277 = vsel %vm639, %v2276, %v2226
        %v2278 = vsel %vm641, %v2277, %v2230
        %v2279 = vsel %vm643, %v2278, %v2234
        %v2280 = vsel %vm645, %v2279, %v2238
        %v2281 = vsel %vm647, %v2280, %v2242
        %v2282 = vsel %vm649, %v2281, %v2246
        %v2283 = vsel %vm637, %v2212, %v2250
        %v2284 = vsel %vm639, %v2283, %v2254
        %v2285 = vsel %vm641, %v2284, %v2258
        %v2286 = vsel %vm643, %v2285, %v2262
        %v2287 = vsel %vm645, %v2286, %v2266
        %v2288 = vsel %vm647, %v2287, %v2270
        %v2289 = vsel %vm649, %v2288, %v2274
        %2290 = vst [vmem:[#allocation2 + $0x40] sm:$0xff] %v2282
        %2291 = vst [vmem:[#allocation2 + $0x48] sm:$0xff] %v2289
        %v2292 = vld [vmem:[%s250 + $0x1] sm:$0xff]
        %v2293 = vld [vmem:[%s250 + $0x9] sm:$0xff]
        %v2294 = vld [vmem:[%s250 + $0x19] sm:$0xff]
        %v2295 = vld [vmem:[%s250 + $0x21] sm:$0xff]
        %v2296 = vld [vmem:[%s250 + $0x31] sm:$0xff]
        %v2297 = vld [vmem:[%s250 + $0x39] sm:$0xff]
        %v2298 = vld [vmem:[%s250 + $0x49] sm:$0xff]
        %v2299 = vld [vmem:[%s250 + $0x51] sm:$0xff]
        %v2300 = vld [vmem:[%s250 + $0x61] sm:$0xff]
        %v2301 = vld [vmem:[%s250 + $0x69] sm:$0xff]
        %v2302 = vld [vmem:[%s250 + $0x79] sm:$0xff]
        %v2303 = vld [vmem:[%s250 + $0x81] sm:$0xff]
        %v2304 = vld [vmem:[%s250 + $0x91] sm:$0xff]
        %v2305 = vld [vmem:[%s250 + $0x99] sm:$0xff]
        %v2306 = vld [vmem:[%s250 + $0xa9] sm:$0xff]
        %v2307 = vld [vmem:[%s250 + $0xb1] sm:$0xff]
        %2324 = vrot.lane.b32.xlu0 %v2292, 126
        %v2325 = vpop.permute.xlu0 %2324
        %2326 = vrot.lane.b32.xlu0 %v2293, 126
        %v2327 = vpop.permute.xlu0 %2326
        %2328 = vrot.lane.b32.xlu0 %v2294, 126
        %v2329 = vpop.permute.xlu0 %2328
        %2330 = vrot.lane.b32.xlu0 %v2295, 126
        %v2331 = vpop.permute.xlu0 %2330
        %2332 = vrot.lane.b32.xlu0 %v2296, 126
        %v2333 = vpop.permute.xlu0 %2332
        %2334 = vrot.lane.b32.xlu0 %v2297, 126
        %v2335 = vpop.permute.xlu0 %2334
        %2336 = vrot.lane.b32.xlu0 %v2298, 126
        %v2337 = vpop.permute.xlu0 %2336
        %2338 = vrot.lane.b32.xlu0 %v2299, 126
        %v2339 = vpop.permute.xlu0 %2338
        %2340 = vrot.lane.b32.xlu0 %v2300, 126
        %v2341 = vpop.permute.xlu0 %2340
        %2342 = vrot.lane.b32.xlu0 %v2301, 126
        %v2343 = vpop.permute.xlu0 %2342
        %2344 = vrot.lane.b32.xlu0 %v2302, 126
        %v2345 = vpop.permute.xlu0 %2344
        %2346 = vrot.lane.b32.xlu0 %v2303, 126
        %v2347 = vpop.permute.xlu0 %2346
        %2348 = vrot.lane.b32.xlu0 %v2304, 126
        %v2349 = vpop.permute.xlu0 %2348
        %2350 = vrot.lane.b32.xlu0 %v2305, 126
        %v2351 = vpop.permute.xlu0 %2350
        %2352 = vrot.lane.b32.xlu0 %v2306, 126
        %v2353 = vpop.permute.xlu0 %2352
        %2354 = vrot.lane.b32.xlu0 %v2307, 126
        %v2355 = vpop.permute.xlu0 %2354
        %v2372 = vcombine.low %v2325, %v2333
        %v2373 = vcombine.high %v2325, %v2333
        %v2375 = vunpack.c.l.s4 1983009808
        %v2376 = vunpack.c.0.s8 %v2375
        %v2377 = vlaneseq
        %v2378 = vshrl.u32 %v2377, 7
        %v2379 = vsub.s32 %v2376, %v2378
        %v2380 = vrot.slane %v2372, %v2379
        %v2382 = vunpack.c.l.s4 1983009808
        %v2383 = vunpack.c.0.s8 %v2382
        %v2384 = vlaneseq
        %v2385 = vshrl.u32 %v2384, 7
        %v2386 = vsub.s32 %v2383, %v2385
        %v2387 = vrot.slane %v2373, %v2386
        %v2388 = vcombine.low %v2329, %v2337
        %v2389 = vcombine.high %v2329, %v2337
        %v2391 = vunpack.c.l.s4 1983009808
        %v2392 = vunpack.c.0.s8 %v2391
        %v2393 = vlaneseq
        %v2394 = vshrl.u32 %v2393, 7
        %v2395 = vsub.s32 %v2392, %v2394
        %v2396 = vrot.slane %v2388, %v2395
        %v2398 = vunpack.c.l.s4 1983009808
        %v2399 = vunpack.c.0.s8 %v2398
        %v2400 = vlaneseq
        %v2401 = vshrl.u32 %v2400, 7
        %v2402 = vsub.s32 %v2399, %v2401
        %v2403 = vrot.slane %v2389, %v2402
        %v2404 = vcombine.low %v2341, %v2349
        %v2405 = vcombine.high %v2341, %v2349
        %v2407 = vunpack.c.l.s4 1983009808
        %v2408 = vunpack.c.0.s8 %v2407
        %v2409 = vlaneseq
        %v2410 = vshrl.u32 %v2409, 7
        %v2411 = vsub.s32 %v2408, %v2410
        %v2412 = vrot.slane %v2404, %v2411
        %v2414 = vunpack.c.l.s4 1983009808
        %v2415 = vunpack.c.0.s8 %v2414
        %v2416 = vlaneseq
        %v2417 = vshrl.u32 %v2416, 7
        %v2418 = vsub.s32 %v2415, %v2417
        %v2419 = vrot.slane %v2405, %v2418
        %v2420 = vcombine.low %v2345, %v2353
        %v2421 = vcombine.high %v2345, %v2353
        %v2423 = vunpack.c.l.s4 1983009808
        %v2424 = vunpack.c.0.s8 %v2423
        %v2425 = vlaneseq
        %v2426 = vshrl.u32 %v2425, 7
        %v2427 = vsub.s32 %v2424, %v2426
        %v2428 = vrot.slane %v2420, %v2427
        %v2430 = vunpack.c.l.s4 1983009808
        %v2431 = vunpack.c.0.s8 %v2430
        %v2432 = vlaneseq
        %v2433 = vshrl.u32 %v2432, 7
        %v2434 = vsub.s32 %v2431, %v2433
        %v2435 = vrot.slane %v2421, %v2434
        %v2436 = vcombine.low %v2380, %v2396
        %v2437 = vcombine.high %v2380, %v2396
        %v2439 = vunpack.c.l.s4 1934713408
        %v2440 = vunpack.c.0.s8 %v2439
        %v2441 = vlaneseq
        %v2442 = vshrl.u32 %v2441, 7
        %v2443 = vsub.s32 %v2440, %v2442
        %v2444 = vrot.slane %v2436, %v2443
        %v2446 = vunpack.c.l.s4 1934713408
        %v2447 = vunpack.c.0.s8 %v2446
        %v2448 = vlaneseq
        %v2449 = vshrl.u32 %v2448, 7
        %v2450 = vsub.s32 %v2447, %v2449
        %v2451 = vrot.slane %v2437, %v2450
        %v2452 = vcombine.low %v2387, %v2403
        %v2453 = vcombine.high %v2387, %v2403
        %v2455 = vunpack.c.l.s4 1934713408
        %v2456 = vunpack.c.0.s8 %v2455
        %v2457 = vlaneseq
        %v2458 = vshrl.u32 %v2457, 7
        %v2459 = vsub.s32 %v2456, %v2458
        %v2460 = vrot.slane %v2452, %v2459
        %v2462 = vunpack.c.l.s4 1934713408
        %v2463 = vunpack.c.0.s8 %v2462
        %v2464 = vlaneseq
        %v2465 = vshrl.u32 %v2464, 7
        %v2466 = vsub.s32 %v2463, %v2465
        %v2467 = vrot.slane %v2453, %v2466
        %v2468 = vcombine.low %v2412, %v2428
        %v2469 = vcombine.high %v2412, %v2428
        %v2471 = vunpack.c.l.s4 1934713408
        %v2472 = vunpack.c.0.s8 %v2471
        %v2473 = vlaneseq
        %v2474 = vshrl.u32 %v2473, 7
        %v2475 = vsub.s32 %v2472, %v2474
        %v2476 = vrot.slane %v2468, %v2475
        %v2478 = vunpack.c.l.s4 1934713408
        %v2479 = vunpack.c.0.s8 %v2478
        %v2480 = vlaneseq
        %v2481 = vshrl.u32 %v2480, 7
        %v2482 = vsub.s32 %v2479, %v2481
        %v2483 = vrot.slane %v2469, %v2482
        %v2484 = vcombine.low %v2419, %v2435
        %v2485 = vcombine.high %v2419, %v2435
        %v2487 = vunpack.c.l.s4 1934713408
        %v2488 = vunpack.c.0.s8 %v2487
        %v2489 = vlaneseq
        %v2490 = vshrl.u32 %v2489, 7
        %v2491 = vsub.s32 %v2488, %v2490
        %v2492 = vrot.slane %v2484, %v2491
        %v2494 = vunpack.c.l.s4 1934713408
        %v2495 = vunpack.c.0.s8 %v2494
        %v2496 = vlaneseq
        %v2497 = vshrl.u32 %v2496, 7
        %v2498 = vsub.s32 %v2495, %v2497
        %v2499 = vrot.slane %v2485, %v2498
        %v2500 = vcombine.low %v2444, %v2476
        %v2501 = vcombine.high %v2444, %v2476
        %v2502 = vcombine.low %v2451, %v2483
        %v2503 = vcombine.high %v2451, %v2483
        %v2504 = vcombine.low %v2460, %v2492
        %v2505 = vcombine.high %v2460, %v2492
        %v2506 = vcombine.low %v2467, %v2499
        %v2507 = vcombine.high %v2467, %v2499
        %v2508 = vcombine.low %v2327, %v2335
        %v2509 = vcombine.high %v2327, %v2335
        %v2511 = vunpack.c.l.s4 1983009808
        %v2512 = vunpack.c.0.s8 %v2511
        %v2513 = vlaneseq
        %v2514 = vshrl.u32 %v2513, 7
        %v2515 = vsub.s32 %v2512, %v2514
        %v2516 = vrot.slane %v2508, %v2515
        %v2518 = vunpack.c.l.s4 1983009808
        %v2519 = vunpack.c.0.s8 %v2518
        %v2520 = vlaneseq
        %v2521 = vshrl.u32 %v2520, 7
        %v2522 = vsub.s32 %v2519, %v2521
        %v2523 = vrot.slane %v2509, %v2522
        %v2524 = vcombine.low %v2331, %v2339
        %v2525 = vcombine.high %v2331, %v2339
        %v2527 = vunpack.c.l.s4 1983009808
        %v2528 = vunpack.c.0.s8 %v2527
        %v2529 = vlaneseq
        %v2530 = vshrl.u32 %v2529, 7
        %v2531 = vsub.s32 %v2528, %v2530
        %v2532 = vrot.slane %v2524, %v2531
        %v2534 = vunpack.c.l.s4 1983009808
        %v2535 = vunpack.c.0.s8 %v2534
        %v2536 = vlaneseq
        %v2537 = vshrl.u32 %v2536, 7
        %v2538 = vsub.s32 %v2535, %v2537
        %v2539 = vrot.slane %v2525, %v2538
        %v2540 = vcombine.low %v2343, %v2351
        %v2541 = vcombine.high %v2343, %v2351
        %v2543 = vunpack.c.l.s4 1983009808
        %v2544 = vunpack.c.0.s8 %v2543
        %v2545 = vlaneseq
        %v2546 = vshrl.u32 %v2545, 7
        %v2547 = vsub.s32 %v2544, %v2546
        %v2548 = vrot.slane %v2540, %v2547
        %v2550 = vunpack.c.l.s4 1983009808
        %v2551 = vunpack.c.0.s8 %v2550
        %v2552 = vlaneseq
        %v2553 = vshrl.u32 %v2552, 7
        %v2554 = vsub.s32 %v2551, %v2553
        %v2555 = vrot.slane %v2541, %v2554
        %v2556 = vcombine.low %v2347, %v2355
        %v2557 = vcombine.high %v2347, %v2355
        %v2559 = vunpack.c.l.s4 1983009808
        %v2560 = vunpack.c.0.s8 %v2559
        %v2561 = vlaneseq
        %v2562 = vshrl.u32 %v2561, 7
        %v2563 = vsub.s32 %v2560, %v2562
        %v2564 = vrot.slane %v2556, %v2563
        %v2566 = vunpack.c.l.s4 1983009808
        %v2567 = vunpack.c.0.s8 %v2566
        %v2568 = vlaneseq
        %v2569 = vshrl.u32 %v2568, 7
        %v2570 = vsub.s32 %v2567, %v2569
        %v2571 = vrot.slane %v2557, %v2570
        %v2572 = vcombine.low %v2516, %v2532
        %v2573 = vcombine.high %v2516, %v2532
        %v2575 = vunpack.c.l.s4 1934713408
        %v2576 = vunpack.c.0.s8 %v2575
        %v2577 = vlaneseq
        %v2578 = vshrl.u32 %v2577, 7
        %v2579 = vsub.s32 %v2576, %v2578
        %v2580 = vrot.slane %v2572, %v2579
        %v2582 = vunpack.c.l.s4 1934713408
        %v2583 = vunpack.c.0.s8 %v2582
        %v2584 = vlaneseq
        %v2585 = vshrl.u32 %v2584, 7
        %v2586 = vsub.s32 %v2583, %v2585
        %v2587 = vrot.slane %v2573, %v2586
        %v2588 = vcombine.low %v2523, %v2539
        %v2589 = vcombine.high %v2523, %v2539
        %v2591 = vunpack.c.l.s4 1934713408
        %v2592 = vunpack.c.0.s8 %v2591
        %v2593 = vlaneseq
        %v2594 = vshrl.u32 %v2593, 7
        %v2595 = vsub.s32 %v2592, %v2594
        %v2596 = vrot.slane %v2588, %v2595
        %v2598 = vunpack.c.l.s4 1934713408
        %v2599 = vunpack.c.0.s8 %v2598
        %v2600 = vlaneseq
        %v2601 = vshrl.u32 %v2600, 7
        %v2602 = vsub.s32 %v2599, %v2601
        %v2603 = vrot.slane %v2589, %v2602
        %v2604 = vcombine.low %v2548, %v2564
        %v2605 = vcombine.high %v2548, %v2564
        %v2607 = vunpack.c.l.s4 1934713408
        %v2608 = vunpack.c.0.s8 %v2607
        %v2609 = vlaneseq
        %v2610 = vshrl.u32 %v2609, 7
        %v2611 = vsub.s32 %v2608, %v2610
        %v2612 = vrot.slane %v2604, %v2611
        %v2614 = vunpack.c.l.s4 1934713408
        %v2615 = vunpack.c.0.s8 %v2614
        %v2616 = vlaneseq
        %v2617 = vshrl.u32 %v2616, 7
        %v2618 = vsub.s32 %v2615, %v2617
        %v2619 = vrot.slane %v2605, %v2618
        %v2620 = vcombine.low %v2555, %v2571
        %v2621 = vcombine.high %v2555, %v2571
        %v2623 = vunpack.c.l.s4 1934713408
        %v2624 = vunpack.c.0.s8 %v2623
        %v2625 = vlaneseq
        %v2626 = vshrl.u32 %v2625, 7
        %v2627 = vsub.s32 %v2624, %v2626
        %v2628 = vrot.slane %v2620, %v2627
        %v2630 = vunpack.c.l.s4 1934713408
        %v2631 = vunpack.c.0.s8 %v2630
        %v2632 = vlaneseq
        %v2633 = vshrl.u32 %v2632, 7
        %v2634 = vsub.s32 %v2631, %v2633
        %v2635 = vrot.slane %v2621, %v2634
        %v2636 = vcombine.low %v2580, %v2612
        %v2637 = vcombine.high %v2580, %v2612
        %v2638 = vcombine.low %v2587, %v2619
        %v2639 = vcombine.high %v2587, %v2619
        %v2640 = vcombine.low %v2596, %v2628
        %v2641 = vcombine.high %v2596, %v2628
        %v2642 = vcombine.low %v2603, %v2635
        %v2643 = vcombine.high %v2603, %v2635
        %2645 = vrot.lane.b32.xlu0 %v2501, 16
        %v2646 = vpop.permute.xlu0 %2645
        %2649 = vrot.lane.b32.xlu0 %v2502, 32
        %v2650 = vpop.permute.xlu0 %2649
        %2653 = vrot.lane.b32.xlu0 %v2503, 48
        %v2654 = vpop.permute.xlu0 %2653
        %2657 = vrot.lane.b32.xlu0 %v2504, 64
        %v2658 = vpop.permute.xlu0 %2657
        %2661 = vrot.lane.b32.xlu0 %v2505, 80
        %v2662 = vpop.permute.xlu0 %2661
        %2665 = vrot.lane.b32.xlu0 %v2506, 96
        %v2666 = vpop.permute.xlu0 %2665
        %2669 = vrot.lane.b32.xlu0 %v2507, 112
        %v2670 = vpop.permute.xlu0 %2669
        %2673 = vrot.lane.b32.xlu0 %v2637, 16
        %v2674 = vpop.permute.xlu0 %2673
        %2677 = vrot.lane.b32.xlu0 %v2638, 32
        %v2678 = vpop.permute.xlu0 %2677
        %2681 = vrot.lane.b32.xlu0 %v2639, 48
        %v2682 = vpop.permute.xlu0 %2681
        %2685 = vrot.lane.b32.xlu0 %v2640, 64
        %v2686 = vpop.permute.xlu0 %2685
        %2689 = vrot.lane.b32.xlu0 %v2641, 80
        %v2690 = vpop.permute.xlu0 %2689
        %2693 = vrot.lane.b32.xlu0 %v2642, 96
        %v2694 = vpop.permute.xlu0 %2693
        %2697 = vrot.lane.b32.xlu0 %v2643, 112
        %v2698 = vpop.permute.xlu0 %2697
        %v2700 = vsel %vm637, %v2500, %v2646
        %v2701 = vsel %vm639, %v2700, %v2650
        %v2702 = vsel %vm641, %v2701, %v2654
        %v2703 = vsel %vm643, %v2702, %v2658
        %v2704 = vsel %vm645, %v2703, %v2662
        %v2705 = vsel %vm647, %v2704, %v2666
        %v2706 = vsel %vm649, %v2705, %v2670
        %v2707 = vsel %vm637, %v2636, %v2674
        %v2708 = vsel %vm639, %v2707, %v2678
        %v2709 = vsel %vm641, %v2708, %v2682
        %v2710 = vsel %vm643, %v2709, %v2686
        %v2711 = vsel %vm645, %v2710, %v2690
        %v2712 = vsel %vm647, %v2711, %v2694
        %v2713 = vsel %vm649, %v2712, %v2698
        %2714 = vst [vmem:[#allocation2 + $0x50] sm:$0xff] %v2706
        %2715 = vst [vmem:[#allocation2 + $0x58] sm:$0xff] %v2713
        %v2716 = vld [vmem:[%s250 + $0x2] sm:$0xff]
        %v2717 = vld [vmem:[%s250 + $0xa] sm:$0xff]
        %v2718 = vld [vmem:[%s250 + $0x1a] sm:$0xff]
        %v2719 = vld [vmem:[%s250 + $0x22] sm:$0xff]
        %v2720 = vld [vmem:[%s250 + $0x32] sm:$0xff]
        %v2721 = vld [vmem:[%s250 + $0x3a] sm:$0xff]
        %v2722 = vld [vmem:[%s250 + $0x4a] sm:$0xff]
        %v2723 = vld [vmem:[%s250 + $0x52] sm:$0xff]
        %v2724 = vld [vmem:[%s250 + $0x62] sm:$0xff]
        %v2725 = vld [vmem:[%s250 + $0x6a] sm:$0xff]
        %v2726 = vld [vmem:[%s250 + $0x7a] sm:$0xff]
        %v2727 = vld [vmem:[%s250 + $0x82] sm:$0xff]
        %v2728 = vld [vmem:[%s250 + $0x92] sm:$0xff]
        %v2729 = vld [vmem:[%s250 + $0x9a] sm:$0xff]
        %v2730 = vld [vmem:[%s250 + $0xaa] sm:$0xff]
        %v2731 = vld [vmem:[%s250 + $0xb2] sm:$0xff]
        %v2732 = vcombine.low %v2716, %v2720
        %v2733 = vcombine.high %v2716, %v2720
        %v2735 = vunpack.c.l.s4 1983009808
        %v2736 = vunpack.c.0.s8 %v2735
        %v2737 = vlaneseq
        %v2738 = vshrl.u32 %v2737, 7
        %v2739 = vsub.s32 %v2736, %v2738
        %v2740 = vrot.slane %v2732, %v2739
        %v2742 = vunpack.c.l.s4 1983009808
        %v2743 = vunpack.c.0.s8 %v2742
        %v2744 = vlaneseq
        %v2745 = vshrl.u32 %v2744, 7
        %v2746 = vsub.s32 %v2743, %v2745
        %v2747 = vrot.slane %v2733, %v2746
        %v2748 = vcombine.low %v2718, %v2722
        %v2749 = vcombine.high %v2718, %v2722
        %v2751 = vunpack.c.l.s4 1983009808
        %v2752 = vunpack.c.0.s8 %v2751
        %v2753 = vlaneseq
        %v2754 = vshrl.u32 %v2753, 7
        %v2755 = vsub.s32 %v2752, %v2754
        %v2756 = vrot.slane %v2748, %v2755
        %v2758 = vunpack.c.l.s4 1983009808
        %v2759 = vunpack.c.0.s8 %v2758
        %v2760 = vlaneseq
        %v2761 = vshrl.u32 %v2760, 7
        %v2762 = vsub.s32 %v2759, %v2761
        %v2763 = vrot.slane %v2749, %v2762
        %v2764 = vcombine.low %v2724, %v2728
        %v2765 = vcombine.high %v2724, %v2728
        %v2767 = vunpack.c.l.s4 1983009808
        %v2768 = vunpack.c.0.s8 %v2767
        %v2769 = vlaneseq
        %v2770 = vshrl.u32 %v2769, 7
        %v2771 = vsub.s32 %v2768, %v2770
        %v2772 = vrot.slane %v2764, %v2771
        %v2774 = vunpack.c.l.s4 1983009808
        %v2775 = vunpack.c.0.s8 %v2774
        %v2776 = vlaneseq
        %v2777 = vshrl.u32 %v2776, 7
        %v2778 = vsub.s32 %v2775, %v2777
        %v2779 = vrot.slane %v2765, %v2778
        %v2780 = vcombine.low %v2726, %v2730
        %v2781 = vcombine.high %v2726, %v2730
        %v2783 = vunpack.c.l.s4 1983009808
        %v2784 = vunpack.c.0.s8 %v2783
        %v2785 = vlaneseq
        %v2786 = vshrl.u32 %v2785, 7
        %v2787 = vsub.s32 %v2784, %v2786
        %v2788 = vrot.slane %v2780, %v2787
        %v2790 = vunpack.c.l.s4 1983009808
        %v2791 = vunpack.c.0.s8 %v2790
        %v2792 = vlaneseq
        %v2793 = vshrl.u32 %v2792, 7
        %v2794 = vsub.s32 %v2791, %v2793
        %v2795 = vrot.slane %v2781, %v2794
        %v2796 = vcombine.low %v2740, %v2756
        %v2797 = vcombine.high %v2740, %v2756
        %v2799 = vunpack.c.l.s4 1934713408
        %v2800 = vunpack.c.0.s8 %v2799
        %v2801 = vlaneseq
        %v2802 = vshrl.u32 %v2801, 7
        %v2803 = vsub.s32 %v2800, %v2802
        %v2804 = vrot.slane %v2796, %v2803
        %v2806 = vunpack.c.l.s4 1934713408
        %v2807 = vunpack.c.0.s8 %v2806
        %v2808 = vlaneseq
        %v2809 = vshrl.u32 %v2808, 7
        %v2810 = vsub.s32 %v2807, %v2809
        %v2811 = vrot.slane %v2797, %v2810
        %v2812 = vcombine.low %v2747, %v2763
        %v2813 = vcombine.high %v2747, %v2763
        %v2815 = vunpack.c.l.s4 1934713408
        %v2816 = vunpack.c.0.s8 %v2815
        %v2817 = vlaneseq
        %v2818 = vshrl.u32 %v2817, 7
        %v2819 = vsub.s32 %v2816, %v2818
        %v2820 = vrot.slane %v2812, %v2819
        %v2822 = vunpack.c.l.s4 1934713408
        %v2823 = vunpack.c.0.s8 %v2822
        %v2824 = vlaneseq
        %v2825 = vshrl.u32 %v2824, 7
        %v2826 = vsub.s32 %v2823, %v2825
        %v2827 = vrot.slane %v2813, %v2826
        %v2828 = vcombine.low %v2772, %v2788
        %v2829 = vcombine.high %v2772, %v2788
        %v2831 = vunpack.c.l.s4 1934713408
        %v2832 = vunpack.c.0.s8 %v2831
        %v2833 = vlaneseq
        %v2834 = vshrl.u32 %v2833, 7
        %v2835 = vsub.s32 %v2832, %v2834
        %v2836 = vrot.slane %v2828, %v2835
        %v2838 = vunpack.c.l.s4 1934713408
        %v2839 = vunpack.c.0.s8 %v2838
        %v2840 = vlaneseq
        %v2841 = vshrl.u32 %v2840, 7
        %v2842 = vsub.s32 %v2839, %v2841
        %v2843 = vrot.slane %v2829, %v2842
        %v2844 = vcombine.low %v2779, %v2795
        %v2845 = vcombine.high %v2779, %v2795
        %v2847 = vunpack.c.l.s4 1934713408
        %v2848 = vunpack.c.0.s8 %v2847
        %v2849 = vlaneseq
        %v2850 = vshrl.u32 %v2849, 7
        %v2851 = vsub.s32 %v2848, %v2850
        %v2852 = vrot.slane %v2844, %v2851
        %v2854 = vunpack.c.l.s4 1934713408
        %v2855 = vunpack.c.0.s8 %v2854
        %v2856 = vlaneseq
        %v2857 = vshrl.u32 %v2856, 7
        %v2858 = vsub.s32 %v2855, %v2857
        %v2859 = vrot.slane %v2845, %v2858
        %v2860 = vcombine.low %v2804, %v2836
        %v2861 = vcombine.high %v2804, %v2836
        %v2862 = vcombine.low %v2811, %v2843
        %v2863 = vcombine.high %v2811, %v2843
        %v2864 = vcombine.low %v2820, %v2852
        %v2865 = vcombine.high %v2820, %v2852
        %v2866 = vcombine.low %v2827, %v2859
        %v2867 = vcombine.high %v2827, %v2859
        %v2868 = vcombine.low %v2717, %v2721
        %v2869 = vcombine.high %v2717, %v2721
        %v2871 = vunpack.c.l.s4 1983009808
        %v2872 = vunpack.c.0.s8 %v2871
        %v2873 = vlaneseq
        %v2874 = vshrl.u32 %v2873, 7
        %v2875 = vsub.s32 %v2872, %v2874
        %v2876 = vrot.slane %v2868, %v2875
        %v2878 = vunpack.c.l.s4 1983009808
        %v2879 = vunpack.c.0.s8 %v2878
        %v2880 = vlaneseq
        %v2881 = vshrl.u32 %v2880, 7
        %v2882 = vsub.s32 %v2879, %v2881
        %v2883 = vrot.slane %v2869, %v2882
        %v2884 = vcombine.low %v2719, %v2723
        %v2885 = vcombine.high %v2719, %v2723
        %v2887 = vunpack.c.l.s4 1983009808
        %v2888 = vunpack.c.0.s8 %v2887
        %v2889 = vlaneseq
        %v2890 = vshrl.u32 %v2889, 7
        %v2891 = vsub.s32 %v2888, %v2890
        %v2892 = vrot.slane %v2884, %v2891
        %v2894 = vunpack.c.l.s4 1983009808
        %v2895 = vunpack.c.0.s8 %v2894
        %v2896 = vlaneseq
        %v2897 = vshrl.u32 %v2896, 7
        %v2898 = vsub.s32 %v2895, %v2897
        %v2899 = vrot.slane %v2885, %v2898
        %v2900 = vcombine.low %v2725, %v2729
        %v2901 = vcombine.high %v2725, %v2729
        %v2903 = vunpack.c.l.s4 1983009808
        %v2904 = vunpack.c.0.s8 %v2903
        %v2905 = vlaneseq
        %v2906 = vshrl.u32 %v2905, 7
        %v2907 = vsub.s32 %v2904, %v2906
        %v2908 = vrot.slane %v2900, %v2907
        %v2910 = vunpack.c.l.s4 1983009808
        %v2911 = vunpack.c.0.s8 %v2910
        %v2912 = vlaneseq
        %v2913 = vshrl.u32 %v2912, 7
        %v2914 = vsub.s32 %v2911, %v2913
        %v2915 = vrot.slane %v2901, %v2914
        %v2916 = vcombine.low %v2727, %v2731
        %v2917 = vcombine.high %v2727, %v2731
        %v2919 = vunpack.c.l.s4 1983009808
        %v2920 = vunpack.c.0.s8 %v2919
        %v2921 = vlaneseq
        %v2922 = vshrl.u32 %v2921, 7
        %v2923 = vsub.s32 %v2920, %v2922
        %v2924 = vrot.slane %v2916, %v2923
        %v2926 = vunpack.c.l.s4 1983009808
        %v2927 = vunpack.c.0.s8 %v2926
        %v2928 = vlaneseq
        %v2929 = vshrl.u32 %v2928, 7
        %v2930 = vsub.s32 %v2927, %v2929
        %v2931 = vrot.slane %v2917, %v2930
        %v2932 = vcombine.low %v2876, %v2892
        %v2933 = vcombine.high %v2876, %v2892
        %v2935 = vunpack.c.l.s4 1934713408
        %v2936 = vunpack.c.0.s8 %v2935
        %v2937 = vlaneseq
        %v2938 = vshrl.u32 %v2937, 7
        %v2939 = vsub.s32 %v2936, %v2938
        %v2940 = vrot.slane %v2932, %v2939
        %v2942 = vunpack.c.l.s4 1934713408
        %v2943 = vunpack.c.0.s8 %v2942
        %v2944 = vlaneseq
        %v2945 = vshrl.u32 %v2944, 7
        %v2946 = vsub.s32 %v2943, %v2945
        %v2947 = vrot.slane %v2933, %v2946
        %v2948 = vcombine.low %v2883, %v2899
        %v2949 = vcombine.high %v2883, %v2899
        %v2951 = vunpack.c.l.s4 1934713408
        %v2952 = vunpack.c.0.s8 %v2951
        %v2953 = vlaneseq
        %v2954 = vshrl.u32 %v2953, 7
        %v2955 = vsub.s32 %v2952, %v2954
        %v2956 = vrot.slane %v2948, %v2955
        %v2958 = vunpack.c.l.s4 1934713408
        %v2959 = vunpack.c.0.s8 %v2958
        %v2960 = vlaneseq
        %v2961 = vshrl.u32 %v2960, 7
        %v2962 = vsub.s32 %v2959, %v2961
        %v2963 = vrot.slane %v2949, %v2962
        %v2964 = vcombine.low %v2908, %v2924
        %v2965 = vcombine.high %v2908, %v2924
        %v2967 = vunpack.c.l.s4 1934713408
        %v2968 = vunpack.c.0.s8 %v2967
        %v2969 = vlaneseq
        %v2970 = vshrl.u32 %v2969, 7
        %v2971 = vsub.s32 %v2968, %v2970
        %v2972 = vrot.slane %v2964, %v2971
        %v2974 = vunpack.c.l.s4 1934713408
        %v2975 = vunpack.c.0.s8 %v2974
        %v2976 = vlaneseq
        %v2977 = vshrl.u32 %v2976, 7
        %v2978 = vsub.s32 %v2975, %v2977
        %v2979 = vrot.slane %v2965, %v2978
        %v2980 = vcombine.low %v2915, %v2931
        %v2981 = vcombine.high %v2915, %v2931
        %v2983 = vunpack.c.l.s4 1934713408
        %v2984 = vunpack.c.0.s8 %v2983
        %v2985 = vlaneseq
        %v2986 = vshrl.u32 %v2985, 7
        %v2987 = vsub.s32 %v2984, %v2986
        %v2988 = vrot.slane %v2980, %v2987
        %v2990 = vunpack.c.l.s4 1934713408
        %v2991 = vunpack.c.0.s8 %v2990
        %v2992 = vlaneseq
        %v2993 = vshrl.u32 %v2992, 7
        %v2994 = vsub.s32 %v2991, %v2993
        %v2995 = vrot.slane %v2981, %v2994
        %v2996 = vcombine.low %v2940, %v2972
        %v2997 = vcombine.high %v2940, %v2972
        %v2998 = vcombine.low %v2947, %v2979
        %v2999 = vcombine.high %v2947, %v2979
        %v3000 = vcombine.low %v2956, %v2988
        %v3001 = vcombine.high %v2956, %v2988
        %v3002 = vcombine.low %v2963, %v2995
        %v3003 = vcombine.high %v2963, %v2995
        %3005 = vrot.lane.b32.xlu0 %v2861, 16
        %v3006 = vpop.permute.xlu0 %3005
        %3009 = vrot.lane.b32.xlu0 %v2862, 32
        %v3010 = vpop.permute.xlu0 %3009
        %3013 = vrot.lane.b32.xlu0 %v2863, 48
        %v3014 = vpop.permute.xlu0 %3013
        %3017 = vrot.lane.b32.xlu0 %v2864, 64
        %v3018 = vpop.permute.xlu0 %3017
        %3021 = vrot.lane.b32.xlu0 %v2865, 80
        %v3022 = vpop.permute.xlu0 %3021
        %3025 = vrot.lane.b32.xlu0 %v2866, 96
        %v3026 = vpop.permute.xlu0 %3025
        %3029 = vrot.lane.b32.xlu0 %v2867, 112
        %v3030 = vpop.permute.xlu0 %3029
        %3033 = vrot.lane.b32.xlu0 %v2997, 16
        %v3034 = vpop.permute.xlu0 %3033
        %3037 = vrot.lane.b32.xlu0 %v2998, 32
        %v3038 = vpop.permute.xlu0 %3037
        %3041 = vrot.lane.b32.xlu0 %v2999, 48
        %v3042 = vpop.permute.xlu0 %3041
        %3045 = vrot.lane.b32.xlu0 %v3000, 64
        %v3046 = vpop.permute.xlu0 %3045
        %3049 = vrot.lane.b32.xlu0 %v3001, 80
        %v3050 = vpop.permute.xlu0 %3049
        %3053 = vrot.lane.b32.xlu0 %v3002, 96
        %v3054 = vpop.permute.xlu0 %3053
        %3057 = vrot.lane.b32.xlu0 %v3003, 112
        %v3058 = vpop.permute.xlu0 %3057
        %v3060 = vsel %vm637, %v2860, %v3006
        %v3061 = vsel %vm639, %v3060, %v3010
        %v3062 = vsel %vm641, %v3061, %v3014
        %v3063 = vsel %vm643, %v3062, %v3018
        %v3064 = vsel %vm645, %v3063, %v3022
        %v3065 = vsel %vm647, %v3064, %v3026
        %v3066 = vsel %vm649, %v3065, %v3030
        %v3067 = vsel %vm637, %v2996, %v3034
        %v3068 = vsel %vm639, %v3067, %v3038
        %v3069 = vsel %vm641, %v3068, %v3042
        %v3070 = vsel %vm643, %v3069, %v3046
        %v3071 = vsel %vm645, %v3070, %v3050
        %v3072 = vsel %vm647, %v3071, %v3054
        %v3073 = vsel %vm649, %v3072, %v3058
        %3074 = vst [vmem:[#allocation2 + $0x60] sm:$0xff] %v3066
        %3075 = vst [vmem:[#allocation2 + $0x68] sm:$0xff] %v3073
        %v3076 = vld [vmem:[%s250 + $0x2] sm:$0xff]
        %v3077 = vld [vmem:[%s250 + $0xa] sm:$0xff]
        %v3078 = vld [vmem:[%s250 + $0x1a] sm:$0xff]
        %v3079 = vld [vmem:[%s250 + $0x22] sm:$0xff]
        %v3080 = vld [vmem:[%s250 + $0x32] sm:$0xff]
        %v3081 = vld [vmem:[%s250 + $0x3a] sm:$0xff]
        %v3082 = vld [vmem:[%s250 + $0x4a] sm:$0xff]
        %v3083 = vld [vmem:[%s250 + $0x52] sm:$0xff]
        %v3084 = vld [vmem:[%s250 + $0x62] sm:$0xff]
        %v3085 = vld [vmem:[%s250 + $0x6a] sm:$0xff]
        %v3086 = vld [vmem:[%s250 + $0x7a] sm:$0xff]
        %v3087 = vld [vmem:[%s250 + $0x82] sm:$0xff]
        %v3088 = vld [vmem:[%s250 + $0x92] sm:$0xff]
        %v3089 = vld [vmem:[%s250 + $0x9a] sm:$0xff]
        %v3090 = vld [vmem:[%s250 + $0xaa] sm:$0xff]
        %v3091 = vld [vmem:[%s250 + $0xb2] sm:$0xff]
        %3108 = vrot.lane.b32.xlu0 %v3076, 127
        %v3109 = vpop.permute.xlu0 %3108
        %3110 = vrot.lane.b32.xlu0 %v3077, 127
        %v3111 = vpop.permute.xlu0 %3110
        %3112 = vrot.lane.b32.xlu0 %v3078, 127
        %v3113 = vpop.permute.xlu0 %3112
        %3114 = vrot.lane.b32.xlu0 %v3079, 127
        %v3115 = vpop.permute.xlu0 %3114
        %3116 = vrot.lane.b32.xlu0 %v3080, 127
        %v3117 = vpop.permute.xlu0 %3116
        %3118 = vrot.lane.b32.xlu0 %v3081, 127
        %v3119 = vpop.permute.xlu0 %3118
        %3120 = vrot.lane.b32.xlu0 %v3082, 127
        %v3121 = vpop.permute.xlu0 %3120
        %3122 = vrot.lane.b32.xlu0 %v3083, 127
        %v3123 = vpop.permute.xlu0 %3122
        %3124 = vrot.lane.b32.xlu0 %v3084, 127
        %v3125 = vpop.permute.xlu0 %3124
        %3126 = vrot.lane.b32.xlu0 %v3085, 127
        %v3127 = vpop.permute.xlu0 %3126
        %3128 = vrot.lane.b32.xlu0 %v3086, 127
        %v3129 = vpop.permute.xlu0 %3128
        %3130 = vrot.lane.b32.xlu0 %v3087, 127
        %v3131 = vpop.permute.xlu0 %3130
        %3132 = vrot.lane.b32.xlu0 %v3088, 127
        %v3133 = vpop.permute.xlu0 %3132
        %3134 = vrot.lane.b32.xlu0 %v3089, 127
        %v3135 = vpop.permute.xlu0 %3134
        %3136 = vrot.lane.b32.xlu0 %v3090, 127
        %v3137 = vpop.permute.xlu0 %3136
        %3138 = vrot.lane.b32.xlu0 %v3091, 127
        %v3139 = vpop.permute.xlu0 %3138
        %v3156 = vcombine.low %v3109, %v3117
        %v3157 = vcombine.high %v3109, %v3117
        %v3159 = vunpack.c.l.s4 1983009808
        %v3160 = vunpack.c.0.s8 %v3159
        %v3161 = vlaneseq
        %v3162 = vshrl.u32 %v3161, 7
        %v3163 = vsub.s32 %v3160, %v3162
        %v3164 = vrot.slane %v3156, %v3163
        %v3166 = vunpack.c.l.s4 1983009808
        %v3167 = vunpack.c.0.s8 %v3166
        %v3168 = vlaneseq
        %v3169 = vshrl.u32 %v3168, 7
        %v3170 = vsub.s32 %v3167, %v3169
        %v3171 = vrot.slane %v3157, %v3170
        %v3172 = vcombine.low %v3113, %v3121
        %v3173 = vcombine.high %v3113, %v3121
        %v3175 = vunpack.c.l.s4 1983009808
        %v3176 = vunpack.c.0.s8 %v3175
        %v3177 = vlaneseq
        %v3178 = vshrl.u32 %v3177, 7
        %v3179 = vsub.s32 %v3176, %v3178
        %v3180 = vrot.slane %v3172, %v3179
        %v3182 = vunpack.c.l.s4 1983009808
        %v3183 = vunpack.c.0.s8 %v3182
        %v3184 = vlaneseq
        %v3185 = vshrl.u32 %v3184, 7
        %v3186 = vsub.s32 %v3183, %v3185
        %v3187 = vrot.slane %v3173, %v3186
        %v3188 = vcombine.low %v3125, %v3133
        %v3189 = vcombine.high %v3125, %v3133
        %v3191 = vunpack.c.l.s4 1983009808
        %v3192 = vunpack.c.0.s8 %v3191
        %v3193 = vlaneseq
        %v3194 = vshrl.u32 %v3193, 7
        %v3195 = vsub.s32 %v3192, %v3194
        %v3196 = vrot.slane %v3188, %v3195
        %v3198 = vunpack.c.l.s4 1983009808
        %v3199 = vunpack.c.0.s8 %v3198
        %v3200 = vlaneseq
        %v3201 = vshrl.u32 %v3200, 7
        %v3202 = vsub.s32 %v3199, %v3201
        %v3203 = vrot.slane %v3189, %v3202
        %v3204 = vcombine.low %v3129, %v3137
        %v3205 = vcombine.high %v3129, %v3137
        %v3207 = vunpack.c.l.s4 1983009808
        %v3208 = vunpack.c.0.s8 %v3207
        %v3209 = vlaneseq
        %v3210 = vshrl.u32 %v3209, 7
        %v3211 = vsub.s32 %v3208, %v3210
        %v3212 = vrot.slane %v3204, %v3211
        %v3214 = vunpack.c.l.s4 1983009808
        %v3215 = vunpack.c.0.s8 %v3214
        %v3216 = vlaneseq
        %v3217 = vshrl.u32 %v3216, 7
        %v3218 = vsub.s32 %v3215, %v3217
        %v3219 = vrot.slane %v3205, %v3218
        %v3220 = vcombine.low %v3164, %v3180
        %v3221 = vcombine.high %v3164, %v3180
        %v3223 = vunpack.c.l.s4 1934713408
        %v3224 = vunpack.c.0.s8 %v3223
        %v3225 = vlaneseq
        %v3226 = vshrl.u32 %v3225, 7
        %v3227 = vsub.s32 %v3224, %v3226
        %v3228 = vrot.slane %v3220, %v3227
        %v3230 = vunpack.c.l.s4 1934713408
        %v3231 = vunpack.c.0.s8 %v3230
        %v3232 = vlaneseq
        %v3233 = vshrl.u32 %v3232, 7
        %v3234 = vsub.s32 %v3231, %v3233
        %v3235 = vrot.slane %v3221, %v3234
        %v3236 = vcombine.low %v3171, %v3187
        %v3237 = vcombine.high %v3171, %v3187
        %v3239 = vunpack.c.l.s4 1934713408
        %v3240 = vunpack.c.0.s8 %v3239
        %v3241 = vlaneseq
        %v3242 = vshrl.u32 %v3241, 7
        %v3243 = vsub.s32 %v3240, %v3242
        %v3244 = vrot.slane %v3236, %v3243
        %v3246 = vunpack.c.l.s4 1934713408
        %v3247 = vunpack.c.0.s8 %v3246
        %v3248 = vlaneseq
        %v3249 = vshrl.u32 %v3248, 7
        %v3250 = vsub.s32 %v3247, %v3249
        %v3251 = vrot.slane %v3237, %v3250
        %v3252 = vcombine.low %v3196, %v3212
        %v3253 = vcombine.high %v3196, %v3212
        %v3255 = vunpack.c.l.s4 1934713408
        %v3256 = vunpack.c.0.s8 %v3255
        %v3257 = vlaneseq
        %v3258 = vshrl.u32 %v3257, 7
        %v3259 = vsub.s32 %v3256, %v3258
        %v3260 = vrot.slane %v3252, %v3259
        %v3262 = vunpack.c.l.s4 1934713408
        %v3263 = vunpack.c.0.s8 %v3262
        %v3264 = vlaneseq
        %v3265 = vshrl.u32 %v3264, 7
        %v3266 = vsub.s32 %v3263, %v3265
        %v3267 = vrot.slane %v3253, %v3266
        %v3268 = vcombine.low %v3203, %v3219
        %v3269 = vcombine.high %v3203, %v3219
        %v3271 = vunpack.c.l.s4 1934713408
        %v3272 = vunpack.c.0.s8 %v3271
        %v3273 = vlaneseq
        %v3274 = vshrl.u32 %v3273, 7
        %v3275 = vsub.s32 %v3272, %v3274
        %v3276 = vrot.slane %v3268, %v3275
        %v3278 = vunpack.c.l.s4 1934713408
        %v3279 = vunpack.c.0.s8 %v3278
        %v3280 = vlaneseq
        %v3281 = vshrl.u32 %v3280, 7
        %v3282 = vsub.s32 %v3279, %v3281
        %v3283 = vrot.slane %v3269, %v3282
        %v3284 = vcombine.low %v3228, %v3260
        %v3285 = vcombine.high %v3228, %v3260
        %v3286 = vcombine.low %v3235, %v3267
        %v3287 = vcombine.high %v3235, %v3267
        %v3288 = vcombine.low %v3244, %v3276
        %v3289 = vcombine.high %v3244, %v3276
        %v3290 = vcombine.low %v3251, %v3283
        %v3291 = vcombine.high %v3251, %v3283
        %v3292 = vcombine.low %v3111, %v3119
        %v3293 = vcombine.high %v3111, %v3119
        %v3295 = vunpack.c.l.s4 1983009808
        %v3296 = vunpack.c.0.s8 %v3295
        %v3297 = vlaneseq
        %v3298 = vshrl.u32 %v3297, 7
        %v3299 = vsub.s32 %v3296, %v3298
        %v3300 = vrot.slane %v3292, %v3299
        %v3302 = vunpack.c.l.s4 1983009808
        %v3303 = vunpack.c.0.s8 %v3302
        %v3304 = vlaneseq
        %v3305 = vshrl.u32 %v3304, 7
        %v3306 = vsub.s32 %v3303, %v3305
        %v3307 = vrot.slane %v3293, %v3306
        %v3308 = vcombine.low %v3115, %v3123
        %v3309 = vcombine.high %v3115, %v3123
        %v3311 = vunpack.c.l.s4 1983009808
        %v3312 = vunpack.c.0.s8 %v3311
        %v3313 = vlaneseq
        %v3314 = vshrl.u32 %v3313, 7
        %v3315 = vsub.s32 %v3312, %v3314
        %v3316 = vrot.slane %v3308, %v3315
        %v3318 = vunpack.c.l.s4 1983009808
        %v3319 = vunpack.c.0.s8 %v3318
        %v3320 = vlaneseq
        %v3321 = vshrl.u32 %v3320, 7
        %v3322 = vsub.s32 %v3319, %v3321
        %v3323 = vrot.slane %v3309, %v3322
        %v3324 = vcombine.low %v3127, %v3135
        %v3325 = vcombine.high %v3127, %v3135
        %v3327 = vunpack.c.l.s4 1983009808
        %v3328 = vunpack.c.0.s8 %v3327
        %v3329 = vlaneseq
        %v3330 = vshrl.u32 %v3329, 7
        %v3331 = vsub.s32 %v3328, %v3330
        %v3332 = vrot.slane %v3324, %v3331
        %v3334 = vunpack.c.l.s4 1983009808
        %v3335 = vunpack.c.0.s8 %v3334
        %v3336 = vlaneseq
        %v3337 = vshrl.u32 %v3336, 7
        %v3338 = vsub.s32 %v3335, %v3337
        %v3339 = vrot.slane %v3325, %v3338
        %v3340 = vcombine.low %v3131, %v3139
        %v3341 = vcombine.high %v3131, %v3139
        %v3343 = vunpack.c.l.s4 1983009808
        %v3344 = vunpack.c.0.s8 %v3343
        %v3345 = vlaneseq
        %v3346 = vshrl.u32 %v3345, 7
        %v3347 = vsub.s32 %v3344, %v3346
        %v3348 = vrot.slane %v3340, %v3347
        %v3350 = vunpack.c.l.s4 1983009808
        %v3351 = vunpack.c.0.s8 %v3350
        %v3352 = vlaneseq
        %v3353 = vshrl.u32 %v3352, 7
        %v3354 = vsub.s32 %v3351, %v3353
        %v3355 = vrot.slane %v3341, %v3354
        %v3356 = vcombine.low %v3300, %v3316
        %v3357 = vcombine.high %v3300, %v3316
        %v3359 = vunpack.c.l.s4 1934713408
        %v3360 = vunpack.c.0.s8 %v3359
        %v3361 = vlaneseq
        %v3362 = vshrl.u32 %v3361, 7
        %v3363 = vsub.s32 %v3360, %v3362
        %v3364 = vrot.slane %v3356, %v3363
        %v3366 = vunpack.c.l.s4 1934713408
        %v3367 = vunpack.c.0.s8 %v3366
        %v3368 = vlaneseq
        %v3369 = vshrl.u32 %v3368, 7
        %v3370 = vsub.s32 %v3367, %v3369
        %v3371 = vrot.slane %v3357, %v3370
        %v3372 = vcombine.low %v3307, %v3323
        %v3373 = vcombine.high %v3307, %v3323
        %v3375 = vunpack.c.l.s4 1934713408
        %v3376 = vunpack.c.0.s8 %v3375
        %v3377 = vlaneseq
        %v3378 = vshrl.u32 %v3377, 7
        %v3379 = vsub.s32 %v3376, %v3378
        %v3380 = vrot.slane %v3372, %v3379
        %v3382 = vunpack.c.l.s4 1934713408
        %v3383 = vunpack.c.0.s8 %v3382
        %v3384 = vlaneseq
        %v3385 = vshrl.u32 %v3384, 7
        %v3386 = vsub.s32 %v3383, %v3385
        %v3387 = vrot.slane %v3373, %v3386
        %v3388 = vcombine.low %v3332, %v3348
        %v3389 = vcombine.high %v3332, %v3348
        %v3391 = vunpack.c.l.s4 1934713408
        %v3392 = vunpack.c.0.s8 %v3391
        %v3393 = vlaneseq
        %v3394 = vshrl.u32 %v3393, 7
        %v3395 = vsub.s32 %v3392, %v3394
        %v3396 = vrot.slane %v3388, %v3395
        %v3398 = vunpack.c.l.s4 1934713408
        %v3399 = vunpack.c.0.s8 %v3398
        %v3400 = vlaneseq
        %v3401 = vshrl.u32 %v3400, 7
        %v3402 = vsub.s32 %v3399, %v3401
        %v3403 = vrot.slane %v3389, %v3402
        %v3404 = vcombine.low %v3339, %v3355
        %v3405 = vcombine.high %v3339, %v3355
        %v3407 = vunpack.c.l.s4 1934713408
        %v3408 = vunpack.c.0.s8 %v3407
        %v3409 = vlaneseq
        %v3410 = vshrl.u32 %v3409, 7
        %v3411 = vsub.s32 %v3408, %v3410
        %v3412 = vrot.slane %v3404, %v3411
        %v3414 = vunpack.c.l.s4 1934713408
        %v3415 = vunpack.c.0.s8 %v3414
        %v3416 = vlaneseq
        %v3417 = vshrl.u32 %v3416, 7
        %v3418 = vsub.s32 %v3415, %v3417
        %v3419 = vrot.slane %v3405, %v3418
        %v3420 = vcombine.low %v3364, %v3396
        %v3421 = vcombine.high %v3364, %v3396
        %v3422 = vcombine.low %v3371, %v3403
        %v3423 = vcombine.high %v3371, %v3403
        %v3424 = vcombine.low %v3380, %v3412
        %v3425 = vcombine.high %v3380, %v3412
        %v3426 = vcombine.low %v3387, %v3419
        %v3427 = vcombine.high %v3387, %v3419
        %3429 = vrot.lane.b32.xlu0 %v3285, 16
        %v3430 = vpop.permute.xlu0 %3429
        %3433 = vrot.lane.b32.xlu0 %v3286, 32
        %v3434 = vpop.permute.xlu0 %3433
        %3437 = vrot.lane.b32.xlu0 %v3287, 48
        %v3438 = vpop.permute.xlu0 %3437
        %3441 = vrot.lane.b32.xlu0 %v3288, 64
        %v3442 = vpop.permute.xlu0 %3441
        %3445 = vrot.lane.b32.xlu0 %v3289, 80
        %v3446 = vpop.permute.xlu0 %3445
        %3449 = vrot.lane.b32.xlu0 %v3290, 96
        %v3450 = vpop.permute.xlu0 %3449
        %3453 = vrot.lane.b32.xlu0 %v3291, 112
        %v3454 = vpop.permute.xlu0 %3453
        %3457 = vrot.lane.b32.xlu0 %v3421, 16
        %v3458 = vpop.permute.xlu0 %3457
        %3461 = vrot.lane.b32.xlu0 %v3422, 32
        %v3462 = vpop.permute.xlu0 %3461
        %3465 = vrot.lane.b32.xlu0 %v3423, 48
        %v3466 = vpop.permute.xlu0 %3465
        %3469 = vrot.lane.b32.xlu0 %v3424, 64
        %v3470 = vpop.permute.xlu0 %3469
        %3473 = vrot.lane.b32.xlu0 %v3425, 80
        %v3474 = vpop.permute.xlu0 %3473
        %3477 = vrot.lane.b32.xlu0 %v3426, 96
        %v3478 = vpop.permute.xlu0 %3477
        %3481 = vrot.lane.b32.xlu0 %v3427, 112
        %v3482 = vpop.permute.xlu0 %3481
        %v3484 = vsel %vm637, %v3284, %v3430
        %v3485 = vsel %vm639, %v3484, %v3434
        %v3486 = vsel %vm641, %v3485, %v3438
        %v3487 = vsel %vm643, %v3486, %v3442
        %v3488 = vsel %vm645, %v3487, %v3446
        %v3489 = vsel %vm647, %v3488, %v3450
        %v3490 = vsel %vm649, %v3489, %v3454
        %v3491 = vsel %vm637, %v3420, %v3458
        %v3492 = vsel %vm639, %v3491, %v3462
        %v3493 = vsel %vm641, %v3492, %v3466
        %v3494 = vsel %vm643, %v3493, %v3470
        %v3495 = vsel %vm645, %v3494, %v3474
        %v3496 = vsel %vm647, %v3495, %v3478
        %v3497 = vsel %vm649, %v3496, %v3482
        %3498 = vst [vmem:[#allocation2 + $0x70] sm:$0xff] %v3490
        %3499 = vst [vmem:[#allocation2 + $0x78] sm:$0xff] %v3497
        %v3500 = vld [vmem:[%s250 + $0x2] sm:$0xff]
        %v3501 = vld [vmem:[%s250 + $0xa] sm:$0xff]
        %v3502 = vld [vmem:[%s250 + $0x1a] sm:$0xff]
        %v3503 = vld [vmem:[%s250 + $0x22] sm:$0xff]
        %v3504 = vld [vmem:[%s250 + $0x32] sm:$0xff]
        %v3505 = vld [vmem:[%s250 + $0x3a] sm:$0xff]
        %v3506 = vld [vmem:[%s250 + $0x4a] sm:$0xff]
        %v3507 = vld [vmem:[%s250 + $0x52] sm:$0xff]
        %v3508 = vld [vmem:[%s250 + $0x62] sm:$0xff]
        %v3509 = vld [vmem:[%s250 + $0x6a] sm:$0xff]
        %v3510 = vld [vmem:[%s250 + $0x7a] sm:$0xff]
        %v3511 = vld [vmem:[%s250 + $0x82] sm:$0xff]
        %v3512 = vld [vmem:[%s250 + $0x92] sm:$0xff]
        %v3513 = vld [vmem:[%s250 + $0x9a] sm:$0xff]
        %v3514 = vld [vmem:[%s250 + $0xaa] sm:$0xff]
        %v3515 = vld [vmem:[%s250 + $0xb2] sm:$0xff]
        %3532 = vrot.lane.b32.xlu0 %v3500, 126
        %v3533 = vpop.permute.xlu0 %3532
        %3534 = vrot.lane.b32.xlu0 %v3501, 126
        %v3535 = vpop.permute.xlu0 %3534
        %3536 = vrot.lane.b32.xlu0 %v3502, 126
        %v3537 = vpop.permute.xlu0 %3536
        %3538 = vrot.lane.b32.xlu0 %v3503, 126
        %v3539 = vpop.permute.xlu0 %3538
        %3540 = vrot.lane.b32.xlu0 %v3504, 126
        %v3541 = vpop.permute.xlu0 %3540
        %3542 = vrot.lane.b32.xlu0 %v3505, 126
        %v3543 = vpop.permute.xlu0 %3542
        %3544 = vrot.lane.b32.xlu0 %v3506, 126
        %v3545 = vpop.permute.xlu0 %3544
        %3546 = vrot.lane.b32.xlu0 %v3507, 126
        %v3547 = vpop.permute.xlu0 %3546
        %3548 = vrot.lane.b32.xlu0 %v3508, 126
        %v3549 = vpop.permute.xlu0 %3548
        %3550 = vrot.lane.b32.xlu0 %v3509, 126
        %v3551 = vpop.permute.xlu0 %3550
        %3552 = vrot.lane.b32.xlu0 %v3510, 126
        %v3553 = vpop.permute.xlu0 %3552
        %3554 = vrot.lane.b32.xlu0 %v3511, 126
        %v3555 = vpop.permute.xlu0 %3554
        %3556 = vrot.lane.b32.xlu0 %v3512, 126
        %v3557 = vpop.permute.xlu0 %3556
        %3558 = vrot.lane.b32.xlu0 %v3513, 126
        %v3559 = vpop.permute.xlu0 %3558
        %3560 = vrot.lane.b32.xlu0 %v3514, 126
        %v3561 = vpop.permute.xlu0 %3560
        %3562 = vrot.lane.b32.xlu0 %v3515, 126
        %v3563 = vpop.permute.xlu0 %3562
        %v3580 = vcombine.low %v3533, %v3541
        %v3581 = vcombine.high %v3533, %v3541
        %v3583 = vunpack.c.l.s4 1983009808
        %v3584 = vunpack.c.0.s8 %v3583
        %v3585 = vlaneseq
        %v3586 = vshrl.u32 %v3585, 7
        %v3587 = vsub.s32 %v3584, %v3586
        %v3588 = vrot.slane %v3580, %v3587
        %v3590 = vunpack.c.l.s4 1983009808
        %v3591 = vunpack.c.0.s8 %v3590
        %v3592 = vlaneseq
        %v3593 = vshrl.u32 %v3592, 7
        %v3594 = vsub.s32 %v3591, %v3593
        %v3595 = vrot.slane %v3581, %v3594
        %v3596 = vcombine.low %v3537, %v3545
        %v3597 = vcombine.high %v3537, %v3545
        %v3599 = vunpack.c.l.s4 1983009808
        %v3600 = vunpack.c.0.s8 %v3599
        %v3601 = vlaneseq
        %v3602 = vshrl.u32 %v3601, 7
        %v3603 = vsub.s32 %v3600, %v3602
        %v3604 = vrot.slane %v3596, %v3603
        %v3606 = vunpack.c.l.s4 1983009808
        %v3607 = vunpack.c.0.s8 %v3606
        %v3608 = vlaneseq
        %v3609 = vshrl.u32 %v3608, 7
        %v3610 = vsub.s32 %v3607, %v3609
        %v3611 = vrot.slane %v3597, %v3610
        %v3612 = vcombine.low %v3549, %v3557
        %v3613 = vcombine.high %v3549, %v3557
        %v3615 = vunpack.c.l.s4 1983009808
        %v3616 = vunpack.c.0.s8 %v3615
        %v3617 = vlaneseq
        %v3618 = vshrl.u32 %v3617, 7
        %v3619 = vsub.s32 %v3616, %v3618
        %v3620 = vrot.slane %v3612, %v3619
        %v3622 = vunpack.c.l.s4 1983009808
        %v3623 = vunpack.c.0.s8 %v3622
        %v3624 = vlaneseq
        %v3625 = vshrl.u32 %v3624, 7
        %v3626 = vsub.s32 %v3623, %v3625
        %v3627 = vrot.slane %v3613, %v3626
        %v3628 = vcombine.low %v3553, %v3561
        %v3629 = vcombine.high %v3553, %v3561
        %v3631 = vunpack.c.l.s4 1983009808
        %v3632 = vunpack.c.0.s8 %v3631
        %v3633 = vlaneseq
        %v3634 = vshrl.u32 %v3633, 7
        %v3635 = vsub.s32 %v3632, %v3634
        %v3636 = vrot.slane %v3628, %v3635
        %v3638 = vunpack.c.l.s4 1983009808
        %v3639 = vunpack.c.0.s8 %v3638
        %v3640 = vlaneseq
        %v3641 = vshrl.u32 %v3640, 7
        %v3642 = vsub.s32 %v3639, %v3641
        %v3643 = vrot.slane %v3629, %v3642
        %v3644 = vcombine.low %v3588, %v3604
        %v3645 = vcombine.high %v3588, %v3604
        %v3647 = vunpack.c.l.s4 1934713408
        %v3648 = vunpack.c.0.s8 %v3647
        %v3649 = vlaneseq
        %v3650 = vshrl.u32 %v3649, 7
        %v3651 = vsub.s32 %v3648, %v3650
        %v3652 = vrot.slane %v3644, %v3651
        %v3654 = vunpack.c.l.s4 1934713408
        %v3655 = vunpack.c.0.s8 %v3654
        %v3656 = vlaneseq
        %v3657 = vshrl.u32 %v3656, 7
        %v3658 = vsub.s32 %v3655, %v3657
        %v3659 = vrot.slane %v3645, %v3658
        %v3660 = vcombine.low %v3595, %v3611
        %v3661 = vcombine.high %v3595, %v3611
        %v3663 = vunpack.c.l.s4 1934713408
        %v3664 = vunpack.c.0.s8 %v3663
        %v3665 = vlaneseq
        %v3666 = vshrl.u32 %v3665, 7
        %v3667 = vsub.s32 %v3664, %v3666
        %v3668 = vrot.slane %v3660, %v3667
        %v3670 = vunpack.c.l.s4 1934713408
        %v3671 = vunpack.c.0.s8 %v3670
        %v3672 = vlaneseq
        %v3673 = vshrl.u32 %v3672, 7
        %v3674 = vsub.s32 %v3671, %v3673
        %v3675 = vrot.slane %v3661, %v3674
        %v3676 = vcombine.low %v3620, %v3636
        %v3677 = vcombine.high %v3620, %v3636
        %v3679 = vunpack.c.l.s4 1934713408
        %v3680 = vunpack.c.0.s8 %v3679
        %v3681 = vlaneseq
        %v3682 = vshrl.u32 %v3681, 7
        %v3683 = vsub.s32 %v3680, %v3682
        %v3684 = vrot.slane %v3676, %v3683
        %v3686 = vunpack.c.l.s4 1934713408
        %v3687 = vunpack.c.0.s8 %v3686
        %v3688 = vlaneseq
        %v3689 = vshrl.u32 %v3688, 7
        %v3690 = vsub.s32 %v3687, %v3689
        %v3691 = vrot.slane %v3677, %v3690
        %v3692 = vcombine.low %v3627, %v3643
        %v3693 = vcombine.high %v3627, %v3643
        %v3695 = vunpack.c.l.s4 1934713408
        %v3696 = vunpack.c.0.s8 %v3695
        %v3697 = vlaneseq
        %v3698 = vshrl.u32 %v3697, 7
        %v3699 = vsub.s32 %v3696, %v3698
        %v3700 = vrot.slane %v3692, %v3699
        %v3702 = vunpack.c.l.s4 1934713408
        %v3703 = vunpack.c.0.s8 %v3702
        %v3704 = vlaneseq
        %v3705 = vshrl.u32 %v3704, 7
        %v3706 = vsub.s32 %v3703, %v3705
        %v3707 = vrot.slane %v3693, %v3706
        %v3708 = vcombine.low %v3652, %v3684
        %v3709 = vcombine.high %v3652, %v3684
        %v3710 = vcombine.low %v3659, %v3691
        %v3711 = vcombine.high %v3659, %v3691
        %v3712 = vcombine.low %v3668, %v3700
        %v3713 = vcombine.high %v3668, %v3700
        %v3714 = vcombine.low %v3675, %v3707
        %v3715 = vcombine.high %v3675, %v3707
        %v3716 = vcombine.low %v3535, %v3543
        %v3717 = vcombine.high %v3535, %v3543
        %v3719 = vunpack.c.l.s4 1983009808
        %v3720 = vunpack.c.0.s8 %v3719
        %v3721 = vlaneseq
        %v3722 = vshrl.u32 %v3721, 7
        %v3723 = vsub.s32 %v3720, %v3722
        %v3724 = vrot.slane %v3716, %v3723
        %v3726 = vunpack.c.l.s4 1983009808
        %v3727 = vunpack.c.0.s8 %v3726
        %v3728 = vlaneseq
        %v3729 = vshrl.u32 %v3728, 7
        %v3730 = vsub.s32 %v3727, %v3729
        %v3731 = vrot.slane %v3717, %v3730
        %v3732 = vcombine.low %v3539, %v3547
        %v3733 = vcombine.high %v3539, %v3547
        %v3735 = vunpack.c.l.s4 1983009808
        %v3736 = vunpack.c.0.s8 %v3735
        %v3737 = vlaneseq
        %v3738 = vshrl.u32 %v3737, 7
        %v3739 = vsub.s32 %v3736, %v3738
        %v3740 = vrot.slane %v3732, %v3739
        %v3742 = vunpack.c.l.s4 1983009808
        %v3743 = vunpack.c.0.s8 %v3742
        %v3744 = vlaneseq
        %v3745 = vshrl.u32 %v3744, 7
        %v3746 = vsub.s32 %v3743, %v3745
        %v3747 = vrot.slane %v3733, %v3746
        %v3748 = vcombine.low %v3551, %v3559
        %v3749 = vcombine.high %v3551, %v3559
        %v3751 = vunpack.c.l.s4 1983009808
        %v3752 = vunpack.c.0.s8 %v3751
        %v3753 = vlaneseq
        %v3754 = vshrl.u32 %v3753, 7
        %v3755 = vsub.s32 %v3752, %v3754
        %v3756 = vrot.slane %v3748, %v3755
        %v3758 = vunpack.c.l.s4 1983009808
        %v3759 = vunpack.c.0.s8 %v3758
        %v3760 = vlaneseq
        %v3761 = vshrl.u32 %v3760, 7
        %v3762 = vsub.s32 %v3759, %v3761
        %v3763 = vrot.slane %v3749, %v3762
        %v3764 = vcombine.low %v3555, %v3563
        %v3765 = vcombine.high %v3555, %v3563
        %v3767 = vunpack.c.l.s4 1983009808
        %v3768 = vunpack.c.0.s8 %v3767
        %v3769 = vlaneseq
        %v3770 = vshrl.u32 %v3769, 7
        %v3771 = vsub.s32 %v3768, %v3770
        %v3772 = vrot.slane %v3764, %v3771
        %v3774 = vunpack.c.l.s4 1983009808
        %v3775 = vunpack.c.0.s8 %v3774
        %v3776 = vlaneseq
        %v3777 = vshrl.u32 %v3776, 7
        %v3778 = vsub.s32 %v3775, %v3777
        %v3779 = vrot.slane %v3765, %v3778
        %v3780 = vcombine.low %v3724, %v3740
        %v3781 = vcombine.high %v3724, %v3740
        %v3783 = vunpack.c.l.s4 1934713408
        %v3784 = vunpack.c.0.s8 %v3783
        %v3785 = vlaneseq
        %v3786 = vshrl.u32 %v3785, 7
        %v3787 = vsub.s32 %v3784, %v3786
        %v3788 = vrot.slane %v3780, %v3787
        %v3790 = vunpack.c.l.s4 1934713408
        %v3791 = vunpack.c.0.s8 %v3790
        %v3792 = vlaneseq
        %v3793 = vshrl.u32 %v3792, 7
        %v3794 = vsub.s32 %v3791, %v3793
        %v3795 = vrot.slane %v3781, %v3794
        %v3796 = vcombine.low %v3731, %v3747
        %v3797 = vcombine.high %v3731, %v3747
        %v3799 = vunpack.c.l.s4 1934713408
        %v3800 = vunpack.c.0.s8 %v3799
        %v3801 = vlaneseq
        %v3802 = vshrl.u32 %v3801, 7
        %v3803 = vsub.s32 %v3800, %v3802
        %v3804 = vrot.slane %v3796, %v3803
        %v3806 = vunpack.c.l.s4 1934713408
        %v3807 = vunpack.c.0.s8 %v3806
        %v3808 = vlaneseq
        %v3809 = vshrl.u32 %v3808, 7
        %v3810 = vsub.s32 %v3807, %v3809
        %v3811 = vrot.slane %v3797, %v3810
        %v3812 = vcombine.low %v3756, %v3772
        %v3813 = vcombine.high %v3756, %v3772
        %v3815 = vunpack.c.l.s4 1934713408
        %v3816 = vunpack.c.0.s8 %v3815
        %v3817 = vlaneseq
        %v3818 = vshrl.u32 %v3817, 7
        %v3819 = vsub.s32 %v3816, %v3818
        %v3820 = vrot.slane %v3812, %v3819
        %v3822 = vunpack.c.l.s4 1934713408
        %v3823 = vunpack.c.0.s8 %v3822
        %v3824 = vlaneseq
        %v3825 = vshrl.u32 %v3824, 7
        %v3826 = vsub.s32 %v3823, %v3825
        %v3827 = vrot.slane %v3813, %v3826
        %v3828 = vcombine.low %v3763, %v3779
        %v3829 = vcombine.high %v3763, %v3779
        %v3831 = vunpack.c.l.s4 1934713408
        %v3832 = vunpack.c.0.s8 %v3831
        %v3833 = vlaneseq
        %v3834 = vshrl.u32 %v3833, 7
        %v3835 = vsub.s32 %v3832, %v3834
        %v3836 = vrot.slane %v3828, %v3835
        %v3838 = vunpack.c.l.s4 1934713408
        %v3839 = vunpack.c.0.s8 %v3838
        %v3840 = vlaneseq
        %v3841 = vshrl.u32 %v3840, 7
        %v3842 = vsub.s32 %v3839, %v3841
        %v3843 = vrot.slane %v3829, %v3842
        %v3844 = vcombine.low %v3788, %v3820
        %v3845 = vcombine.high %v3788, %v3820
        %v3846 = vcombine.low %v3795, %v3827
        %v3847 = vcombine.high %v3795, %v3827
        %v3848 = vcombine.low %v3804, %v3836
        %v3849 = vcombine.high %v3804, %v3836
        %v3850 = vcombine.low %v3811, %v3843
        %v3851 = vcombine.high %v3811, %v3843
        %3853 = vrot.lane.b32.xlu0 %v3709, 16
        %v3854 = vpop.permute.xlu0 %3853
        %3857 = vrot.lane.b32.xlu0 %v3710, 32
        %v3858 = vpop.permute.xlu0 %3857
        %3861 = vrot.lane.b32.xlu0 %v3711, 48
        %v3862 = vpop.permute.xlu0 %3861
        %3865 = vrot.lane.b32.xlu0 %v3712, 64
        %v3866 = vpop.permute.xlu0 %3865
        %3869 = vrot.lane.b32.xlu0 %v3713, 80
        %v3870 = vpop.permute.xlu0 %3869
        %3873 = vrot.lane.b32.xlu0 %v3714, 96
        %v3874 = vpop.permute.xlu0 %3873
        %3877 = vrot.lane.b32.xlu0 %v3715, 112
        %v3878 = vpop.permute.xlu0 %3877
        %3881 = vrot.lane.b32.xlu0 %v3845, 16
        %v3882 = vpop.permute.xlu0 %3881
        %3885 = vrot.lane.b32.xlu0 %v3846, 32
        %v3886 = vpop.permute.xlu0 %3885
        %3889 = vrot.lane.b32.xlu0 %v3847, 48
        %v3890 = vpop.permute.xlu0 %3889
        %3893 = vrot.lane.b32.xlu0 %v3848, 64
        %v3894 = vpop.permute.xlu0 %3893
        %3897 = vrot.lane.b32.xlu0 %v3849, 80
        %v3898 = vpop.permute.xlu0 %3897
        %3901 = vrot.lane.b32.xlu0 %v3850, 96
        %v3902 = vpop.permute.xlu0 %3901
        %3905 = vrot.lane.b32.xlu0 %v3851, 112
        %v3906 = vpop.permute.xlu0 %3905
        %v3908 = vsel %vm637, %v3708, %v3854
        %v3909 = vsel %vm639, %v3908, %v3858
        %v3910 = vsel %vm641, %v3909, %v3862
        %v3911 = vsel %vm643, %v3910, %v3866
        %v3912 = vsel %vm645, %v3911, %v3870
        %v3913 = vsel %vm647, %v3912, %v3874
        %v3914 = vsel %vm649, %v3913, %v3878
        %v3915 = vsel %vm637, %v3844, %v3882
        %v3916 = vsel %vm639, %v3915, %v3886
        %v3917 = vsel %vm641, %v3916, %v3890
        %v3918 = vsel %vm643, %v3917, %v3894
        %v3919 = vsel %vm645, %v3918, %v3898
        %v3920 = vsel %vm647, %v3919, %v3902
        %v3921 = vsel %vm649, %v3920, %v3906
        %3922 = vst [vmem:[#allocation2 + $0x80] sm:$0xff] %v3914
        %3923 = vst [vmem:[#allocation2 + $0x88] sm:$0xff] %v3921
        %v3924 = vld [vmem:[#allocation8] sm:$0xff]
        %v3925 = vld [vmem:[#allocation2] sm:$0xff]
        %v3926 = vld [vmem:[#allocation2 + $0x8] sm:$0xff]
        %v3927 = vld [vmem:[#allocation2 + $0x10] sm:$0xff]
        %v3928 = vld [vmem:[#allocation2 + $0x18] sm:$0xff]
        %v3929 = vld [vmem:[#allocation2 + $0x20] sm:$0xff]
        %v3930 = vld [vmem:[#allocation2 + $0x28] sm:$0xff]
        %v3931 = vld [vmem:[#allocation2 + $0x30] sm:$0xff]
        %v3932 = vld [vmem:[#allocation2 + $0x38] sm:$0xff]
        %v3933 = vld [vmem:[#allocation2 + $0x40] sm:$0xff]
        %v3934 = vld [vmem:[#allocation2 + $0x48] sm:$0xff]
        %v3935 = vld [vmem:[#allocation2 + $0x50] sm:$0xff]
        %v3936 = vld [vmem:[#allocation2 + $0x58] sm:$0xff]
        %v3937 = vld [vmem:[#allocation2 + $0x60] sm:$0xff]
        %v3938 = vld [vmem:[#allocation2 + $0x68] sm:$0xff]
        %v3939 = vld [vmem:[#allocation2 + $0x70] sm:$0xff]
        %v3940 = vld [vmem:[#allocation2 + $0x78] sm:$0xff]
        %v3941 = vld [vmem:[#allocation2 + $0x80] sm:$0xff]
        %v3942 = vld [vmem:[#allocation2 + $0x88] sm:$0xff]
        %v3943 = vld [vmem:[#allocation10] sm:$0xff]
        %3945 = vset.pattern.permute.xlu0 0
        %3946 = vperm.xlu0 %3945, %v3943
        %v3947 = vpop.permute.xlu0 %3946
        %vm3949 = vcmask 588800
        %v3951 = vsel %vm3949, %v3924, 0
        %3953 = vmatprep.subr.mxu0 %v3926
        %3954 = vmatpush1.msra.mxu0 %v3925
        %3955 = vmatprep.subr.mxu0 %v3928
        %3956 = vmatpush1.msra.mxu0 %v3927
        %3957 = vmatprep.subr.mxu0 %v3930
        %3958 = vmatpush1.msra.mxu0 %v3929
        %3959 = vmatprep.subr.mxu0 %v3932
        %3960 = vmatpush1.msra.mxu0 %v3931
        %3961 = vmatprep.subr.mxu0 %v3934
        %3962 = vmatpush1.msra.mxu0 %v3933
        %3963 = vmatprep.subr.mxu0 %v3936
        %3964 = vmatpush1.msra.mxu0 %v3935
        %3965 = vmatprep.subr.mxu0 %v3938
        %3966 = vmatpush1.msra.mxu0 %v3937
        %3967 = vmatprep.subr.mxu0 %v3940
        %3968 = vmatpush1.msra.mxu0 %v3939
        %3969 = vmatprep.subr.mxu0 %v3942
        %3970 = vmatpush1.msra.mxu0 %v3941
        %3971 = vmatprep.subr.mxu0 0.0
        %3972 = vmatpush1.msra.mxu0 0.0
        %3973 = vmatprep.subr.mxu0 0.0
        %3974 = vmatpush1.msra.mxu0 0.0
        %3975 = vmatprep.subr.mxu0 0.0
        %3976 = vmatpush1.msra.mxu0 0.0
        %3977 = vmatprep.subr.mxu0 0.0
        %3978 = vmatpush1.msra.mxu0 0.0
        %3979 = vmatprep.subr.mxu0 0.0
        %3980 = vmatpush1.msra.mxu0 0.0
        %3981 = vmatprep.subr.mxu0 0.0
        %3982 = vmatpush1.msra.mxu0 0.0
        %3983 = vmatprep.subr.mxu0 0.0
        %3984 = vmatpush1.msra.mxu0 0.0
        %3985 = vmatprep.subr.mxu0 0.0
        %3986 = vmatpush1.msra.mxu0 0.0
        %3987 = vmatprep.subr.mxu0 0.0
        %3988 = vmatpush1.msra.mxu0 0.0
        %3989 = vmatprep.subr.mxu0 0.0
        %3990 = vmatpush1.msra.mxu0 0.0
        %3991 = vmatprep.subr.mxu0 0.0
        %3992 = vmatpush1.msra.mxu0 0.0
        %3993 = vmatprep.subr.mxu0 0.0
        %3994 = vmatpush1.msra.mxu0 0.0
        %3995 = vmatprep.subr.mxu0 0.0
        %3996 = vmatpush1.msra.mxu0 0.0
        %3997 = vmatprep.subr.mxu0 0.0
        %3998 = vmatpush1.msra.mxu0 0.0
        %3999 = vmatprep.subr.mxu0 0.0
        %4000 = vmatpush1.msra.mxu0 0.0
        %4001 = vmatprep.subr.mxu0 0.0
        %4002 = vmatpush1.msra.mxu0 0.0
        %4003 = vmatprep.subr.mxu0 0.0
        %4004 = vmatpush1.msra.mxu0 0.0
        %4005 = vmatprep.subr.mxu0 0.0
        %4006 = vmatpush1.msra.mxu0 0.0
        %4007 = vmatprep.subr.mxu0 0.0
        %4008 = vmatpush1.msra.mxu0 0.0
        %4009 = vmatprep.subr.mxu0 0.0
        %4010 = vmatpush1.msra.mxu0 0.0
        %4011 = vmatprep.subr.mxu0 0.0
        %4012 = vmatpush1.msra.mxu0 0.0
        %4013 = vmatprep.subr.mxu0 0.0
        %4014 = vmatpush1.msra.mxu0 0.0
        %4015 = vmatprep.subr.mxu0 0.0
        %4016 = vmatpush1.msra.mxu0 0.0
        %4017 = vmatprep.mubr.f32.mxu0 0.0
        %4018 = vmatmul.mubr.f32.gmra.mrb[0].mxu0 %v3951
        %v4019 = vpop.f32.mrb[0].mxu0
        %v4020 = vadd.f32 %v3947, %v4019
        %v4021 = vpop.f32.mrb[0].mxu0
        %v4022 = vadd.f32 %v3947, %v4021
        %4023 = vdwg.mxu0
        %v4024 = vmax.f32 %v4020, 0.0
        %v4025 = vmax.f32 %v4022, 0.0
        %vm4026 = vcmask 146432
        %4027 = vst.msk [vmem:[#allocation4] sm:$0xff] %vm4026, 0.0
        %4028 = vst.msk [vmem:[#allocation4 + $0x8] sm:$0xff] %vm4026, 0.0
        %vm4029 = vcmask 140288
        %4030 = vst.msk [vmem:[#allocation4 + $0x10] sm:$0x3] %vm4029, 0.0
        %4031 = vst.msk [vmem:[#allocation4 + $0x18] sm:$0xff] %vm4026, 0.0
        %4032 = vst.msk [vmem:[#allocation4 + $0x20] sm:$0xff] %vm4026, 0.0
        %4033 = vst.msk [vmem:[#allocation4 + $0x28] sm:$0x3] %vm4029, 0.0
        %4034 = vst.msk [vmem:[#allocation4 + $0x30] sm:$0xff] %vm4026, 0.0
        %4035 = vst.msk [vmem:[#allocation4 + $0x38] sm:$0xff] %vm4026, 0.0
        %4036 = vst.msk [vmem:[#allocation4 + $0x40] sm:$0x3] %vm4029, 0.0
        %4037 = vst.msk [vmem:[#allocation4 + $0x48] sm:$0xff] %vm4026, 0.0
        %4038 = vst.msk [vmem:[#allocation4 + $0x50] sm:$0xff] %vm4026, 0.0
        %4039 = vst.msk [vmem:[#allocation4 + $0x58] sm:$0x3] %vm4029, 0.0
        %4040 = vst.msk [vmem:[#allocation4 + $0x60] sm:$0xff] %vm4026, 0.0
        %4041 = vst.msk [vmem:[#allocation4 + $0x68] sm:$0xff] %vm4026, 0.0
        %4042 = vst.msk [vmem:[#allocation4 + $0x70] sm:$0x3] %vm4029, 0.0
        %4043 = vst.msk [vmem:[#allocation4 + $0x78] sm:$0xff] %vm4026, 0.0
        %4044 = vst.msk [vmem:[#allocation4 + $0x80] sm:$0xff] %vm4026, 0.0
        %4045 = vst.msk [vmem:[#allocation4 + $0x88] sm:$0x3] %vm4029, 0.0
        %4046 = vst.msk [vmem:[#allocation4 + $0x90] sm:$0xff] %vm4026, 0.0
        %4047 = vst.msk [vmem:[#allocation4 + $0x98] sm:$0xff] %vm4026, 0.0
        %4048 = vst.msk [vmem:[#allocation4 + $0xa0] sm:$0x3] %vm4029, 0.0
        %4049 = vst.msk [vmem:[#allocation4 + $0xa8] sm:$0xff] %vm4026, 0.0
        %4050 = vst.msk [vmem:[#allocation4 + $0xb0] sm:$0xff] %vm4026, 0.0
        %4051 = vst.msk [vmem:[#allocation4 + $0xb8] sm:$0x3] %vm4029, 0.0
        %4053 = vrot.lane.b32.xlu0 %v4024, 112
        %v4054 = vpop.permute.xlu0 %4053
        %4056 = vrot.lane.b32.xlu0 %v4024, 96
        %v4057 = vpop.permute.xlu0 %4056
        %4059 = vrot.lane.b32.xlu0 %v4024, 80
        %v4060 = vpop.permute.xlu0 %4059
        %4062 = vrot.lane.b32.xlu0 %v4024, 64
        %v4063 = vpop.permute.xlu0 %4062
        %4065 = vrot.lane.b32.xlu0 %v4024, 48
        %v4066 = vpop.permute.xlu0 %4065
        %4068 = vrot.lane.b32.xlu0 %v4024, 32
        %v4069 = vpop.permute.xlu0 %4068
        %4071 = vrot.lane.b32.xlu0 %v4024, 16
        %v4072 = vpop.permute.xlu0 %4071
        %4075 = vrot.lane.b32.xlu0 %v4025, 112
        %v4076 = vpop.permute.xlu0 %4075
        %4078 = vrot.lane.b32.xlu0 %v4025, 96
        %v4079 = vpop.permute.xlu0 %4078
        %4081 = vrot.lane.b32.xlu0 %v4025, 80
        %v4082 = vpop.permute.xlu0 %4081
        %4084 = vrot.lane.b32.xlu0 %v4025, 64
        %v4085 = vpop.permute.xlu0 %4084
        %4087 = vrot.lane.b32.xlu0 %v4025, 48
        %v4088 = vpop.permute.xlu0 %4087
        %4090 = vrot.lane.b32.xlu0 %v4025, 32
        %v4091 = vpop.permute.xlu0 %4090
        %4093 = vrot.lane.b32.xlu0 %v4025, 16
        %v4094 = vpop.permute.xlu0 %4093
        %v4096 = vcombine.low %v4024, %v4057
        %v4097 = vcombine.high %v4024, %v4057
        %v4099 = vunpack.c.l.s4 1983009808
        %v4100 = vunpack.c.0.s8 %v4099
        %v4101 = vlaneseq
        %v4102 = vshrl.u32 %v4101, 7
        %v4103 = vsub.s32 %v4100, %v4102
        %v4104 = vrot.slane %v4096, %v4103
        %v4106 = vunpack.c.l.s4 1983009808
        %v4107 = vunpack.c.0.s8 %v4106
        %v4108 = vlaneseq
        %v4109 = vshrl.u32 %v4108, 7
        %v4110 = vsub.s32 %v4107, %v4109
        %v4111 = vrot.slane %v4097, %v4110
        %v4112 = vcombine.low %v4054, %v4060
        %v4113 = vcombine.high %v4054, %v4060
        %v4115 = vunpack.c.l.s4 1983009808
        %v4116 = vunpack.c.0.s8 %v4115
        %v4117 = vlaneseq
        %v4118 = vshrl.u32 %v4117, 7
        %v4119 = vsub.s32 %v4116, %v4118
        %v4120 = vrot.slane %v4112, %v4119
        %v4122 = vunpack.c.l.s4 1983009808
        %v4123 = vunpack.c.0.s8 %v4122
        %v4124 = vlaneseq
        %v4125 = vshrl.u32 %v4124, 7
        %v4126 = vsub.s32 %v4123, %v4125
        %v4127 = vrot.slane %v4113, %v4126
        %v4128 = vcombine.low %v4063, %v4069
        %v4129 = vcombine.high %v4063, %v4069
        %v4131 = vunpack.c.l.s4 1983009808
        %v4132 = vunpack.c.0.s8 %v4131
        %v4133 = vlaneseq
        %v4134 = vshrl.u32 %v4133, 7
        %v4135 = vsub.s32 %v4132, %v4134
        %v4136 = vrot.slane %v4128, %v4135
        %v4138 = vunpack.c.l.s4 1983009808
        %v4139 = vunpack.c.0.s8 %v4138
        %v4140 = vlaneseq
        %v4141 = vshrl.u32 %v4140, 7
        %v4142 = vsub.s32 %v4139, %v4141
        %v4143 = vrot.slane %v4129, %v4142
        %v4144 = vcombine.low %v4066, %v4072
        %v4145 = vcombine.high %v4066, %v4072
        %v4147 = vunpack.c.l.s4 1983009808
        %v4148 = vunpack.c.0.s8 %v4147
        %v4149 = vlaneseq
        %v4150 = vshrl.u32 %v4149, 7
        %v4151 = vsub.s32 %v4148, %v4150
        %v4152 = vrot.slane %v4144, %v4151
        %v4154 = vunpack.c.l.s4 1983009808
        %v4155 = vunpack.c.0.s8 %v4154
        %v4156 = vlaneseq
        %v4157 = vshrl.u32 %v4156, 7
        %v4158 = vsub.s32 %v4155, %v4157
        %v4159 = vrot.slane %v4145, %v4158
        %v4160 = vcombine.low %v4104, %v4120
        %v4161 = vcombine.high %v4104, %v4120
        %v4163 = vunpack.c.l.s4 1934713408
        %v4164 = vunpack.c.0.s8 %v4163
        %v4165 = vlaneseq
        %v4166 = vshrl.u32 %v4165, 7
        %v4167 = vsub.s32 %v4164, %v4166
        %v4168 = vrot.slane %v4160, %v4167
        %v4170 = vunpack.c.l.s4 1934713408
        %v4171 = vunpack.c.0.s8 %v4170
        %v4172 = vlaneseq
        %v4173 = vshrl.u32 %v4172, 7
        %v4174 = vsub.s32 %v4171, %v4173
        %v4175 = vrot.slane %v4161, %v4174
        %v4176 = vcombine.low %v4111, %v4127
        %v4177 = vcombine.high %v4111, %v4127
        %v4179 = vunpack.c.l.s4 1934713408
        %v4180 = vunpack.c.0.s8 %v4179
        %v4181 = vlaneseq
        %v4182 = vshrl.u32 %v4181, 7
        %v4183 = vsub.s32 %v4180, %v4182
        %v4184 = vrot.slane %v4176, %v4183
        %v4186 = vunpack.c.l.s4 1934713408
        %v4187 = vunpack.c.0.s8 %v4186
        %v4188 = vlaneseq
        %v4189 = vshrl.u32 %v4188, 7
        %v4190 = vsub.s32 %v4187, %v4189
        %v4191 = vrot.slane %v4177, %v4190
        %v4192 = vcombine.low %v4136, %v4152
        %v4193 = vcombine.high %v4136, %v4152
        %v4195 = vunpack.c.l.s4 1934713408
        %v4196 = vunpack.c.0.s8 %v4195
        %v4197 = vlaneseq
        %v4198 = vshrl.u32 %v4197, 7
        %v4199 = vsub.s32 %v4196, %v4198
        %v4200 = vrot.slane %v4192, %v4199
        %v4202 = vunpack.c.l.s4 1934713408
        %v4203 = vunpack.c.0.s8 %v4202
        %v4204 = vlaneseq
        %v4205 = vshrl.u32 %v4204, 7
        %v4206 = vsub.s32 %v4203, %v4205
        %v4207 = vrot.slane %v4193, %v4206
        %v4208 = vcombine.low %v4143, %v4159
        %v4209 = vcombine.high %v4143, %v4159
        %v4211 = vunpack.c.l.s4 1934713408
        %v4212 = vunpack.c.0.s8 %v4211
        %v4213 = vlaneseq
        %v4214 = vshrl.u32 %v4213, 7
        %v4215 = vsub.s32 %v4212, %v4214
        %v4216 = vrot.slane %v4208, %v4215
        %v4218 = vunpack.c.l.s4 1934713408
        %v4219 = vunpack.c.0.s8 %v4218
        %v4220 = vlaneseq
        %v4221 = vshrl.u32 %v4220, 7
        %v4222 = vsub.s32 %v4219, %v4221
        %v4223 = vrot.slane %v4209, %v4222
        %v4224 = vcombine.low %v4168, %v4200
        %v4225 = vcombine.high %v4168, %v4200
        %v4226 = vcombine.low %v4175, %v4207
        %v4227 = vcombine.high %v4175, %v4207
        %v4228 = vcombine.low %v4184, %v4216
        %v4229 = vcombine.high %v4184, %v4216
        %v4230 = vcombine.low %v4191, %v4223
        %v4231 = vcombine.high %v4191, %v4223
        %v4232 = vcombine.low %v4025, %v4079
        %v4233 = vcombine.high %v4025, %v4079
        %v4235 = vunpack.c.l.s4 1983009808
        %v4236 = vunpack.c.0.s8 %v4235
        %v4237 = vlaneseq
        %v4238 = vshrl.u32 %v4237, 7
        %v4239 = vsub.s32 %v4236, %v4238
        %v4240 = vrot.slane %v4232, %v4239
        %v4242 = vunpack.c.l.s4 1983009808
        %v4243 = vunpack.c.0.s8 %v4242
        %v4244 = vlaneseq
        %v4245 = vshrl.u32 %v4244, 7
        %v4246 = vsub.s32 %v4243, %v4245
        %v4247 = vrot.slane %v4233, %v4246
        %v4248 = vcombine.low %v4076, %v4082
        %v4249 = vcombine.high %v4076, %v4082
        %v4251 = vunpack.c.l.s4 1983009808
        %v4252 = vunpack.c.0.s8 %v4251
        %v4253 = vlaneseq
        %v4254 = vshrl.u32 %v4253, 7
        %v4255 = vsub.s32 %v4252, %v4254
        %v4256 = vrot.slane %v4248, %v4255
        %v4258 = vunpack.c.l.s4 1983009808
        %v4259 = vunpack.c.0.s8 %v4258
        %v4260 = vlaneseq
        %v4261 = vshrl.u32 %v4260, 7
        %v4262 = vsub.s32 %v4259, %v4261
        %v4263 = vrot.slane %v4249, %v4262
        %v4264 = vcombine.low %v4085, %v4091
        %v4265 = vcombine.high %v4085, %v4091
        %v4267 = vunpack.c.l.s4 1983009808
        %v4268 = vunpack.c.0.s8 %v4267
        %v4269 = vlaneseq
        %v4270 = vshrl.u32 %v4269, 7
        %v4271 = vsub.s32 %v4268, %v4270
        %v4272 = vrot.slane %v4264, %v4271
        %v4274 = vunpack.c.l.s4 1983009808
        %v4275 = vunpack.c.0.s8 %v4274
        %v4276 = vlaneseq
        %v4277 = vshrl.u32 %v4276, 7
        %v4278 = vsub.s32 %v4275, %v4277
        %v4279 = vrot.slane %v4265, %v4278
        %v4280 = vcombine.low %v4088, %v4094
        %v4281 = vcombine.high %v4088, %v4094
        %v4283 = vunpack.c.l.s4 1983009808
        %v4284 = vunpack.c.0.s8 %v4283
        %v4285 = vlaneseq
        %v4286 = vshrl.u32 %v4285, 7
        %v4287 = vsub.s32 %v4284, %v4286
        %v4288 = vrot.slane %v4280, %v4287
        %v4290 = vunpack.c.l.s4 1983009808
        %v4291 = vunpack.c.0.s8 %v4290
        %v4292 = vlaneseq
        %v4293 = vshrl.u32 %v4292, 7
        %v4294 = vsub.s32 %v4291, %v4293
        %v4295 = vrot.slane %v4281, %v4294
        %v4296 = vcombine.low %v4240, %v4256
        %v4297 = vcombine.high %v4240, %v4256
        %v4299 = vunpack.c.l.s4 1934713408
        %v4300 = vunpack.c.0.s8 %v4299
        %v4301 = vlaneseq
        %v4302 = vshrl.u32 %v4301, 7
        %v4303 = vsub.s32 %v4300, %v4302
        %v4304 = vrot.slane %v4296, %v4303
        %v4306 = vunpack.c.l.s4 1934713408
        %v4307 = vunpack.c.0.s8 %v4306
        %v4308 = vlaneseq
        %v4309 = vshrl.u32 %v4308, 7
        %v4310 = vsub.s32 %v4307, %v4309
        %v4311 = vrot.slane %v4297, %v4310
        %v4312 = vcombine.low %v4247, %v4263
        %v4313 = vcombine.high %v4247, %v4263
        %v4315 = vunpack.c.l.s4 1934713408
        %v4316 = vunpack.c.0.s8 %v4315
        %v4317 = vlaneseq
        %v4318 = vshrl.u32 %v4317, 7
        %v4319 = vsub.s32 %v4316, %v4318
        %v4320 = vrot.slane %v4312, %v4319
        %v4322 = vunpack.c.l.s4 1934713408
        %v4323 = vunpack.c.0.s8 %v4322
        %v4324 = vlaneseq
        %v4325 = vshrl.u32 %v4324, 7
        %v4326 = vsub.s32 %v4323, %v4325
        %v4327 = vrot.slane %v4313, %v4326
        %v4328 = vcombine.low %v4272, %v4288
        %v4329 = vcombine.high %v4272, %v4288
        %v4331 = vunpack.c.l.s4 1934713408
        %v4332 = vunpack.c.0.s8 %v4331
        %v4333 = vlaneseq
        %v4334 = vshrl.u32 %v4333, 7
        %v4335 = vsub.s32 %v4332, %v4334
        %v4336 = vrot.slane %v4328, %v4335
        %v4338 = vunpack.c.l.s4 1934713408
        %v4339 = vunpack.c.0.s8 %v4338
        %v4340 = vlaneseq
        %v4341 = vshrl.u32 %v4340, 7
        %v4342 = vsub.s32 %v4339, %v4341
        %v4343 = vrot.slane %v4329, %v4342
        %v4344 = vcombine.low %v4279, %v4295
        %v4345 = vcombine.high %v4279, %v4295
        %v4347 = vunpack.c.l.s4 1934713408
        %v4348 = vunpack.c.0.s8 %v4347
        %v4349 = vlaneseq
        %v4350 = vshrl.u32 %v4349, 7
        %v4351 = vsub.s32 %v4348, %v4350
        %v4352 = vrot.slane %v4344, %v4351
        %v4354 = vunpack.c.l.s4 1934713408
        %v4355 = vunpack.c.0.s8 %v4354
        %v4356 = vlaneseq
        %v4357 = vshrl.u32 %v4356, 7
        %v4358 = vsub.s32 %v4355, %v4357
        %v4359 = vrot.slane %v4345, %v4358
        %v4360 = vcombine.low %v4304, %v4336
        %v4361 = vcombine.high %v4304, %v4336
        %v4362 = vcombine.low %v4311, %v4343
        %v4363 = vcombine.high %v4311, %v4343
        %v4364 = vcombine.low %v4320, %v4352
        %v4365 = vcombine.high %v4320, %v4352
        %v4366 = vcombine.low %v4327, %v4359
        %v4367 = vcombine.high %v4327, %v4359
        %4384 = vrot.lane.b32.xlu0 %v4224, 1
        %v4385 = vpop.permute.xlu0 %4384
        %4386 = vrot.lane.b32.xlu0 %v4360, 1
        %v4387 = vpop.permute.xlu0 %4386
        %4388 = vrot.lane.b32.xlu0 %v4225, 1
        %v4389 = vpop.permute.xlu0 %4388
        %4390 = vrot.lane.b32.xlu0 %v4361, 1
        %v4391 = vpop.permute.xlu0 %4390
        %4392 = vrot.lane.b32.xlu0 %v4226, 1
        %v4393 = vpop.permute.xlu0 %4392
        %4394 = vrot.lane.b32.xlu0 %v4362, 1
        %v4395 = vpop.permute.xlu0 %4394
        %4396 = vrot.lane.b32.xlu0 %v4227, 1
        %v4397 = vpop.permute.xlu0 %4396
        %4398 = vrot.lane.b32.xlu0 %v4363, 1
        %v4399 = vpop.permute.xlu0 %4398
        %4400 = vrot.lane.b32.xlu0 %v4228, 1
        %v4401 = vpop.permute.xlu0 %4400
        %4402 = vrot.lane.b32.xlu0 %v4364, 1
        %v4403 = vpop.permute.xlu0 %4402
        %4404 = vrot.lane.b32.xlu0 %v4229, 1
        %v4405 = vpop.permute.xlu0 %4404
        %4406 = vrot.lane.b32.xlu0 %v4365, 1
        %v4407 = vpop.permute.xlu0 %4406
        %4408 = vrot.lane.b32.xlu0 %v4230, 1
        %v4409 = vpop.permute.xlu0 %4408
        %4410 = vrot.lane.b32.xlu0 %v4366, 1
        %v4411 = vpop.permute.xlu0 %4410
        %4412 = vrot.lane.b32.xlu0 %v4231, 1
        %v4413 = vpop.permute.xlu0 %4412
        %4414 = vrot.lane.b32.xlu0 %v4367, 1
        %v4415 = vpop.permute.xlu0 %4414
        %vm4432 = vcmask 138248
        %4433 = vst.msk [vmem:[#allocation4 + $0x1] sm:$0xff] %vm4432, %v4385
        %4434 = vst.msk [vmem:[#allocation4 + $0x9] sm:$0xff] %vm4432, %v4387
        %4435 = vst.msk [vmem:[#allocation4 + $0x19] sm:$0xff] %vm4432, %v4389
        %4436 = vst.msk [vmem:[#allocation4 + $0x21] sm:$0xff] %vm4432, %v4391
        %4437 = vst.msk [vmem:[#allocation4 + $0x31] sm:$0xff] %vm4432, %v4393
        %4438 = vst.msk [vmem:[#allocation4 + $0x39] sm:$0xff] %vm4432, %v4395
        %4439 = vst.msk [vmem:[#allocation4 + $0x49] sm:$0xff] %vm4432, %v4397
        %4440 = vst.msk [vmem:[#allocation4 + $0x51] sm:$0xff] %vm4432, %v4399
        %4441 = vst.msk [vmem:[#allocation4 + $0x61] sm:$0xff] %vm4432, %v4401
        %4442 = vst.msk [vmem:[#allocation4 + $0x69] sm:$0xff] %vm4432, %v4403
        %4443 = vst.msk [vmem:[#allocation4 + $0x79] sm:$0xff] %vm4432, %v4405
        %4444 = vst.msk [vmem:[#allocation4 + $0x81] sm:$0xff] %vm4432, %v4407
        %4445 = vst.msk [vmem:[#allocation4 + $0x91] sm:$0xff] %vm4432, %v4409
        %4446 = vst.msk [vmem:[#allocation4 + $0x99] sm:$0xff] %vm4432, %v4411
        %4447 = vst.msk [vmem:[#allocation4 + $0xa9] sm:$0xff] %vm4432, %v4413
        %4448 = vst.msk [vmem:[#allocation4 + $0xb1] sm:$0xff] %vm4432, %v4415
        %v4449 = vld [vmem:[#allocation4] sm:$0xff]
        %v4450 = vld [vmem:[#allocation4 + $0x8] sm:$0xff]
        %v4451 = vld [vmem:[#allocation4 + $0x18] sm:$0xff]
        %v4452 = vld [vmem:[#allocation4 + $0x20] sm:$0xff]
        %v4453 = vld [vmem:[#allocation4 + $0x30] sm:$0xff]
        %v4454 = vld [vmem:[#allocation4 + $0x38] sm:$0xff]
        %v4455 = vld [vmem:[#allocation4 + $0x48] sm:$0xff]
        %v4456 = vld [vmem:[#allocation4 + $0x50] sm:$0xff]
        %v4457 = vld [vmem:[#allocation4 + $0x60] sm:$0xff]
        %v4458 = vld [vmem:[#allocation4 + $0x68] sm:$0xff]
        %v4459 = vld [vmem:[#allocation4 + $0x78] sm:$0xff]
        %v4460 = vld [vmem:[#allocation4 + $0x80] sm:$0xff]
        %v4461 = vld [vmem:[#allocation4 + $0x90] sm:$0xff]
        %v4462 = vld [vmem:[#allocation4 + $0x98] sm:$0xff]
        %v4463 = vld [vmem:[#allocation4 + $0xa8] sm:$0xff]
        %v4464 = vld [vmem:[#allocation4 + $0xb0] sm:$0xff]
        %v4465 = vcombine.low %v4449, %v4453
        %v4466 = vcombine.high %v4449, %v4453
        %v4468 = vunpack.c.l.s4 1983009808
        %v4469 = vunpack.c.0.s8 %v4468
        %v4470 = vlaneseq
        %v4471 = vshrl.u32 %v4470, 7
        %v4472 = vsub.s32 %v4469, %v4471
        %v4473 = vrot.slane %v4465, %v4472
        %v4475 = vunpack.c.l.s4 1983009808
        %v4476 = vunpack.c.0.s8 %v4475
        %v4477 = vlaneseq
        %v4478 = vshrl.u32 %v4477, 7
        %v4479 = vsub.s32 %v4476, %v4478
        %v4480 = vrot.slane %v4466, %v4479
        %v4481 = vcombine.low %v4451, %v4455
        %v4482 = vcombine.high %v4451, %v4455
        %v4484 = vunpack.c.l.s4 1983009808
        %v4485 = vunpack.c.0.s8 %v4484
        %v4486 = vlaneseq
        %v4487 = vshrl.u32 %v4486, 7
        %v4488 = vsub.s32 %v4485, %v4487
        %v4489 = vrot.slane %v4481, %v4488
        %v4491 = vunpack.c.l.s4 1983009808
        %v4492 = vunpack.c.0.s8 %v4491
        %v4493 = vlaneseq
        %v4494 = vshrl.u32 %v4493, 7
        %v4495 = vsub.s32 %v4492, %v4494
        %v4496 = vrot.slane %v4482, %v4495
        %v4497 = vcombine.low %v4457, %v4461
        %v4498 = vcombine.high %v4457, %v4461
        %v4500 = vunpack.c.l.s4 1983009808
        %v4501 = vunpack.c.0.s8 %v4500
        %v4502 = vlaneseq
        %v4503 = vshrl.u32 %v4502, 7
        %v4504 = vsub.s32 %v4501, %v4503
        %v4505 = vrot.slane %v4497, %v4504
        %v4507 = vunpack.c.l.s4 1983009808
        %v4508 = vunpack.c.0.s8 %v4507
        %v4509 = vlaneseq
        %v4510 = vshrl.u32 %v4509, 7
        %v4511 = vsub.s32 %v4508, %v4510
        %v4512 = vrot.slane %v4498, %v4511
        %v4513 = vcombine.low %v4459, %v4463
        %v4514 = vcombine.high %v4459, %v4463
        %v4516 = vunpack.c.l.s4 1983009808
        %v4517 = vunpack.c.0.s8 %v4516
        %v4518 = vlaneseq
        %v4519 = vshrl.u32 %v4518, 7
        %v4520 = vsub.s32 %v4517, %v4519
        %v4521 = vrot.slane %v4513, %v4520
        %v4523 = vunpack.c.l.s4 1983009808
        %v4524 = vunpack.c.0.s8 %v4523
        %v4525 = vlaneseq
        %v4526 = vshrl.u32 %v4525, 7
        %v4527 = vsub.s32 %v4524, %v4526
        %v4528 = vrot.slane %v4514, %v4527
        %v4529 = vcombine.low %v4473, %v4489
        %v4530 = vcombine.high %v4473, %v4489
        %v4532 = vunpack.c.l.s4 1934713408
        %v4533 = vunpack.c.0.s8 %v4532
        %v4534 = vlaneseq
        %v4535 = vshrl.u32 %v4534, 7
        %v4536 = vsub.s32 %v4533, %v4535
        %v4537 = vrot.slane %v4529, %v4536
        %v4539 = vunpack.c.l.s4 1934713408
        %v4540 = vunpack.c.0.s8 %v4539
        %v4541 = vlaneseq
        %v4542 = vshrl.u32 %v4541, 7
        %v4543 = vsub.s32 %v4540, %v4542
        %v4544 = vrot.slane %v4530, %v4543
        %v4545 = vcombine.low %v4480, %v4496
        %v4546 = vcombine.high %v4480, %v4496
        %v4548 = vunpack.c.l.s4 1934713408
        %v4549 = vunpack.c.0.s8 %v4548
        %v4550 = vlaneseq
        %v4551 = vshrl.u32 %v4550, 7
        %v4552 = vsub.s32 %v4549, %v4551
        %v4553 = vrot.slane %v4545, %v4552
        %v4555 = vunpack.c.l.s4 1934713408
        %v4556 = vunpack.c.0.s8 %v4555
        %v4557 = vlaneseq
        %v4558 = vshrl.u32 %v4557, 7
        %v4559 = vsub.s32 %v4556, %v4558
        %v4560 = vrot.slane %v4546, %v4559
        %v4561 = vcombine.low %v4505, %v4521
        %v4562 = vcombine.high %v4505, %v4521
        %v4564 = vunpack.c.l.s4 1934713408
        %v4565 = vunpack.c.0.s8 %v4564
        %v4566 = vlaneseq
        %v4567 = vshrl.u32 %v4566, 7
        %v4568 = vsub.s32 %v4565, %v4567
        %v4569 = vrot.slane %v4561, %v4568
        %v4571 = vunpack.c.l.s4 1934713408
        %v4572 = vunpack.c.0.s8 %v4571
        %v4573 = vlaneseq
        %v4574 = vshrl.u32 %v4573, 7
        %v4575 = vsub.s32 %v4572, %v4574
        %v4576 = vrot.slane %v4562, %v4575
        %v4577 = vcombine.low %v4512, %v4528
        %v4578 = vcombine.high %v4512, %v4528
        %v4580 = vunpack.c.l.s4 1934713408
        %v4581 = vunpack.c.0.s8 %v4580
        %v4582 = vlaneseq
        %v4583 = vshrl.u32 %v4582, 7
        %v4584 = vsub.s32 %v4581, %v4583
        %v4585 = vrot.slane %v4577, %v4584
        %v4587 = vunpack.c.l.s4 1934713408
        %v4588 = vunpack.c.0.s8 %v4587
        %v4589 = vlaneseq
        %v4590 = vshrl.u32 %v4589, 7
        %v4591 = vsub.s32 %v4588, %v4590
        %v4592 = vrot.slane %v4578, %v4591
        %v4593 = vcombine.low %v4537, %v4569
        %v4594 = vcombine.high %v4537, %v4569
        %v4595 = vcombine.low %v4544, %v4576
        %v4596 = vcombine.high %v4544, %v4576
        %v4597 = vcombine.low %v4553, %v4585
        %v4598 = vcombine.high %v4553, %v4585
        %v4599 = vcombine.low %v4560, %v4592
        %v4600 = vcombine.high %v4560, %v4592
        %v4601 = vcombine.low %v4450, %v4454
        %v4602 = vcombine.high %v4450, %v4454
        %v4604 = vunpack.c.l.s4 1983009808
        %v4605 = vunpack.c.0.s8 %v4604
        %v4606 = vlaneseq
        %v4607 = vshrl.u32 %v4606, 7
        %v4608 = vsub.s32 %v4605, %v4607
        %v4609 = vrot.slane %v4601, %v4608
        %v4611 = vunpack.c.l.s4 1983009808
        %v4612 = vunpack.c.0.s8 %v4611
        %v4613 = vlaneseq
        %v4614 = vshrl.u32 %v4613, 7
        %v4615 = vsub.s32 %v4612, %v4614
        %v4616 = vrot.slane %v4602, %v4615
        %v4617 = vcombine.low %v4452, %v4456
        %v4618 = vcombine.high %v4452, %v4456
        %v4620 = vunpack.c.l.s4 1983009808
        %v4621 = vunpack.c.0.s8 %v4620
        %v4622 = vlaneseq
        %v4623 = vshrl.u32 %v4622, 7
        %v4624 = vsub.s32 %v4621, %v4623
        %v4625 = vrot.slane %v4617, %v4624
        %v4627 = vunpack.c.l.s4 1983009808
        %v4628 = vunpack.c.0.s8 %v4627
        %v4629 = vlaneseq
        %v4630 = vshrl.u32 %v4629, 7
        %v4631 = vsub.s32 %v4628, %v4630
        %v4632 = vrot.slane %v4618, %v4631
        %v4633 = vcombine.low %v4458, %v4462
        %v4634 = vcombine.high %v4458, %v4462
        %v4636 = vunpack.c.l.s4 1983009808
        %v4637 = vunpack.c.0.s8 %v4636
        %v4638 = vlaneseq
        %v4639 = vshrl.u32 %v4638, 7
        %v4640 = vsub.s32 %v4637, %v4639
        %v4641 = vrot.slane %v4633, %v4640
        %v4643 = vunpack.c.l.s4 1983009808
        %v4644 = vunpack.c.0.s8 %v4643
        %v4645 = vlaneseq
        %v4646 = vshrl.u32 %v4645, 7
        %v4647 = vsub.s32 %v4644, %v4646
        %v4648 = vrot.slane %v4634, %v4647
        %v4649 = vcombine.low %v4460, %v4464
        %v4650 = vcombine.high %v4460, %v4464
        %v4652 = vunpack.c.l.s4 1983009808
        %v4653 = vunpack.c.0.s8 %v4652
        %v4654 = vlaneseq
        %v4655 = vshrl.u32 %v4654, 7
        %v4656 = vsub.s32 %v4653, %v4655
        %v4657 = vrot.slane %v4649, %v4656
        %v4659 = vunpack.c.l.s4 1983009808
        %v4660 = vunpack.c.0.s8 %v4659
        %v4661 = vlaneseq
        %v4662 = vshrl.u32 %v4661, 7
        %v4663 = vsub.s32 %v4660, %v4662
        %v4664 = vrot.slane %v4650, %v4663
        %v4665 = vcombine.low %v4609, %v4625
        %v4666 = vcombine.high %v4609, %v4625
        %v4668 = vunpack.c.l.s4 1934713408
        %v4669 = vunpack.c.0.s8 %v4668
        %v4670 = vlaneseq
        %v4671 = vshrl.u32 %v4670, 7
        %v4672 = vsub.s32 %v4669, %v4671
        %v4673 = vrot.slane %v4665, %v4672
        %v4675 = vunpack.c.l.s4 1934713408
        %v4676 = vunpack.c.0.s8 %v4675
        %v4677 = vlaneseq
        %v4678 = vshrl.u32 %v4677, 7
        %v4679 = vsub.s32 %v4676, %v4678
        %v4680 = vrot.slane %v4666, %v4679
        %v4681 = vcombine.low %v4616, %v4632
        %v4682 = vcombine.high %v4616, %v4632
        %v4684 = vunpack.c.l.s4 1934713408
        %v4685 = vunpack.c.0.s8 %v4684
        %v4686 = vlaneseq
        %v4687 = vshrl.u32 %v4686, 7
        %v4688 = vsub.s32 %v4685, %v4687
        %v4689 = vrot.slane %v4681, %v4688
        %v4691 = vunpack.c.l.s4 1934713408
        %v4692 = vunpack.c.0.s8 %v4691
        %v4693 = vlaneseq
        %v4694 = vshrl.u32 %v4693, 7
        %v4695 = vsub.s32 %v4692, %v4694
        %v4696 = vrot.slane %v4682, %v4695
        %v4697 = vcombine.low %v4641, %v4657
        %v4698 = vcombine.high %v4641, %v4657
        %v4700 = vunpack.c.l.s4 1934713408
        %v4701 = vunpack.c.0.s8 %v4700
        %v4702 = vlaneseq
        %v4703 = vshrl.u32 %v4702, 7
        %v4704 = vsub.s32 %v4701, %v4703
        %v4705 = vrot.slane %v4697, %v4704
        %v4707 = vunpack.c.l.s4 1934713408
        %v4708 = vunpack.c.0.s8 %v4707
        %v4709 = vlaneseq
        %v4710 = vshrl.u32 %v4709, 7
        %v4711 = vsub.s32 %v4708, %v4710
        %v4712 = vrot.slane %v4698, %v4711
        %v4713 = vcombine.low %v4648, %v4664
        %v4714 = vcombine.high %v4648, %v4664
        %v4716 = vunpack.c.l.s4 1934713408
        %v4717 = vunpack.c.0.s8 %v4716
        %v4718 = vlaneseq
        %v4719 = vshrl.u32 %v4718, 7
        %v4720 = vsub.s32 %v4717, %v4719
        %v4721 = vrot.slane %v4713, %v4720
        %v4723 = vunpack.c.l.s4 1934713408
        %v4724 = vunpack.c.0.s8 %v4723
        %v4725 = vlaneseq
        %v4726 = vshrl.u32 %v4725, 7
        %v4727 = vsub.s32 %v4724, %v4726
        %v4728 = vrot.slane %v4714, %v4727
        %v4729 = vcombine.low %v4673, %v4705
        %v4730 = vcombine.high %v4673, %v4705
        %v4731 = vcombine.low %v4680, %v4712
        %v4732 = vcombine.high %v4680, %v4712
        %v4733 = vcombine.low %v4689, %v4721
        %v4734 = vcombine.high %v4689, %v4721
        %v4735 = vcombine.low %v4696, %v4728
        %v4736 = vcombine.high %v4696, %v4728
        %4738 = vrot.lane.b32.xlu0 %v4594, 16
        %v4739 = vpop.permute.xlu0 %4738
        %4742 = vrot.lane.b32.xlu0 %v4595, 32
        %v4743 = vpop.permute.xlu0 %4742
        %4746 = vrot.lane.b32.xlu0 %v4596, 48
        %v4747 = vpop.permute.xlu0 %4746
        %4750 = vrot.lane.b32.xlu0 %v4597, 64
        %v4751 = vpop.permute.xlu0 %4750
        %4754 = vrot.lane.b32.xlu0 %v4598, 80
        %v4755 = vpop.permute.xlu0 %4754
        %4758 = vrot.lane.b32.xlu0 %v4599, 96
        %v4759 = vpop.permute.xlu0 %4758
        %4762 = vrot.lane.b32.xlu0 %v4600, 112
        %v4763 = vpop.permute.xlu0 %4762
        %4766 = vrot.lane.b32.xlu0 %v4730, 16
        %v4767 = vpop.permute.xlu0 %4766
        %4770 = vrot.lane.b32.xlu0 %v4731, 32
        %v4771 = vpop.permute.xlu0 %4770
        %4774 = vrot.lane.b32.xlu0 %v4732, 48
        %v4775 = vpop.permute.xlu0 %4774
        %4778 = vrot.lane.b32.xlu0 %v4733, 64
        %v4779 = vpop.permute.xlu0 %4778
        %4782 = vrot.lane.b32.xlu0 %v4734, 80
        %v4783 = vpop.permute.xlu0 %4782
        %4786 = vrot.lane.b32.xlu0 %v4735, 96
        %v4787 = vpop.permute.xlu0 %4786
        %4790 = vrot.lane.b32.xlu0 %v4736, 112
        %v4791 = vpop.permute.xlu0 %4790
        %v4793 = vsel %vm637, %v4593, %v4739
        %v4794 = vsel %vm639, %v4793, %v4743
        %v4795 = vsel %vm641, %v4794, %v4747
        %v4796 = vsel %vm643, %v4795, %v4751
        %v4797 = vsel %vm645, %v4796, %v4755
        %v4798 = vsel %vm647, %v4797, %v4759
        %v4799 = vsel %vm649, %v4798, %v4763
        %v4800 = vsel %vm637, %v4729, %v4767
        %v4801 = vsel %vm639, %v4800, %v4771
        %v4802 = vsel %vm641, %v4801, %v4775
        %v4803 = vsel %vm643, %v4802, %v4779
        %v4804 = vsel %vm645, %v4803, %v4783
        %v4805 = vsel %vm647, %v4804, %v4787
        %v4806 = vsel %vm649, %v4805, %v4791
        %4807 = vst [vmem:[#allocation3] sm:$0xff] %v4799
        %4808 = vst [vmem:[#allocation3 + $0x8] sm:$0xff] %v4806
        %v4809 = vld [vmem:[#allocation4] sm:$0xff]
        %v4810 = vld [vmem:[#allocation4 + $0x8] sm:$0xff]
        %v4811 = vld [vmem:[#allocation4 + $0x18] sm:$0xff]
        %v4812 = vld [vmem:[#allocation4 + $0x20] sm:$0xff]
        %v4813 = vld [vmem:[#allocation4 + $0x30] sm:$0xff]
        %v4814 = vld [vmem:[#allocation4 + $0x38] sm:$0xff]
        %v4815 = vld [vmem:[#allocation4 + $0x48] sm:$0xff]
        %v4816 = vld [vmem:[#allocation4 + $0x50] sm:$0xff]
        %v4817 = vld [vmem:[#allocation4 + $0x60] sm:$0xff]
        %v4818 = vld [vmem:[#allocation4 + $0x68] sm:$0xff]
        %v4819 = vld [vmem:[#allocation4 + $0x78] sm:$0xff]
        %v4820 = vld [vmem:[#allocation4 + $0x80] sm:$0xff]
        %v4821 = vld [vmem:[#allocation4 + $0x90] sm:$0xff]
        %v4822 = vld [vmem:[#allocation4 + $0x98] sm:$0xff]
        %v4823 = vld [vmem:[#allocation4 + $0xa8] sm:$0xff]
        %v4824 = vld [vmem:[#allocation4 + $0xb0] sm:$0xff]
        %4841 = vrot.lane.b32.xlu0 %v4809, 127
        %v4842 = vpop.permute.xlu0 %4841
        %4843 = vrot.lane.b32.xlu0 %v4810, 127
        %v4844 = vpop.permute.xlu0 %4843
        %4845 = vrot.lane.b32.xlu0 %v4811, 127
        %v4846 = vpop.permute.xlu0 %4845
        %4847 = vrot.lane.b32.xlu0 %v4812, 127
        %v4848 = vpop.permute.xlu0 %4847
        %4849 = vrot.lane.b32.xlu0 %v4813, 127
        %v4850 = vpop.permute.xlu0 %4849
        %4851 = vrot.lane.b32.xlu0 %v4814, 127
        %v4852 = vpop.permute.xlu0 %4851
        %4853 = vrot.lane.b32.xlu0 %v4815, 127
        %v4854 = vpop.permute.xlu0 %4853
        %4855 = vrot.lane.b32.xlu0 %v4816, 127
        %v4856 = vpop.permute.xlu0 %4855
        %4857 = vrot.lane.b32.xlu0 %v4817, 127
        %v4858 = vpop.permute.xlu0 %4857
        %4859 = vrot.lane.b32.xlu0 %v4818, 127
        %v4860 = vpop.permute.xlu0 %4859
        %4861 = vrot.lane.b32.xlu0 %v4819, 127
        %v4862 = vpop.permute.xlu0 %4861
        %4863 = vrot.lane.b32.xlu0 %v4820, 127
        %v4864 = vpop.permute.xlu0 %4863
        %4865 = vrot.lane.b32.xlu0 %v4821, 127
        %v4866 = vpop.permute.xlu0 %4865
        %4867 = vrot.lane.b32.xlu0 %v4822, 127
        %v4868 = vpop.permute.xlu0 %4867
        %4869 = vrot.lane.b32.xlu0 %v4823, 127
        %v4870 = vpop.permute.xlu0 %4869
        %4871 = vrot.lane.b32.xlu0 %v4824, 127
        %v4872 = vpop.permute.xlu0 %4871
        %v4889 = vcombine.low %v4842, %v4850
        %v4890 = vcombine.high %v4842, %v4850
        %v4892 = vunpack.c.l.s4 1983009808
        %v4893 = vunpack.c.0.s8 %v4892
        %v4894 = vlaneseq
        %v4895 = vshrl.u32 %v4894, 7
        %v4896 = vsub.s32 %v4893, %v4895
        %v4897 = vrot.slane %v4889, %v4896
        %v4899 = vunpack.c.l.s4 1983009808
        %v4900 = vunpack.c.0.s8 %v4899
        %v4901 = vlaneseq
        %v4902 = vshrl.u32 %v4901, 7
        %v4903 = vsub.s32 %v4900, %v4902
        %v4904 = vrot.slane %v4890, %v4903
        %v4905 = vcombine.low %v4846, %v4854
        %v4906 = vcombine.high %v4846, %v4854
        %v4908 = vunpack.c.l.s4 1983009808
        %v4909 = vunpack.c.0.s8 %v4908
        %v4910 = vlaneseq
        %v4911 = vshrl.u32 %v4910, 7
        %v4912 = vsub.s32 %v4909, %v4911
        %v4913 = vrot.slane %v4905, %v4912
        %v4915 = vunpack.c.l.s4 1983009808
        %v4916 = vunpack.c.0.s8 %v4915
        %v4917 = vlaneseq
        %v4918 = vshrl.u32 %v4917, 7
        %v4919 = vsub.s32 %v4916, %v4918
        %v4920 = vrot.slane %v4906, %v4919
        %v4921 = vcombine.low %v4858, %v4866
        %v4922 = vcombine.high %v4858, %v4866
        %v4924 = vunpack.c.l.s4 1983009808
        %v4925 = vunpack.c.0.s8 %v4924
        %v4926 = vlaneseq
        %v4927 = vshrl.u32 %v4926, 7
        %v4928 = vsub.s32 %v4925, %v4927
        %v4929 = vrot.slane %v4921, %v4928
        %v4931 = vunpack.c.l.s4 1983009808
        %v4932 = vunpack.c.0.s8 %v4931
        %v4933 = vlaneseq
        %v4934 = vshrl.u32 %v4933, 7
        %v4935 = vsub.s32 %v4932, %v4934
        %v4936 = vrot.slane %v4922, %v4935
        %v4937 = vcombine.low %v4862, %v4870
        %v4938 = vcombine.high %v4862, %v4870
        %v4940 = vunpack.c.l.s4 1983009808
        %v4941 = vunpack.c.0.s8 %v4940
        %v4942 = vlaneseq
        %v4943 = vshrl.u32 %v4942, 7
        %v4944 = vsub.s32 %v4941, %v4943
        %v4945 = vrot.slane %v4937, %v4944
        %v4947 = vunpack.c.l.s4 1983009808
        %v4948 = vunpack.c.0.s8 %v4947
        %v4949 = vlaneseq
        %v4950 = vshrl.u32 %v4949, 7
        %v4951 = vsub.s32 %v4948, %v4950
        %v4952 = vrot.slane %v4938, %v4951
        %v4953 = vcombine.low %v4897, %v4913
        %v4954 = vcombine.high %v4897, %v4913
        %v4956 = vunpack.c.l.s4 1934713408
        %v4957 = vunpack.c.0.s8 %v4956
        %v4958 = vlaneseq
        %v4959 = vshrl.u32 %v4958, 7
        %v4960 = vsub.s32 %v4957, %v4959
        %v4961 = vrot.slane %v4953, %v4960
        %v4963 = vunpack.c.l.s4 1934713408
        %v4964 = vunpack.c.0.s8 %v4963
        %v4965 = vlaneseq
        %v4966 = vshrl.u32 %v4965, 7
        %v4967 = vsub.s32 %v4964, %v4966
        %v4968 = vrot.slane %v4954, %v4967
        %v4969 = vcombine.low %v4904, %v4920
        %v4970 = vcombine.high %v4904, %v4920
        %v4972 = vunpack.c.l.s4 1934713408
        %v4973 = vunpack.c.0.s8 %v4972
        %v4974 = vlaneseq
        %v4975 = vshrl.u32 %v4974, 7
        %v4976 = vsub.s32 %v4973, %v4975
        %v4977 = vrot.slane %v4969, %v4976
        %v4979 = vunpack.c.l.s4 1934713408
        %v4980 = vunpack.c.0.s8 %v4979
        %v4981 = vlaneseq
        %v4982 = vshrl.u32 %v4981, 7
        %v4983 = vsub.s32 %v4980, %v4982
        %v4984 = vrot.slane %v4970, %v4983
        %v4985 = vcombine.low %v4929, %v4945
        %v4986 = vcombine.high %v4929, %v4945
        %v4988 = vunpack.c.l.s4 1934713408
        %v4989 = vunpack.c.0.s8 %v4988
        %v4990 = vlaneseq
        %v4991 = vshrl.u32 %v4990, 7
        %v4992 = vsub.s32 %v4989, %v4991
        %v4993 = vrot.slane %v4985, %v4992
        %v4995 = vunpack.c.l.s4 1934713408
        %v4996 = vunpack.c.0.s8 %v4995
        %v4997 = vlaneseq
        %v4998 = vshrl.u32 %v4997, 7
        %v4999 = vsub.s32 %v4996, %v4998
        %v5000 = vrot.slane %v4986, %v4999
        %v5001 = vcombine.low %v4936, %v4952
        %v5002 = vcombine.high %v4936, %v4952
        %v5004 = vunpack.c.l.s4 1934713408
        %v5005 = vunpack.c.0.s8 %v5004
        %v5006 = vlaneseq
        %v5007 = vshrl.u32 %v5006, 7
        %v5008 = vsub.s32 %v5005, %v5007
        %v5009 = vrot.slane %v5001, %v5008
        %v5011 = vunpack.c.l.s4 1934713408
        %v5012 = vunpack.c.0.s8 %v5011
        %v5013 = vlaneseq
        %v5014 = vshrl.u32 %v5013, 7
        %v5015 = vsub.s32 %v5012, %v5014
        %v5016 = vrot.slane %v5002, %v5015
        %v5017 = vcombine.low %v4961, %v4993
        %v5018 = vcombine.high %v4961, %v4993
        %v5019 = vcombine.low %v4968, %v5000
        %v5020 = vcombine.high %v4968, %v5000
        %v5021 = vcombine.low %v4977, %v5009
        %v5022 = vcombine.high %v4977, %v5009
        %v5023 = vcombine.low %v4984, %v5016
        %v5024 = vcombine.high %v4984, %v5016
        %v5025 = vcombine.low %v4844, %v4852
        %v5026 = vcombine.high %v4844, %v4852
        %v5028 = vunpack.c.l.s4 1983009808
        %v5029 = vunpack.c.0.s8 %v5028
        %v5030 = vlaneseq
        %v5031 = vshrl.u32 %v5030, 7
        %v5032 = vsub.s32 %v5029, %v5031
        %v5033 = vrot.slane %v5025, %v5032
        %v5035 = vunpack.c.l.s4 1983009808
        %v5036 = vunpack.c.0.s8 %v5035
        %v5037 = vlaneseq
        %v5038 = vshrl.u32 %v5037, 7
        %v5039 = vsub.s32 %v5036, %v5038
        %v5040 = vrot.slane %v5026, %v5039
        %v5041 = vcombine.low %v4848, %v4856
        %v5042 = vcombine.high %v4848, %v4856
        %v5044 = vunpack.c.l.s4 1983009808
        %v5045 = vunpack.c.0.s8 %v5044
        %v5046 = vlaneseq
        %v5047 = vshrl.u32 %v5046, 7
        %v5048 = vsub.s32 %v5045, %v5047
        %v5049 = vrot.slane %v5041, %v5048
        %v5051 = vunpack.c.l.s4 1983009808
        %v5052 = vunpack.c.0.s8 %v5051
        %v5053 = vlaneseq
        %v5054 = vshrl.u32 %v5053, 7
        %v5055 = vsub.s32 %v5052, %v5054
        %v5056 = vrot.slane %v5042, %v5055
        %v5057 = vcombine.low %v4860, %v4868
        %v5058 = vcombine.high %v4860, %v4868
        %v5060 = vunpack.c.l.s4 1983009808
        %v5061 = vunpack.c.0.s8 %v5060
        %v5062 = vlaneseq
        %v5063 = vshrl.u32 %v5062, 7
        %v5064 = vsub.s32 %v5061, %v5063
        %v5065 = vrot.slane %v5057, %v5064
        %v5067 = vunpack.c.l.s4 1983009808
        %v5068 = vunpack.c.0.s8 %v5067
        %v5069 = vlaneseq
        %v5070 = vshrl.u32 %v5069, 7
        %v5071 = vsub.s32 %v5068, %v5070
        %v5072 = vrot.slane %v5058, %v5071
        %v5073 = vcombine.low %v4864, %v4872
        %v5074 = vcombine.high %v4864, %v4872
        %v5076 = vunpack.c.l.s4 1983009808
        %v5077 = vunpack.c.0.s8 %v5076
        %v5078 = vlaneseq
        %v5079 = vshrl.u32 %v5078, 7
        %v5080 = vsub.s32 %v5077, %v5079
        %v5081 = vrot.slane %v5073, %v5080
        %v5083 = vunpack.c.l.s4 1983009808
        %v5084 = vunpack.c.0.s8 %v5083
        %v5085 = vlaneseq
        %v5086 = vshrl.u32 %v5085, 7
        %v5087 = vsub.s32 %v5084, %v5086
        %v5088 = vrot.slane %v5074, %v5087
        %v5089 = vcombine.low %v5033, %v5049
        %v5090 = vcombine.high %v5033, %v5049
        %v5092 = vunpack.c.l.s4 1934713408
        %v5093 = vunpack.c.0.s8 %v5092
        %v5094 = vlaneseq
        %v5095 = vshrl.u32 %v5094, 7
        %v5096 = vsub.s32 %v5093, %v5095
        %v5097 = vrot.slane %v5089, %v5096
        %v5099 = vunpack.c.l.s4 1934713408
        %v5100 = vunpack.c.0.s8 %v5099
        %v5101 = vlaneseq
        %v5102 = vshrl.u32 %v5101, 7
        %v5103 = vsub.s32 %v5100, %v5102
        %v5104 = vrot.slane %v5090, %v5103
        %v5105 = vcombine.low %v5040, %v5056
        %v5106 = vcombine.high %v5040, %v5056
        %v5108 = vunpack.c.l.s4 1934713408
        %v5109 = vunpack.c.0.s8 %v5108
        %v5110 = vlaneseq
        %v5111 = vshrl.u32 %v5110, 7
        %v5112 = vsub.s32 %v5109, %v5111
        %v5113 = vrot.slane %v5105, %v5112
        %v5115 = vunpack.c.l.s4 1934713408
        %v5116 = vunpack.c.0.s8 %v5115
        %v5117 = vlaneseq
        %v5118 = vshrl.u32 %v5117, 7
        %v5119 = vsub.s32 %v5116, %v5118
        %v5120 = vrot.slane %v5106, %v5119
        %v5121 = vcombine.low %v5065, %v5081
        %v5122 = vcombine.high %v5065, %v5081
        %v5124 = vunpack.c.l.s4 1934713408
        %v5125 = vunpack.c.0.s8 %v5124
        %v5126 = vlaneseq
        %v5127 = vshrl.u32 %v5126, 7
        %v5128 = vsub.s32 %v5125, %v5127
        %v5129 = vrot.slane %v5121, %v5128
        %v5131 = vunpack.c.l.s4 1934713408
        %v5132 = vunpack.c.0.s8 %v5131
        %v5133 = vlaneseq
        %v5134 = vshrl.u32 %v5133, 7
        %v5135 = vsub.s32 %v5132, %v5134
        %v5136 = vrot.slane %v5122, %v5135
        %v5137 = vcombine.low %v5072, %v5088
        %v5138 = vcombine.high %v5072, %v5088
        %v5140 = vunpack.c.l.s4 1934713408
        %v5141 = vunpack.c.0.s8 %v5140
        %v5142 = vlaneseq
        %v5143 = vshrl.u32 %v5142, 7
        %v5144 = vsub.s32 %v5141, %v5143
        %v5145 = vrot.slane %v5137, %v5144
        %v5147 = vunpack.c.l.s4 1934713408
        %v5148 = vunpack.c.0.s8 %v5147
        %v5149 = vlaneseq
        %v5150 = vshrl.u32 %v5149, 7
        %v5151 = vsub.s32 %v5148, %v5150
        %v5152 = vrot.slane %v5138, %v5151
        %v5153 = vcombine.low %v5097, %v5129
        %v5154 = vcombine.high %v5097, %v5129
        %v5155 = vcombine.low %v5104, %v5136
        %v5156 = vcombine.high %v5104, %v5136
        %v5157 = vcombine.low %v5113, %v5145
        %v5158 = vcombine.high %v5113, %v5145
        %v5159 = vcombine.low %v5120, %v5152
        %v5160 = vcombine.high %v5120, %v5152
        %5162 = vrot.lane.b32.xlu0 %v5018, 16
        %v5163 = vpop.permute.xlu0 %5162
        %5166 = vrot.lane.b32.xlu0 %v5019, 32
        %v5167 = vpop.permute.xlu0 %5166
        %5170 = vrot.lane.b32.xlu0 %v5020, 48
        %v5171 = vpop.permute.xlu0 %5170
        %5174 = vrot.lane.b32.xlu0 %v5021, 64
        %v5175 = vpop.permute.xlu0 %5174
        %5178 = vrot.lane.b32.xlu0 %v5022, 80
        %v5179 = vpop.permute.xlu0 %5178
        %5182 = vrot.lane.b32.xlu0 %v5023, 96
        %v5183 = vpop.permute.xlu0 %5182
        %5186 = vrot.lane.b32.xlu0 %v5024, 112
        %v5187 = vpop.permute.xlu0 %5186
        %5190 = vrot.lane.b32.xlu0 %v5154, 16
        %v5191 = vpop.permute.xlu0 %5190
        %5194 = vrot.lane.b32.xlu0 %v5155, 32
        %v5195 = vpop.permute.xlu0 %5194
        %5198 = vrot.lane.b32.xlu0 %v5156, 48
        %v5199 = vpop.permute.xlu0 %5198
        %5202 = vrot.lane.b32.xlu0 %v5157, 64
        %v5203 = vpop.permute.xlu0 %5202
        %5206 = vrot.lane.b32.xlu0 %v5158, 80
        %v5207 = vpop.permute.xlu0 %5206
        %5210 = vrot.lane.b32.xlu0 %v5159, 96
        %v5211 = vpop.permute.xlu0 %5210
        %5214 = vrot.lane.b32.xlu0 %v5160, 112
        %v5215 = vpop.permute.xlu0 %5214
        %v5217 = vsel %vm637, %v5017, %v5163
        %v5218 = vsel %vm639, %v5217, %v5167
        %v5219 = vsel %vm641, %v5218, %v5171
        %v5220 = vsel %vm643, %v5219, %v5175
        %v5221 = vsel %vm645, %v5220, %v5179
        %v5222 = vsel %vm647, %v5221, %v5183
        %v5223 = vsel %vm649, %v5222, %v5187
        %v5224 = vsel %vm637, %v5153, %v5191
        %v5225 = vsel %vm639, %v5224, %v5195
        %v5226 = vsel %vm641, %v5225, %v5199
        %v5227 = vsel %vm643, %v5226, %v5203
        %v5228 = vsel %vm645, %v5227, %v5207
        %v5229 = vsel %vm647, %v5228, %v5211
        %v5230 = vsel %vm649, %v5229, %v5215
        %5231 = vst [vmem:[#allocation3 + $0x10] sm:$0xff] %v5223
        %5232 = vst [vmem:[#allocation3 + $0x18] sm:$0xff] %v5230
        %v5233 = vld [vmem:[#allocation4] sm:$0xff]
        %v5234 = vld [vmem:[#allocation4 + $0x8] sm:$0xff]
        %v5235 = vld [vmem:[#allocation4 + $0x18] sm:$0xff]
        %v5236 = vld [vmem:[#allocation4 + $0x20] sm:$0xff]
        %v5237 = vld [vmem:[#allocation4 + $0x30] sm:$0xff]
        %v5238 = vld [vmem:[#allocation4 + $0x38] sm:$0xff]
        %v5239 = vld [vmem:[#allocation4 + $0x48] sm:$0xff]
        %v5240 = vld [vmem:[#allocation4 + $0x50] sm:$0xff]
        %v5241 = vld [vmem:[#allocation4 + $0x60] sm:$0xff]
        %v5242 = vld [vmem:[#allocation4 + $0x68] sm:$0xff]
        %v5243 = vld [vmem:[#allocation4 + $0x78] sm:$0xff]
        %v5244 = vld [vmem:[#allocation4 + $0x80] sm:$0xff]
        %v5245 = vld [vmem:[#allocation4 + $0x90] sm:$0xff]
        %v5246 = vld [vmem:[#allocation4 + $0x98] sm:$0xff]
        %v5247 = vld [vmem:[#allocation4 + $0xa8] sm:$0xff]
        %v5248 = vld [vmem:[#allocation4 + $0xb0] sm:$0xff]
        %5265 = vrot.lane.b32.xlu0 %v5233, 126
        %v5266 = vpop.permute.xlu0 %5265
        %5267 = vrot.lane.b32.xlu0 %v5234, 126
        %v5268 = vpop.permute.xlu0 %5267
        %5269 = vrot.lane.b32.xlu0 %v5235, 126
        %v5270 = vpop.permute.xlu0 %5269
        %5271 = vrot.lane.b32.xlu0 %v5236, 126
        %v5272 = vpop.permute.xlu0 %5271
        %5273 = vrot.lane.b32.xlu0 %v5237, 126
        %v5274 = vpop.permute.xlu0 %5273
        %5275 = vrot.lane.b32.xlu0 %v5238, 126
        %v5276 = vpop.permute.xlu0 %5275
        %5277 = vrot.lane.b32.xlu0 %v5239, 126
        %v5278 = vpop.permute.xlu0 %5277
        %5279 = vrot.lane.b32.xlu0 %v5240, 126
        %v5280 = vpop.permute.xlu0 %5279
        %5281 = vrot.lane.b32.xlu0 %v5241, 126
        %v5282 = vpop.permute.xlu0 %5281
        %5283 = vrot.lane.b32.xlu0 %v5242, 126
        %v5284 = vpop.permute.xlu0 %5283
        %5285 = vrot.lane.b32.xlu0 %v5243, 126
        %v5286 = vpop.permute.xlu0 %5285
        %5287 = vrot.lane.b32.xlu0 %v5244, 126
        %v5288 = vpop.permute.xlu0 %5287
        %5289 = vrot.lane.b32.xlu0 %v5245, 126
        %v5290 = vpop.permute.xlu0 %5289
        %5291 = vrot.lane.b32.xlu0 %v5246, 126
        %v5292 = vpop.permute.xlu0 %5291
        %5293 = vrot.lane.b32.xlu0 %v5247, 126
        %v5294 = vpop.permute.xlu0 %5293
        %5295 = vrot.lane.b32.xlu0 %v5248, 126
        %v5296 = vpop.permute.xlu0 %5295
        %v5313 = vcombine.low %v5266, %v5274
        %v5314 = vcombine.high %v5266, %v5274
        %v5316 = vunpack.c.l.s4 1983009808
        %v5317 = vunpack.c.0.s8 %v5316
        %v5318 = vlaneseq
        %v5319 = vshrl.u32 %v5318, 7
        %v5320 = vsub.s32 %v5317, %v5319
        %v5321 = vrot.slane %v5313, %v5320
        %v5323 = vunpack.c.l.s4 1983009808
        %v5324 = vunpack.c.0.s8 %v5323
        %v5325 = vlaneseq
        %v5326 = vshrl.u32 %v5325, 7
        %v5327 = vsub.s32 %v5324, %v5326
        %v5328 = vrot.slane %v5314, %v5327
        %v5329 = vcombine.low %v5270, %v5278
        %v5330 = vcombine.high %v5270, %v5278
        %v5332 = vunpack.c.l.s4 1983009808
        %v5333 = vunpack.c.0.s8 %v5332
        %v5334 = vlaneseq
        %v5335 = vshrl.u32 %v5334, 7
        %v5336 = vsub.s32 %v5333, %v5335
        %v5337 = vrot.slane %v5329, %v5336
        %v5339 = vunpack.c.l.s4 1983009808
        %v5340 = vunpack.c.0.s8 %v5339
        %v5341 = vlaneseq
        %v5342 = vshrl.u32 %v5341, 7
        %v5343 = vsub.s32 %v5340, %v5342
        %v5344 = vrot.slane %v5330, %v5343
        %v5345 = vcombine.low %v5282, %v5290
        %v5346 = vcombine.high %v5282, %v5290
        %v5348 = vunpack.c.l.s4 1983009808
        %v5349 = vunpack.c.0.s8 %v5348
        %v5350 = vlaneseq
        %v5351 = vshrl.u32 %v5350, 7
        %v5352 = vsub.s32 %v5349, %v5351
        %v5353 = vrot.slane %v5345, %v5352
        %v5355 = vunpack.c.l.s4 1983009808
        %v5356 = vunpack.c.0.s8 %v5355
        %v5357 = vlaneseq
        %v5358 = vshrl.u32 %v5357, 7
        %v5359 = vsub.s32 %v5356, %v5358
        %v5360 = vrot.slane %v5346, %v5359
        %v5361 = vcombine.low %v5286, %v5294
        %v5362 = vcombine.high %v5286, %v5294
        %v5364 = vunpack.c.l.s4 1983009808
        %v5365 = vunpack.c.0.s8 %v5364
        %v5366 = vlaneseq
        %v5367 = vshrl.u32 %v5366, 7
        %v5368 = vsub.s32 %v5365, %v5367
        %v5369 = vrot.slane %v5361, %v5368
        %v5371 = vunpack.c.l.s4 1983009808
        %v5372 = vunpack.c.0.s8 %v5371
        %v5373 = vlaneseq
        %v5374 = vshrl.u32 %v5373, 7
        %v5375 = vsub.s32 %v5372, %v5374
        %v5376 = vrot.slane %v5362, %v5375
        %v5377 = vcombine.low %v5321, %v5337
        %v5378 = vcombine.high %v5321, %v5337
        %v5380 = vunpack.c.l.s4 1934713408
        %v5381 = vunpack.c.0.s8 %v5380
        %v5382 = vlaneseq
        %v5383 = vshrl.u32 %v5382, 7
        %v5384 = vsub.s32 %v5381, %v5383
        %v5385 = vrot.slane %v5377, %v5384
        %v5387 = vunpack.c.l.s4 1934713408
        %v5388 = vunpack.c.0.s8 %v5387
        %v5389 = vlaneseq
        %v5390 = vshrl.u32 %v5389, 7
        %v5391 = vsub.s32 %v5388, %v5390
        %v5392 = vrot.slane %v5378, %v5391
        %v5393 = vcombine.low %v5328, %v5344
        %v5394 = vcombine.high %v5328, %v5344
        %v5396 = vunpack.c.l.s4 1934713408
        %v5397 = vunpack.c.0.s8 %v5396
        %v5398 = vlaneseq
        %v5399 = vshrl.u32 %v5398, 7
        %v5400 = vsub.s32 %v5397, %v5399
        %v5401 = vrot.slane %v5393, %v5400
        %v5403 = vunpack.c.l.s4 1934713408
        %v5404 = vunpack.c.0.s8 %v5403
        %v5405 = vlaneseq
        %v5406 = vshrl.u32 %v5405, 7
        %v5407 = vsub.s32 %v5404, %v5406
        %v5408 = vrot.slane %v5394, %v5407
        %v5409 = vcombine.low %v5353, %v5369
        %v5410 = vcombine.high %v5353, %v5369
        %v5412 = vunpack.c.l.s4 1934713408
        %v5413 = vunpack.c.0.s8 %v5412
        %v5414 = vlaneseq
        %v5415 = vshrl.u32 %v5414, 7
        %v5416 = vsub.s32 %v5413, %v5415
        %v5417 = vrot.slane %v5409, %v5416
        %v5419 = vunpack.c.l.s4 1934713408
        %v5420 = vunpack.c.0.s8 %v5419
        %v5421 = vlaneseq
        %v5422 = vshrl.u32 %v5421, 7
        %v5423 = vsub.s32 %v5420, %v5422
        %v5424 = vrot.slane %v5410, %v5423
        %v5425 = vcombine.low %v5360, %v5376
        %v5426 = vcombine.high %v5360, %v5376
        %v5428 = vunpack.c.l.s4 1934713408
        %v5429 = vunpack.c.0.s8 %v5428
        %v5430 = vlaneseq
        %v5431 = vshrl.u32 %v5430, 7
        %v5432 = vsub.s32 %v5429, %v5431
        %v5433 = vrot.slane %v5425, %v5432
        %v5435 = vunpack.c.l.s4 1934713408
        %v5436 = vunpack.c.0.s8 %v5435
        %v5437 = vlaneseq
        %v5438 = vshrl.u32 %v5437, 7
        %v5439 = vsub.s32 %v5436, %v5438
        %v5440 = vrot.slane %v5426, %v5439
        %v5441 = vcombine.low %v5385, %v5417
        %v5442 = vcombine.high %v5385, %v5417
        %v5443 = vcombine.low %v5392, %v5424
        %v5444 = vcombine.high %v5392, %v5424
        %v5445 = vcombine.low %v5401, %v5433
        %v5446 = vcombine.high %v5401, %v5433
        %v5447 = vcombine.low %v5408, %v5440
        %v5448 = vcombine.high %v5408, %v5440
        %v5449 = vcombine.low %v5268, %v5276
        %v5450 = vcombine.high %v5268, %v5276
        %v5452 = vunpack.c.l.s4 1983009808
        %v5453 = vunpack.c.0.s8 %v5452
        %v5454 = vlaneseq
        %v5455 = vshrl.u32 %v5454, 7
        %v5456 = vsub.s32 %v5453, %v5455
        %v5457 = vrot.slane %v5449, %v5456
        %v5459 = vunpack.c.l.s4 1983009808
        %v5460 = vunpack.c.0.s8 %v5459
        %v5461 = vlaneseq
        %v5462 = vshrl.u32 %v5461, 7
        %v5463 = vsub.s32 %v5460, %v5462
        %v5464 = vrot.slane %v5450, %v5463
        %v5465 = vcombine.low %v5272, %v5280
        %v5466 = vcombine.high %v5272, %v5280
        %v5468 = vunpack.c.l.s4 1983009808
        %v5469 = vunpack.c.0.s8 %v5468
        %v5470 = vlaneseq
        %v5471 = vshrl.u32 %v5470, 7
        %v5472 = vsub.s32 %v5469, %v5471
        %v5473 = vrot.slane %v5465, %v5472
        %v5475 = vunpack.c.l.s4 1983009808
        %v5476 = vunpack.c.0.s8 %v5475
        %v5477 = vlaneseq
        %v5478 = vshrl.u32 %v5477, 7
        %v5479 = vsub.s32 %v5476, %v5478
        %v5480 = vrot.slane %v5466, %v5479
        %v5481 = vcombine.low %v5284, %v5292
        %v5482 = vcombine.high %v5284, %v5292
        %v5484 = vunpack.c.l.s4 1983009808
        %v5485 = vunpack.c.0.s8 %v5484
        %v5486 = vlaneseq
        %v5487 = vshrl.u32 %v5486, 7
        %v5488 = vsub.s32 %v5485, %v5487
        %v5489 = vrot.slane %v5481, %v5488
        %v5491 = vunpack.c.l.s4 1983009808
        %v5492 = vunpack.c.0.s8 %v5491
        %v5493 = vlaneseq
        %v5494 = vshrl.u32 %v5493, 7
        %v5495 = vsub.s32 %v5492, %v5494
        %v5496 = vrot.slane %v5482, %v5495
        %v5497 = vcombine.low %v5288, %v5296
        %v5498 = vcombine.high %v5288, %v5296
        %v5500 = vunpack.c.l.s4 1983009808
        %v5501 = vunpack.c.0.s8 %v5500
        %v5502 = vlaneseq
        %v5503 = vshrl.u32 %v5502, 7
        %v5504 = vsub.s32 %v5501, %v5503
        %v5505 = vrot.slane %v5497, %v5504
        %v5507 = vunpack.c.l.s4 1983009808
        %v5508 = vunpack.c.0.s8 %v5507
        %v5509 = vlaneseq
        %v5510 = vshrl.u32 %v5509, 7
        %v5511 = vsub.s32 %v5508, %v5510
        %v5512 = vrot.slane %v5498, %v5511
        %v5513 = vcombine.low %v5457, %v5473
        %v5514 = vcombine.high %v5457, %v5473
        %v5516 = vunpack.c.l.s4 1934713408
        %v5517 = vunpack.c.0.s8 %v5516
        %v5518 = vlaneseq
        %v5519 = vshrl.u32 %v5518, 7
        %v5520 = vsub.s32 %v5517, %v5519
        %v5521 = vrot.slane %v5513, %v5520
        %v5523 = vunpack.c.l.s4 1934713408
        %v5524 = vunpack.c.0.s8 %v5523
        %v5525 = vlaneseq
        %v5526 = vshrl.u32 %v5525, 7
        %v5527 = vsub.s32 %v5524, %v5526
        %v5528 = vrot.slane %v5514, %v5527
        %v5529 = vcombine.low %v5464, %v5480
        %v5530 = vcombine.high %v5464, %v5480
        %v5532 = vunpack.c.l.s4 1934713408
        %v5533 = vunpack.c.0.s8 %v5532
        %v5534 = vlaneseq
        %v5535 = vshrl.u32 %v5534, 7
        %v5536 = vsub.s32 %v5533, %v5535
        %v5537 = vrot.slane %v5529, %v5536
        %v5539 = vunpack.c.l.s4 1934713408
        %v5540 = vunpack.c.0.s8 %v5539
        %v5541 = vlaneseq
        %v5542 = vshrl.u32 %v5541, 7
        %v5543 = vsub.s32 %v5540, %v5542
        %v5544 = vrot.slane %v5530, %v5543
        %v5545 = vcombine.low %v5489, %v5505
        %v5546 = vcombine.high %v5489, %v5505
        %v5548 = vunpack.c.l.s4 1934713408
        %v5549 = vunpack.c.0.s8 %v5548
        %v5550 = vlaneseq
        %v5551 = vshrl.u32 %v5550, 7
        %v5552 = vsub.s32 %v5549, %v5551
        %v5553 = vrot.slane %v5545, %v5552
        %v5555 = vunpack.c.l.s4 1934713408
        %v5556 = vunpack.c.0.s8 %v5555
        %v5557 = vlaneseq
        %v5558 = vshrl.u32 %v5557, 7
        %v5559 = vsub.s32 %v5556, %v5558
        %v5560 = vrot.slane %v5546, %v5559
        %v5561 = vcombine.low %v5496, %v5512
        %v5562 = vcombine.high %v5496, %v5512
        %v5564 = vunpack.c.l.s4 1934713408
        %v5565 = vunpack.c.0.s8 %v5564
        %v5566 = vlaneseq
        %v5567 = vshrl.u32 %v5566, 7
        %v5568 = vsub.s32 %v5565, %v5567
        %v5569 = vrot.slane %v5561, %v5568
        %v5571 = vunpack.c.l.s4 1934713408
        %v5572 = vunpack.c.0.s8 %v5571
        %v5573 = vlaneseq
        %v5574 = vshrl.u32 %v5573, 7
        %v5575 = vsub.s32 %v5572, %v5574
        %v5576 = vrot.slane %v5562, %v5575
        %v5577 = vcombine.low %v5521, %v5553
        %v5578 = vcombine.high %v5521, %v5553
        %v5579 = vcombine.low %v5528, %v5560
        %v5580 = vcombine.high %v5528, %v5560
        %v5581 = vcombine.low %v5537, %v5569
        %v5582 = vcombine.high %v5537, %v5569
        %v5583 = vcombine.low %v5544, %v5576
        %v5584 = vcombine.high %v5544, %v5576
        %5586 = vrot.lane.b32.xlu0 %v5442, 16
        %v5587 = vpop.permute.xlu0 %5586
        %5590 = vrot.lane.b32.xlu0 %v5443, 32
        %v5591 = vpop.permute.xlu0 %5590
        %5594 = vrot.lane.b32.xlu0 %v5444, 48
        %v5595 = vpop.permute.xlu0 %5594
        %5598 = vrot.lane.b32.xlu0 %v5445, 64
        %v5599 = vpop.permute.xlu0 %5598
        %5602 = vrot.lane.b32.xlu0 %v5446, 80
        %v5603 = vpop.permute.xlu0 %5602
        %5606 = vrot.lane.b32.xlu0 %v5447, 96
        %v5607 = vpop.permute.xlu0 %5606
        %5610 = vrot.lane.b32.xlu0 %v5448, 112
        %v5611 = vpop.permute.xlu0 %5610
        %5614 = vrot.lane.b32.xlu0 %v5578, 16
        %v5615 = vpop.permute.xlu0 %5614
        %5618 = vrot.lane.b32.xlu0 %v5579, 32
        %v5619 = vpop.permute.xlu0 %5618
        %5622 = vrot.lane.b32.xlu0 %v5580, 48
        %v5623 = vpop.permute.xlu0 %5622
        %5626 = vrot.lane.b32.xlu0 %v5581, 64
        %v5627 = vpop.permute.xlu0 %5626
        %5630 = vrot.lane.b32.xlu0 %v5582, 80
        %v5631 = vpop.permute.xlu0 %5630
        %5634 = vrot.lane.b32.xlu0 %v5583, 96
        %v5635 = vpop.permute.xlu0 %5634
        %5638 = vrot.lane.b32.xlu0 %v5584, 112
        %v5639 = vpop.permute.xlu0 %5638
        %v5641 = vsel %vm637, %v5441, %v5587
        %v5642 = vsel %vm639, %v5641, %v5591
        %v5643 = vsel %vm641, %v5642, %v5595
        %v5644 = vsel %vm643, %v5643, %v5599
        %v5645 = vsel %vm645, %v5644, %v5603
        %v5646 = vsel %vm647, %v5645, %v5607
        %v5647 = vsel %vm649, %v5646, %v5611
        %v5648 = vsel %vm637, %v5577, %v5615
        %v5649 = vsel %vm639, %v5648, %v5619
        %v5650 = vsel %vm641, %v5649, %v5623
        %v5651 = vsel %vm643, %v5650, %v5627
        %v5652 = vsel %vm645, %v5651, %v5631
        %v5653 = vsel %vm647, %v5652, %v5635
        %v5654 = vsel %vm649, %v5653, %v5639
        %5655 = vst [vmem:[#allocation3 + $0x20] sm:$0xff] %v5647
        %5656 = vst [vmem:[#allocation3 + $0x28] sm:$0xff] %v5654
        %v5657 = vld [vmem:[#allocation4 + $0x1] sm:$0xff]
        %v5658 = vld [vmem:[#allocation4 + $0x9] sm:$0xff]
        %v5659 = vld [vmem:[#allocation4 + $0x19] sm:$0xff]
        %v5660 = vld [vmem:[#allocation4 + $0x21] sm:$0xff]
        %v5661 = vld [vmem:[#allocation4 + $0x31] sm:$0xff]
        %v5662 = vld [vmem:[#allocation4 + $0x39] sm:$0xff]
        %v5663 = vld [vmem:[#allocation4 + $0x49] sm:$0xff]
        %v5664 = vld [vmem:[#allocation4 + $0x51] sm:$0xff]
        %v5665 = vld [vmem:[#allocation4 + $0x61] sm:$0xff]
        %v5666 = vld [vmem:[#allocation4 + $0x69] sm:$0xff]
        %v5667 = vld [vmem:[#allocation4 + $0x79] sm:$0xff]
        %v5668 = vld [vmem:[#allocation4 + $0x81] sm:$0xff]
        %v5669 = vld [vmem:[#allocation4 + $0x91] sm:$0xff]
        %v5670 = vld [vmem:[#allocation4 + $0x99] sm:$0xff]
        %v5671 = vld [vmem:[#allocation4 + $0xa9] sm:$0xff]
        %v5672 = vld [vmem:[#allocation4 + $0xb1] sm:$0xff]
        %v5673 = vcombine.low %v5657, %v5661
        %v5674 = vcombine.high %v5657, %v5661
        %v5676 = vunpack.c.l.s4 1983009808
        %v5677 = vunpack.c.0.s8 %v5676
        %v5678 = vlaneseq
        %v5679 = vshrl.u32 %v5678, 7
        %v5680 = vsub.s32 %v5677, %v5679
        %v5681 = vrot.slane %v5673, %v5680
        %v5683 = vunpack.c.l.s4 1983009808
        %v5684 = vunpack.c.0.s8 %v5683
        %v5685 = vlaneseq
        %v5686 = vshrl.u32 %v5685, 7
        %v5687 = vsub.s32 %v5684, %v5686
        %v5688 = vrot.slane %v5674, %v5687
        %v5689 = vcombine.low %v5659, %v5663
        %v5690 = vcombine.high %v5659, %v5663
        %v5692 = vunpack.c.l.s4 1983009808
        %v5693 = vunpack.c.0.s8 %v5692
        %v5694 = vlaneseq
        %v5695 = vshrl.u32 %v5694, 7
        %v5696 = vsub.s32 %v5693, %v5695
        %v5697 = vrot.slane %v5689, %v5696
        %v5699 = vunpack.c.l.s4 1983009808
        %v5700 = vunpack.c.0.s8 %v5699
        %v5701 = vlaneseq
        %v5702 = vshrl.u32 %v5701, 7
        %v5703 = vsub.s32 %v5700, %v5702
        %v5704 = vrot.slane %v5690, %v5703
        %v5705 = vcombine.low %v5665, %v5669
        %v5706 = vcombine.high %v5665, %v5669
        %v5708 = vunpack.c.l.s4 1983009808
        %v5709 = vunpack.c.0.s8 %v5708
        %v5710 = vlaneseq
        %v5711 = vshrl.u32 %v5710, 7
        %v5712 = vsub.s32 %v5709, %v5711
        %v5713 = vrot.slane %v5705, %v5712
        %v5715 = vunpack.c.l.s4 1983009808
        %v5716 = vunpack.c.0.s8 %v5715
        %v5717 = vlaneseq
        %v5718 = vshrl.u32 %v5717, 7
        %v5719 = vsub.s32 %v5716, %v5718
        %v5720 = vrot.slane %v5706, %v5719
        %v5721 = vcombine.low %v5667, %v5671
        %v5722 = vcombine.high %v5667, %v5671
        %v5724 = vunpack.c.l.s4 1983009808
        %v5725 = vunpack.c.0.s8 %v5724
        %v5726 = vlaneseq
        %v5727 = vshrl.u32 %v5726, 7
        %v5728 = vsub.s32 %v5725, %v5727
        %v5729 = vrot.slane %v5721, %v5728
        %v5731 = vunpack.c.l.s4 1983009808
        %v5732 = vunpack.c.0.s8 %v5731
        %v5733 = vlaneseq
        %v5734 = vshrl.u32 %v5733, 7
        %v5735 = vsub.s32 %v5732, %v5734
        %v5736 = vrot.slane %v5722, %v5735
        %v5737 = vcombine.low %v5681, %v5697
        %v5738 = vcombine.high %v5681, %v5697
        %v5740 = vunpack.c.l.s4 1934713408
        %v5741 = vunpack.c.0.s8 %v5740
        %v5742 = vlaneseq
        %v5743 = vshrl.u32 %v5742, 7
        %v5744 = vsub.s32 %v5741, %v5743
        %v5745 = vrot.slane %v5737, %v5744
        %v5747 = vunpack.c.l.s4 1934713408
        %v5748 = vunpack.c.0.s8 %v5747
        %v5749 = vlaneseq
        %v5750 = vshrl.u32 %v5749, 7
        %v5751 = vsub.s32 %v5748, %v5750
        %v5752 = vrot.slane %v5738, %v5751
        %v5753 = vcombine.low %v5688, %v5704
        %v5754 = vcombine.high %v5688, %v5704
        %v5756 = vunpack.c.l.s4 1934713408
        %v5757 = vunpack.c.0.s8 %v5756
        %v5758 = vlaneseq
        %v5759 = vshrl.u32 %v5758, 7
        %v5760 = vsub.s32 %v5757, %v5759
        %v5761 = vrot.slane %v5753, %v5760
        %v5763 = vunpack.c.l.s4 1934713408
        %v5764 = vunpack.c.0.s8 %v5763
        %v5765 = vlaneseq
        %v5766 = vshrl.u32 %v5765, 7
        %v5767 = vsub.s32 %v5764, %v5766
        %v5768 = vrot.slane %v5754, %v5767
        %v5769 = vcombine.low %v5713, %v5729
        %v5770 = vcombine.high %v5713, %v5729
        %v5772 = vunpack.c.l.s4 1934713408
        %v5773 = vunpack.c.0.s8 %v5772
        %v5774 = vlaneseq
        %v5775 = vshrl.u32 %v5774, 7
        %v5776 = vsub.s32 %v5773, %v5775
        %v5777 = vrot.slane %v5769, %v5776
        %v5779 = vunpack.c.l.s4 1934713408
        %v5780 = vunpack.c.0.s8 %v5779
        %v5781 = vlaneseq
        %v5782 = vshrl.u32 %v5781, 7
        %v5783 = vsub.s32 %v5780, %v5782
        %v5784 = vrot.slane %v5770, %v5783
        %v5785 = vcombine.low %v5720, %v5736
        %v5786 = vcombine.high %v5720, %v5736
        %v5788 = vunpack.c.l.s4 1934713408
        %v5789 = vunpack.c.0.s8 %v5788
        %v5790 = vlaneseq
        %v5791 = vshrl.u32 %v5790, 7
        %v5792 = vsub.s32 %v5789, %v5791
        %v5793 = vrot.slane %v5785, %v5792
        %v5795 = vunpack.c.l.s4 1934713408
        %v5796 = vunpack.c.0.s8 %v5795
        %v5797 = vlaneseq
        %v5798 = vshrl.u32 %v5797, 7
        %v5799 = vsub.s32 %v5796, %v5798
        %v5800 = vrot.slane %v5786, %v5799
        %v5801 = vcombine.low %v5745, %v5777
        %v5802 = vcombine.high %v5745, %v5777
        %v5803 = vcombine.low %v5752, %v5784
        %v5804 = vcombine.high %v5752, %v5784
        %v5805 = vcombine.low %v5761, %v5793
        %v5806 = vcombine.high %v5761, %v5793
        %v5807 = vcombine.low %v5768, %v5800
        %v5808 = vcombine.high %v5768, %v5800
        %v5809 = vcombine.low %v5658, %v5662
        %v5810 = vcombine.high %v5658, %v5662
        %v5812 = vunpack.c.l.s4 1983009808
        %v5813 = vunpack.c.0.s8 %v5812
        %v5814 = vlaneseq
        %v5815 = vshrl.u32 %v5814, 7
        %v5816 = vsub.s32 %v5813, %v5815
        %v5817 = vrot.slane %v5809, %v5816
        %v5819 = vunpack.c.l.s4 1983009808
        %v5820 = vunpack.c.0.s8 %v5819
        %v5821 = vlaneseq
        %v5822 = vshrl.u32 %v5821, 7
        %v5823 = vsub.s32 %v5820, %v5822
        %v5824 = vrot.slane %v5810, %v5823
        %v5825 = vcombine.low %v5660, %v5664
        %v5826 = vcombine.high %v5660, %v5664
        %v5828 = vunpack.c.l.s4 1983009808
        %v5829 = vunpack.c.0.s8 %v5828
        %v5830 = vlaneseq
        %v5831 = vshrl.u32 %v5830, 7
        %v5832 = vsub.s32 %v5829, %v5831
        %v5833 = vrot.slane %v5825, %v5832
        %v5835 = vunpack.c.l.s4 1983009808
        %v5836 = vunpack.c.0.s8 %v5835
        %v5837 = vlaneseq
        %v5838 = vshrl.u32 %v5837, 7
        %v5839 = vsub.s32 %v5836, %v5838
        %v5840 = vrot.slane %v5826, %v5839
        %v5841 = vcombine.low %v5666, %v5670
        %v5842 = vcombine.high %v5666, %v5670
        %v5844 = vunpack.c.l.s4 1983009808
        %v5845 = vunpack.c.0.s8 %v5844
        %v5846 = vlaneseq
        %v5847 = vshrl.u32 %v5846, 7
        %v5848 = vsub.s32 %v5845, %v5847
        %v5849 = vrot.slane %v5841, %v5848
        %v5851 = vunpack.c.l.s4 1983009808
        %v5852 = vunpack.c.0.s8 %v5851
        %v5853 = vlaneseq
        %v5854 = vshrl.u32 %v5853, 7
        %v5855 = vsub.s32 %v5852, %v5854
        %v5856 = vrot.slane %v5842, %v5855
        %v5857 = vcombine.low %v5668, %v5672
        %v5858 = vcombine.high %v5668, %v5672
        %v5860 = vunpack.c.l.s4 1983009808
        %v5861 = vunpack.c.0.s8 %v5860
        %v5862 = vlaneseq
        %v5863 = vshrl.u32 %v5862, 7
        %v5864 = vsub.s32 %v5861, %v5863
        %v5865 = vrot.slane %v5857, %v5864
        %v5867 = vunpack.c.l.s4 1983009808
        %v5868 = vunpack.c.0.s8 %v5867
        %v5869 = vlaneseq
        %v5870 = vshrl.u32 %v5869, 7
        %v5871 = vsub.s32 %v5868, %v5870
        %v5872 = vrot.slane %v5858, %v5871
        %v5873 = vcombine.low %v5817, %v5833
        %v5874 = vcombine.high %v5817, %v5833
        %v5876 = vunpack.c.l.s4 1934713408
        %v5877 = vunpack.c.0.s8 %v5876
        %v5878 = vlaneseq
        %v5879 = vshrl.u32 %v5878, 7
        %v5880 = vsub.s32 %v5877, %v5879
        %v5881 = vrot.slane %v5873, %v5880
        %v5883 = vunpack.c.l.s4 1934713408
        %v5884 = vunpack.c.0.s8 %v5883
        %v5885 = vlaneseq
        %v5886 = vshrl.u32 %v5885, 7
        %v5887 = vsub.s32 %v5884, %v5886
        %v5888 = vrot.slane %v5874, %v5887
        %v5889 = vcombine.low %v5824, %v5840
        %v5890 = vcombine.high %v5824, %v5840
        %v5892 = vunpack.c.l.s4 1934713408
        %v5893 = vunpack.c.0.s8 %v5892
        %v5894 = vlaneseq
        %v5895 = vshrl.u32 %v5894, 7
        %v5896 = vsub.s32 %v5893, %v5895
        %v5897 = vrot.slane %v5889, %v5896
        %v5899 = vunpack.c.l.s4 1934713408
        %v5900 = vunpack.c.0.s8 %v5899
        %v5901 = vlaneseq
        %v5902 = vshrl.u32 %v5901, 7
        %v5903 = vsub.s32 %v5900, %v5902
        %v5904 = vrot.slane %v5890, %v5903
        %v5905 = vcombine.low %v5849, %v5865
        %v5906 = vcombine.high %v5849, %v5865
        %v5908 = vunpack.c.l.s4 1934713408
        %v5909 = vunpack.c.0.s8 %v5908
        %v5910 = vlaneseq
        %v5911 = vshrl.u32 %v5910, 7
        %v5912 = vsub.s32 %v5909, %v5911
        %v5913 = vrot.slane %v5905, %v5912
        %v5915 = vunpack.c.l.s4 1934713408
        %v5916 = vunpack.c.0.s8 %v5915
        %v5917 = vlaneseq
        %v5918 = vshrl.u32 %v5917, 7
        %v5919 = vsub.s32 %v5916, %v5918
        %v5920 = vrot.slane %v5906, %v5919
        %v5921 = vcombine.low %v5856, %v5872
        %v5922 = vcombine.high %v5856, %v5872
        %v5924 = vunpack.c.l.s4 1934713408
        %v5925 = vunpack.c.0.s8 %v5924
        %v5926 = vlaneseq
        %v5927 = vshrl.u32 %v5926, 7
        %v5928 = vsub.s32 %v5925, %v5927
        %v5929 = vrot.slane %v5921, %v5928
        %v5931 = vunpack.c.l.s4 1934713408
        %v5932 = vunpack.c.0.s8 %v5931
        %v5933 = vlaneseq
        %v5934 = vshrl.u32 %v5933, 7
        %v5935 = vsub.s32 %v5932, %v5934
        %v5936 = vrot.slane %v5922, %v5935
        %v5937 = vcombine.low %v5881, %v5913
        %v5938 = vcombine.high %v5881, %v5913
        %v5939 = vcombine.low %v5888, %v5920
        %v5940 = vcombine.high %v5888, %v5920
        %v5941 = vcombine.low %v5897, %v5929
        %v5942 = vcombine.high %v5897, %v5929
        %v5943 = vcombine.low %v5904, %v5936
        %v5944 = vcombine.high %v5904, %v5936
        %5946 = vrot.lane.b32.xlu0 %v5802, 16
        %v5947 = vpop.permute.xlu0 %5946
        %5950 = vrot.lane.b32.xlu0 %v5803, 32
        %v5951 = vpop.permute.xlu0 %5950
        %5954 = vrot.lane.b32.xlu0 %v5804, 48
        %v5955 = vpop.permute.xlu0 %5954
        %5958 = vrot.lane.b32.xlu0 %v5805, 64
        %v5959 = vpop.permute.xlu0 %5958
        %5962 = vrot.lane.b32.xlu0 %v5806, 80
        %v5963 = vpop.permute.xlu0 %5962
        %5966 = vrot.lane.b32.xlu0 %v5807, 96
        %v5967 = vpop.permute.xlu0 %5966
        %5970 = vrot.lane.b32.xlu0 %v5808, 112
        %v5971 = vpop.permute.xlu0 %5970
        %5974 = vrot.lane.b32.xlu0 %v5938, 16
        %v5975 = vpop.permute.xlu0 %5974
        %5978 = vrot.lane.b32.xlu0 %v5939, 32
        %v5979 = vpop.permute.xlu0 %5978
        %5982 = vrot.lane.b32.xlu0 %v5940, 48
        %v5983 = vpop.permute.xlu0 %5982
        %5986 = vrot.lane.b32.xlu0 %v5941, 64
        %v5987 = vpop.permute.xlu0 %5986
        %5990 = vrot.lane.b32.xlu0 %v5942, 80
        %v5991 = vpop.permute.xlu0 %5990
        %5994 = vrot.lane.b32.xlu0 %v5943, 96
        %v5995 = vpop.permute.xlu0 %5994
        %5998 = vrot.lane.b32.xlu0 %v5944, 112
        %v5999 = vpop.permute.xlu0 %5998
        %v6001 = vsel %vm637, %v5801, %v5947
        %v6002 = vsel %vm639, %v6001, %v5951
        %v6003 = vsel %vm641, %v6002, %v5955
        %v6004 = vsel %vm643, %v6003, %v5959
        %v6005 = vsel %vm645, %v6004, %v5963
        %v6006 = vsel %vm647, %v6005, %v5967
        %v6007 = vsel %vm649, %v6006, %v5971
        %v6008 = vsel %vm637, %v5937, %v5975
        %v6009 = vsel %vm639, %v6008, %v5979
        %v6010 = vsel %vm641, %v6009, %v5983
        %v6011 = vsel %vm643, %v6010, %v5987
        %v6012 = vsel %vm645, %v6011, %v5991
        %v6013 = vsel %vm647, %v6012, %v5995
        %v6014 = vsel %vm649, %v6013, %v5999
        %6015 = vst [vmem:[#allocation3 + $0x30] sm:$0xff] %v6007
        %6016 = vst [vmem:[#allocation3 + $0x38] sm:$0xff] %v6014
        %v6017 = vld [vmem:[#allocation4 + $0x1] sm:$0xff]
        %v6018 = vld [vmem:[#allocation4 + $0x9] sm:$0xff]
        %v6019 = vld [vmem:[#allocation4 + $0x19] sm:$0xff]
        %v6020 = vld [vmem:[#allocation4 + $0x21] sm:$0xff]
        %v6021 = vld [vmem:[#allocation4 + $0x31] sm:$0xff]
        %v6022 = vld [vmem:[#allocation4 + $0x39] sm:$0xff]
        %v6023 = vld [vmem:[#allocation4 + $0x49] sm:$0xff]
        %v6024 = vld [vmem:[#allocation4 + $0x51] sm:$0xff]
        %v6025 = vld [vmem:[#allocation4 + $0x61] sm:$0xff]
        %v6026 = vld [vmem:[#allocation4 + $0x69] sm:$0xff]
        %v6027 = vld [vmem:[#allocation4 + $0x79] sm:$0xff]
        %v6028 = vld [vmem:[#allocation4 + $0x81] sm:$0xff]
        %v6029 = vld [vmem:[#allocation4 + $0x91] sm:$0xff]
        %v6030 = vld [vmem:[#allocation4 + $0x99] sm:$0xff]
        %v6031 = vld [vmem:[#allocation4 + $0xa9] sm:$0xff]
        %v6032 = vld [vmem:[#allocation4 + $0xb1] sm:$0xff]
        %6049 = vrot.lane.b32.xlu0 %v6017, 127
        %v6050 = vpop.permute.xlu0 %6049
        %6051 = vrot.lane.b32.xlu0 %v6018, 127
        %v6052 = vpop.permute.xlu0 %6051
        %6053 = vrot.lane.b32.xlu0 %v6019, 127
        %v6054 = vpop.permute.xlu0 %6053
        %6055 = vrot.lane.b32.xlu0 %v6020, 127
        %v6056 = vpop.permute.xlu0 %6055
        %6057 = vrot.lane.b32.xlu0 %v6021, 127
        %v6058 = vpop.permute.xlu0 %6057
        %6059 = vrot.lane.b32.xlu0 %v6022, 127
        %v6060 = vpop.permute.xlu0 %6059
        %6061 = vrot.lane.b32.xlu0 %v6023, 127
        %v6062 = vpop.permute.xlu0 %6061
        %6063 = vrot.lane.b32.xlu0 %v6024, 127
        %v6064 = vpop.permute.xlu0 %6063
        %6065 = vrot.lane.b32.xlu0 %v6025, 127
        %v6066 = vpop.permute.xlu0 %6065
        %6067 = vrot.lane.b32.xlu0 %v6026, 127
        %v6068 = vpop.permute.xlu0 %6067
        %6069 = vrot.lane.b32.xlu0 %v6027, 127
        %v6070 = vpop.permute.xlu0 %6069
        %6071 = vrot.lane.b32.xlu0 %v6028, 127
        %v6072 = vpop.permute.xlu0 %6071
        %6073 = vrot.lane.b32.xlu0 %v6029, 127
        %v6074 = vpop.permute.xlu0 %6073
        %6075 = vrot.lane.b32.xlu0 %v6030, 127
        %v6076 = vpop.permute.xlu0 %6075
        %6077 = vrot.lane.b32.xlu0 %v6031, 127
        %v6078 = vpop.permute.xlu0 %6077
        %6079 = vrot.lane.b32.xlu0 %v6032, 127
        %v6080 = vpop.permute.xlu0 %6079
        %v6097 = vcombine.low %v6050, %v6058
        %v6098 = vcombine.high %v6050, %v6058
        %v6100 = vunpack.c.l.s4 1983009808
        %v6101 = vunpack.c.0.s8 %v6100
        %v6102 = vlaneseq
        %v6103 = vshrl.u32 %v6102, 7
        %v6104 = vsub.s32 %v6101, %v6103
        %v6105 = vrot.slane %v6097, %v6104
        %v6107 = vunpack.c.l.s4 1983009808
        %v6108 = vunpack.c.0.s8 %v6107
        %v6109 = vlaneseq
        %v6110 = vshrl.u32 %v6109, 7
        %v6111 = vsub.s32 %v6108, %v6110
        %v6112 = vrot.slane %v6098, %v6111
        %v6113 = vcombine.low %v6054, %v6062
        %v6114 = vcombine.high %v6054, %v6062
        %v6116 = vunpack.c.l.s4 1983009808
        %v6117 = vunpack.c.0.s8 %v6116
        %v6118 = vlaneseq
        %v6119 = vshrl.u32 %v6118, 7
        %v6120 = vsub.s32 %v6117, %v6119
        %v6121 = vrot.slane %v6113, %v6120
        %v6123 = vunpack.c.l.s4 1983009808
        %v6124 = vunpack.c.0.s8 %v6123
        %v6125 = vlaneseq
        %v6126 = vshrl.u32 %v6125, 7
        %v6127 = vsub.s32 %v6124, %v6126
        %v6128 = vrot.slane %v6114, %v6127
        %v6129 = vcombine.low %v6066, %v6074
        %v6130 = vcombine.high %v6066, %v6074
        %v6132 = vunpack.c.l.s4 1983009808
        %v6133 = vunpack.c.0.s8 %v6132
        %v6134 = vlaneseq
        %v6135 = vshrl.u32 %v6134, 7
        %v6136 = vsub.s32 %v6133, %v6135
        %v6137 = vrot.slane %v6129, %v6136
        %v6139 = vunpack.c.l.s4 1983009808
        %v6140 = vunpack.c.0.s8 %v6139
        %v6141 = vlaneseq
        %v6142 = vshrl.u32 %v6141, 7
        %v6143 = vsub.s32 %v6140, %v6142
        %v6144 = vrot.slane %v6130, %v6143
        %v6145 = vcombine.low %v6070, %v6078
        %v6146 = vcombine.high %v6070, %v6078
        %v6148 = vunpack.c.l.s4 1983009808
        %v6149 = vunpack.c.0.s8 %v6148
        %v6150 = vlaneseq
        %v6151 = vshrl.u32 %v6150, 7
        %v6152 = vsub.s32 %v6149, %v6151
        %v6153 = vrot.slane %v6145, %v6152
        %v6155 = vunpack.c.l.s4 1983009808
        %v6156 = vunpack.c.0.s8 %v6155
        %v6157 = vlaneseq
        %v6158 = vshrl.u32 %v6157, 7
        %v6159 = vsub.s32 %v6156, %v6158
        %v6160 = vrot.slane %v6146, %v6159
        %v6161 = vcombine.low %v6105, %v6121
        %v6162 = vcombine.high %v6105, %v6121
        %v6164 = vunpack.c.l.s4 1934713408
        %v6165 = vunpack.c.0.s8 %v6164
        %v6166 = vlaneseq
        %v6167 = vshrl.u32 %v6166, 7
        %v6168 = vsub.s32 %v6165, %v6167
        %v6169 = vrot.slane %v6161, %v6168
        %v6171 = vunpack.c.l.s4 1934713408
        %v6172 = vunpack.c.0.s8 %v6171
        %v6173 = vlaneseq
        %v6174 = vshrl.u32 %v6173, 7
        %v6175 = vsub.s32 %v6172, %v6174
        %v6176 = vrot.slane %v6162, %v6175
        %v6177 = vcombine.low %v6112, %v6128
        %v6178 = vcombine.high %v6112, %v6128
        %v6180 = vunpack.c.l.s4 1934713408
        %v6181 = vunpack.c.0.s8 %v6180
        %v6182 = vlaneseq
        %v6183 = vshrl.u32 %v6182, 7
        %v6184 = vsub.s32 %v6181, %v6183
        %v6185 = vrot.slane %v6177, %v6184
        %v6187 = vunpack.c.l.s4 1934713408
        %v6188 = vunpack.c.0.s8 %v6187
        %v6189 = vlaneseq
        %v6190 = vshrl.u32 %v6189, 7
        %v6191 = vsub.s32 %v6188, %v6190
        %v6192 = vrot.slane %v6178, %v6191
        %v6193 = vcombine.low %v6137, %v6153
        %v6194 = vcombine.high %v6137, %v6153
        %v6196 = vunpack.c.l.s4 1934713408
        %v6197 = vunpack.c.0.s8 %v6196
        %v6198 = vlaneseq
        %v6199 = vshrl.u32 %v6198, 7
        %v6200 = vsub.s32 %v6197, %v6199
        %v6201 = vrot.slane %v6193, %v6200
        %v6203 = vunpack.c.l.s4 1934713408
        %v6204 = vunpack.c.0.s8 %v6203
        %v6205 = vlaneseq
        %v6206 = vshrl.u32 %v6205, 7
        %v6207 = vsub.s32 %v6204, %v6206
        %v6208 = vrot.slane %v6194, %v6207
        %v6209 = vcombine.low %v6144, %v6160
        %v6210 = vcombine.high %v6144, %v6160
        %v6212 = vunpack.c.l.s4 1934713408
        %v6213 = vunpack.c.0.s8 %v6212
        %v6214 = vlaneseq
        %v6215 = vshrl.u32 %v6214, 7
        %v6216 = vsub.s32 %v6213, %v6215
        %v6217 = vrot.slane %v6209, %v6216
        %v6219 = vunpack.c.l.s4 1934713408
        %v6220 = vunpack.c.0.s8 %v6219
        %v6221 = vlaneseq
        %v6222 = vshrl.u32 %v6221, 7
        %v6223 = vsub.s32 %v6220, %v6222
        %v6224 = vrot.slane %v6210, %v6223
        %v6225 = vcombine.low %v6169, %v6201
        %v6226 = vcombine.high %v6169, %v6201
        %v6227 = vcombine.low %v6176, %v6208
        %v6228 = vcombine.high %v6176, %v6208
        %v6229 = vcombine.low %v6185, %v6217
        %v6230 = vcombine.high %v6185, %v6217
        %v6231 = vcombine.low %v6192, %v6224
        %v6232 = vcombine.high %v6192, %v6224
        %v6233 = vcombine.low %v6052, %v6060
        %v6234 = vcombine.high %v6052, %v6060
        %v6236 = vunpack.c.l.s4 1983009808
        %v6237 = vunpack.c.0.s8 %v6236
        %v6238 = vlaneseq
        %v6239 = vshrl.u32 %v6238, 7
        %v6240 = vsub.s32 %v6237, %v6239
        %v6241 = vrot.slane %v6233, %v6240
        %v6243 = vunpack.c.l.s4 1983009808
        %v6244 = vunpack.c.0.s8 %v6243
        %v6245 = vlaneseq
        %v6246 = vshrl.u32 %v6245, 7
        %v6247 = vsub.s32 %v6244, %v6246
        %v6248 = vrot.slane %v6234, %v6247
        %v6249 = vcombine.low %v6056, %v6064
        %v6250 = vcombine.high %v6056, %v6064
        %v6252 = vunpack.c.l.s4 1983009808
        %v6253 = vunpack.c.0.s8 %v6252
        %v6254 = vlaneseq
        %v6255 = vshrl.u32 %v6254, 7
        %v6256 = vsub.s32 %v6253, %v6255
        %v6257 = vrot.slane %v6249, %v6256
        %v6259 = vunpack.c.l.s4 1983009808
        %v6260 = vunpack.c.0.s8 %v6259
        %v6261 = vlaneseq
        %v6262 = vshrl.u32 %v6261, 7
        %v6263 = vsub.s32 %v6260, %v6262
        %v6264 = vrot.slane %v6250, %v6263
        %v6265 = vcombine.low %v6068, %v6076
        %v6266 = vcombine.high %v6068, %v6076
        %v6268 = vunpack.c.l.s4 1983009808
        %v6269 = vunpack.c.0.s8 %v6268
        %v6270 = vlaneseq
        %v6271 = vshrl.u32 %v6270, 7
        %v6272 = vsub.s32 %v6269, %v6271
        %v6273 = vrot.slane %v6265, %v6272
        %v6275 = vunpack.c.l.s4 1983009808
        %v6276 = vunpack.c.0.s8 %v6275
        %v6277 = vlaneseq
        %v6278 = vshrl.u32 %v6277, 7
        %v6279 = vsub.s32 %v6276, %v6278
        %v6280 = vrot.slane %v6266, %v6279
        %v6281 = vcombine.low %v6072, %v6080
        %v6282 = vcombine.high %v6072, %v6080
        %v6284 = vunpack.c.l.s4 1983009808
        %v6285 = vunpack.c.0.s8 %v6284
        %v6286 = vlaneseq
        %v6287 = vshrl.u32 %v6286, 7
        %v6288 = vsub.s32 %v6285, %v6287
        %v6289 = vrot.slane %v6281, %v6288
        %v6291 = vunpack.c.l.s4 1983009808
        %v6292 = vunpack.c.0.s8 %v6291
        %v6293 = vlaneseq
        %v6294 = vshrl.u32 %v6293, 7
        %v6295 = vsub.s32 %v6292, %v6294
        %v6296 = vrot.slane %v6282, %v6295
        %v6297 = vcombine.low %v6241, %v6257
        %v6298 = vcombine.high %v6241, %v6257
        %v6300 = vunpack.c.l.s4 1934713408
        %v6301 = vunpack.c.0.s8 %v6300
        %v6302 = vlaneseq
        %v6303 = vshrl.u32 %v6302, 7
        %v6304 = vsub.s32 %v6301, %v6303
        %v6305 = vrot.slane %v6297, %v6304
        %v6307 = vunpack.c.l.s4 1934713408
        %v6308 = vunpack.c.0.s8 %v6307
        %v6309 = vlaneseq
        %v6310 = vshrl.u32 %v6309, 7
        %v6311 = vsub.s32 %v6308, %v6310
        %v6312 = vrot.slane %v6298, %v6311
        %v6313 = vcombine.low %v6248, %v6264
        %v6314 = vcombine.high %v6248, %v6264
        %v6316 = vunpack.c.l.s4 1934713408
        %v6317 = vunpack.c.0.s8 %v6316
        %v6318 = vlaneseq
        %v6319 = vshrl.u32 %v6318, 7
        %v6320 = vsub.s32 %v6317, %v6319
        %v6321 = vrot.slane %v6313, %v6320
        %v6323 = vunpack.c.l.s4 1934713408
        %v6324 = vunpack.c.0.s8 %v6323
        %v6325 = vlaneseq
        %v6326 = vshrl.u32 %v6325, 7
        %v6327 = vsub.s32 %v6324, %v6326
        %v6328 = vrot.slane %v6314, %v6327
        %v6329 = vcombine.low %v6273, %v6289
        %v6330 = vcombine.high %v6273, %v6289
        %v6332 = vunpack.c.l.s4 1934713408
        %v6333 = vunpack.c.0.s8 %v6332
        %v6334 = vlaneseq
        %v6335 = vshrl.u32 %v6334, 7
        %v6336 = vsub.s32 %v6333, %v6335
        %v6337 = vrot.slane %v6329, %v6336
        %v6339 = vunpack.c.l.s4 1934713408
        %v6340 = vunpack.c.0.s8 %v6339
        %v6341 = vlaneseq
        %v6342 = vshrl.u32 %v6341, 7
        %v6343 = vsub.s32 %v6340, %v6342
        %v6344 = vrot.slane %v6330, %v6343
        %v6345 = vcombine.low %v6280, %v6296
        %v6346 = vcombine.high %v6280, %v6296
        %v6348 = vunpack.c.l.s4 1934713408
        %v6349 = vunpack.c.0.s8 %v6348
        %v6350 = vlaneseq
        %v6351 = vshrl.u32 %v6350, 7
        %v6352 = vsub.s32 %v6349, %v6351
        %v6353 = vrot.slane %v6345, %v6352
        %v6355 = vunpack.c.l.s4 1934713408
        %v6356 = vunpack.c.0.s8 %v6355
        %v6357 = vlaneseq
        %v6358 = vshrl.u32 %v6357, 7
        %v6359 = vsub.s32 %v6356, %v6358
        %v6360 = vrot.slane %v6346, %v6359
        %v6361 = vcombine.low %v6305, %v6337
        %v6362 = vcombine.high %v6305, %v6337
        %v6363 = vcombine.low %v6312, %v6344
        %v6364 = vcombine.high %v6312, %v6344
        %v6365 = vcombine.low %v6321, %v6353
        %v6366 = vcombine.high %v6321, %v6353
        %v6367 = vcombine.low %v6328, %v6360
        %v6368 = vcombine.high %v6328, %v6360
        %6370 = vrot.lane.b32.xlu0 %v6226, 16
        %v6371 = vpop.permute.xlu0 %6370
        %6374 = vrot.lane.b32.xlu0 %v6227, 32
        %v6375 = vpop.permute.xlu0 %6374
        %6378 = vrot.lane.b32.xlu0 %v6228, 48
        %v6379 = vpop.permute.xlu0 %6378
        %6382 = vrot.lane.b32.xlu0 %v6229, 64
        %v6383 = vpop.permute.xlu0 %6382
        %6386 = vrot.lane.b32.xlu0 %v6230, 80
        %v6387 = vpop.permute.xlu0 %6386
        %6390 = vrot.lane.b32.xlu0 %v6231, 96
        %v6391 = vpop.permute.xlu0 %6390
        %6394 = vrot.lane.b32.xlu0 %v6232, 112
        %v6395 = vpop.permute.xlu0 %6394
        %6398 = vrot.lane.b32.xlu0 %v6362, 16
        %v6399 = vpop.permute.xlu0 %6398
        %6402 = vrot.lane.b32.xlu0 %v6363, 32
        %v6403 = vpop.permute.xlu0 %6402
        %6406 = vrot.lane.b32.xlu0 %v6364, 48
        %v6407 = vpop.permute.xlu0 %6406
        %6410 = vrot.lane.b32.xlu0 %v6365, 64
        %v6411 = vpop.permute.xlu0 %6410
        %6414 = vrot.lane.b32.xlu0 %v6366, 80
        %v6415 = vpop.permute.xlu0 %6414
        %6418 = vrot.lane.b32.xlu0 %v6367, 96
        %v6419 = vpop.permute.xlu0 %6418
        %6422 = vrot.lane.b32.xlu0 %v6368, 112
        %v6423 = vpop.permute.xlu0 %6422
        %v6425 = vsel %vm637, %v6225, %v6371
        %v6426 = vsel %vm639, %v6425, %v6375
        %v6427 = vsel %vm641, %v6426, %v6379
        %v6428 = vsel %vm643, %v6427, %v6383
        %v6429 = vsel %vm645, %v6428, %v6387
        %v6430 = vsel %vm647, %v6429, %v6391
        %v6431 = vsel %vm649, %v6430, %v6395
        %v6432 = vsel %vm637, %v6361, %v6399
        %v6433 = vsel %vm639, %v6432, %v6403
        %v6434 = vsel %vm641, %v6433, %v6407
        %v6435 = vsel %vm643, %v6434, %v6411
        %v6436 = vsel %vm645, %v6435, %v6415
        %v6437 = vsel %vm647, %v6436, %v6419
        %v6438 = vsel %vm649, %v6437, %v6423
        %6439 = vst [vmem:[#allocation3 + $0x40] sm:$0xff] %v6431
        %6440 = vst [vmem:[#allocation3 + $0x48] sm:$0xff] %v6438
        %v6441 = vld [vmem:[#allocation4 + $0x1] sm:$0xff]
        %v6442 = vld [vmem:[#allocation4 + $0x9] sm:$0xff]
        %v6443 = vld [vmem:[#allocation4 + $0x19] sm:$0xff]
        %v6444 = vld [vmem:[#allocation4 + $0x21] sm:$0xff]
        %v6445 = vld [vmem:[#allocation4 + $0x31] sm:$0xff]
        %v6446 = vld [vmem:[#allocation4 + $0x39] sm:$0xff]
        %v6447 = vld [vmem:[#allocation4 + $0x49] sm:$0xff]
        %v6448 = vld [vmem:[#allocation4 + $0x51] sm:$0xff]
        %v6449 = vld [vmem:[#allocation4 + $0x61] sm:$0xff]
        %v6450 = vld [vmem:[#allocation4 + $0x69] sm:$0xff]
        %v6451 = vld [vmem:[#allocation4 + $0x79] sm:$0xff]
        %v6452 = vld [vmem:[#allocation4 + $0x81] sm:$0xff]
        %v6453 = vld [vmem:[#allocation4 + $0x91] sm:$0xff]
        %v6454 = vld [vmem:[#allocation4 + $0x99] sm:$0xff]
        %v6455 = vld [vmem:[#allocation4 + $0xa9] sm:$0xff]
        %v6456 = vld [vmem:[#allocation4 + $0xb1] sm:$0xff]
        %6473 = vrot.lane.b32.xlu0 %v6441, 126
        %v6474 = vpop.permute.xlu0 %6473
        %6475 = vrot.lane.b32.xlu0 %v6442, 126
        %v6476 = vpop.permute.xlu0 %6475
        %6477 = vrot.lane.b32.xlu0 %v6443, 126
        %v6478 = vpop.permute.xlu0 %6477
        %6479 = vrot.lane.b32.xlu0 %v6444, 126
        %v6480 = vpop.permute.xlu0 %6479
        %6481 = vrot.lane.b32.xlu0 %v6445, 126
        %v6482 = vpop.permute.xlu0 %6481
        %6483 = vrot.lane.b32.xlu0 %v6446, 126
        %v6484 = vpop.permute.xlu0 %6483
        %6485 = vrot.lane.b32.xlu0 %v6447, 126
        %v6486 = vpop.permute.xlu0 %6485
        %6487 = vrot.lane.b32.xlu0 %v6448, 126
        %v6488 = vpop.permute.xlu0 %6487
        %6489 = vrot.lane.b32.xlu0 %v6449, 126
        %v6490 = vpop.permute.xlu0 %6489
        %6491 = vrot.lane.b32.xlu0 %v6450, 126
        %v6492 = vpop.permute.xlu0 %6491
        %6493 = vrot.lane.b32.xlu0 %v6451, 126
        %v6494 = vpop.permute.xlu0 %6493
        %6495 = vrot.lane.b32.xlu0 %v6452, 126
        %v6496 = vpop.permute.xlu0 %6495
        %6497 = vrot.lane.b32.xlu0 %v6453, 126
        %v6498 = vpop.permute.xlu0 %6497
        %6499 = vrot.lane.b32.xlu0 %v6454, 126
        %v6500 = vpop.permute.xlu0 %6499
        %6501 = vrot.lane.b32.xlu0 %v6455, 126
        %v6502 = vpop.permute.xlu0 %6501
        %6503 = vrot.lane.b32.xlu0 %v6456, 126
        %v6504 = vpop.permute.xlu0 %6503
        %v6521 = vcombine.low %v6474, %v6482
        %v6522 = vcombine.high %v6474, %v6482
        %v6524 = vunpack.c.l.s4 1983009808
        %v6525 = vunpack.c.0.s8 %v6524
        %v6526 = vlaneseq
        %v6527 = vshrl.u32 %v6526, 7
        %v6528 = vsub.s32 %v6525, %v6527
        %v6529 = vrot.slane %v6521, %v6528
        %v6531 = vunpack.c.l.s4 1983009808
        %v6532 = vunpack.c.0.s8 %v6531
        %v6533 = vlaneseq
        %v6534 = vshrl.u32 %v6533, 7
        %v6535 = vsub.s32 %v6532, %v6534
        %v6536 = vrot.slane %v6522, %v6535
        %v6537 = vcombine.low %v6478, %v6486
        %v6538 = vcombine.high %v6478, %v6486
        %v6540 = vunpack.c.l.s4 1983009808
        %v6541 = vunpack.c.0.s8 %v6540
        %v6542 = vlaneseq
        %v6543 = vshrl.u32 %v6542, 7
        %v6544 = vsub.s32 %v6541, %v6543
        %v6545 = vrot.slane %v6537, %v6544
        %v6547 = vunpack.c.l.s4 1983009808
        %v6548 = vunpack.c.0.s8 %v6547
        %v6549 = vlaneseq
        %v6550 = vshrl.u32 %v6549, 7
        %v6551 = vsub.s32 %v6548, %v6550
        %v6552 = vrot.slane %v6538, %v6551
        %v6553 = vcombine.low %v6490, %v6498
        %v6554 = vcombine.high %v6490, %v6498
        %v6556 = vunpack.c.l.s4 1983009808
        %v6557 = vunpack.c.0.s8 %v6556
        %v6558 = vlaneseq
        %v6559 = vshrl.u32 %v6558, 7
        %v6560 = vsub.s32 %v6557, %v6559
        %v6561 = vrot.slane %v6553, %v6560
        %v6563 = vunpack.c.l.s4 1983009808
        %v6564 = vunpack.c.0.s8 %v6563
        %v6565 = vlaneseq
        %v6566 = vshrl.u32 %v6565, 7
        %v6567 = vsub.s32 %v6564, %v6566
        %v6568 = vrot.slane %v6554, %v6567
        %v6569 = vcombine.low %v6494, %v6502
        %v6570 = vcombine.high %v6494, %v6502
        %v6572 = vunpack.c.l.s4 1983009808
        %v6573 = vunpack.c.0.s8 %v6572
        %v6574 = vlaneseq
        %v6575 = vshrl.u32 %v6574, 7
        %v6576 = vsub.s32 %v6573, %v6575
        %v6577 = vrot.slane %v6569, %v6576
        %v6579 = vunpack.c.l.s4 1983009808
        %v6580 = vunpack.c.0.s8 %v6579
        %v6581 = vlaneseq
        %v6582 = vshrl.u32 %v6581, 7
        %v6583 = vsub.s32 %v6580, %v6582
        %v6584 = vrot.slane %v6570, %v6583
        %v6585 = vcombine.low %v6529, %v6545
        %v6586 = vcombine.high %v6529, %v6545
        %v6588 = vunpack.c.l.s4 1934713408
        %v6589 = vunpack.c.0.s8 %v6588
        %v6590 = vlaneseq
        %v6591 = vshrl.u32 %v6590, 7
        %v6592 = vsub.s32 %v6589, %v6591
        %v6593 = vrot.slane %v6585, %v6592
        %v6595 = vunpack.c.l.s4 1934713408
        %v6596 = vunpack.c.0.s8 %v6595
        %v6597 = vlaneseq
        %v6598 = vshrl.u32 %v6597, 7
        %v6599 = vsub.s32 %v6596, %v6598
        %v6600 = vrot.slane %v6586, %v6599
        %v6601 = vcombine.low %v6536, %v6552
        %v6602 = vcombine.high %v6536, %v6552
        %v6604 = vunpack.c.l.s4 1934713408
        %v6605 = vunpack.c.0.s8 %v6604
        %v6606 = vlaneseq
        %v6607 = vshrl.u32 %v6606, 7
        %v6608 = vsub.s32 %v6605, %v6607
        %v6609 = vrot.slane %v6601, %v6608
        %v6611 = vunpack.c.l.s4 1934713408
        %v6612 = vunpack.c.0.s8 %v6611
        %v6613 = vlaneseq
        %v6614 = vshrl.u32 %v6613, 7
        %v6615 = vsub.s32 %v6612, %v6614
        %v6616 = vrot.slane %v6602, %v6615
        %v6617 = vcombine.low %v6561, %v6577
        %v6618 = vcombine.high %v6561, %v6577
        %v6620 = vunpack.c.l.s4 1934713408
        %v6621 = vunpack.c.0.s8 %v6620
        %v6622 = vlaneseq
        %v6623 = vshrl.u32 %v6622, 7
        %v6624 = vsub.s32 %v6621, %v6623
        %v6625 = vrot.slane %v6617, %v6624
        %v6627 = vunpack.c.l.s4 1934713408
        %v6628 = vunpack.c.0.s8 %v6627
        %v6629 = vlaneseq
        %v6630 = vshrl.u32 %v6629, 7
        %v6631 = vsub.s32 %v6628, %v6630
        %v6632 = vrot.slane %v6618, %v6631
        %v6633 = vcombine.low %v6568, %v6584
        %v6634 = vcombine.high %v6568, %v6584
        %v6636 = vunpack.c.l.s4 1934713408
        %v6637 = vunpack.c.0.s8 %v6636
        %v6638 = vlaneseq
        %v6639 = vshrl.u32 %v6638, 7
        %v6640 = vsub.s32 %v6637, %v6639
        %v6641 = vrot.slane %v6633, %v6640
        %v6643 = vunpack.c.l.s4 1934713408
        %v6644 = vunpack.c.0.s8 %v6643
        %v6645 = vlaneseq
        %v6646 = vshrl.u32 %v6645, 7
        %v6647 = vsub.s32 %v6644, %v6646
        %v6648 = vrot.slane %v6634, %v6647
        %v6649 = vcombine.low %v6593, %v6625
        %v6650 = vcombine.high %v6593, %v6625
        %v6651 = vcombine.low %v6600, %v6632
        %v6652 = vcombine.high %v6600, %v6632
        %v6653 = vcombine.low %v6609, %v6641
        %v6654 = vcombine.high %v6609, %v6641
        %v6655 = vcombine.low %v6616, %v6648
        %v6656 = vcombine.high %v6616, %v6648
        %v6657 = vcombine.low %v6476, %v6484
        %v6658 = vcombine.high %v6476, %v6484
        %v6660 = vunpack.c.l.s4 1983009808
        %v6661 = vunpack.c.0.s8 %v6660
        %v6662 = vlaneseq
        %v6663 = vshrl.u32 %v6662, 7
        %v6664 = vsub.s32 %v6661, %v6663
        %v6665 = vrot.slane %v6657, %v6664
        %v6667 = vunpack.c.l.s4 1983009808
        %v6668 = vunpack.c.0.s8 %v6667
        %v6669 = vlaneseq
        %v6670 = vshrl.u32 %v6669, 7
        %v6671 = vsub.s32 %v6668, %v6670
        %v6672 = vrot.slane %v6658, %v6671
        %v6673 = vcombine.low %v6480, %v6488
        %v6674 = vcombine.high %v6480, %v6488
        %v6676 = vunpack.c.l.s4 1983009808
        %v6677 = vunpack.c.0.s8 %v6676
        %v6678 = vlaneseq
        %v6679 = vshrl.u32 %v6678, 7
        %v6680 = vsub.s32 %v6677, %v6679
        %v6681 = vrot.slane %v6673, %v6680
        %v6683 = vunpack.c.l.s4 1983009808
        %v6684 = vunpack.c.0.s8 %v6683
        %v6685 = vlaneseq
        %v6686 = vshrl.u32 %v6685, 7
        %v6687 = vsub.s32 %v6684, %v6686
        %v6688 = vrot.slane %v6674, %v6687
        %v6689 = vcombine.low %v6492, %v6500
        %v6690 = vcombine.high %v6492, %v6500
        %v6692 = vunpack.c.l.s4 1983009808
        %v6693 = vunpack.c.0.s8 %v6692
        %v6694 = vlaneseq
        %v6695 = vshrl.u32 %v6694, 7
        %v6696 = vsub.s32 %v6693, %v6695
        %v6697 = vrot.slane %v6689, %v6696
        %v6699 = vunpack.c.l.s4 1983009808
        %v6700 = vunpack.c.0.s8 %v6699
        %v6701 = vlaneseq
        %v6702 = vshrl.u32 %v6701, 7
        %v6703 = vsub.s32 %v6700, %v6702
        %v6704 = vrot.slane %v6690, %v6703
        %v6705 = vcombine.low %v6496, %v6504
        %v6706 = vcombine.high %v6496, %v6504
        %v6708 = vunpack.c.l.s4 1983009808
        %v6709 = vunpack.c.0.s8 %v6708
        %v6710 = vlaneseq
        %v6711 = vshrl.u32 %v6710, 7
        %v6712 = vsub.s32 %v6709, %v6711
        %v6713 = vrot.slane %v6705, %v6712
        %v6715 = vunpack.c.l.s4 1983009808
        %v6716 = vunpack.c.0.s8 %v6715
        %v6717 = vlaneseq
        %v6718 = vshrl.u32 %v6717, 7
        %v6719 = vsub.s32 %v6716, %v6718
        %v6720 = vrot.slane %v6706, %v6719
        %v6721 = vcombine.low %v6665, %v6681
        %v6722 = vcombine.high %v6665, %v6681
        %v6724 = vunpack.c.l.s4 1934713408
        %v6725 = vunpack.c.0.s8 %v6724
        %v6726 = vlaneseq
        %v6727 = vshrl.u32 %v6726, 7
        %v6728 = vsub.s32 %v6725, %v6727
        %v6729 = vrot.slane %v6721, %v6728
        %v6731 = vunpack.c.l.s4 1934713408
        %v6732 = vunpack.c.0.s8 %v6731
        %v6733 = vlaneseq
        %v6734 = vshrl.u32 %v6733, 7
        %v6735 = vsub.s32 %v6732, %v6734
        %v6736 = vrot.slane %v6722, %v6735
        %v6737 = vcombine.low %v6672, %v6688
        %v6738 = vcombine.high %v6672, %v6688
        %v6740 = vunpack.c.l.s4 1934713408
        %v6741 = vunpack.c.0.s8 %v6740
        %v6742 = vlaneseq
        %v6743 = vshrl.u32 %v6742, 7
        %v6744 = vsub.s32 %v6741, %v6743
        %v6745 = vrot.slane %v6737, %v6744
        %v6747 = vunpack.c.l.s4 1934713408
        %v6748 = vunpack.c.0.s8 %v6747
        %v6749 = vlaneseq
        %v6750 = vshrl.u32 %v6749, 7
        %v6751 = vsub.s32 %v6748, %v6750
        %v6752 = vrot.slane %v6738, %v6751
        %v6753 = vcombine.low %v6697, %v6713
        %v6754 = vcombine.high %v6697, %v6713
        %v6756 = vunpack.c.l.s4 1934713408
        %v6757 = vunpack.c.0.s8 %v6756
        %v6758 = vlaneseq
        %v6759 = vshrl.u32 %v6758, 7
        %v6760 = vsub.s32 %v6757, %v6759
        %v6761 = vrot.slane %v6753, %v6760
        %v6763 = vunpack.c.l.s4 1934713408
        %v6764 = vunpack.c.0.s8 %v6763
        %v6765 = vlaneseq
        %v6766 = vshrl.u32 %v6765, 7
        %v6767 = vsub.s32 %v6764, %v6766
        %v6768 = vrot.slane %v6754, %v6767
        %v6769 = vcombine.low %v6704, %v6720
        %v6770 = vcombine.high %v6704, %v6720
        %v6772 = vunpack.c.l.s4 1934713408
        %v6773 = vunpack.c.0.s8 %v6772
        %v6774 = vlaneseq
        %v6775 = vshrl.u32 %v6774, 7
        %v6776 = vsub.s32 %v6773, %v6775
        %v6777 = vrot.slane %v6769, %v6776
        %v6779 = vunpack.c.l.s4 1934713408
        %v6780 = vunpack.c.0.s8 %v6779
        %v6781 = vlaneseq
        %v6782 = vshrl.u32 %v6781, 7
        %v6783 = vsub.s32 %v6780, %v6782
        %v6784 = vrot.slane %v6770, %v6783
        %v6785 = vcombine.low %v6729, %v6761
        %v6786 = vcombine.high %v6729, %v6761
        %v6787 = vcombine.low %v6736, %v6768
        %v6788 = vcombine.high %v6736, %v6768
        %v6789 = vcombine.low %v6745, %v6777
        %v6790 = vcombine.high %v6745, %v6777
        %v6791 = vcombine.low %v6752, %v6784
        %v6792 = vcombine.high %v6752, %v6784
        %6794 = vrot.lane.b32.xlu0 %v6650, 16
        %v6795 = vpop.permute.xlu0 %6794
        %6798 = vrot.lane.b32.xlu0 %v6651, 32
        %v6799 = vpop.permute.xlu0 %6798
        %6802 = vrot.lane.b32.xlu0 %v6652, 48
        %v6803 = vpop.permute.xlu0 %6802
        %6806 = vrot.lane.b32.xlu0 %v6653, 64
        %v6807 = vpop.permute.xlu0 %6806
        %6810 = vrot.lane.b32.xlu0 %v6654, 80
        %v6811 = vpop.permute.xlu0 %6810
        %6814 = vrot.lane.b32.xlu0 %v6655, 96
        %v6815 = vpop.permute.xlu0 %6814
        %6818 = vrot.lane.b32.xlu0 %v6656, 112
        %v6819 = vpop.permute.xlu0 %6818
        %6822 = vrot.lane.b32.xlu0 %v6786, 16
        %v6823 = vpop.permute.xlu0 %6822
        %6826 = vrot.lane.b32.xlu0 %v6787, 32
        %v6827 = vpop.permute.xlu0 %6826
        %6830 = vrot.lane.b32.xlu0 %v6788, 48
        %v6831 = vpop.permute.xlu0 %6830
        %6834 = vrot.lane.b32.xlu0 %v6789, 64
        %v6835 = vpop.permute.xlu0 %6834
        %6838 = vrot.lane.b32.xlu0 %v6790, 80
        %v6839 = vpop.permute.xlu0 %6838
        %6842 = vrot.lane.b32.xlu0 %v6791, 96
        %v6843 = vpop.permute.xlu0 %6842
        %6846 = vrot.lane.b32.xlu0 %v6792, 112
        %v6847 = vpop.permute.xlu0 %6846
        %v6849 = vsel %vm637, %v6649, %v6795
        %v6850 = vsel %vm639, %v6849, %v6799
        %v6851 = vsel %vm641, %v6850, %v6803
        %v6852 = vsel %vm643, %v6851, %v6807
        %v6853 = vsel %vm645, %v6852, %v6811
        %v6854 = vsel %vm647, %v6853, %v6815
        %v6855 = vsel %vm649, %v6854, %v6819
        %v6856 = vsel %vm637, %v6785, %v6823
        %v6857 = vsel %vm639, %v6856, %v6827
        %v6858 = vsel %vm641, %v6857, %v6831
        %v6859 = vsel %vm643, %v6858, %v6835
        %v6860 = vsel %vm645, %v6859, %v6839
        %v6861 = vsel %vm647, %v6860, %v6843
        %v6862 = vsel %vm649, %v6861, %v6847
        %6863 = vst [vmem:[#allocation3 + $0x50] sm:$0xff] %v6855
        %6864 = vst [vmem:[#allocation3 + $0x58] sm:$0xff] %v6862
        %v6865 = vld [vmem:[#allocation4 + $0x2] sm:$0xff]
        %v6866 = vld [vmem:[#allocation4 + $0xa] sm:$0xff]
        %v6867 = vld [vmem:[#allocation4 + $0x1a] sm:$0xff]
        %v6868 = vld [vmem:[#allocation4 + $0x22] sm:$0xff]
        %v6869 = vld [vmem:[#allocation4 + $0x32] sm:$0xff]
        %v6870 = vld [vmem:[#allocation4 + $0x3a] sm:$0xff]
        %v6871 = vld [vmem:[#allocation4 + $0x4a] sm:$0xff]
        %v6872 = vld [vmem:[#allocation4 + $0x52] sm:$0xff]
        %v6873 = vld [vmem:[#allocation4 + $0x62] sm:$0xff]
        %v6874 = vld [vmem:[#allocation4 + $0x6a] sm:$0xff]
        %v6875 = vld [vmem:[#allocation4 + $0x7a] sm:$0xff]
        %v6876 = vld [vmem:[#allocation4 + $0x82] sm:$0xff]
        %v6877 = vld [vmem:[#allocation4 + $0x92] sm:$0xff]
        %v6878 = vld [vmem:[#allocation4 + $0x9a] sm:$0xff]
        %v6879 = vld [vmem:[#allocation4 + $0xaa] sm:$0xff]
        %v6880 = vld [vmem:[#allocation4 + $0xb2] sm:$0xff]
        %v6881 = vcombine.low %v6865, %v6869
        %v6882 = vcombine.high %v6865, %v6869
        %v6884 = vunpack.c.l.s4 1983009808
        %v6885 = vunpack.c.0.s8 %v6884
        %v6886 = vlaneseq
        %v6887 = vshrl.u32 %v6886, 7
        %v6888 = vsub.s32 %v6885, %v6887
        %v6889 = vrot.slane %v6881, %v6888
        %v6891 = vunpack.c.l.s4 1983009808
        %v6892 = vunpack.c.0.s8 %v6891
        %v6893 = vlaneseq
        %v6894 = vshrl.u32 %v6893, 7
        %v6895 = vsub.s32 %v6892, %v6894
        %v6896 = vrot.slane %v6882, %v6895
        %v6897 = vcombine.low %v6867, %v6871
        %v6898 = vcombine.high %v6867, %v6871
        %v6900 = vunpack.c.l.s4 1983009808
        %v6901 = vunpack.c.0.s8 %v6900
        %v6902 = vlaneseq
        %v6903 = vshrl.u32 %v6902, 7
        %v6904 = vsub.s32 %v6901, %v6903
        %v6905 = vrot.slane %v6897, %v6904
        %v6907 = vunpack.c.l.s4 1983009808
        %v6908 = vunpack.c.0.s8 %v6907
        %v6909 = vlaneseq
        %v6910 = vshrl.u32 %v6909, 7
        %v6911 = vsub.s32 %v6908, %v6910
        %v6912 = vrot.slane %v6898, %v6911
        %v6913 = vcombine.low %v6873, %v6877
        %v6914 = vcombine.high %v6873, %v6877
        %v6916 = vunpack.c.l.s4 1983009808
        %v6917 = vunpack.c.0.s8 %v6916
        %v6918 = vlaneseq
        %v6919 = vshrl.u32 %v6918, 7
        %v6920 = vsub.s32 %v6917, %v6919
        %v6921 = vrot.slane %v6913, %v6920
        %v6923 = vunpack.c.l.s4 1983009808
        %v6924 = vunpack.c.0.s8 %v6923
        %v6925 = vlaneseq
        %v6926 = vshrl.u32 %v6925, 7
        %v6927 = vsub.s32 %v6924, %v6926
        %v6928 = vrot.slane %v6914, %v6927
        %v6929 = vcombine.low %v6875, %v6879
        %v6930 = vcombine.high %v6875, %v6879
        %v6932 = vunpack.c.l.s4 1983009808
        %v6933 = vunpack.c.0.s8 %v6932
        %v6934 = vlaneseq
        %v6935 = vshrl.u32 %v6934, 7
        %v6936 = vsub.s32 %v6933, %v6935
        %v6937 = vrot.slane %v6929, %v6936
        %v6939 = vunpack.c.l.s4 1983009808
        %v6940 = vunpack.c.0.s8 %v6939
        %v6941 = vlaneseq
        %v6942 = vshrl.u32 %v6941, 7
        %v6943 = vsub.s32 %v6940, %v6942
        %v6944 = vrot.slane %v6930, %v6943
        %v6945 = vcombine.low %v6889, %v6905
        %v6946 = vcombine.high %v6889, %v6905
        %v6948 = vunpack.c.l.s4 1934713408
        %v6949 = vunpack.c.0.s8 %v6948
        %v6950 = vlaneseq
        %v6951 = vshrl.u32 %v6950, 7
        %v6952 = vsub.s32 %v6949, %v6951
        %v6953 = vrot.slane %v6945, %v6952
        %v6955 = vunpack.c.l.s4 1934713408
        %v6956 = vunpack.c.0.s8 %v6955
        %v6957 = vlaneseq
        %v6958 = vshrl.u32 %v6957, 7
        %v6959 = vsub.s32 %v6956, %v6958
        %v6960 = vrot.slane %v6946, %v6959
        %v6961 = vcombine.low %v6896, %v6912
        %v6962 = vcombine.high %v6896, %v6912
        %v6964 = vunpack.c.l.s4 1934713408
        %v6965 = vunpack.c.0.s8 %v6964
        %v6966 = vlaneseq
        %v6967 = vshrl.u32 %v6966, 7
        %v6968 = vsub.s32 %v6965, %v6967
        %v6969 = vrot.slane %v6961, %v6968
        %v6971 = vunpack.c.l.s4 1934713408
        %v6972 = vunpack.c.0.s8 %v6971
        %v6973 = vlaneseq
        %v6974 = vshrl.u32 %v6973, 7
        %v6975 = vsub.s32 %v6972, %v6974
        %v6976 = vrot.slane %v6962, %v6975
        %v6977 = vcombine.low %v6921, %v6937
        %v6978 = vcombine.high %v6921, %v6937
        %v6980 = vunpack.c.l.s4 1934713408
        %v6981 = vunpack.c.0.s8 %v6980
        %v6982 = vlaneseq
        %v6983 = vshrl.u32 %v6982, 7
        %v6984 = vsub.s32 %v6981, %v6983
        %v6985 = vrot.slane %v6977, %v6984
        %v6987 = vunpack.c.l.s4 1934713408
        %v6988 = vunpack.c.0.s8 %v6987
        %v6989 = vlaneseq
        %v6990 = vshrl.u32 %v6989, 7
        %v6991 = vsub.s32 %v6988, %v6990
        %v6992 = vrot.slane %v6978, %v6991
        %v6993 = vcombine.low %v6928, %v6944
        %v6994 = vcombine.high %v6928, %v6944
        %v6996 = vunpack.c.l.s4 1934713408
        %v6997 = vunpack.c.0.s8 %v6996
        %v6998 = vlaneseq
        %v6999 = vshrl.u32 %v6998, 7
        %v7000 = vsub.s32 %v6997, %v6999
        %v7001 = vrot.slane %v6993, %v7000
        %v7003 = vunpack.c.l.s4 1934713408
        %v7004 = vunpack.c.0.s8 %v7003
        %v7005 = vlaneseq
        %v7006 = vshrl.u32 %v7005, 7
        %v7007 = vsub.s32 %v7004, %v7006
        %v7008 = vrot.slane %v6994, %v7007
        %v7009 = vcombine.low %v6953, %v6985
        %v7010 = vcombine.high %v6953, %v6985
        %v7011 = vcombine.low %v6960, %v6992
        %v7012 = vcombine.high %v6960, %v6992
        %v7013 = vcombine.low %v6969, %v7001
        %v7014 = vcombine.high %v6969, %v7001
        %v7015 = vcombine.low %v6976, %v7008
        %v7016 = vcombine.high %v6976, %v7008
        %v7017 = vcombine.low %v6866, %v6870
        %v7018 = vcombine.high %v6866, %v6870
        %v7020 = vunpack.c.l.s4 1983009808
        %v7021 = vunpack.c.0.s8 %v7020
        %v7022 = vlaneseq
        %v7023 = vshrl.u32 %v7022, 7
        %v7024 = vsub.s32 %v7021, %v7023
        %v7025 = vrot.slane %v7017, %v7024
        %v7027 = vunpack.c.l.s4 1983009808
        %v7028 = vunpack.c.0.s8 %v7027
        %v7029 = vlaneseq
        %v7030 = vshrl.u32 %v7029, 7
        %v7031 = vsub.s32 %v7028, %v7030
        %v7032 = vrot.slane %v7018, %v7031
        %v7033 = vcombine.low %v6868, %v6872
        %v7034 = vcombine.high %v6868, %v6872
        %v7036 = vunpack.c.l.s4 1983009808
        %v7037 = vunpack.c.0.s8 %v7036
        %v7038 = vlaneseq
        %v7039 = vshrl.u32 %v7038, 7
        %v7040 = vsub.s32 %v7037, %v7039
        %v7041 = vrot.slane %v7033, %v7040
        %v7043 = vunpack.c.l.s4 1983009808
        %v7044 = vunpack.c.0.s8 %v7043
        %v7045 = vlaneseq
        %v7046 = vshrl.u32 %v7045, 7
        %v7047 = vsub.s32 %v7044, %v7046
        %v7048 = vrot.slane %v7034, %v7047
        %v7049 = vcombine.low %v6874, %v6878
        %v7050 = vcombine.high %v6874, %v6878
        %v7052 = vunpack.c.l.s4 1983009808
        %v7053 = vunpack.c.0.s8 %v7052
        %v7054 = vlaneseq
        %v7055 = vshrl.u32 %v7054, 7
        %v7056 = vsub.s32 %v7053, %v7055
        %v7057 = vrot.slane %v7049, %v7056
        %v7059 = vunpack.c.l.s4 1983009808
        %v7060 = vunpack.c.0.s8 %v7059
        %v7061 = vlaneseq
        %v7062 = vshrl.u32 %v7061, 7
        %v7063 = vsub.s32 %v7060, %v7062
        %v7064 = vrot.slane %v7050, %v7063
        %v7065 = vcombine.low %v6876, %v6880
        %v7066 = vcombine.high %v6876, %v6880
        %v7068 = vunpack.c.l.s4 1983009808
        %v7069 = vunpack.c.0.s8 %v7068
        %v7070 = vlaneseq
        %v7071 = vshrl.u32 %v7070, 7
        %v7072 = vsub.s32 %v7069, %v7071
        %v7073 = vrot.slane %v7065, %v7072
        %v7075 = vunpack.c.l.s4 1983009808
        %v7076 = vunpack.c.0.s8 %v7075
        %v7077 = vlaneseq
        %v7078 = vshrl.u32 %v7077, 7
        %v7079 = vsub.s32 %v7076, %v7078
        %v7080 = vrot.slane %v7066, %v7079
        %v7081 = vcombine.low %v7025, %v7041
        %v7082 = vcombine.high %v7025, %v7041
        %v7084 = vunpack.c.l.s4 1934713408
        %v7085 = vunpack.c.0.s8 %v7084
        %v7086 = vlaneseq
        %v7087 = vshrl.u32 %v7086, 7
        %v7088 = vsub.s32 %v7085, %v7087
        %v7089 = vrot.slane %v7081, %v7088
        %v7091 = vunpack.c.l.s4 1934713408
        %v7092 = vunpack.c.0.s8 %v7091
        %v7093 = vlaneseq
        %v7094 = vshrl.u32 %v7093, 7
        %v7095 = vsub.s32 %v7092, %v7094
        %v7096 = vrot.slane %v7082, %v7095
        %v7097 = vcombine.low %v7032, %v7048
        %v7098 = vcombine.high %v7032, %v7048
        %v7100 = vunpack.c.l.s4 1934713408
        %v7101 = vunpack.c.0.s8 %v7100
        %v7102 = vlaneseq
        %v7103 = vshrl.u32 %v7102, 7
        %v7104 = vsub.s32 %v7101, %v7103
        %v7105 = vrot.slane %v7097, %v7104
        %v7107 = vunpack.c.l.s4 1934713408
        %v7108 = vunpack.c.0.s8 %v7107
        %v7109 = vlaneseq
        %v7110 = vshrl.u32 %v7109, 7
        %v7111 = vsub.s32 %v7108, %v7110
        %v7112 = vrot.slane %v7098, %v7111
        %v7113 = vcombine.low %v7057, %v7073
        %v7114 = vcombine.high %v7057, %v7073
        %v7116 = vunpack.c.l.s4 1934713408
        %v7117 = vunpack.c.0.s8 %v7116
        %v7118 = vlaneseq
        %v7119 = vshrl.u32 %v7118, 7
        %v7120 = vsub.s32 %v7117, %v7119
        %v7121 = vrot.slane %v7113, %v7120
        %v7123 = vunpack.c.l.s4 1934713408
        %v7124 = vunpack.c.0.s8 %v7123
        %v7125 = vlaneseq
        %v7126 = vshrl.u32 %v7125, 7
        %v7127 = vsub.s32 %v7124, %v7126
        %v7128 = vrot.slane %v7114, %v7127
        %v7129 = vcombine.low %v7064, %v7080
        %v7130 = vcombine.high %v7064, %v7080
        %v7132 = vunpack.c.l.s4 1934713408
        %v7133 = vunpack.c.0.s8 %v7132
        %v7134 = vlaneseq
        %v7135 = vshrl.u32 %v7134, 7
        %v7136 = vsub.s32 %v7133, %v7135
        %v7137 = vrot.slane %v7129, %v7136
        %v7139 = vunpack.c.l.s4 1934713408
        %v7140 = vunpack.c.0.s8 %v7139
        %v7141 = vlaneseq
        %v7142 = vshrl.u32 %v7141, 7
        %v7143 = vsub.s32 %v7140, %v7142
        %v7144 = vrot.slane %v7130, %v7143
        %v7145 = vcombine.low %v7089, %v7121
        %v7146 = vcombine.high %v7089, %v7121
        %v7147 = vcombine.low %v7096, %v7128
        %v7148 = vcombine.high %v7096, %v7128
        %v7149 = vcombine.low %v7105, %v7137
        %v7150 = vcombine.high %v7105, %v7137
        %v7151 = vcombine.low %v7112, %v7144
        %v7152 = vcombine.high %v7112, %v7144
        %7154 = vrot.lane.b32.xlu0 %v7010, 16
        %v7155 = vpop.permute.xlu0 %7154
        %7158 = vrot.lane.b32.xlu0 %v7011, 32
        %v7159 = vpop.permute.xlu0 %7158
        %7162 = vrot.lane.b32.xlu0 %v7012, 48
        %v7163 = vpop.permute.xlu0 %7162
        %7166 = vrot.lane.b32.xlu0 %v7013, 64
        %v7167 = vpop.permute.xlu0 %7166
        %7170 = vrot.lane.b32.xlu0 %v7014, 80
        %v7171 = vpop.permute.xlu0 %7170
        %7174 = vrot.lane.b32.xlu0 %v7015, 96
        %v7175 = vpop.permute.xlu0 %7174
        %7178 = vrot.lane.b32.xlu0 %v7016, 112
        %v7179 = vpop.permute.xlu0 %7178
        %7182 = vrot.lane.b32.xlu0 %v7146, 16
        %v7183 = vpop.permute.xlu0 %7182
        %7186 = vrot.lane.b32.xlu0 %v7147, 32
        %v7187 = vpop.permute.xlu0 %7186
        %7190 = vrot.lane.b32.xlu0 %v7148, 48
        %v7191 = vpop.permute.xlu0 %7190
        %7194 = vrot.lane.b32.xlu0 %v7149, 64
        %v7195 = vpop.permute.xlu0 %7194
        %7198 = vrot.lane.b32.xlu0 %v7150, 80
        %v7199 = vpop.permute.xlu0 %7198
        %7202 = vrot.lane.b32.xlu0 %v7151, 96
        %v7203 = vpop.permute.xlu0 %7202
        %7206 = vrot.lane.b32.xlu0 %v7152, 112
        %v7207 = vpop.permute.xlu0 %7206
        %v7209 = vsel %vm637, %v7009, %v7155
        %v7210 = vsel %vm639, %v7209, %v7159
        %v7211 = vsel %vm641, %v7210, %v7163
        %v7212 = vsel %vm643, %v7211, %v7167
        %v7213 = vsel %vm645, %v7212, %v7171
        %v7214 = vsel %vm647, %v7213, %v7175
        %v7215 = vsel %vm649, %v7214, %v7179
        %v7216 = vsel %vm637, %v7145, %v7183
        %v7217 = vsel %vm639, %v7216, %v7187
        %v7218 = vsel %vm641, %v7217, %v7191
        %v7219 = vsel %vm643, %v7218, %v7195
        %v7220 = vsel %vm645, %v7219, %v7199
        %v7221 = vsel %vm647, %v7220, %v7203
        %v7222 = vsel %vm649, %v7221, %v7207
        %7223 = vst [vmem:[#allocation3 + $0x60] sm:$0xff] %v7215
        %7224 = vst [vmem:[#allocation3 + $0x68] sm:$0xff] %v7222
        %v7225 = vld [vmem:[#allocation4 + $0x2] sm:$0xff]
        %v7226 = vld [vmem:[#allocation4 + $0xa] sm:$0xff]
        %v7227 = vld [vmem:[#allocation4 + $0x1a] sm:$0xff]
        %v7228 = vld [vmem:[#allocation4 + $0x22] sm:$0xff]
        %v7229 = vld [vmem:[#allocation4 + $0x32] sm:$0xff]
        %v7230 = vld [vmem:[#allocation4 + $0x3a] sm:$0xff]
        %v7231 = vld [vmem:[#allocation4 + $0x4a] sm:$0xff]
        %v7232 = vld [vmem:[#allocation4 + $0x52] sm:$0xff]
        %v7233 = vld [vmem:[#allocation4 + $0x62] sm:$0xff]
        %v7234 = vld [vmem:[#allocation4 + $0x6a] sm:$0xff]
        %v7235 = vld [vmem:[#allocation4 + $0x7a] sm:$0xff]
        %v7236 = vld [vmem:[#allocation4 + $0x82] sm:$0xff]
        %v7237 = vld [vmem:[#allocation4 + $0x92] sm:$0xff]
        %v7238 = vld [vmem:[#allocation4 + $0x9a] sm:$0xff]
        %v7239 = vld [vmem:[#allocation4 + $0xaa] sm:$0xff]
        %v7240 = vld [vmem:[#allocation4 + $0xb2] sm:$0xff]
        %7257 = vrot.lane.b32.xlu0 %v7225, 127
        %v7258 = vpop.permute.xlu0 %7257
        %7259 = vrot.lane.b32.xlu0 %v7226, 127
        %v7260 = vpop.permute.xlu0 %7259
        %7261 = vrot.lane.b32.xlu0 %v7227, 127
        %v7262 = vpop.permute.xlu0 %7261
        %7263 = vrot.lane.b32.xlu0 %v7228, 127
        %v7264 = vpop.permute.xlu0 %7263
        %7265 = vrot.lane.b32.xlu0 %v7229, 127
        %v7266 = vpop.permute.xlu0 %7265
        %7267 = vrot.lane.b32.xlu0 %v7230, 127
        %v7268 = vpop.permute.xlu0 %7267
        %7269 = vrot.lane.b32.xlu0 %v7231, 127
        %v7270 = vpop.permute.xlu0 %7269
        %7271 = vrot.lane.b32.xlu0 %v7232, 127
        %v7272 = vpop.permute.xlu0 %7271
        %7273 = vrot.lane.b32.xlu0 %v7233, 127
        %v7274 = vpop.permute.xlu0 %7273
        %7275 = vrot.lane.b32.xlu0 %v7234, 127
        %v7276 = vpop.permute.xlu0 %7275
        %7277 = vrot.lane.b32.xlu0 %v7235, 127
        %v7278 = vpop.permute.xlu0 %7277
        %7279 = vrot.lane.b32.xlu0 %v7236, 127
        %v7280 = vpop.permute.xlu0 %7279
        %7281 = vrot.lane.b32.xlu0 %v7237, 127
        %v7282 = vpop.permute.xlu0 %7281
        %7283 = vrot.lane.b32.xlu0 %v7238, 127
        %v7284 = vpop.permute.xlu0 %7283
        %7285 = vrot.lane.b32.xlu0 %v7239, 127
        %v7286 = vpop.permute.xlu0 %7285
        %7287 = vrot.lane.b32.xlu0 %v7240, 127
        %v7288 = vpop.permute.xlu0 %7287
        %v7305 = vcombine.low %v7258, %v7266
        %v7306 = vcombine.high %v7258, %v7266
        %v7308 = vunpack.c.l.s4 1983009808
        %v7309 = vunpack.c.0.s8 %v7308
        %v7310 = vlaneseq
        %v7311 = vshrl.u32 %v7310, 7
        %v7312 = vsub.s32 %v7309, %v7311
        %v7313 = vrot.slane %v7305, %v7312
        %v7315 = vunpack.c.l.s4 1983009808
        %v7316 = vunpack.c.0.s8 %v7315
        %v7317 = vlaneseq
        %v7318 = vshrl.u32 %v7317, 7
        %v7319 = vsub.s32 %v7316, %v7318
        %v7320 = vrot.slane %v7306, %v7319
        %v7321 = vcombine.low %v7262, %v7270
        %v7322 = vcombine.high %v7262, %v7270
        %v7324 = vunpack.c.l.s4 1983009808
        %v7325 = vunpack.c.0.s8 %v7324
        %v7326 = vlaneseq
        %v7327 = vshrl.u32 %v7326, 7
        %v7328 = vsub.s32 %v7325, %v7327
        %v7329 = vrot.slane %v7321, %v7328
        %v7331 = vunpack.c.l.s4 1983009808
        %v7332 = vunpack.c.0.s8 %v7331
        %v7333 = vlaneseq
        %v7334 = vshrl.u32 %v7333, 7
        %v7335 = vsub.s32 %v7332, %v7334
        %v7336 = vrot.slane %v7322, %v7335
        %v7337 = vcombine.low %v7274, %v7282
        %v7338 = vcombine.high %v7274, %v7282
        %v7340 = vunpack.c.l.s4 1983009808
        %v7341 = vunpack.c.0.s8 %v7340
        %v7342 = vlaneseq
        %v7343 = vshrl.u32 %v7342, 7
        %v7344 = vsub.s32 %v7341, %v7343
        %v7345 = vrot.slane %v7337, %v7344
        %v7347 = vunpack.c.l.s4 1983009808
        %v7348 = vunpack.c.0.s8 %v7347
        %v7349 = vlaneseq
        %v7350 = vshrl.u32 %v7349, 7
        %v7351 = vsub.s32 %v7348, %v7350
        %v7352 = vrot.slane %v7338, %v7351
        %v7353 = vcombine.low %v7278, %v7286
        %v7354 = vcombine.high %v7278, %v7286
        %v7356 = vunpack.c.l.s4 1983009808
        %v7357 = vunpack.c.0.s8 %v7356
        %v7358 = vlaneseq
        %v7359 = vshrl.u32 %v7358, 7
        %v7360 = vsub.s32 %v7357, %v7359
        %v7361 = vrot.slane %v7353, %v7360
        %v7363 = vunpack.c.l.s4 1983009808
        %v7364 = vunpack.c.0.s8 %v7363
        %v7365 = vlaneseq
        %v7366 = vshrl.u32 %v7365, 7
        %v7367 = vsub.s32 %v7364, %v7366
        %v7368 = vrot.slane %v7354, %v7367
        %v7369 = vcombine.low %v7313, %v7329
        %v7370 = vcombine.high %v7313, %v7329
        %v7372 = vunpack.c.l.s4 1934713408
        %v7373 = vunpack.c.0.s8 %v7372
        %v7374 = vlaneseq
        %v7375 = vshrl.u32 %v7374, 7
        %v7376 = vsub.s32 %v7373, %v7375
        %v7377 = vrot.slane %v7369, %v7376
        %v7379 = vunpack.c.l.s4 1934713408
        %v7380 = vunpack.c.0.s8 %v7379
        %v7381 = vlaneseq
        %v7382 = vshrl.u32 %v7381, 7
        %v7383 = vsub.s32 %v7380, %v7382
        %v7384 = vrot.slane %v7370, %v7383
        %v7385 = vcombine.low %v7320, %v7336
        %v7386 = vcombine.high %v7320, %v7336
        %v7388 = vunpack.c.l.s4 1934713408
        %v7389 = vunpack.c.0.s8 %v7388
        %v7390 = vlaneseq
        %v7391 = vshrl.u32 %v7390, 7
        %v7392 = vsub.s32 %v7389, %v7391
        %v7393 = vrot.slane %v7385, %v7392
        %v7395 = vunpack.c.l.s4 1934713408
        %v7396 = vunpack.c.0.s8 %v7395
        %v7397 = vlaneseq
        %v7398 = vshrl.u32 %v7397, 7
        %v7399 = vsub.s32 %v7396, %v7398
        %v7400 = vrot.slane %v7386, %v7399
        %v7401 = vcombine.low %v7345, %v7361
        %v7402 = vcombine.high %v7345, %v7361
        %v7404 = vunpack.c.l.s4 1934713408
        %v7405 = vunpack.c.0.s8 %v7404
        %v7406 = vlaneseq
        %v7407 = vshrl.u32 %v7406, 7
        %v7408 = vsub.s32 %v7405, %v7407
        %v7409 = vrot.slane %v7401, %v7408
        %v7411 = vunpack.c.l.s4 1934713408
        %v7412 = vunpack.c.0.s8 %v7411
        %v7413 = vlaneseq
        %v7414 = vshrl.u32 %v7413, 7
        %v7415 = vsub.s32 %v7412, %v7414
        %v7416 = vrot.slane %v7402, %v7415
        %v7417 = vcombine.low %v7352, %v7368
        %v7418 = vcombine.high %v7352, %v7368
        %v7420 = vunpack.c.l.s4 1934713408
        %v7421 = vunpack.c.0.s8 %v7420
        %v7422 = vlaneseq
        %v7423 = vshrl.u32 %v7422, 7
        %v7424 = vsub.s32 %v7421, %v7423
        %v7425 = vrot.slane %v7417, %v7424
        %v7427 = vunpack.c.l.s4 1934713408
        %v7428 = vunpack.c.0.s8 %v7427
        %v7429 = vlaneseq
        %v7430 = vshrl.u32 %v7429, 7
        %v7431 = vsub.s32 %v7428, %v7430
        %v7432 = vrot.slane %v7418, %v7431
        %v7433 = vcombine.low %v7377, %v7409
        %v7434 = vcombine.high %v7377, %v7409
        %v7435 = vcombine.low %v7384, %v7416
        %v7436 = vcombine.high %v7384, %v7416
        %v7437 = vcombine.low %v7393, %v7425
        %v7438 = vcombine.high %v7393, %v7425
        %v7439 = vcombine.low %v7400, %v7432
        %v7440 = vcombine.high %v7400, %v7432
        %v7441 = vcombine.low %v7260, %v7268
        %v7442 = vcombine.high %v7260, %v7268
        %v7444 = vunpack.c.l.s4 1983009808
        %v7445 = vunpack.c.0.s8 %v7444
        %v7446 = vlaneseq
        %v7447 = vshrl.u32 %v7446, 7
        %v7448 = vsub.s32 %v7445, %v7447
        %v7449 = vrot.slane %v7441, %v7448
        %v7451 = vunpack.c.l.s4 1983009808
        %v7452 = vunpack.c.0.s8 %v7451
        %v7453 = vlaneseq
        %v7454 = vshrl.u32 %v7453, 7
        %v7455 = vsub.s32 %v7452, %v7454
        %v7456 = vrot.slane %v7442, %v7455
        %v7457 = vcombine.low %v7264, %v7272
        %v7458 = vcombine.high %v7264, %v7272
        %v7460 = vunpack.c.l.s4 1983009808
        %v7461 = vunpack.c.0.s8 %v7460
        %v7462 = vlaneseq
        %v7463 = vshrl.u32 %v7462, 7
        %v7464 = vsub.s32 %v7461, %v7463
        %v7465 = vrot.slane %v7457, %v7464
        %v7467 = vunpack.c.l.s4 1983009808
        %v7468 = vunpack.c.0.s8 %v7467
        %v7469 = vlaneseq
        %v7470 = vshrl.u32 %v7469, 7
        %v7471 = vsub.s32 %v7468, %v7470
        %v7472 = vrot.slane %v7458, %v7471
        %v7473 = vcombine.low %v7276, %v7284
        %v7474 = vcombine.high %v7276, %v7284
        %v7476 = vunpack.c.l.s4 1983009808
        %v7477 = vunpack.c.0.s8 %v7476
        %v7478 = vlaneseq
        %v7479 = vshrl.u32 %v7478, 7
        %v7480 = vsub.s32 %v7477, %v7479
        %v7481 = vrot.slane %v7473, %v7480
        %v7483 = vunpack.c.l.s4 1983009808
        %v7484 = vunpack.c.0.s8 %v7483
        %v7485 = vlaneseq
        %v7486 = vshrl.u32 %v7485, 7
        %v7487 = vsub.s32 %v7484, %v7486
        %v7488 = vrot.slane %v7474, %v7487
        %v7489 = vcombine.low %v7280, %v7288
        %v7490 = vcombine.high %v7280, %v7288
        %v7492 = vunpack.c.l.s4 1983009808
        %v7493 = vunpack.c.0.s8 %v7492
        %v7494 = vlaneseq
        %v7495 = vshrl.u32 %v7494, 7
        %v7496 = vsub.s32 %v7493, %v7495
        %v7497 = vrot.slane %v7489, %v7496
        %v7499 = vunpack.c.l.s4 1983009808
        %v7500 = vunpack.c.0.s8 %v7499
        %v7501 = vlaneseq
        %v7502 = vshrl.u32 %v7501, 7
        %v7503 = vsub.s32 %v7500, %v7502
        %v7504 = vrot.slane %v7490, %v7503
        %v7505 = vcombine.low %v7449, %v7465
        %v7506 = vcombine.high %v7449, %v7465
        %v7508 = vunpack.c.l.s4 1934713408
        %v7509 = vunpack.c.0.s8 %v7508
        %v7510 = vlaneseq
        %v7511 = vshrl.u32 %v7510, 7
        %v7512 = vsub.s32 %v7509, %v7511
        %v7513 = vrot.slane %v7505, %v7512
        %v7515 = vunpack.c.l.s4 1934713408
        %v7516 = vunpack.c.0.s8 %v7515
        %v7517 = vlaneseq
        %v7518 = vshrl.u32 %v7517, 7
        %v7519 = vsub.s32 %v7516, %v7518
        %v7520 = vrot.slane %v7506, %v7519
        %v7521 = vcombine.low %v7456, %v7472
        %v7522 = vcombine.high %v7456, %v7472
        %v7524 = vunpack.c.l.s4 1934713408
        %v7525 = vunpack.c.0.s8 %v7524
        %v7526 = vlaneseq
        %v7527 = vshrl.u32 %v7526, 7
        %v7528 = vsub.s32 %v7525, %v7527
        %v7529 = vrot.slane %v7521, %v7528
        %v7531 = vunpack.c.l.s4 1934713408
        %v7532 = vunpack.c.0.s8 %v7531
        %v7533 = vlaneseq
        %v7534 = vshrl.u32 %v7533, 7
        %v7535 = vsub.s32 %v7532, %v7534
        %v7536 = vrot.slane %v7522, %v7535
        %v7537 = vcombine.low %v7481, %v7497
        %v7538 = vcombine.high %v7481, %v7497
        %v7540 = vunpack.c.l.s4 1934713408
        %v7541 = vunpack.c.0.s8 %v7540
        %v7542 = vlaneseq
        %v7543 = vshrl.u32 %v7542, 7
        %v7544 = vsub.s32 %v7541, %v7543
        %v7545 = vrot.slane %v7537, %v7544
        %v7547 = vunpack.c.l.s4 1934713408
        %v7548 = vunpack.c.0.s8 %v7547
        %v7549 = vlaneseq
        %v7550 = vshrl.u32 %v7549, 7
        %v7551 = vsub.s32 %v7548, %v7550
        %v7552 = vrot.slane %v7538, %v7551
        %v7553 = vcombine.low %v7488, %v7504
        %v7554 = vcombine.high %v7488, %v7504
        %v7556 = vunpack.c.l.s4 1934713408
        %v7557 = vunpack.c.0.s8 %v7556
        %v7558 = vlaneseq
        %v7559 = vshrl.u32 %v7558, 7
        %v7560 = vsub.s32 %v7557, %v7559
        %v7561 = vrot.slane %v7553, %v7560
        %v7563 = vunpack.c.l.s4 1934713408
        %v7564 = vunpack.c.0.s8 %v7563
        %v7565 = vlaneseq
        %v7566 = vshrl.u32 %v7565, 7
        %v7567 = vsub.s32 %v7564, %v7566
        %v7568 = vrot.slane %v7554, %v7567
        %v7569 = vcombine.low %v7513, %v7545
        %v7570 = vcombine.high %v7513, %v7545
        %v7571 = vcombine.low %v7520, %v7552
        %v7572 = vcombine.high %v7520, %v7552
        %v7573 = vcombine.low %v7529, %v7561
        %v7574 = vcombine.high %v7529, %v7561
        %v7575 = vcombine.low %v7536, %v7568
        %v7576 = vcombine.high %v7536, %v7568
        %7578 = vrot.lane.b32.xlu0 %v7434, 16
        %v7579 = vpop.permute.xlu0 %7578
        %7582 = vrot.lane.b32.xlu0 %v7435, 32
        %v7583 = vpop.permute.xlu0 %7582
        %7586 = vrot.lane.b32.xlu0 %v7436, 48
        %v7587 = vpop.permute.xlu0 %7586
        %7590 = vrot.lane.b32.xlu0 %v7437, 64
        %v7591 = vpop.permute.xlu0 %7590
        %7594 = vrot.lane.b32.xlu0 %v7438, 80
        %v7595 = vpop.permute.xlu0 %7594
        %7598 = vrot.lane.b32.xlu0 %v7439, 96
        %v7599 = vpop.permute.xlu0 %7598
        %7602 = vrot.lane.b32.xlu0 %v7440, 112
        %v7603 = vpop.permute.xlu0 %7602
        %7606 = vrot.lane.b32.xlu0 %v7570, 16
        %v7607 = vpop.permute.xlu0 %7606
        %7610 = vrot.lane.b32.xlu0 %v7571, 32
        %v7611 = vpop.permute.xlu0 %7610
        %7614 = vrot.lane.b32.xlu0 %v7572, 48
        %v7615 = vpop.permute.xlu0 %7614
        %7618 = vrot.lane.b32.xlu0 %v7573, 64
        %v7619 = vpop.permute.xlu0 %7618
        %7622 = vrot.lane.b32.xlu0 %v7574, 80
        %v7623 = vpop.permute.xlu0 %7622
        %7626 = vrot.lane.b32.xlu0 %v7575, 96
        %v7627 = vpop.permute.xlu0 %7626
        %7630 = vrot.lane.b32.xlu0 %v7576, 112
        %v7631 = vpop.permute.xlu0 %7630
        %v7633 = vsel %vm637, %v7433, %v7579
        %v7634 = vsel %vm639, %v7633, %v7583
        %v7635 = vsel %vm641, %v7634, %v7587
        %v7636 = vsel %vm643, %v7635, %v7591
        %v7637 = vsel %vm645, %v7636, %v7595
        %v7638 = vsel %vm647, %v7637, %v7599
        %v7639 = vsel %vm649, %v7638, %v7603
        %v7640 = vsel %vm637, %v7569, %v7607
        %v7641 = vsel %vm639, %v7640, %v7611
        %v7642 = vsel %vm641, %v7641, %v7615
        %v7643 = vsel %vm643, %v7642, %v7619
        %v7644 = vsel %vm645, %v7643, %v7623
        %v7645 = vsel %vm647, %v7644, %v7627
        %v7646 = vsel %vm649, %v7645, %v7631
        %7647 = vst [vmem:[#allocation3 + $0x70] sm:$0xff] %v7639
        %7648 = vst [vmem:[#allocation3 + $0x78] sm:$0xff] %v7646
        %v7649 = vld [vmem:[#allocation4 + $0x2] sm:$0xff]
        %v7650 = vld [vmem:[#allocation4 + $0xa] sm:$0xff]
        %v7651 = vld [vmem:[#allocation4 + $0x1a] sm:$0xff]
        %v7652 = vld [vmem:[#allocation4 + $0x22] sm:$0xff]
        %v7653 = vld [vmem:[#allocation4 + $0x32] sm:$0xff]
        %v7654 = vld [vmem:[#allocation4 + $0x3a] sm:$0xff]
        %v7655 = vld [vmem:[#allocation4 + $0x4a] sm:$0xff]
        %v7656 = vld [vmem:[#allocation4 + $0x52] sm:$0xff]
        %v7657 = vld [vmem:[#allocation4 + $0x62] sm:$0xff]
        %v7658 = vld [vmem:[#allocation4 + $0x6a] sm:$0xff]
        %v7659 = vld [vmem:[#allocation4 + $0x7a] sm:$0xff]
        %v7660 = vld [vmem:[#allocation4 + $0x82] sm:$0xff]
        %v7661 = vld [vmem:[#allocation4 + $0x92] sm:$0xff]
        %v7662 = vld [vmem:[#allocation4 + $0x9a] sm:$0xff]
        %v7663 = vld [vmem:[#allocation4 + $0xaa] sm:$0xff]
        %v7664 = vld [vmem:[#allocation4 + $0xb2] sm:$0xff]
        %7681 = vrot.lane.b32.xlu0 %v7649, 126
        %v7682 = vpop.permute.xlu0 %7681
        %7683 = vrot.lane.b32.xlu0 %v7650, 126
        %v7684 = vpop.permute.xlu0 %7683
        %7685 = vrot.lane.b32.xlu0 %v7651, 126
        %v7686 = vpop.permute.xlu0 %7685
        %7687 = vrot.lane.b32.xlu0 %v7652, 126
        %v7688 = vpop.permute.xlu0 %7687
        %7689 = vrot.lane.b32.xlu0 %v7653, 126
        %v7690 = vpop.permute.xlu0 %7689
        %7691 = vrot.lane.b32.xlu0 %v7654, 126
        %v7692 = vpop.permute.xlu0 %7691
        %7693 = vrot.lane.b32.xlu0 %v7655, 126
        %v7694 = vpop.permute.xlu0 %7693
        %7695 = vrot.lane.b32.xlu0 %v7656, 126
        %v7696 = vpop.permute.xlu0 %7695
        %7697 = vrot.lane.b32.xlu0 %v7657, 126
        %v7698 = vpop.permute.xlu0 %7697
        %7699 = vrot.lane.b32.xlu0 %v7658, 126
        %v7700 = vpop.permute.xlu0 %7699
        %7701 = vrot.lane.b32.xlu0 %v7659, 126
        %v7702 = vpop.permute.xlu0 %7701
        %7703 = vrot.lane.b32.xlu0 %v7660, 126
        %v7704 = vpop.permute.xlu0 %7703
        %7705 = vrot.lane.b32.xlu0 %v7661, 126
        %v7706 = vpop.permute.xlu0 %7705
        %7707 = vrot.lane.b32.xlu0 %v7662, 126
        %v7708 = vpop.permute.xlu0 %7707
        %7709 = vrot.lane.b32.xlu0 %v7663, 126
        %v7710 = vpop.permute.xlu0 %7709
        %7711 = vrot.lane.b32.xlu0 %v7664, 126
        %v7712 = vpop.permute.xlu0 %7711
        %v7729 = vcombine.low %v7682, %v7690
        %v7730 = vcombine.high %v7682, %v7690
        %v7732 = vunpack.c.l.s4 1983009808
        %v7733 = vunpack.c.0.s8 %v7732
        %v7734 = vlaneseq
        %v7735 = vshrl.u32 %v7734, 7
        %v7736 = vsub.s32 %v7733, %v7735
        %v7737 = vrot.slane %v7729, %v7736
        %v7739 = vunpack.c.l.s4 1983009808
        %v7740 = vunpack.c.0.s8 %v7739
        %v7741 = vlaneseq
        %v7742 = vshrl.u32 %v7741, 7
        %v7743 = vsub.s32 %v7740, %v7742
        %v7744 = vrot.slane %v7730, %v7743
        %v7745 = vcombine.low %v7686, %v7694
        %v7746 = vcombine.high %v7686, %v7694
        %v7748 = vunpack.c.l.s4 1983009808
        %v7749 = vunpack.c.0.s8 %v7748
        %v7750 = vlaneseq
        %v7751 = vshrl.u32 %v7750, 7
        %v7752 = vsub.s32 %v7749, %v7751
        %v7753 = vrot.slane %v7745, %v7752
        %v7755 = vunpack.c.l.s4 1983009808
        %v7756 = vunpack.c.0.s8 %v7755
        %v7757 = vlaneseq
        %v7758 = vshrl.u32 %v7757, 7
        %v7759 = vsub.s32 %v7756, %v7758
        %v7760 = vrot.slane %v7746, %v7759
        %v7761 = vcombine.low %v7698, %v7706
        %v7762 = vcombine.high %v7698, %v7706
        %v7764 = vunpack.c.l.s4 1983009808
        %v7765 = vunpack.c.0.s8 %v7764
        %v7766 = vlaneseq
        %v7767 = vshrl.u32 %v7766, 7
        %v7768 = vsub.s32 %v7765, %v7767
        %v7769 = vrot.slane %v7761, %v7768
        %v7771 = vunpack.c.l.s4 1983009808
        %v7772 = vunpack.c.0.s8 %v7771
        %v7773 = vlaneseq
        %v7774 = vshrl.u32 %v7773, 7
        %v7775 = vsub.s32 %v7772, %v7774
        %v7776 = vrot.slane %v7762, %v7775
        %v7777 = vcombine.low %v7702, %v7710
        %v7778 = vcombine.high %v7702, %v7710
        %v7780 = vunpack.c.l.s4 1983009808
        %v7781 = vunpack.c.0.s8 %v7780
        %v7782 = vlaneseq
        %v7783 = vshrl.u32 %v7782, 7
        %v7784 = vsub.s32 %v7781, %v7783
        %v7785 = vrot.slane %v7777, %v7784
        %v7787 = vunpack.c.l.s4 1983009808
        %v7788 = vunpack.c.0.s8 %v7787
        %v7789 = vlaneseq
        %v7790 = vshrl.u32 %v7789, 7
        %v7791 = vsub.s32 %v7788, %v7790
        %v7792 = vrot.slane %v7778, %v7791
        %v7793 = vcombine.low %v7737, %v7753
        %v7794 = vcombine.high %v7737, %v7753
        %v7796 = vunpack.c.l.s4 1934713408
        %v7797 = vunpack.c.0.s8 %v7796
        %v7798 = vlaneseq
        %v7799 = vshrl.u32 %v7798, 7
        %v7800 = vsub.s32 %v7797, %v7799
        %v7801 = vrot.slane %v7793, %v7800
        %v7803 = vunpack.c.l.s4 1934713408
        %v7804 = vunpack.c.0.s8 %v7803
        %v7805 = vlaneseq
        %v7806 = vshrl.u32 %v7805, 7
        %v7807 = vsub.s32 %v7804, %v7806
        %v7808 = vrot.slane %v7794, %v7807
        %v7809 = vcombine.low %v7744, %v7760
        %v7810 = vcombine.high %v7744, %v7760
        %v7812 = vunpack.c.l.s4 1934713408
        %v7813 = vunpack.c.0.s8 %v7812
        %v7814 = vlaneseq
        %v7815 = vshrl.u32 %v7814, 7
        %v7816 = vsub.s32 %v7813, %v7815
        %v7817 = vrot.slane %v7809, %v7816
        %v7819 = vunpack.c.l.s4 1934713408
        %v7820 = vunpack.c.0.s8 %v7819
        %v7821 = vlaneseq
        %v7822 = vshrl.u32 %v7821, 7
        %v7823 = vsub.s32 %v7820, %v7822
        %v7824 = vrot.slane %v7810, %v7823
        %v7825 = vcombine.low %v7769, %v7785
        %v7826 = vcombine.high %v7769, %v7785
        %v7828 = vunpack.c.l.s4 1934713408
        %v7829 = vunpack.c.0.s8 %v7828
        %v7830 = vlaneseq
        %v7831 = vshrl.u32 %v7830, 7
        %v7832 = vsub.s32 %v7829, %v7831
        %v7833 = vrot.slane %v7825, %v7832
        %v7835 = vunpack.c.l.s4 1934713408
        %v7836 = vunpack.c.0.s8 %v7835
        %v7837 = vlaneseq
        %v7838 = vshrl.u32 %v7837, 7
        %v7839 = vsub.s32 %v7836, %v7838
        %v7840 = vrot.slane %v7826, %v7839
        %v7841 = vcombine.low %v7776, %v7792
        %v7842 = vcombine.high %v7776, %v7792
        %v7844 = vunpack.c.l.s4 1934713408
        %v7845 = vunpack.c.0.s8 %v7844
        %v7846 = vlaneseq
        %v7847 = vshrl.u32 %v7846, 7
        %v7848 = vsub.s32 %v7845, %v7847
        %v7849 = vrot.slane %v7841, %v7848
        %v7851 = vunpack.c.l.s4 1934713408
        %v7852 = vunpack.c.0.s8 %v7851
        %v7853 = vlaneseq
        %v7854 = vshrl.u32 %v7853, 7
        %v7855 = vsub.s32 %v7852, %v7854
        %v7856 = vrot.slane %v7842, %v7855
        %v7857 = vcombine.low %v7801, %v7833
        %v7858 = vcombine.high %v7801, %v7833
        %v7859 = vcombine.low %v7808, %v7840
        %v7860 = vcombine.high %v7808, %v7840
        %v7861 = vcombine.low %v7817, %v7849
        %v7862 = vcombine.high %v7817, %v7849
        %v7863 = vcombine.low %v7824, %v7856
        %v7864 = vcombine.high %v7824, %v7856
        %v7865 = vcombine.low %v7684, %v7692
        %v7866 = vcombine.high %v7684, %v7692
        %v7868 = vunpack.c.l.s4 1983009808
        %v7869 = vunpack.c.0.s8 %v7868
        %v7870 = vlaneseq
        %v7871 = vshrl.u32 %v7870, 7
        %v7872 = vsub.s32 %v7869, %v7871
        %v7873 = vrot.slane %v7865, %v7872
        %v7875 = vunpack.c.l.s4 1983009808
        %v7876 = vunpack.c.0.s8 %v7875
        %v7877 = vlaneseq
        %v7878 = vshrl.u32 %v7877, 7
        %v7879 = vsub.s32 %v7876, %v7878
        %v7880 = vrot.slane %v7866, %v7879
        %v7881 = vcombine.low %v7688, %v7696
        %v7882 = vcombine.high %v7688, %v7696
        %v7884 = vunpack.c.l.s4 1983009808
        %v7885 = vunpack.c.0.s8 %v7884
        %v7886 = vlaneseq
        %v7887 = vshrl.u32 %v7886, 7
        %v7888 = vsub.s32 %v7885, %v7887
        %v7889 = vrot.slane %v7881, %v7888
        %v7891 = vunpack.c.l.s4 1983009808
        %v7892 = vunpack.c.0.s8 %v7891
        %v7893 = vlaneseq
        %v7894 = vshrl.u32 %v7893, 7
        %v7895 = vsub.s32 %v7892, %v7894
        %v7896 = vrot.slane %v7882, %v7895
        %v7897 = vcombine.low %v7700, %v7708
        %v7898 = vcombine.high %v7700, %v7708
        %v7900 = vunpack.c.l.s4 1983009808
        %v7901 = vunpack.c.0.s8 %v7900
        %v7902 = vlaneseq
        %v7903 = vshrl.u32 %v7902, 7
        %v7904 = vsub.s32 %v7901, %v7903
        %v7905 = vrot.slane %v7897, %v7904
        %v7907 = vunpack.c.l.s4 1983009808
        %v7908 = vunpack.c.0.s8 %v7907
        %v7909 = vlaneseq
        %v7910 = vshrl.u32 %v7909, 7
        %v7911 = vsub.s32 %v7908, %v7910
        %v7912 = vrot.slane %v7898, %v7911
        %v7913 = vcombine.low %v7704, %v7712
        %v7914 = vcombine.high %v7704, %v7712
        %v7916 = vunpack.c.l.s4 1983009808
        %v7917 = vunpack.c.0.s8 %v7916
        %v7918 = vlaneseq
        %v7919 = vshrl.u32 %v7918, 7
        %v7920 = vsub.s32 %v7917, %v7919
        %v7921 = vrot.slane %v7913, %v7920
        %v7923 = vunpack.c.l.s4 1983009808
        %v7924 = vunpack.c.0.s8 %v7923
        %v7925 = vlaneseq
        %v7926 = vshrl.u32 %v7925, 7
        %v7927 = vsub.s32 %v7924, %v7926
        %v7928 = vrot.slane %v7914, %v7927
        %v7929 = vcombine.low %v7873, %v7889
        %v7930 = vcombine.high %v7873, %v7889
        %v7932 = vunpack.c.l.s4 1934713408
        %v7933 = vunpack.c.0.s8 %v7932
        %v7934 = vlaneseq
        %v7935 = vshrl.u32 %v7934, 7
        %v7936 = vsub.s32 %v7933, %v7935
        %v7937 = vrot.slane %v7929, %v7936
        %v7939 = vunpack.c.l.s4 1934713408
        %v7940 = vunpack.c.0.s8 %v7939
        %v7941 = vlaneseq
        %v7942 = vshrl.u32 %v7941, 7
        %v7943 = vsub.s32 %v7940, %v7942
        %v7944 = vrot.slane %v7930, %v7943
        %v7945 = vcombine.low %v7880, %v7896
        %v7946 = vcombine.high %v7880, %v7896
        %v7948 = vunpack.c.l.s4 1934713408
        %v7949 = vunpack.c.0.s8 %v7948
        %v7950 = vlaneseq
        %v7951 = vshrl.u32 %v7950, 7
        %v7952 = vsub.s32 %v7949, %v7951
        %v7953 = vrot.slane %v7945, %v7952
        %v7955 = vunpack.c.l.s4 1934713408
        %v7956 = vunpack.c.0.s8 %v7955
        %v7957 = vlaneseq
        %v7958 = vshrl.u32 %v7957, 7
        %v7959 = vsub.s32 %v7956, %v7958
        %v7960 = vrot.slane %v7946, %v7959
        %v7961 = vcombine.low %v7905, %v7921
        %v7962 = vcombine.high %v7905, %v7921
        %v7964 = vunpack.c.l.s4 1934713408
        %v7965 = vunpack.c.0.s8 %v7964
        %v7966 = vlaneseq
        %v7967 = vshrl.u32 %v7966, 7
        %v7968 = vsub.s32 %v7965, %v7967
        %v7969 = vrot.slane %v7961, %v7968
        %v7971 = vunpack.c.l.s4 1934713408
        %v7972 = vunpack.c.0.s8 %v7971
        %v7973 = vlaneseq
        %v7974 = vshrl.u32 %v7973, 7
        %v7975 = vsub.s32 %v7972, %v7974
        %v7976 = vrot.slane %v7962, %v7975
        %v7977 = vcombine.low %v7912, %v7928
        %v7978 = vcombine.high %v7912, %v7928
        %v7980 = vunpack.c.l.s4 1934713408
        %v7981 = vunpack.c.0.s8 %v7980
        %v7982 = vlaneseq
        %v7983 = vshrl.u32 %v7982, 7
        %v7984 = vsub.s32 %v7981, %v7983
        %v7985 = vrot.slane %v7977, %v7984
        %v7987 = vunpack.c.l.s4 1934713408
        %v7988 = vunpack.c.0.s8 %v7987
        %v7989 = vlaneseq
        %v7990 = vshrl.u32 %v7989, 7
        %v7991 = vsub.s32 %v7988, %v7990
        %v7992 = vrot.slane %v7978, %v7991
        %v7993 = vcombine.low %v7937, %v7969
        %v7994 = vcombine.high %v7937, %v7969
        %v7995 = vcombine.low %v7944, %v7976
        %v7996 = vcombine.high %v7944, %v7976
        %v7997 = vcombine.low %v7953, %v7985
        %v7998 = vcombine.high %v7953, %v7985
        %v7999 = vcombine.low %v7960, %v7992
        %v8000 = vcombine.high %v7960, %v7992
        %8002 = vrot.lane.b32.xlu0 %v7858, 16
        %v8003 = vpop.permute.xlu0 %8002
        %8006 = vrot.lane.b32.xlu0 %v7859, 32
        %v8007 = vpop.permute.xlu0 %8006
        %8010 = vrot.lane.b32.xlu0 %v7860, 48
        %v8011 = vpop.permute.xlu0 %8010
        %8014 = vrot.lane.b32.xlu0 %v7861, 64
        %v8015 = vpop.permute.xlu0 %8014
        %8018 = vrot.lane.b32.xlu0 %v7862, 80
        %v8019 = vpop.permute.xlu0 %8018
        %8022 = vrot.lane.b32.xlu0 %v7863, 96
        %v8023 = vpop.permute.xlu0 %8022
        %8026 = vrot.lane.b32.xlu0 %v7864, 112
        %v8027 = vpop.permute.xlu0 %8026
        %8030 = vrot.lane.b32.xlu0 %v7994, 16
        %v8031 = vpop.permute.xlu0 %8030
        %8034 = vrot.lane.b32.xlu0 %v7995, 32
        %v8035 = vpop.permute.xlu0 %8034
        %8038 = vrot.lane.b32.xlu0 %v7996, 48
        %v8039 = vpop.permute.xlu0 %8038
        %8042 = vrot.lane.b32.xlu0 %v7997, 64
        %v8043 = vpop.permute.xlu0 %8042
        %8046 = vrot.lane.b32.xlu0 %v7998, 80
        %v8047 = vpop.permute.xlu0 %8046
        %8050 = vrot.lane.b32.xlu0 %v7999, 96
        %v8051 = vpop.permute.xlu0 %8050
        %8054 = vrot.lane.b32.xlu0 %v8000, 112
        %v8055 = vpop.permute.xlu0 %8054
        %v8057 = vsel %vm637, %v7857, %v8003
        %v8058 = vsel %vm639, %v8057, %v8007
        %v8059 = vsel %vm641, %v8058, %v8011
        %v8060 = vsel %vm643, %v8059, %v8015
        %v8061 = vsel %vm645, %v8060, %v8019
        %v8062 = vsel %vm647, %v8061, %v8023
        %v8063 = vsel %vm649, %v8062, %v8027
        %v8064 = vsel %vm637, %v7993, %v8031
        %v8065 = vsel %vm639, %v8064, %v8035
        %v8066 = vsel %vm641, %v8065, %v8039
        %v8067 = vsel %vm643, %v8066, %v8043
        %v8068 = vsel %vm645, %v8067, %v8047
        %v8069 = vsel %vm647, %v8068, %v8051
        %v8070 = vsel %vm649, %v8069, %v8055
        %8071 = vst [vmem:[#allocation3 + $0x80] sm:$0xff] %v8063
        %8072 = vst [vmem:[#allocation3 + $0x88] sm:$0xff] %v8070
        %v8073 = vld [vmem:[#allocation11] sm:$0xff]
        %v8074 = vld [vmem:[#allocation3] sm:$0xff]
        %v8075 = vld [vmem:[#allocation3 + $0x8] sm:$0xff]
        %v8076 = vld [vmem:[#allocation3 + $0x10] sm:$0xff]
        %v8077 = vld [vmem:[#allocation3 + $0x18] sm:$0xff]
        %v8078 = vld [vmem:[#allocation3 + $0x20] sm:$0xff]
        %v8079 = vld [vmem:[#allocation3 + $0x28] sm:$0xff]
        %v8080 = vld [vmem:[#allocation3 + $0x30] sm:$0xff]
        %v8081 = vld [vmem:[#allocation3 + $0x38] sm:$0xff]
        %v8082 = vld [vmem:[#allocation3 + $0x40] sm:$0xff]
        %v8083 = vld [vmem:[#allocation3 + $0x48] sm:$0xff]
        %v8084 = vld [vmem:[#allocation3 + $0x50] sm:$0xff]
        %v8085 = vld [vmem:[#allocation3 + $0x58] sm:$0xff]
        %v8086 = vld [vmem:[#allocation3 + $0x60] sm:$0xff]
        %v8087 = vld [vmem:[#allocation3 + $0x68] sm:$0xff]
        %v8088 = vld [vmem:[#allocation3 + $0x70] sm:$0xff]
        %v8089 = vld [vmem:[#allocation3 + $0x78] sm:$0xff]
        %v8090 = vld [vmem:[#allocation3 + $0x80] sm:$0xff]
        %v8091 = vld [vmem:[#allocation3 + $0x88] sm:$0xff]
        %v8092 = vld [vmem:[#allocation13] sm:$0xff]
        %8094 = vset.pattern.permute.xlu0 0
        %8095 = vperm.xlu0 %8094, %v8092
        %v8096 = vpop.permute.xlu0 %8095
        %v8099 = vsel %vm3949, %v8073, 0
        %8101 = vmatprep.subr.mxu0 %v8075
        %8102 = vmatpush1.msra.mxu0 %v8074
        %8103 = vmatprep.subr.mxu0 %v8077
        %8104 = vmatpush1.msra.mxu0 %v8076
        %8105 = vmatprep.subr.mxu0 %v8079
        %8106 = vmatpush1.msra.mxu0 %v8078
        %8107 = vmatprep.subr.mxu0 %v8081
        %8108 = vmatpush1.msra.mxu0 %v8080
        %8109 = vmatprep.subr.mxu0 %v8083
        %8110 = vmatpush1.msra.mxu0 %v8082
        %8111 = vmatprep.subr.mxu0 %v8085
        %8112 = vmatpush1.msra.mxu0 %v8084
        %8113 = vmatprep.subr.mxu0 %v8087
        %8114 = vmatpush1.msra.mxu0 %v8086
        %8115 = vmatprep.subr.mxu0 %v8089
        %8116 = vmatpush1.msra.mxu0 %v8088
        %8117 = vmatprep.subr.mxu0 %v8091
        %8118 = vmatpush1.msra.mxu0 %v8090
        %8119 = vmatprep.subr.mxu0 0.0
        %8120 = vmatpush1.msra.mxu0 0.0
        %8121 = vmatprep.subr.mxu0 0.0
        %8122 = vmatpush1.msra.mxu0 0.0
        %8123 = vmatprep.subr.mxu0 0.0
        %8124 = vmatpush1.msra.mxu0 0.0
        %8125 = vmatprep.subr.mxu0 0.0
        %8126 = vmatpush1.msra.mxu0 0.0
        %8127 = vmatprep.subr.mxu0 0.0
        %8128 = vmatpush1.msra.mxu0 0.0
        %8129 = vmatprep.subr.mxu0 0.0
        %8130 = vmatpush1.msra.mxu0 0.0
        %8131 = vmatprep.subr.mxu0 0.0
        %8132 = vmatpush1.msra.mxu0 0.0
        %8133 = vmatprep.subr.mxu0 0.0
        %8134 = vmatpush1.msra.mxu0 0.0
        %8135 = vmatprep.subr.mxu0 0.0
        %8136 = vmatpush1.msra.mxu0 0.0
        %8137 = vmatprep.subr.mxu0 0.0
        %8138 = vmatpush1.msra.mxu0 0.0
        %8139 = vmatprep.subr.mxu0 0.0
        %8140 = vmatpush1.msra.mxu0 0.0
        %8141 = vmatprep.subr.mxu0 0.0
        %8142 = vmatpush1.msra.mxu0 0.0
        %8143 = vmatprep.subr.mxu0 0.0
        %8144 = vmatpush1.msra.mxu0 0.0
        %8145 = vmatprep.subr.mxu0 0.0
        %8146 = vmatpush1.msra.mxu0 0.0
        %8147 = vmatprep.subr.mxu0 0.0
        %8148 = vmatpush1.msra.mxu0 0.0
        %8149 = vmatprep.subr.mxu0 0.0
        %8150 = vmatpush1.msra.mxu0 0.0
        %8151 = vmatprep.subr.mxu0 0.0
        %8152 = vmatpush1.msra.mxu0 0.0
        %8153 = vmatprep.subr.mxu0 0.0
        %8154 = vmatpush1.msra.mxu0 0.0
        %8155 = vmatprep.subr.mxu0 0.0
        %8156 = vmatpush1.msra.mxu0 0.0
        %8157 = vmatprep.subr.mxu0 0.0
        %8158 = vmatpush1.msra.mxu0 0.0
        %8159 = vmatprep.subr.mxu0 0.0
        %8160 = vmatpush1.msra.mxu0 0.0
        %8161 = vmatprep.subr.mxu0 0.0
        %8162 = vmatpush1.msra.mxu0 0.0
        %8163 = vmatprep.subr.mxu0 0.0
        %8164 = vmatpush1.msra.mxu0 0.0
        %8165 = vmatprep.mubr.f32.mxu0 0.0
        %8166 = vmatmul.mubr.f32.gmra.mrb[0].mxu0 %v8099
        %v8167 = vpop.f32.mrb[0].mxu0
        %v8168 = vadd.f32 %v8096, %v8167
        %v8169 = vpop.f32.mrb[0].mxu0
        %v8170 = vadd.f32 %v8096, %v8169
        %8171 = vdwg.mxu0
        %v8172 = vmax.f32 %v8168, 0.0
        %v8173 = vmax.f32 %v8170, 0.0
        %8174 = vst [vmem:[%s292] sm:$0xff] %v8172
        %8175 = vst [vmem:[%s292 + $0x8] sm:$0xff] %v8173
        %s8176 = sand.u32 %s142, 1
        %s8177 = scalar_lea.sflag [#allocation7], %s8176
        %s8178 = sand.u32 %s142, 1
        %s8179 = smul.addr %s8178, 16
        %s8180 = scalar_lea.vmem [#allocation14], %s8179
        // Predicated region
        $region61: #{tpu_custom_call.1} parent=39 // pred_check
          %p8181 = pneg %p152
        $region62: #{tpu_custom_call.1} parent=39 // pred_check_branch
          %8183 = sbr.rel (%p8181) target = $region64
        $region63: #{tpu_custom_call.1} parent=39 // pred_region
          %s8185 = ssub.s32 256, 256
          %8186 = vsyncadd %s8177, %s8185
          %s8187 = smul.addr %s24, 2
          %s8188 = smul.addr %s8187, 128
          %s8189 = scalar_lea.hbm %s5, %s8188
          %s8191 = sshll.u32 %s8180, 4
          %s8192 = int_to_ptr.vmem [resolvable:$true] %s8191
          %8194 = dma.vmem_to_hbm [thread:$0]  %s8192, 256, %s8189, %s8177
        $region64: #{tpu_custom_call.1} parent=39 // pred_fallthru
          _
      $region40: #{tpu_custom_call.1} parent=5 // pred_fallthru
        _
      %p8195 = scmp.le.s32.totalorder 2, %s19
      // Predicated region
      $region65: #{tpu_custom_call.1} parent=5 // pred_check
        %p8196 = pneg %p8195
      $region66: #{tpu_custom_call.1} parent=5 // pred_check_branch
        %8198 = sbr.rel (%p8196) target = $region68
      $region67: #{tpu_custom_call.1} parent=5 // pred_region
        %s8199 = ssub.s32 %s19, 2
        // Predicated region
        $region69: #{tpu_custom_call.1} parent=67 // pred_check
          %p8200 = pneg %p158
        $region70: #{tpu_custom_call.1} parent=67 // pred_check_branch
          %8202 = sbr.rel (%p8200) target = $region72
        $region71: #{tpu_custom_call.1} parent=67 // pred_region
          %s8203 = sand.u32 %s143, 1
          %s8204 = scalar_lea.sflag [#allocation7], %s8203
          %s8205 = sand.u32 %s143, 1
          %s8206 = smul.addr %s8205, 16
          %s8207 = scalar_lea.vmem [#allocation14], %s8206
          %8208 = dma.done %s8204, 256
        $region72: #{tpu_custom_call.1} parent=67 // pred_fallthru
          _
      $region68: #{tpu_custom_call.1} parent=5 // pred_fallthru
        _
    $region6: #{tpu_custom_call.1} parent=1 // loop_footer
      %s23 = sadd.s32 1, %s19
    $region7: #{tpu_custom_call.1} parent=1 // loop_footer_branch
      %18 = sbr.rel target = $region3
    $region8: #{tpu_custom_call.1} parent=1 // loop_exit
      _
    %8209 = vsyncpa [#allocation6], 1
    %s8210 = scalar_lea.sflag [#allocation6], 1
    %8211 = vsyncpa %s8210, 1
    %8212 = vsyncpa [#allocation9], 1
    %8213 = vsyncpa [#allocation12], 1
    %8214 = vsyncpa [#allocation7], 1
    %s8215 = scalar_lea.sflag [#allocation7], 1
    %8216 = vsyncpa %s8215, 1

</llo_original>
